<compile_context>
chip_gen: v7x
topology: tpu7x:2x2x1
jax: 0.10.0
libtpu: 0.0.40
codegen_flags: <defaults>
</compile_context>

<pallas_src>
import functools

import jax
import jax.numpy as jnp
from jax.experimental import pallas as pl
from jax.experimental.pallas import tpu as pltpu


def _round_up(n, m=128):
    return ((n + m - 1) // m) * m


# ----------------------------------------------------------------------------
# Deterministic parameter construction (matches the nn.Module shapes),
# eval-mode BatchNorm folded:  y = (x @ W) * scale + shift  ->  x @ (W*scale) + shift
# ----------------------------------------------------------------------------
def _init_bn(key, c):
    k1, k2, k3, k4 = jax.random.split(key, 4)
    gamma = jax.random.uniform(k1, (c,), minval=0.5, maxval=1.2)
    beta = 0.1 * jax.random.normal(k2, (c,))
    running_mean = 0.1 * jax.random.normal(k3, (c,))
    running_var = jax.random.uniform(k4, (c,), minval=0.5, maxval=1.5)
    eps = 1e-5
    scale = gamma / jnp.sqrt(running_var + eps)
    shift = beta - running_mean * scale
    return scale.astype(jnp.float32), shift.astype(jnp.float32)


def _init_conv_center(key, cin, cout, ksize):
    # Full Conv1d weight (cout, cin, ksize); with L == 1 only the center tap contributes.
    w = jax.random.normal(key, (cout, cin, ksize), dtype=jnp.float32) / jnp.sqrt(float(cin))
    center = w[:, :, ksize // 2]          # (cout, cin)
    return jnp.transpose(center)          # (cin, cout) so the kernel computes x @ W


def _fold_conv_bn(wkey, bnkey, cin, cout, ksize):
    w = _init_conv_center(wkey, cin, cout, ksize)
    scale, shift = _init_bn(bnkey, cout)
    w_folded = (w * scale[None, :]).astype(jnp.bfloat16)   # BN scale folded into weights
    return w_folded, shift.reshape(1, cout)                 # shift stays f32


def _init_block(key, cin, cout, stride):
    keys = jax.random.split(key, 6)
    w1, b1 = _fold_conv_bn(keys[0], keys[1], cin, cout, 3)
    w2, b2 = _fold_conv_bn(keys[2], keys[3], cout, cout, 3)
    blk = {"w1": w1, "b1": b1, "w2": w2, "b2": b2}
    if stride != 1 or cin != cout:
        wd, bd = _fold_conv_bn(keys[4], keys[5], cin, cout, 1)
        blk["wd"] = wd
        blk["bd"] = bd
    return blk


def init_resnet_params(key, input_size, num_classes, num_blocks):
    keys = jax.random.split(key, 8)
    w1, b1 = _fold_conv_bn(keys[0], keys[1], input_size, 64, 7)   # conv1 k=7 center tap
    params = {"w1": w1, "b1": b1}
    layers = []
    in_c = 64
    layer_cfg = [
        (64, num_blocks[0], 1),
        (128, num_blocks[1], 2),
        (256, num_blocks[2], 2),
        (512, num_blocks[3], 2),
    ]
    for li, (out_c, nb, stride) in enumerate(layer_cfg):
        blocks = []
        bkeys = jax.random.split(keys[2 + li], nb)
        for bi in range(nb):
            s = stride if bi == 0 else 1
            blocks.append(_init_block(bkeys[bi], in_c, out_c, s))
            in_c = out_c
        layers.append(blocks)
    params["layers"] = layers
    kfc_w, kfc_b = jax.random.split(keys[6], 2)
    params["wfc"] = (jax.random.normal(kfc_w, (512, num_classes), dtype=jnp.float32)
                     / jnp.sqrt(512.0)).astype(jnp.bfloat16)
    params["bfc"] = (0.1 * jax.random.normal(kfc_b, (num_classes,), dtype=jnp.float32)
                     ).reshape(1, num_classes)
    return params


# ----------------------------------------------------------------------------
# Pad every channel dim to a multiple of 128 (lane-dense blocks; 32->128, 64->128, 10->128).
# Padded rows/cols are zero, so the math in the real region is unchanged.
# ----------------------------------------------------------------------------
def _pad2(a, rows, cols):
    r, c = a.shape
    return jnp.pad(a, ((0, rows - r), (0, cols - c)))


def pad_params(params):
    def pad_w(w):
        return _pad2(w, _round_up(w.shape[0]), _round_up(w.shape[1]))

    def pad_b(b):
        return _pad2(b, 1, _round_up(b.shape[1]))

    padded = {
        "w1": pad_w(params["w1"]), "b1": pad_b(params["b1"]),
        "wfc": pad_w(params["wfc"]), "bfc": pad_b(params["bfc"]),
        "layers": [],
    }
    for layer in params["layers"]:
        pblocks = []
        for blk in layer:
            pblocks.append({k: (pad_w(v) if k.startswith("w") else pad_b(v))
                            for k, v in blk.items()})
        padded["layers"].append(pblocks)
    return padded


# ----------------------------------------------------------------------------
# Single fused Pallas kernel: the whole layer chain unrolled, activations in vregs/VMEM.
# ----------------------------------------------------------------------------
def _fused_resnet_kernel(treedef, n_params, *refs):
    x_ref = refs[0]
    param_refs = refs[1:1 + n_params]
    out_ref = refs[1 + n_params]
    p = jax.tree_util.tree_unflatten(treedef, param_refs)

    def dense(h, w_ref, b_ref, residual=None, relu=True):
        # bf16 x bf16 -> f32 accumulate on the MXU; BN scale is pre-folded into w.
        y = jnp.dot(h.astype(jnp.bfloat16), w_ref[...],
                    preferred_element_type=jnp.float32)
        y = y + b_ref[...]                      # f32 epilogue (shift)
        if residual is not None:
            y = y + residual                    # real residual only (no zero dummy)
        if relu:
            y = jnp.maximum(y, 0.0)
        return y

    # conv1 -> bn1 -> relu   (MaxPool1d(3,2,1) on L==1 is identity)
    h = dense(x_ref[...], p["w1"], p["b1"], relu=True)

    # 16 residual blocks, statically unrolled
    for layer in p["layers"]:
        for blk in layer:
            t = dense(h, blk["w1"], blk["b1"], relu=True)                 # conv1+bn1+relu
            if "wd" in blk:
                res = dense(h, blk["wd"], blk["bd"], relu=False)          # downsample conv+bn
            else:
                res = h                                                   # identity shortcut
            h = dense(t, blk["w2"], blk["b2"], residual=res, relu=True)   # conv2+bn2+add+relu

    # AdaptiveAvgPool1d(1) on L==1 is identity; dropout is eval-mode identity; fc:
    # TODO(synk): train-mode Dropout randomness is not implemented (eval-mode identity).
    out_ref[...] = dense(h, p["wfc"], p["bfc"], relu=False)


def fused_resnet_forward(x_pad, padded_params):
    flat, treedef = jax.tree_util.tree_flatten(padded_params)
    n_params = len(flat)
    batch = x_pad.shape[0]
    out_cols = padded_params["wfc"].shape[1]

    kernel = functools.partial(_fused_resnet_kernel, treedef, n_params)
    vmem = pl.BlockSpec(memory_space=pltpu.MemorySpace.VMEM)
    return pl.pallas_call(
        kernel,
        out_shape=jax.ShapeDtypeStruct((batch, out_cols), jnp.float32),
        in_specs=[vmem] * (1 + n_params),
        out_specs=vmem,
        compiler_params=pltpu.CompilerParams(vmem_limit_bytes=32 * 1024 * 1024),
    )(x_pad, *flat)


# ----------------------------------------------------------------------------
# Pure-JAX reference on the UNPADDED params (same bf16-matmul / f32-accumulate math),
# used to validate both the fused kernel and the channel-padding transformation.
# ----------------------------------------------------------------------------
def ref_forward(x, params):
    def dense(h, w, b, residual=None, relu=True):
        y = jnp.dot(h.astype(jnp.bfloat16), w, preferred_element_type=jnp.float32)
        y = y + b
        if residual is not None:
            y = y + residual
        if relu:
            y = jnp.maximum(y, 0.0)
        return y

    h = dense(x, params["w1"], params["b1"], relu=True)
    for layer in params["layers"]:
        for blk in layer:
            t = dense(h, blk["w1"], blk["b1"], relu=True)
            res = dense(h, blk["wd"], blk["bd"], relu=False) if "wd" in blk else h
            h = dense(t, blk["w2"], blk["b2"], residual=res, relu=True)
    return dense(h, params["wfc"], params["bfc"], relu=False)


# ----------------------------------------------------------------------------
if __name__ == "__main__":
    key = jax.random.PRNGKey(0)
    kx, kp = jax.random.split(key)

    B, input_size, num_classes = 8, 32, 10
    num_blocks = [3, 4, 6, 3]

    x = jax.random.normal(kx, (B, input_size), dtype=jnp.float32)
    params = init_resnet_params(kp, input_size, num_classes, num_blocks)
    padded = pad_params(params)

    cin_pad = padded["w1"].shape[0]
    x_pad = jnp.pad(x, ((0, 0), (0, cin_pad - input_size)))

    pallas_fwd = jax.jit(fused_resnet_forward)
    out_pad = jax.block_until_ready(pallas_fwd(x_pad, padded))
    out = out_pad[:, :num_classes]

    ref = jax.block_until_ready(jax.jit(ref_forward)(x, params))

    assert out.shape == (B, num_classes), out.shape
    if not jnp.allclose(out, ref, rtol=2e-2, atol=2e-2):
        max_err = float(jnp.max(jnp.abs(out - ref)))
        raise AssertionError(f"Pallas output mismatch vs reference, max abs err = {max_err}")

    print("KERNEL_OK")
</pallas_src>

<mosaic_0001>
module attributes {stable_mosaic.version = 11 : i64} {
  func.func @_fused_resnet_kernel(%arg0: memref<8x128xf32, #tpu.memory_space<vmem>>, %arg1: memref<1x128xf32, #tpu.memory_space<vmem>>, %arg2: memref<1x128xf32, #tpu.memory_space<vmem>>, %arg3: memref<1x128xf32, #tpu.memory_space<vmem>>, %arg4: memref<1x128xf32, #tpu.memory_space<vmem>>, %arg5: memref<128x128xbf16, #tpu.memory_space<vmem>>, %arg6: memref<128x128xbf16, #tpu.memory_space<vmem>>, %arg7: memref<1x128xf32, #tpu.memory_space<vmem>>, %arg8: memref<1x128xf32, #tpu.memory_space<vmem>>, %arg9: memref<128x128xbf16, #tpu.memory_space<vmem>>, %arg10: memref<128x128xbf16, #tpu.memory_space<vmem>>, %arg11: memref<1x128xf32, #tpu.memory_space<vmem>>, %arg12: memref<1x128xf32, #tpu.memory_space<vmem>>, %arg13: memref<128x128xbf16, #tpu.memory_space<vmem>>, %arg14: memref<128x128xbf16, #tpu.memory_space<vmem>>, %arg15: memref<1x128xf32, #tpu.memory_space<vmem>>, %arg16: memref<1x128xf32, #tpu.memory_space<vmem>>, %arg17: memref<1x128xf32, #tpu.memory_space<vmem>>, %arg18: memref<128x128xbf16, #tpu.memory_space<vmem>>, %arg19: memref<128x128xbf16, #tpu.memory_space<vmem>>, %arg20: memref<128x128xbf16, #tpu.memory_space<vmem>>, %arg21: memref<1x128xf32, #tpu.memory_space<vmem>>, %arg22: memref<1x128xf32, #tpu.memory_space<vmem>>, %arg23: memref<128x128xbf16, #tpu.memory_space<vmem>>, %arg24: memref<128x128xbf16, #tpu.memory_space<vmem>>, %arg25: memref<1x128xf32, #tpu.memory_space<vmem>>, %arg26: memref<1x128xf32, #tpu.memory_space<vmem>>, %arg27: memref<128x128xbf16, #tpu.memory_space<vmem>>, %arg28: memref<128x128xbf16, #tpu.memory_space<vmem>>, %arg29: memref<1x128xf32, #tpu.memory_space<vmem>>, %arg30: memref<1x128xf32, #tpu.memory_space<vmem>>, %arg31: memref<128x128xbf16, #tpu.memory_space<vmem>>, %arg32: memref<128x128xbf16, #tpu.memory_space<vmem>>, %arg33: memref<1x256xf32, #tpu.memory_space<vmem>>, %arg34: memref<1x256xf32, #tpu.memory_space<vmem>>, %arg35: memref<1x256xf32, #tpu.memory_space<vmem>>, %arg36: memref<128x256xbf16, #tpu.memory_space<vmem>>, %arg37: memref<256x256xbf16, #tpu.memory_space<vmem>>, %arg38: memref<128x256xbf16, #tpu.memory_space<vmem>>, %arg39: memref<1x256xf32, #tpu.memory_space<vmem>>, %arg40: memref<1x256xf32, #tpu.memory_space<vmem>>, %arg41: memref<256x256xbf16, #tpu.memory_space<vmem>>, %arg42: memref<256x256xbf16, #tpu.memory_space<vmem>>, %arg43: memref<1x256xf32, #tpu.memory_space<vmem>>, %arg44: memref<1x256xf32, #tpu.memory_space<vmem>>, %arg45: memref<256x256xbf16, #tpu.memory_space<vmem>>, %arg46: memref<256x256xbf16, #tpu.memory_space<vmem>>, %arg47: memref<1x256xf32, #tpu.memory_space<vmem>>, %arg48: memref<1x256xf32, #tpu.memory_space<vmem>>, %arg49: memref<256x256xbf16, #tpu.memory_space<vmem>>, %arg50: memref<256x256xbf16, #tpu.memory_space<vmem>>, %arg51: memref<1x256xf32, #tpu.memory_space<vmem>>, %arg52: memref<1x256xf32, #tpu.memory_space<vmem>>, %arg53: memref<256x256xbf16, #tpu.memory_space<vmem>>, %arg54: memref<256x256xbf16, #tpu.memory_space<vmem>>, %arg55: memref<1x256xf32, #tpu.memory_space<vmem>>, %arg56: memref<1x256xf32, #tpu.memory_space<vmem>>, %arg57: memref<256x256xbf16, #tpu.memory_space<vmem>>, %arg58: memref<256x256xbf16, #tpu.memory_space<vmem>>, %arg59: memref<1x512xf32, #tpu.memory_space<vmem>>, %arg60: memref<1x512xf32, #tpu.memory_space<vmem>>, %arg61: memref<1x512xf32, #tpu.memory_space<vmem>>, %arg62: memref<256x512xbf16, #tpu.memory_space<vmem>>, %arg63: memref<512x512xbf16, #tpu.memory_space<vmem>>, %arg64: memref<256x512xbf16, #tpu.memory_space<vmem>>, %arg65: memref<1x512xf32, #tpu.memory_space<vmem>>, %arg66: memref<1x512xf32, #tpu.memory_space<vmem>>, %arg67: memref<512x512xbf16, #tpu.memory_space<vmem>>, %arg68: memref<512x512xbf16, #tpu.memory_space<vmem>>, %arg69: memref<1x512xf32, #tpu.memory_space<vmem>>, %arg70: memref<1x512xf32, #tpu.memory_space<vmem>>, %arg71: memref<512x512xbf16, #tpu.memory_space<vmem>>, %arg72: memref<512x512xbf16, #tpu.memory_space<vmem>>, %arg73: memref<128x128xbf16, #tpu.memory_space<vmem>>, %arg74: memref<512x128xbf16, #tpu.memory_space<vmem>>, %arg75: memref<8x128xf32, #tpu.memory_space<vmem>>) attributes {dimension_semantics = [], scalar_prefetch = 0 : i64, scratch_operands = 0 : i64, tpu.core_type = #tpu.core_type<tc>} {
    %c0 = arith.constant 0 : index
    %c0_0 = arith.constant 0 : index
    %0 = vector.load %arg0[%c0, %c0_0] : memref<8x128xf32, #tpu.memory_space<vmem>>, vector<8x128xf32>
    %1 = arith.truncf %0 : vector<8x128xf32> to vector<8x128xbf16>
    %c0_1 = arith.constant 0 : index
    %c0_2 = arith.constant 0 : index
    %2 = vector.load %arg73[%c0_1, %c0_2] : memref<128x128xbf16, #tpu.memory_space<vmem>>, vector<128x128xbf16>
    %cst = arith.constant dense<0.000000e+00> : vector<8x128xf32>
    %3 = tpu.matmul %1, %2, %cst {dimension_numbers = #tpu.dot_dimension_numbers<[1], [0], [0], [1], [0, 0, 1, 1], [], []>} : vector<8x128xbf16>, vector<128x128xbf16>, vector<8x128xf32> -> vector<8x128xf32>
    %c0_3 = arith.constant 0 : index
    %c0_4 = arith.constant 0 : index
    %4 = vector.load %arg1[%c0_3, %c0_4] : memref<1x128xf32, #tpu.memory_space<vmem>>, vector<1x128xf32>
    %5 = vector.broadcast %4 : vector<1x128xf32> to vector<8x128xf32>
    %6 = arith.addf %3, %5 : vector<8x128xf32>
    %cst_5 = arith.constant 0.000000e+00 : f32
    %7 = vector.broadcast %cst_5 : f32 to vector<8x128xf32>
    %8 = arith.maximumf %6, %7 : vector<8x128xf32>
    %9 = arith.truncf %8 : vector<8x128xf32> to vector<8x128xbf16>
    %c0_6 = arith.constant 0 : index
    %c0_7 = arith.constant 0 : index
    %10 = vector.load %arg5[%c0_6, %c0_7] : memref<128x128xbf16, #tpu.memory_space<vmem>>, vector<128x128xbf16>
    %cst_8 = arith.constant dense<0.000000e+00> : vector<8x128xf32>
    %11 = tpu.matmul %9, %10, %cst_8 {dimension_numbers = #tpu.dot_dimension_numbers<[1], [0], [0], [1], [0, 0, 1, 1], [], []>} : vector<8x128xbf16>, vector<128x128xbf16>, vector<8x128xf32> -> vector<8x128xf32>
    %c0_9 = arith.constant 0 : index
    %c0_10 = arith.constant 0 : index
    %12 = vector.load %arg3[%c0_9, %c0_10] : memref<1x128xf32, #tpu.memory_space<vmem>>, vector<1x128xf32>
    %13 = vector.broadcast %12 : vector<1x128xf32> to vector<8x128xf32>
    %14 = arith.addf %11, %13 : vector<8x128xf32>
    %cst_11 = arith.constant 0.000000e+00 : f32
    %15 = vector.broadcast %cst_11 : f32 to vector<8x128xf32>
    %16 = arith.maximumf %14, %15 : vector<8x128xf32>
    %17 = arith.truncf %16 : vector<8x128xf32> to vector<8x128xbf16>
    %c0_12 = arith.constant 0 : index
    %c0_13 = arith.constant 0 : index
    %18 = vector.load %arg6[%c0_12, %c0_13] : memref<128x128xbf16, #tpu.memory_space<vmem>>, vector<128x128xbf16>
    %cst_14 = arith.constant dense<0.000000e+00> : vector<8x128xf32>
    %19 = tpu.matmul %17, %18, %cst_14 {dimension_numbers = #tpu.dot_dimension_numbers<[1], [0], [0], [1], [0, 0, 1, 1], [], []>} : vector<8x128xbf16>, vector<128x128xbf16>, vector<8x128xf32> -> vector<8x128xf32>
    %c0_15 = arith.constant 0 : index
    %c0_16 = arith.constant 0 : index
    %20 = vector.load %arg4[%c0_15, %c0_16] : memref<1x128xf32, #tpu.memory_space<vmem>>, vector<1x128xf32>
    %21 = vector.broadcast %20 : vector<1x128xf32> to vector<8x128xf32>
    %22 = arith.addf %19, %21 : vector<8x128xf32>
    %23 = arith.addf %22, %8 : vector<8x128xf32>
    %cst_17 = arith.constant 0.000000e+00 : f32
    %24 = vector.broadcast %cst_17 : f32 to vector<8x128xf32>
    %25 = arith.maximumf %23, %24 : vector<8x128xf32>
    %26 = arith.truncf %25 : vector<8x128xf32> to vector<8x128xbf16>
    %c0_18 = arith.constant 0 : index
    %c0_19 = arith.constant 0 : index
    %27 = vector.load %arg9[%c0_18, %c0_19] : memref<128x128xbf16, #tpu.memory_space<vmem>>, vector<128x128xbf16>
    %cst_20 = arith.constant dense<0.000000e+00> : vector<8x128xf32>
    %28 = tpu.matmul %26, %27, %cst_20 {dimension_numbers = #tpu.dot_dimension_numbers<[1], [0], [0], [1], [0, 0, 1, 1], [], []>} : vector<8x128xbf16>, vector<128x128xbf16>, vector<8x128xf32> -> vector<8x128xf32>
    %c0_21 = arith.constant 0 : index
    %c0_22 = arith.constant 0 : index
    %29 = vector.load %arg7[%c0_21, %c0_22] : memref<1x128xf32, #tpu.memory_space<vmem>>, vector<1x128xf32>
    %30 = vector.broadcast %29 : vector<1x128xf32> to vector<8x128xf32>
    %31 = arith.addf %28, %30 : vector<8x128xf32>
    %cst_23 = arith.constant 0.000000e+00 : f32
    %32 = vector.broadcast %cst_23 : f32 to vector<8x128xf32>
    %33 = arith.maximumf %31, %32 : vector<8x128xf32>
    %34 = arith.truncf %33 : vector<8x128xf32> to vector<8x128xbf16>
    %c0_24 = arith.constant 0 : index
    %c0_25 = arith.constant 0 : index
    %35 = vector.load %arg10[%c0_24, %c0_25] : memref<128x128xbf16, #tpu.memory_space<vmem>>, vector<128x128xbf16>
    %cst_26 = arith.constant dense<0.000000e+00> : vector<8x128xf32>
    %36 = tpu.matmul %34, %35, %cst_26 {dimension_numbers = #tpu.dot_dimension_numbers<[1], [0], [0], [1], [0, 0, 1, 1], [], []>} : vector<8x128xbf16>, vector<128x128xbf16>, vector<8x128xf32> -> vector<8x128xf32>
    %c0_27 = arith.constant 0 : index
    %c0_28 = arith.constant 0 : index
    %37 = vector.load %arg8[%c0_27, %c0_28] : memref<1x128xf32, #tpu.memory_space<vmem>>, vector<1x128xf32>
    %38 = vector.broadcast %37 : vector<1x128xf32> to vector<8x128xf32>
    %39 = arith.addf %36, %38 : vector<8x128xf32>
    %40 = arith.addf %39, %25 : vector<8x128xf32>
    %cst_29 = arith.constant 0.000000e+00 : f32
    %41 = vector.broadcast %cst_29 : f32 to vector<8x128xf32>
    %42 = arith.maximumf %40, %41 : vector<8x128xf32>
    %43 = arith.truncf %42 : vector<8x128xf32> to vector<8x128xbf16>
    %c0_30 = arith.constant 0 : index
    %c0_31 = arith.constant 0 : index
    %44 = vector.load %arg13[%c0_30, %c0_31] : memref<128x128xbf16, #tpu.memory_space<vmem>>, vector<128x128xbf16>
    %cst_32 = arith.constant dense<0.000000e+00> : vector<8x128xf32>
    %45 = tpu.matmul %43, %44, %cst_32 {dimension_numbers = #tpu.dot_dimension_numbers<[1], [0], [0], [1], [0, 0, 1, 1], [], []>} : vector<8x128xbf16>, vector<128x128xbf16>, vector<8x128xf32> -> vector<8x128xf32>
    %c0_33 = arith.constant 0 : index
    %c0_34 = arith.constant 0 : index
    %46 = vector.load %arg11[%c0_33, %c0_34] : memref<1x128xf32, #tpu.memory_space<vmem>>, vector<1x128xf32>
    %47 = vector.broadcast %46 : vector<1x128xf32> to vector<8x128xf32>
    %48 = arith.addf %45, %47 : vector<8x128xf32>
    %cst_35 = arith.constant 0.000000e+00 : f32
    %49 = vector.broadcast %cst_35 : f32 to vector<8x128xf32>
    %50 = arith.maximumf %48, %49 : vector<8x128xf32>
    %51 = arith.truncf %50 : vector<8x128xf32> to vector<8x128xbf16>
    %c0_36 = arith.constant 0 : index
    %c0_37 = arith.constant 0 : index
    %52 = vector.load %arg14[%c0_36, %c0_37] : memref<128x128xbf16, #tpu.memory_space<vmem>>, vector<128x128xbf16>
    %cst_38 = arith.constant dense<0.000000e+00> : vector<8x128xf32>
    %53 = tpu.matmul %51, %52, %cst_38 {dimension_numbers = #tpu.dot_dimension_numbers<[1], [0], [0], [1], [0, 0, 1, 1], [], []>} : vector<8x128xbf16>, vector<128x128xbf16>, vector<8x128xf32> -> vector<8x128xf32>
    %c0_39 = arith.constant 0 : index
    %c0_40 = arith.constant 0 : index
    %54 = vector.load %arg12[%c0_39, %c0_40] : memref<1x128xf32, #tpu.memory_space<vmem>>, vector<1x128xf32>
    %55 = vector.broadcast %54 : vector<1x128xf32> to vector<8x128xf32>
    %56 = arith.addf %53, %55 : vector<8x128xf32>
    %57 = arith.addf %56, %42 : vector<8x128xf32>
    %cst_41 = arith.constant 0.000000e+00 : f32
    %58 = vector.broadcast %cst_41 : f32 to vector<8x128xf32>
    %59 = arith.maximumf %57, %58 : vector<8x128xf32>
    %60 = arith.truncf %59 : vector<8x128xf32> to vector<8x128xbf16>
    %c0_42 = arith.constant 0 : index
    %c0_43 = arith.constant 0 : index
    %61 = vector.load %arg18[%c0_42, %c0_43] : memref<128x128xbf16, #tpu.memory_space<vmem>>, vector<128x128xbf16>
    %cst_44 = arith.constant dense<0.000000e+00> : vector<8x128xf32>
    %62 = tpu.matmul %60, %61, %cst_44 {dimension_numbers = #tpu.dot_dimension_numbers<[1], [0], [0], [1], [0, 0, 1, 1], [], []>} : vector<8x128xbf16>, vector<128x128xbf16>, vector<8x128xf32> -> vector<8x128xf32>
    %c0_45 = arith.constant 0 : index
    %c0_46 = arith.constant 0 : index
    %63 = vector.load %arg15[%c0_45, %c0_46] : memref<1x128xf32, #tpu.memory_space<vmem>>, vector<1x128xf32>
    %64 = vector.broadcast %63 : vector<1x128xf32> to vector<8x128xf32>
    %65 = arith.addf %62, %64 : vector<8x128xf32>
    %cst_47 = arith.constant 0.000000e+00 : f32
    %66 = vector.broadcast %cst_47 : f32 to vector<8x128xf32>
    %67 = arith.maximumf %65, %66 : vector<8x128xf32>
    %68 = arith.truncf %59 : vector<8x128xf32> to vector<8x128xbf16>
    %c0_48 = arith.constant 0 : index
    %c0_49 = arith.constant 0 : index
    %69 = vector.load %arg20[%c0_48, %c0_49] : memref<128x128xbf16, #tpu.memory_space<vmem>>, vector<128x128xbf16>
    %cst_50 = arith.constant dense<0.000000e+00> : vector<8x128xf32>
    %70 = tpu.matmul %68, %69, %cst_50 {dimension_numbers = #tpu.dot_dimension_numbers<[1], [0], [0], [1], [0, 0, 1, 1], [], []>} : vector<8x128xbf16>, vector<128x128xbf16>, vector<8x128xf32> -> vector<8x128xf32>
    %c0_51 = arith.constant 0 : index
    %c0_52 = arith.constant 0 : index
    %71 = vector.load %arg17[%c0_51, %c0_52] : memref<1x128xf32, #tpu.memory_space<vmem>>, vector<1x128xf32>
    %72 = vector.broadcast %71 : vector<1x128xf32> to vector<8x128xf32>
    %73 = arith.addf %70, %72 : vector<8x128xf32>
    %74 = arith.truncf %67 : vector<8x128xf32> to vector<8x128xbf16>
    %c0_53 = arith.constant 0 : index
    %c0_54 = arith.constant 0 : index
    %75 = vector.load %arg19[%c0_53, %c0_54] : memref<128x128xbf16, #tpu.memory_space<vmem>>, vector<128x128xbf16>
    %cst_55 = arith.constant dense<0.000000e+00> : vector<8x128xf32>
    %76 = tpu.matmul %74, %75, %cst_55 {dimension_numbers = #tpu.dot_dimension_numbers<[1], [0], [0], [1], [0, 0, 1, 1], [], []>} : vector<8x128xbf16>, vector<128x128xbf16>, vector<8x128xf32> -> vector<8x128xf32>
    %c0_56 = arith.constant 0 : index
    %c0_57 = arith.constant 0 : index
    %77 = vector.load %arg16[%c0_56, %c0_57] : memref<1x128xf32, #tpu.memory_space<vmem>>, vector<1x128xf32>
    %78 = vector.broadcast %77 : vector<1x128xf32> to vector<8x128xf32>
    %79 = arith.addf %76, %78 : vector<8x128xf32>
    %80 = arith.addf %79, %73 : vector<8x128xf32>
    %cst_58 = arith.constant 0.000000e+00 : f32
    %81 = vector.broadcast %cst_58 : f32 to vector<8x128xf32>
    %82 = arith.maximumf %80, %81 : vector<8x128xf32>
    %83 = arith.truncf %82 : vector<8x128xf32> to vector<8x128xbf16>
    %c0_59 = arith.constant 0 : index
    %c0_60 = arith.constant 0 : index
    %84 = vector.load %arg23[%c0_59, %c0_60] : memref<128x128xbf16, #tpu.memory_space<vmem>>, vector<128x128xbf16>
    %cst_61 = arith.constant dense<0.000000e+00> : vector<8x128xf32>
    %85 = tpu.matmul %83, %84, %cst_61 {dimension_numbers = #tpu.dot_dimension_numbers<[1], [0], [0], [1], [0, 0, 1, 1], [], []>} : vector<8x128xbf16>, vector<128x128xbf16>, vector<8x128xf32> -> vector<8x128xf32>
    %c0_62 = arith.constant 0 : index
    %c0_63 = arith.constant 0 : index
    %86 = vector.load %arg21[%c0_62, %c0_63] : memref<1x128xf32, #tpu.memory_space<vmem>>, vector<1x128xf32>
    %87 = vector.broadcast %86 : vector<1x128xf32> to vector<8x128xf32>
    %88 = arith.addf %85, %87 : vector<8x128xf32>
    %cst_64 = arith.constant 0.000000e+00 : f32
    %89 = vector.broadcast %cst_64 : f32 to vector<8x128xf32>
    %90 = arith.maximumf %88, %89 : vector<8x128xf32>
    %91 = arith.truncf %90 : vector<8x128xf32> to vector<8x128xbf16>
    %c0_65 = arith.constant 0 : index
    %c0_66 = arith.constant 0 : index
    %92 = vector.load %arg24[%c0_65, %c0_66] : memref<128x128xbf16, #tpu.memory_space<vmem>>, vector<128x128xbf16>
    %cst_67 = arith.constant dense<0.000000e+00> : vector<8x128xf32>
    %93 = tpu.matmul %91, %92, %cst_67 {dimension_numbers = #tpu.dot_dimension_numbers<[1], [0], [0], [1], [0, 0, 1, 1], [], []>} : vector<8x128xbf16>, vector<128x128xbf16>, vector<8x128xf32> -> vector<8x128xf32>
    %c0_68 = arith.constant 0 : index
    %c0_69 = arith.constant 0 : index
    %94 = vector.load %arg22[%c0_68, %c0_69] : memref<1x128xf32, #tpu.memory_space<vmem>>, vector<1x128xf32>
    %95 = vector.broadcast %94 : vector<1x128xf32> to vector<8x128xf32>
    %96 = arith.addf %93, %95 : vector<8x128xf32>
    %97 = arith.addf %96, %82 : vector<8x128xf32>
    %cst_70 = arith.constant 0.000000e+00 : f32
    %98 = vector.broadcast %cst_70 : f32 to vector<8x128xf32>
    %99 = arith.maximumf %97, %98 : vector<8x128xf32>
    %100 = arith.truncf %99 : vector<8x128xf32> to vector<8x128xbf16>
    %c0_71 = arith.constant 0 : index
    %c0_72 = arith.constant 0 : index
    %101 = vector.load %arg27[%c0_71, %c0_72] : memref<128x128xbf16, #tpu.memory_space<vmem>>, vector<128x128xbf16>
    %cst_73 = arith.constant dense<0.000000e+00> : vector<8x128xf32>
    %102 = tpu.matmul %100, %101, %cst_73 {dimension_numbers = #tpu.dot_dimension_numbers<[1], [0], [0], [1], [0, 0, 1, 1], [], []>} : vector<8x128xbf16>, vector<128x128xbf16>, vector<8x128xf32> -> vector<8x128xf32>
    %c0_74 = arith.constant 0 : index
    %c0_75 = arith.constant 0 : index
    %103 = vector.load %arg25[%c0_74, %c0_75] : memref<1x128xf32, #tpu.memory_space<vmem>>, vector<1x128xf32>
    %104 = vector.broadcast %103 : vector<1x128xf32> to vector<8x128xf32>
    %105 = arith.addf %102, %104 : vector<8x128xf32>
    %cst_76 = arith.constant 0.000000e+00 : f32
    %106 = vector.broadcast %cst_76 : f32 to vector<8x128xf32>
    %107 = arith.maximumf %105, %106 : vector<8x128xf32>
    %108 = arith.truncf %107 : vector<8x128xf32> to vector<8x128xbf16>
    %c0_77 = arith.constant 0 : index
    %c0_78 = arith.constant 0 : index
    %109 = vector.load %arg28[%c0_77, %c0_78] : memref<128x128xbf16, #tpu.memory_space<vmem>>, vector<128x128xbf16>
    %cst_79 = arith.constant dense<0.000000e+00> : vector<8x128xf32>
    %110 = tpu.matmul %108, %109, %cst_79 {dimension_numbers = #tpu.dot_dimension_numbers<[1], [0], [0], [1], [0, 0, 1, 1], [], []>} : vector<8x128xbf16>, vector<128x128xbf16>, vector<8x128xf32> -> vector<8x128xf32>
    %c0_80 = arith.constant 0 : index
    %c0_81 = arith.constant 0 : index
    %111 = vector.load %arg26[%c0_80, %c0_81] : memref<1x128xf32, #tpu.memory_space<vmem>>, vector<1x128xf32>
    %112 = vector.broadcast %111 : vector<1x128xf32> to vector<8x128xf32>
    %113 = arith.addf %110, %112 : vector<8x128xf32>
    %114 = arith.addf %113, %99 : vector<8x128xf32>
    %cst_82 = arith.constant 0.000000e+00 : f32
    %115 = vector.broadcast %cst_82 : f32 to vector<8x128xf32>
    %116 = arith.maximumf %114, %115 : vector<8x128xf32>
    %117 = arith.truncf %116 : vector<8x128xf32> to vector<8x128xbf16>
    %c0_83 = arith.constant 0 : index
    %c0_84 = arith.constant 0 : index
    %118 = vector.load %arg31[%c0_83, %c0_84] : memref<128x128xbf16, #tpu.memory_space<vmem>>, vector<128x128xbf16>
    %cst_85 = arith.constant dense<0.000000e+00> : vector<8x128xf32>
    %119 = tpu.matmul %117, %118, %cst_85 {dimension_numbers = #tpu.dot_dimension_numbers<[1], [0], [0], [1], [0, 0, 1, 1], [], []>} : vector<8x128xbf16>, vector<128x128xbf16>, vector<8x128xf32> -> vector<8x128xf32>
    %c0_86 = arith.constant 0 : index
    %c0_87 = arith.constant 0 : index
    %120 = vector.load %arg29[%c0_86, %c0_87] : memref<1x128xf32, #tpu.memory_space<vmem>>, vector<1x128xf32>
    %121 = vector.broadcast %120 : vector<1x128xf32> to vector<8x128xf32>
    %122 = arith.addf %119, %121 : vector<8x128xf32>
    %cst_88 = arith.constant 0.000000e+00 : f32
    %123 = vector.broadcast %cst_88 : f32 to vector<8x128xf32>
    %124 = arith.maximumf %122, %123 : vector<8x128xf32>
    %125 = arith.truncf %124 : vector<8x128xf32> to vector<8x128xbf16>
    %c0_89 = arith.constant 0 : index
    %c0_90 = arith.constant 0 : index
    %126 = vector.load %arg32[%c0_89, %c0_90] : memref<128x128xbf16, #tpu.memory_space<vmem>>, vector<128x128xbf16>
    %cst_91 = arith.constant dense<0.000000e+00> : vector<8x128xf32>
    %127 = tpu.matmul %125, %126, %cst_91 {dimension_numbers = #tpu.dot_dimension_numbers<[1], [0], [0], [1], [0, 0, 1, 1], [], []>} : vector<8x128xbf16>, vector<128x128xbf16>, vector<8x128xf32> -> vector<8x128xf32>
    %c0_92 = arith.constant 0 : index
    %c0_93 = arith.constant 0 : index
    %128 = vector.load %arg30[%c0_92, %c0_93] : memref<1x128xf32, #tpu.memory_space<vmem>>, vector<1x128xf32>
    %129 = vector.broadcast %128 : vector<1x128xf32> to vector<8x128xf32>
    %130 = arith.addf %127, %129 : vector<8x128xf32>
    %131 = arith.addf %130, %116 : vector<8x128xf32>
    %cst_94 = arith.constant 0.000000e+00 : f32
    %132 = vector.broadcast %cst_94 : f32 to vector<8x128xf32>
    %133 = arith.maximumf %131, %132 : vector<8x128xf32>
    %134 = arith.truncf %133 : vector<8x128xf32> to vector<8x128xbf16>
    %c0_95 = arith.constant 0 : index
    %c0_96 = arith.constant 0 : index
    %135 = vector.load %arg36[%c0_95, %c0_96] : memref<128x256xbf16, #tpu.memory_space<vmem>>, vector<128x256xbf16>
    %cst_97 = arith.constant dense<0.000000e+00> : vector<8x256xf32>
    %136 = tpu.matmul %134, %135, %cst_97 {dimension_numbers = #tpu.dot_dimension_numbers<[1], [0], [0], [1], [0, 0, 1, 1], [], []>} : vector<8x128xbf16>, vector<128x256xbf16>, vector<8x256xf32> -> vector<8x256xf32>
    %c0_98 = arith.constant 0 : index
    %c0_99 = arith.constant 0 : index
    %137 = vector.load %arg33[%c0_98, %c0_99] : memref<1x256xf32, #tpu.memory_space<vmem>>, vector<1x256xf32>
    %138 = vector.broadcast %137 : vector<1x256xf32> to vector<8x256xf32>
    %139 = arith.addf %136, %138 : vector<8x256xf32>
    %cst_100 = arith.constant 0.000000e+00 : f32
    %140 = vector.broadcast %cst_100 : f32 to vector<8x256xf32>
    %141 = arith.maximumf %139, %140 : vector<8x256xf32>
    %142 = arith.truncf %133 : vector<8x128xf32> to vector<8x128xbf16>
    %c0_101 = arith.constant 0 : index
    %c0_102 = arith.constant 0 : index
    %143 = vector.load %arg38[%c0_101, %c0_102] : memref<128x256xbf16, #tpu.memory_space<vmem>>, vector<128x256xbf16>
    %cst_103 = arith.constant dense<0.000000e+00> : vector<8x256xf32>
    %144 = tpu.matmul %142, %143, %cst_103 {dimension_numbers = #tpu.dot_dimension_numbers<[1], [0], [0], [1], [0, 0, 1, 1], [], []>} : vector<8x128xbf16>, vector<128x256xbf16>, vector<8x256xf32> -> vector<8x256xf32>
    %c0_104 = arith.constant 0 : index
    %c0_105 = arith.constant 0 : index
    %145 = vector.load %arg35[%c0_104, %c0_105] : memref<1x256xf32, #tpu.memory_space<vmem>>, vector<1x256xf32>
    %146 = vector.broadcast %145 : vector<1x256xf32> to vector<8x256xf32>
    %147 = arith.addf %144, %146 : vector<8x256xf32>
    %148 = arith.truncf %141 : vector<8x256xf32> to vector<8x256xbf16>
    %c0_106 = arith.constant 0 : index
    %c0_107 = arith.constant 0 : index
    %149 = vector.load %arg37[%c0_106, %c0_107] : memref<256x256xbf16, #tpu.memory_space<vmem>>, vector<256x256xbf16>
    %cst_108 = arith.constant dense<0.000000e+00> : vector<8x256xf32>
    %150 = tpu.matmul %148, %149, %cst_108 {dimension_numbers = #tpu.dot_dimension_numbers<[1], [0], [0], [1], [0, 0, 1, 1], [], []>} : vector<8x256xbf16>, vector<256x256xbf16>, vector<8x256xf32> -> vector<8x256xf32>
    %c0_109 = arith.constant 0 : index
    %c0_110 = arith.constant 0 : index
    %151 = vector.load %arg34[%c0_109, %c0_110] : memref<1x256xf32, #tpu.memory_space<vmem>>, vector<1x256xf32>
    %152 = vector.broadcast %151 : vector<1x256xf32> to vector<8x256xf32>
    %153 = arith.addf %150, %152 : vector<8x256xf32>
    %154 = arith.addf %153, %147 : vector<8x256xf32>
    %cst_111 = arith.constant 0.000000e+00 : f32
    %155 = vector.broadcast %cst_111 : f32 to vector<8x256xf32>
    %156 = arith.maximumf %154, %155 : vector<8x256xf32>
    %157 = arith.truncf %156 : vector<8x256xf32> to vector<8x256xbf16>
    %c0_112 = arith.constant 0 : index
    %c0_113 = arith.constant 0 : index
    %158 = vector.load %arg41[%c0_112, %c0_113] : memref<256x256xbf16, #tpu.memory_space<vmem>>, vector<256x256xbf16>
    %cst_114 = arith.constant dense<0.000000e+00> : vector<8x256xf32>
    %159 = tpu.matmul %157, %158, %cst_114 {dimension_numbers = #tpu.dot_dimension_numbers<[1], [0], [0], [1], [0, 0, 1, 1], [], []>} : vector<8x256xbf16>, vector<256x256xbf16>, vector<8x256xf32> -> vector<8x256xf32>
    %c0_115 = arith.constant 0 : index
    %c0_116 = arith.constant 0 : index
    %160 = vector.load %arg39[%c0_115, %c0_116] : memref<1x256xf32, #tpu.memory_space<vmem>>, vector<1x256xf32>
    %161 = vector.broadcast %160 : vector<1x256xf32> to vector<8x256xf32>
    %162 = arith.addf %159, %161 : vector<8x256xf32>
    %cst_117 = arith.constant 0.000000e+00 : f32
    %163 = vector.broadcast %cst_117 : f32 to vector<8x256xf32>
    %164 = arith.maximumf %162, %163 : vector<8x256xf32>
    %165 = arith.truncf %164 : vector<8x256xf32> to vector<8x256xbf16>
    %c0_118 = arith.constant 0 : index
    %c0_119 = arith.constant 0 : index
    %166 = vector.load %arg42[%c0_118, %c0_119] : memref<256x256xbf16, #tpu.memory_space<vmem>>, vector<256x256xbf16>
    %cst_120 = arith.constant dense<0.000000e+00> : vector<8x256xf32>
    %167 = tpu.matmul %165, %166, %cst_120 {dimension_numbers = #tpu.dot_dimension_numbers<[1], [0], [0], [1], [0, 0, 1, 1], [], []>} : vector<8x256xbf16>, vector<256x256xbf16>, vector<8x256xf32> -> vector<8x256xf32>
    %c0_121 = arith.constant 0 : index
    %c0_122 = arith.constant 0 : index
    %168 = vector.load %arg40[%c0_121, %c0_122] : memref<1x256xf32, #tpu.memory_space<vmem>>, vector<1x256xf32>
    %169 = vector.broadcast %168 : vector<1x256xf32> to vector<8x256xf32>
    %170 = arith.addf %167, %169 : vector<8x256xf32>
    %171 = arith.addf %170, %156 : vector<8x256xf32>
    %cst_123 = arith.constant 0.000000e+00 : f32
    %172 = vector.broadcast %cst_123 : f32 to vector<8x256xf32>
    %173 = arith.maximumf %171, %172 : vector<8x256xf32>
    %174 = arith.truncf %173 : vector<8x256xf32> to vector<8x256xbf16>
    %c0_124 = arith.constant 0 : index
    %c0_125 = arith.constant 0 : index
    %175 = vector.load %arg45[%c0_124, %c0_125] : memref<256x256xbf16, #tpu.memory_space<vmem>>, vector<256x256xbf16>
    %cst_126 = arith.constant dense<0.000000e+00> : vector<8x256xf32>
    %176 = tpu.matmul %174, %175, %cst_126 {dimension_numbers = #tpu.dot_dimension_numbers<[1], [0], [0], [1], [0, 0, 1, 1], [], []>} : vector<8x256xbf16>, vector<256x256xbf16>, vector<8x256xf32> -> vector<8x256xf32>
    %c0_127 = arith.constant 0 : index
    %c0_128 = arith.constant 0 : index
    %177 = vector.load %arg43[%c0_127, %c0_128] : memref<1x256xf32, #tpu.memory_space<vmem>>, vector<1x256xf32>
    %178 = vector.broadcast %177 : vector<1x256xf32> to vector<8x256xf32>
    %179 = arith.addf %176, %178 : vector<8x256xf32>
    %cst_129 = arith.constant 0.000000e+00 : f32
    %180 = vector.broadcast %cst_129 : f32 to vector<8x256xf32>
    %181 = arith.maximumf %179, %180 : vector<8x256xf32>
    %182 = arith.truncf %181 : vector<8x256xf32> to vector<8x256xbf16>
    %c0_130 = arith.constant 0 : index
    %c0_131 = arith.constant 0 : index
    %183 = vector.load %arg46[%c0_130, %c0_131] : memref<256x256xbf16, #tpu.memory_space<vmem>>, vector<256x256xbf16>
    %cst_132 = arith.constant dense<0.000000e+00> : vector<8x256xf32>
    %184 = tpu.matmul %182, %183, %cst_132 {dimension_numbers = #tpu.dot_dimension_numbers<[1], [0], [0], [1], [0, 0, 1, 1], [], []>} : vector<8x256xbf16>, vector<256x256xbf16>, vector<8x256xf32> -> vector<8x256xf32>
    %c0_133 = arith.constant 0 : index
    %c0_134 = arith.constant 0 : index
    %185 = vector.load %arg44[%c0_133, %c0_134] : memref<1x256xf32, #tpu.memory_space<vmem>>, vector<1x256xf32>
    %186 = vector.broadcast %185 : vector<1x256xf32> to vector<8x256xf32>
    %187 = arith.addf %184, %186 : vector<8x256xf32>
    %188 = arith.addf %187, %173 : vector<8x256xf32>
    %cst_135 = arith.constant 0.000000e+00 : f32
    %189 = vector.broadcast %cst_135 : f32 to vector<8x256xf32>
    %190 = arith.maximumf %188, %189 : vector<8x256xf32>
    %191 = arith.truncf %190 : vector<8x256xf32> to vector<8x256xbf16>
    %c0_136 = arith.constant 0 : index
    %c0_137 = arith.constant 0 : index
    %192 = vector.load %arg49[%c0_136, %c0_137] : memref<256x256xbf16, #tpu.memory_space<vmem>>, vector<256x256xbf16>
    %cst_138 = arith.constant dense<0.000000e+00> : vector<8x256xf32>
    %193 = tpu.matmul %191, %192, %cst_138 {dimension_numbers = #tpu.dot_dimension_numbers<[1], [0], [0], [1], [0, 0, 1, 1], [], []>} : vector<8x256xbf16>, vector<256x256xbf16>, vector<8x256xf32> -> vector<8x256xf32>
    %c0_139 = arith.constant 0 : index
    %c0_140 = arith.constant 0 : index
    %194 = vector.load %arg47[%c0_139, %c0_140] : memref<1x256xf32, #tpu.memory_space<vmem>>, vector<1x256xf32>
    %195 = vector.broadcast %194 : vector<1x256xf32> to vector<8x256xf32>
    %196 = arith.addf %193, %195 : vector<8x256xf32>
    %cst_141 = arith.constant 0.000000e+00 : f32
    %197 = vector.broadcast %cst_141 : f32 to vector<8x256xf32>
    %198 = arith.maximumf %196, %197 : vector<8x256xf32>
    %199 = arith.truncf %198 : vector<8x256xf32> to vector<8x256xbf16>
    %c0_142 = arith.constant 0 : index
    %c0_143 = arith.constant 0 : index
    %200 = vector.load %arg50[%c0_142, %c0_143] : memref<256x256xbf16, #tpu.memory_space<vmem>>, vector<256x256xbf16>
    %cst_144 = arith.constant dense<0.000000e+00> : vector<8x256xf32>
    %201 = tpu.matmul %199, %200, %cst_144 {dimension_numbers = #tpu.dot_dimension_numbers<[1], [0], [0], [1], [0, 0, 1, 1], [], []>} : vector<8x256xbf16>, vector<256x256xbf16>, vector<8x256xf32> -> vector<8x256xf32>
    %c0_145 = arith.constant 0 : index
    %c0_146 = arith.constant 0 : index
    %202 = vector.load %arg48[%c0_145, %c0_146] : memref<1x256xf32, #tpu.memory_space<vmem>>, vector<1x256xf32>
    %203 = vector.broadcast %202 : vector<1x256xf32> to vector<8x256xf32>
    %204 = arith.addf %201, %203 : vector<8x256xf32>
    %205 = arith.addf %204, %190 : vector<8x256xf32>
    %cst_147 = arith.constant 0.000000e+00 : f32
    %206 = vector.broadcast %cst_147 : f32 to vector<8x256xf32>
    %207 = arith.maximumf %205, %206 : vector<8x256xf32>
    %208 = arith.truncf %207 : vector<8x256xf32> to vector<8x256xbf16>
    %c0_148 = arith.constant 0 : index
    %c0_149 = arith.constant 0 : index
    %209 = vector.load %arg53[%c0_148, %c0_149] : memref<256x256xbf16, #tpu.memory_space<vmem>>, vector<256x256xbf16>
    %cst_150 = arith.constant dense<0.000000e+00> : vector<8x256xf32>
    %210 = tpu.matmul %208, %209, %cst_150 {dimension_numbers = #tpu.dot_dimension_numbers<[1], [0], [0], [1], [0, 0, 1, 1], [], []>} : vector<8x256xbf16>, vector<256x256xbf16>, vector<8x256xf32> -> vector<8x256xf32>
    %c0_151 = arith.constant 0 : index
    %c0_152 = arith.constant 0 : index
    %211 = vector.load %arg51[%c0_151, %c0_152] : memref<1x256xf32, #tpu.memory_space<vmem>>, vector<1x256xf32>
    %212 = vector.broadcast %211 : vector<1x256xf32> to vector<8x256xf32>
    %213 = arith.addf %210, %212 : vector<8x256xf32>
    %cst_153 = arith.constant 0.000000e+00 : f32
    %214 = vector.broadcast %cst_153 : f32 to vector<8x256xf32>
    %215 = arith.maximumf %213, %214 : vector<8x256xf32>
    %216 = arith.truncf %215 : vector<8x256xf32> to vector<8x256xbf16>
    %c0_154 = arith.constant 0 : index
    %c0_155 = arith.constant 0 : index
    %217 = vector.load %arg54[%c0_154, %c0_155] : memref<256x256xbf16, #tpu.memory_space<vmem>>, vector<256x256xbf16>
    %cst_156 = arith.constant dense<0.000000e+00> : vector<8x256xf32>
    %218 = tpu.matmul %216, %217, %cst_156 {dimension_numbers = #tpu.dot_dimension_numbers<[1], [0], [0], [1], [0, 0, 1, 1], [], []>} : vector<8x256xbf16>, vector<256x256xbf16>, vector<8x256xf32> -> vector<8x256xf32>
    %c0_157 = arith.constant 0 : index
    %c0_158 = arith.constant 0 : index
    %219 = vector.load %arg52[%c0_157, %c0_158] : memref<1x256xf32, #tpu.memory_space<vmem>>, vector<1x256xf32>
    %220 = vector.broadcast %219 : vector<1x256xf32> to vector<8x256xf32>
    %221 = arith.addf %218, %220 : vector<8x256xf32>
    %222 = arith.addf %221, %207 : vector<8x256xf32>
    %cst_159 = arith.constant 0.000000e+00 : f32
    %223 = vector.broadcast %cst_159 : f32 to vector<8x256xf32>
    %224 = arith.maximumf %222, %223 : vector<8x256xf32>
    %225 = arith.truncf %224 : vector<8x256xf32> to vector<8x256xbf16>
    %c0_160 = arith.constant 0 : index
    %c0_161 = arith.constant 0 : index
    %226 = vector.load %arg57[%c0_160, %c0_161] : memref<256x256xbf16, #tpu.memory_space<vmem>>, vector<256x256xbf16>
    %cst_162 = arith.constant dense<0.000000e+00> : vector<8x256xf32>
    %227 = tpu.matmul %225, %226, %cst_162 {dimension_numbers = #tpu.dot_dimension_numbers<[1], [0], [0], [1], [0, 0, 1, 1], [], []>} : vector<8x256xbf16>, vector<256x256xbf16>, vector<8x256xf32> -> vector<8x256xf32>
    %c0_163 = arith.constant 0 : index
    %c0_164 = arith.constant 0 : index
    %228 = vector.load %arg55[%c0_163, %c0_164] : memref<1x256xf32, #tpu.memory_space<vmem>>, vector<1x256xf32>
    %229 = vector.broadcast %228 : vector<1x256xf32> to vector<8x256xf32>
    %230 = arith.addf %227, %229 : vector<8x256xf32>
    %cst_165 = arith.constant 0.000000e+00 : f32
    %231 = vector.broadcast %cst_165 : f32 to vector<8x256xf32>
    %232 = arith.maximumf %230, %231 : vector<8x256xf32>
    %233 = arith.truncf %232 : vector<8x256xf32> to vector<8x256xbf16>
    %c0_166 = arith.constant 0 : index
    %c0_167 = arith.constant 0 : index
    %234 = vector.load %arg58[%c0_166, %c0_167] : memref<256x256xbf16, #tpu.memory_space<vmem>>, vector<256x256xbf16>
    %cst_168 = arith.constant dense<0.000000e+00> : vector<8x256xf32>
    %235 = tpu.matmul %233, %234, %cst_168 {dimension_numbers = #tpu.dot_dimension_numbers<[1], [0], [0], [1], [0, 0, 1, 1], [], []>} : vector<8x256xbf16>, vector<256x256xbf16>, vector<8x256xf32> -> vector<8x256xf32>
    %c0_169 = arith.constant 0 : index
    %c0_170 = arith.constant 0 : index
    %236 = vector.load %arg56[%c0_169, %c0_170] : memref<1x256xf32, #tpu.memory_space<vmem>>, vector<1x256xf32>
    %237 = vector.broadcast %236 : vector<1x256xf32> to vector<8x256xf32>
    %238 = arith.addf %235, %237 : vector<8x256xf32>
    %239 = arith.addf %238, %224 : vector<8x256xf32>
    %cst_171 = arith.constant 0.000000e+00 : f32
    %240 = vector.broadcast %cst_171 : f32 to vector<8x256xf32>
    %241 = arith.maximumf %239, %240 : vector<8x256xf32>
    %242 = arith.truncf %241 : vector<8x256xf32> to vector<8x256xbf16>
    %c0_172 = arith.constant 0 : index
    %c0_173 = arith.constant 0 : index
    %243 = vector.load %arg62[%c0_172, %c0_173] : memref<256x512xbf16, #tpu.memory_space<vmem>>, vector<256x512xbf16>
    %cst_174 = arith.constant dense<0.000000e+00> : vector<8x512xf32>
    %244 = tpu.matmul %242, %243, %cst_174 {dimension_numbers = #tpu.dot_dimension_numbers<[1], [0], [0], [1], [0, 0, 1, 1], [], []>} : vector<8x256xbf16>, vector<256x512xbf16>, vector<8x512xf32> -> vector<8x512xf32>
    %c0_175 = arith.constant 0 : index
    %c0_176 = arith.constant 0 : index
    %245 = vector.load %arg59[%c0_175, %c0_176] : memref<1x512xf32, #tpu.memory_space<vmem>>, vector<1x512xf32>
    %246 = vector.broadcast %245 : vector<1x512xf32> to vector<8x512xf32>
    %247 = arith.addf %244, %246 : vector<8x512xf32>
    %cst_177 = arith.constant 0.000000e+00 : f32
    %248 = vector.broadcast %cst_177 : f32 to vector<8x512xf32>
    %249 = arith.maximumf %247, %248 : vector<8x512xf32>
    %250 = arith.truncf %241 : vector<8x256xf32> to vector<8x256xbf16>
    %c0_178 = arith.constant 0 : index
    %c0_179 = arith.constant 0 : index
    %251 = vector.load %arg64[%c0_178, %c0_179] : memref<256x512xbf16, #tpu.memory_space<vmem>>, vector<256x512xbf16>
    %cst_180 = arith.constant dense<0.000000e+00> : vector<8x512xf32>
    %252 = tpu.matmul %250, %251, %cst_180 {dimension_numbers = #tpu.dot_dimension_numbers<[1], [0], [0], [1], [0, 0, 1, 1], [], []>} : vector<8x256xbf16>, vector<256x512xbf16>, vector<8x512xf32> -> vector<8x512xf32>
    %c0_181 = arith.constant 0 : index
    %c0_182 = arith.constant 0 : index
    %253 = vector.load %arg61[%c0_181, %c0_182] : memref<1x512xf32, #tpu.memory_space<vmem>>, vector<1x512xf32>
    %254 = vector.broadcast %253 : vector<1x512xf32> to vector<8x512xf32>
    %255 = arith.addf %252, %254 : vector<8x512xf32>
    %256 = arith.truncf %249 : vector<8x512xf32> to vector<8x512xbf16>
    %c0_183 = arith.constant 0 : index
    %c0_184 = arith.constant 0 : index
    %257 = vector.load %arg63[%c0_183, %c0_184] : memref<512x512xbf16, #tpu.memory_space<vmem>>, vector<512x512xbf16>
    %cst_185 = arith.constant dense<0.000000e+00> : vector<8x512xf32>
    %258 = tpu.matmul %256, %257, %cst_185 {dimension_numbers = #tpu.dot_dimension_numbers<[1], [0], [0], [1], [0, 0, 1, 1], [], []>} : vector<8x512xbf16>, vector<512x512xbf16>, vector<8x512xf32> -> vector<8x512xf32>
    %c0_186 = arith.constant 0 : index
    %c0_187 = arith.constant 0 : index
    %259 = vector.load %arg60[%c0_186, %c0_187] : memref<1x512xf32, #tpu.memory_space<vmem>>, vector<1x512xf32>
    %260 = vector.broadcast %259 : vector<1x512xf32> to vector<8x512xf32>
    %261 = arith.addf %258, %260 : vector<8x512xf32>
    %262 = arith.addf %261, %255 : vector<8x512xf32>
    %cst_188 = arith.constant 0.000000e+00 : f32
    %263 = vector.broadcast %cst_188 : f32 to vector<8x512xf32>
    %264 = arith.maximumf %262, %263 : vector<8x512xf32>
    %265 = arith.truncf %264 : vector<8x512xf32> to vector<8x512xbf16>
    %c0_189 = arith.constant 0 : index
    %c0_190 = arith.constant 0 : index
    %266 = vector.load %arg67[%c0_189, %c0_190] : memref<512x512xbf16, #tpu.memory_space<vmem>>, vector<512x512xbf16>
    %cst_191 = arith.constant dense<0.000000e+00> : vector<8x512xf32>
    %267 = tpu.matmul %265, %266, %cst_191 {dimension_numbers = #tpu.dot_dimension_numbers<[1], [0], [0], [1], [0, 0, 1, 1], [], []>} : vector<8x512xbf16>, vector<512x512xbf16>, vector<8x512xf32> -> vector<8x512xf32>
    %c0_192 = arith.constant 0 : index
    %c0_193 = arith.constant 0 : index
    %268 = vector.load %arg65[%c0_192, %c0_193] : memref<1x512xf32, #tpu.memory_space<vmem>>, vector<1x512xf32>
    %269 = vector.broadcast %268 : vector<1x512xf32> to vector<8x512xf32>
    %270 = arith.addf %267, %269 : vector<8x512xf32>
    %cst_194 = arith.constant 0.000000e+00 : f32
    %271 = vector.broadcast %cst_194 : f32 to vector<8x512xf32>
    %272 = arith.maximumf %270, %271 : vector<8x512xf32>
    %273 = arith.truncf %272 : vector<8x512xf32> to vector<8x512xbf16>
    %c0_195 = arith.constant 0 : index
    %c0_196 = arith.constant 0 : index
    %274 = vector.load %arg68[%c0_195, %c0_196] : memref<512x512xbf16, #tpu.memory_space<vmem>>, vector<512x512xbf16>
    %cst_197 = arith.constant dense<0.000000e+00> : vector<8x512xf32>
    %275 = tpu.matmul %273, %274, %cst_197 {dimension_numbers = #tpu.dot_dimension_numbers<[1], [0], [0], [1], [0, 0, 1, 1], [], []>} : vector<8x512xbf16>, vector<512x512xbf16>, vector<8x512xf32> -> vector<8x512xf32>
    %c0_198 = arith.constant 0 : index
    %c0_199 = arith.constant 0 : index
    %276 = vector.load %arg66[%c0_198, %c0_199] : memref<1x512xf32, #tpu.memory_space<vmem>>, vector<1x512xf32>
    %277 = vector.broadcast %276 : vector<1x512xf32> to vector<8x512xf32>
    %278 = arith.addf %275, %277 : vector<8x512xf32>
    %279 = arith.addf %278, %264 : vector<8x512xf32>
    %cst_200 = arith.constant 0.000000e+00 : f32
    %280 = vector.broadcast %cst_200 : f32 to vector<8x512xf32>
    %281 = arith.maximumf %279, %280 : vector<8x512xf32>
    %282 = arith.truncf %281 : vector<8x512xf32> to vector<8x512xbf16>
    %c0_201 = arith.constant 0 : index
    %c0_202 = arith.constant 0 : index
    %283 = vector.load %arg71[%c0_201, %c0_202] : memref<512x512xbf16, #tpu.memory_space<vmem>>, vector<512x512xbf16>
    %cst_203 = arith.constant dense<0.000000e+00> : vector<8x512xf32>
    %284 = tpu.matmul %282, %283, %cst_203 {dimension_numbers = #tpu.dot_dimension_numbers<[1], [0], [0], [1], [0, 0, 1, 1], [], []>} : vector<8x512xbf16>, vector<512x512xbf16>, vector<8x512xf32> -> vector<8x512xf32>
    %c0_204 = arith.constant 0 : index
    %c0_205 = arith.constant 0 : index
    %285 = vector.load %arg69[%c0_204, %c0_205] : memref<1x512xf32, #tpu.memory_space<vmem>>, vector<1x512xf32>
    %286 = vector.broadcast %285 : vector<1x512xf32> to vector<8x512xf32>
    %287 = arith.addf %284, %286 : vector<8x512xf32>
    %cst_206 = arith.constant 0.000000e+00 : f32
    %288 = vector.broadcast %cst_206 : f32 to vector<8x512xf32>
    %289 = arith.maximumf %287, %288 : vector<8x512xf32>
    %290 = arith.truncf %289 : vector<8x512xf32> to vector<8x512xbf16>
    %c0_207 = arith.constant 0 : index
    %c0_208 = arith.constant 0 : index
    %291 = vector.load %arg72[%c0_207, %c0_208] : memref<512x512xbf16, #tpu.memory_space<vmem>>, vector<512x512xbf16>
    %cst_209 = arith.constant dense<0.000000e+00> : vector<8x512xf32>
    %292 = tpu.matmul %290, %291, %cst_209 {dimension_numbers = #tpu.dot_dimension_numbers<[1], [0], [0], [1], [0, 0, 1, 1], [], []>} : vector<8x512xbf16>, vector<512x512xbf16>, vector<8x512xf32> -> vector<8x512xf32>
    %c0_210 = arith.constant 0 : index
    %c0_211 = arith.constant 0 : index
    %293 = vector.load %arg70[%c0_210, %c0_211] : memref<1x512xf32, #tpu.memory_space<vmem>>, vector<1x512xf32>
    %294 = vector.broadcast %293 : vector<1x512xf32> to vector<8x512xf32>
    %295 = arith.addf %292, %294 : vector<8x512xf32>
    %296 = arith.addf %295, %281 : vector<8x512xf32>
    %cst_212 = arith.constant 0.000000e+00 : f32
    %297 = vector.broadcast %cst_212 : f32 to vector<8x512xf32>
    %298 = arith.maximumf %296, %297 : vector<8x512xf32>
    %299 = arith.truncf %298 : vector<8x512xf32> to vector<8x512xbf16>
    %c0_213 = arith.constant 0 : index
    %c0_214 = arith.constant 0 : index
    %300 = vector.load %arg74[%c0_213, %c0_214] : memref<512x128xbf16, #tpu.memory_space<vmem>>, vector<512x128xbf16>
    %cst_215 = arith.constant dense<0.000000e+00> : vector<8x128xf32>
    %301 = tpu.matmul %299, %300, %cst_215 {dimension_numbers = #tpu.dot_dimension_numbers<[1], [0], [0], [1], [0, 0, 1, 1], [], []>} : vector<8x512xbf16>, vector<512x128xbf16>, vector<8x128xf32> -> vector<8x128xf32>
    %c0_216 = arith.constant 0 : index
    %c0_217 = arith.constant 0 : index
    %302 = vector.load %arg2[%c0_216, %c0_217] : memref<1x128xf32, #tpu.memory_space<vmem>>, vector<1x128xf32>
    %303 = vector.broadcast %302 : vector<1x128xf32> to vector<8x128xf32>
    %304 = arith.addf %301, %303 : vector<8x128xf32>
    %c0_218 = arith.constant 0 : index
    %c0_219 = arith.constant 0 : index
    %305 = vector.load %arg75[%c0_218, %c0_219] : memref<8x128xf32, #tpu.memory_space<vmem>>, vector<8x128xf32>
    tpu.vector_store %arg75[%c0_218, %c0_219], %304 {strides = array<i32>} : memref<8x128xf32, #tpu.memory_space<vmem>>, vector<8x128xf32>,
    return
  }
}

</mosaic_0001>

<llo_original>
// kernel: fused_resnet_forward.1
$region0: #{fused_resnet_forward.1}
  #allocation0 [shape = 'u32[]', space=smem, size = 0x4, offset = 0x4, fixed_abs, tag = 'smem constant byte address 0x4 - core index']
  #allocation1 [shape = 'u32[144,128]{1,0:T(1,128)}', space=vmem, size = 0x12000, scoped, tag = 'internal scratch']
  %s0 = inlined_call_operand.smem [shape: u32[76], index: -1, kind: input, shape index: {}]
  %s1 = sld [smem:[%s0]]
  %s2 = scalar_lea.smem %s0, 1
  %s3 = sld [smem:[%s2]]
  %s4 = scalar_lea.smem %s0, 2
  %s5 = sld [smem:[%s4]]
  %s6 = scalar_lea.smem %s0, 3
  %s7 = sld [smem:[%s6]]
  %s8 = scalar_lea.smem %s0, 4
  %s9 = sld [smem:[%s8]]
  %s10 = scalar_lea.smem %s0, 5
  %s11 = sld [smem:[%s10]]
  %s12 = scalar_lea.smem %s0, 6
  %s13 = sld [smem:[%s12]]
  %s14 = scalar_lea.smem %s0, 7
  %s15 = sld [smem:[%s14]]
  %s16 = scalar_lea.smem %s0, 8
  %s17 = sld [smem:[%s16]]
  %s18 = scalar_lea.smem %s0, 9
  %s19 = sld [smem:[%s18]]
  %s20 = scalar_lea.smem %s0, 10
  %s21 = sld [smem:[%s20]]
  %s22 = scalar_lea.smem %s0, 11
  %s23 = sld [smem:[%s22]]
  %s24 = scalar_lea.smem %s0, 12
  %s25 = sld [smem:[%s24]]
  %s26 = scalar_lea.smem %s0, 13
  %s27 = sld [smem:[%s26]]
  %s28 = scalar_lea.smem %s0, 14
  %s29 = sld [smem:[%s28]]
  %s30 = scalar_lea.smem %s0, 15
  %s31 = sld [smem:[%s30]]
  %s32 = scalar_lea.smem %s0, 16
  %s33 = sld [smem:[%s32]]
  %s34 = scalar_lea.smem %s0, 17
  %s35 = sld [smem:[%s34]]
  %s36 = scalar_lea.smem %s0, 18
  %s37 = sld [smem:[%s36]]
  %s38 = scalar_lea.smem %s0, 19
  %s39 = sld [smem:[%s38]]
  %s40 = scalar_lea.smem %s0, 20
  %s41 = sld [smem:[%s40]]
  %s42 = scalar_lea.smem %s0, 21
  %s43 = sld [smem:[%s42]]
  %s44 = scalar_lea.smem %s0, 22
  %s45 = sld [smem:[%s44]]
  %s46 = scalar_lea.smem %s0, 23
  %s47 = sld [smem:[%s46]]
  %s48 = scalar_lea.smem %s0, 24
  %s49 = sld [smem:[%s48]]
  %s50 = scalar_lea.smem %s0, 25
  %s51 = sld [smem:[%s50]]
  %s52 = scalar_lea.smem %s0, 26
  %s53 = sld [smem:[%s52]]
  %s54 = scalar_lea.smem %s0, 27
  %s55 = sld [smem:[%s54]]
  %s56 = scalar_lea.smem %s0, 28
  %s57 = sld [smem:[%s56]]
  %s58 = scalar_lea.smem %s0, 29
  %s59 = sld [smem:[%s58]]
  %s60 = scalar_lea.smem %s0, 30
  %s61 = sld [smem:[%s60]]
  %s62 = scalar_lea.smem %s0, 31
  %s63 = sld [smem:[%s62]]
  %s64 = scalar_lea.smem %s0, 32
  %s65 = sld [smem:[%s64]]
  %s66 = scalar_lea.smem %s0, 33
  %s67 = sld [smem:[%s66]]
  %s68 = scalar_lea.smem %s0, 34
  %s69 = sld [smem:[%s68]]
  %s70 = scalar_lea.smem %s0, 35
  %s71 = sld [smem:[%s70]]
  %s72 = scalar_lea.smem %s0, 36
  %s73 = sld [smem:[%s72]]
  %s74 = scalar_lea.smem %s0, 37
  %s75 = sld [smem:[%s74]]
  %s76 = scalar_lea.smem %s0, 38
  %s77 = sld [smem:[%s76]]
  %s78 = scalar_lea.smem %s0, 39
  %s79 = sld [smem:[%s78]]
  %s80 = scalar_lea.smem %s0, 40
  %s81 = sld [smem:[%s80]]
  %s82 = scalar_lea.smem %s0, 41
  %s83 = sld [smem:[%s82]]
  %s84 = scalar_lea.smem %s0, 42
  %s85 = sld [smem:[%s84]]
  %s86 = scalar_lea.smem %s0, 43
  %s87 = sld [smem:[%s86]]
  %s88 = scalar_lea.smem %s0, 44
  %s89 = sld [smem:[%s88]]
  %s90 = scalar_lea.smem %s0, 45
  %s91 = sld [smem:[%s90]]
  %s92 = scalar_lea.smem %s0, 46
  %s93 = sld [smem:[%s92]]
  %s94 = scalar_lea.smem %s0, 47
  %s95 = sld [smem:[%s94]]
  %s96 = scalar_lea.smem %s0, 48
  %s97 = sld [smem:[%s96]]
  %s98 = scalar_lea.smem %s0, 49
  %s99 = sld [smem:[%s98]]
  %s100 = scalar_lea.smem %s0, 50
  %s101 = sld [smem:[%s100]]
  %s102 = scalar_lea.smem %s0, 51
  %s103 = sld [smem:[%s102]]
  %s104 = scalar_lea.smem %s0, 52
  %s105 = sld [smem:[%s104]]
  %s106 = scalar_lea.smem %s0, 53
  %s107 = sld [smem:[%s106]]
  %s108 = scalar_lea.smem %s0, 54
  %s109 = sld [smem:[%s108]]
  %s110 = scalar_lea.smem %s0, 55
  %s111 = sld [smem:[%s110]]
  %s112 = scalar_lea.smem %s0, 56
  %s113 = sld [smem:[%s112]]
  %s114 = scalar_lea.smem %s0, 57
  %s115 = sld [smem:[%s114]]
  %s116 = scalar_lea.smem %s0, 58
  %s117 = sld [smem:[%s116]]
  %s118 = scalar_lea.smem %s0, 59
  %s119 = sld [smem:[%s118]]
  %s120 = scalar_lea.smem %s0, 60
  %s121 = sld [smem:[%s120]]
  %s122 = scalar_lea.smem %s0, 61
  %s123 = sld [smem:[%s122]]
  %s124 = scalar_lea.smem %s0, 62
  %s125 = sld [smem:[%s124]]
  %s126 = scalar_lea.smem %s0, 63
  %s127 = sld [smem:[%s126]]
  %s128 = scalar_lea.smem %s0, 64
  %s129 = sld [smem:[%s128]]
  %s130 = scalar_lea.smem %s0, 65
  %s131 = sld [smem:[%s130]]
  %s132 = scalar_lea.smem %s0, 66
  %s133 = sld [smem:[%s132]]
  %s134 = scalar_lea.smem %s0, 67
  %s135 = sld [smem:[%s134]]
  %s136 = scalar_lea.smem %s0, 68
  %s137 = sld [smem:[%s136]]
  %s138 = scalar_lea.smem %s0, 69
  %s139 = sld [smem:[%s138]]
  %s140 = scalar_lea.smem %s0, 70
  %s141 = sld [smem:[%s140]]
  %s142 = scalar_lea.smem %s0, 71
  %s143 = sld [smem:[%s142]]
  %s144 = scalar_lea.smem %s0, 72
  %s145 = sld [smem:[%s144]]
  %s146 = scalar_lea.smem %s0, 73
  %s147 = sld [smem:[%s146]]
  %s148 = scalar_lea.smem %s0, 74
  %s149 = sld [smem:[%s148]]
  %s150 = scalar_lea.smem %s0, 75
  %s151 = sld [smem:[%s150]]
  %s152 = sld [smem:[#allocation0]]
  $region582: #{fused_resnet_forward.1} parent=0
    _
  %s154 = ssub.s32 1, %s152
  %s155 = scalar_select 0, %s154, %s152
  $region1: #{fused_resnet_forward.1} parent=0
    #allocation2 [shape = 'u8[4096]{0}', space=vmem, size = 0x1000, scoped, tag = 'input window, operand 0, single buffered']
    #allocation3 [shape = 's32[1]{0}', space=sflag, size = 0x4, scoped, tag = 'scoped memory for fused_resnet_forward.1']
    #allocation4 [shape = 's32[1]{0}', space=sflag, size = 0x4, scoped, tag = 'scoped memory for fused_resnet_forward.1']
    #allocation5 [shape = 'u8[512]{0}', space=vmem, size = 0x400, scoped, tag = 'input window, operand 1, single buffered']
    #allocation6 [shape = 's32[1]{0}', space=sflag, size = 0x4, scoped, tag = 'scoped memory for fused_resnet_forward.1']
    #allocation7 [shape = 'u8[512]{0}', space=vmem, size = 0x400, scoped, tag = 'input window, operand 2, single buffered']
    #allocation8 [shape = 'u8[512]{0}', space=vmem, size = 0x400, scoped, tag = 'input window, operand 3, single buffered']
    #allocation9 [shape = 's32[1]{0}', space=sflag, size = 0x4, scoped, tag = 'scoped memory for fused_resnet_forward.1']
    #allocation10 [shape = 'u8[512]{0}', space=vmem, size = 0x400, scoped, tag = 'input window, operand 4, single buffered']
    #allocation11 [shape = 'u8[32768]{0}', space=vmem, size = 0x8000, scoped, tag = 'input window, operand 5, single buffered']
    #allocation12 [shape = 's32[1]{0}', space=sflag, size = 0x4, scoped, tag = 'scoped memory for fused_resnet_forward.1']
    #allocation13 [shape = 'u8[32768]{0}', space=vmem, size = 0x8000, scoped, tag = 'input window, operand 6, single buffered']
    #allocation14 [shape = 'u8[512]{0}', space=vmem, size = 0x400, scoped, tag = 'input window, operand 7, single buffered']
    #allocation15 [shape = 's32[1]{0}', space=sflag, size = 0x4, scoped, tag = 'scoped memory for fused_resnet_forward.1']
    #allocation16 [shape = 'u8[512]{0}', space=vmem, size = 0x400, scoped, tag = 'input window, operand 8, single buffered']
    #allocation17 [shape = 'u8[32768]{0}', space=vmem, size = 0x8000, scoped, tag = 'input window, operand 9, single buffered']
    #allocation18 [shape = 's32[1]{0}', space=sflag, size = 0x4, scoped, tag = 'scoped memory for fused_resnet_forward.1']
    #allocation19 [shape = 'u8[32768]{0}', space=vmem, size = 0x8000, scoped, tag = 'input window, operand 10, single buffered']
    #allocation20 [shape = 'u8[512]{0}', space=vmem, size = 0x400, scoped, tag = 'input window, operand 11, single buffered']
    #allocation21 [shape = 's32[1]{0}', space=sflag, size = 0x4, scoped, tag = 'scoped memory for fused_resnet_forward.1']
    #allocation22 [shape = 'u8[512]{0}', space=vmem, size = 0x400, scoped, tag = 'input window, operand 12, single buffered']
    #allocation23 [shape = 'u8[32768]{0}', space=vmem, size = 0x8000, scoped, tag = 'input window, operand 13, single buffered']
    #allocation24 [shape = 's32[1]{0}', space=sflag, size = 0x4, scoped, tag = 'scoped memory for fused_resnet_forward.1']
    #allocation25 [shape = 'u8[32768]{0}', space=vmem, size = 0x8000, scoped, tag = 'input window, operand 14, single buffered']
    #allocation26 [shape = 'u8[512]{0}', space=vmem, size = 0x400, scoped, tag = 'input window, operand 15, single buffered']
    #allocation27 [shape = 's32[1]{0}', space=sflag, size = 0x4, scoped, tag = 'scoped memory for fused_resnet_forward.1']
    #allocation28 [shape = 'u8[512]{0}', space=vmem, size = 0x400, scoped, tag = 'input window, operand 16, single buffered']
    #allocation29 [shape = 'u8[512]{0}', space=vmem, size = 0x400, scoped, tag = 'input window, operand 17, single buffered']
    #allocation30 [shape = 's32[1]{0}', space=sflag, size = 0x4, scoped, tag = 'scoped memory for fused_resnet_forward.1']
    #allocation31 [shape = 'u8[32768]{0}', space=vmem, size = 0x8000, scoped, tag = 'input window, operand 18, single buffered']
    #allocation32 [shape = 'u8[32768]{0}', space=vmem, size = 0x8000, scoped, tag = 'input window, operand 19, single buffered']
    #allocation33 [shape = 's32[1]{0}', space=sflag, size = 0x4, scoped, tag = 'scoped memory for fused_resnet_forward.1']
    #allocation34 [shape = 'u8[32768]{0}', space=vmem, size = 0x8000, scoped, tag = 'input window, operand 20, single buffered']
    #allocation35 [shape = 'u8[512]{0}', space=vmem, size = 0x400, scoped, tag = 'input window, operand 21, single buffered']
    #allocation36 [shape = 's32[1]{0}', space=sflag, size = 0x4, scoped, tag = 'scoped memory for fused_resnet_forward.1']
    #allocation37 [shape = 'u8[512]{0}', space=vmem, size = 0x400, scoped, tag = 'input window, operand 22, single buffered']
    #allocation38 [shape = 'u8[32768]{0}', space=vmem, size = 0x8000, scoped, tag = 'input window, operand 23, single buffered']
    #allocation39 [shape = 's32[1]{0}', space=sflag, size = 0x4, scoped, tag = 'scoped memory for fused_resnet_forward.1']
    #allocation40 [shape = 'u8[32768]{0}', space=vmem, size = 0x8000, scoped, tag = 'input window, operand 24, single buffered']
    #allocation41 [shape = 'u8[512]{0}', space=vmem, size = 0x400, scoped, tag = 'input window, operand 25, single buffered']
    #allocation42 [shape = 's32[1]{0}', space=sflag, size = 0x4, scoped, tag = 'scoped memory for fused_resnet_forward.1']
    #allocation43 [shape = 'u8[512]{0}', space=vmem, size = 0x400, scoped, tag = 'input window, operand 26, single buffered']
    #allocation44 [shape = 'u8[32768]{0}', space=vmem, size = 0x8000, scoped, tag = 'input window, operand 27, single buffered']
    #allocation45 [shape = 's32[1]{0}', space=sflag, size = 0x4, scoped, tag = 'scoped memory for fused_resnet_forward.1']
    #allocation46 [shape = 'u8[32768]{0}', space=vmem, size = 0x8000, scoped, tag = 'input window, operand 28, single buffered']
    #allocation47 [shape = 'u8[512]{0}', space=vmem, size = 0x400, scoped, tag = 'input window, operand 29, single buffered']
    #allocation48 [shape = 's32[1]{0}', space=sflag, size = 0x4, scoped, tag = 'scoped memory for fused_resnet_forward.1']
    #allocation49 [shape = 'u8[512]{0}', space=vmem, size = 0x400, scoped, tag = 'input window, operand 30, single buffered']
    #allocation50 [shape = 'u8[32768]{0}', space=vmem, size = 0x8000, scoped, tag = 'input window, operand 31, single buffered']
    #allocation51 [shape = 's32[1]{0}', space=sflag, size = 0x4, scoped, tag = 'scoped memory for fused_resnet_forward.1']
    #allocation52 [shape = 'u8[32768]{0}', space=vmem, size = 0x8000, scoped, tag = 'input window, operand 32, single buffered']
    #allocation53 [shape = 'u8[1024]{0}', space=vmem, size = 0x400, scoped, tag = 'input window, operand 33, single buffered']
    #allocation54 [shape = 's32[1]{0}', space=sflag, size = 0x4, scoped, tag = 'scoped memory for fused_resnet_forward.1']
    #allocation55 [shape = 'u8[1024]{0}', space=vmem, size = 0x400, scoped, tag = 'input window, operand 34, single buffered']
    #allocation56 [shape = 'u8[1024]{0}', space=vmem, size = 0x400, scoped, tag = 'input window, operand 35, single buffered']
    #allocation57 [shape = 's32[1]{0}', space=sflag, size = 0x4, scoped, tag = 'scoped memory for fused_resnet_forward.1']
    #allocation58 [shape = 'u8[65536]{0}', space=vmem, size = 0x10000, scoped, tag = 'input window, operand 36, single buffered']
    #allocation59 [shape = 'u8[131072]{0}', space=vmem, size = 0x20000, scoped, tag = 'input window, operand 37, single buffered']
    #allocation60 [shape = 's32[1]{0}', space=sflag, size = 0x4, scoped, tag = 'scoped memory for fused_resnet_forward.1']
    #allocation61 [shape = 'u8[65536]{0}', space=vmem, size = 0x10000, scoped, tag = 'input window, operand 38, single buffered']
    #allocation62 [shape = 'u8[1024]{0}', space=vmem, size = 0x400, scoped, tag = 'input window, operand 39, single buffered']
    #allocation63 [shape = 's32[1]{0}', space=sflag, size = 0x4, scoped, tag = 'scoped memory for fused_resnet_forward.1']
    #allocation64 [shape = 'u8[1024]{0}', space=vmem, size = 0x400, scoped, tag = 'input window, operand 40, single buffered']
    #allocation65 [shape = 'u8[131072]{0}', space=vmem, size = 0x20000, scoped, tag = 'input window, operand 41, single buffered']
    #allocation66 [shape = 's32[1]{0}', space=sflag, size = 0x4, scoped, tag = 'scoped memory for fused_resnet_forward.1']
    #allocation67 [shape = 'u8[131072]{0}', space=vmem, size = 0x20000, scoped, tag = 'input window, operand 42, single buffered']
    #allocation68 [shape = 'u8[1024]{0}', space=vmem, size = 0x400, scoped, tag = 'input window, operand 43, single buffered']
    #allocation69 [shape = 's32[1]{0}', space=sflag, size = 0x4, scoped, tag = 'scoped memory for fused_resnet_forward.1']
    #allocation70 [shape = 'u8[1024]{0}', space=vmem, size = 0x400, scoped, tag = 'input window, operand 44, single buffered']
    #allocation71 [shape = 'u8[131072]{0}', space=vmem, size = 0x20000, scoped, tag = 'input window, operand 45, single buffered']
    #allocation72 [shape = 's32[1]{0}', space=sflag, size = 0x4, scoped, tag = 'scoped memory for fused_resnet_forward.1']
    #allocation73 [shape = 'u8[131072]{0}', space=vmem, size = 0x20000, scoped, tag = 'input window, operand 46, single buffered']
    #allocation74 [shape = 'u8[1024]{0}', space=vmem, size = 0x400, scoped, tag = 'input window, operand 47, single buffered']
    #allocation75 [shape = 's32[1]{0}', space=sflag, size = 0x4, scoped, tag = 'scoped memory for fused_resnet_forward.1']
    #allocation76 [shape = 'u8[1024]{0}', space=vmem, size = 0x400, scoped, tag = 'input window, operand 48, single buffered']
    #allocation77 [shape = 'u8[131072]{0}', space=vmem, size = 0x20000, scoped, tag = 'input window, operand 49, single buffered']
    #allocation78 [shape = 's32[1]{0}', space=sflag, size = 0x4, scoped, tag = 'scoped memory for fused_resnet_forward.1']
    #allocation79 [shape = 'u8[131072]{0}', space=vmem, size = 0x20000, scoped, tag = 'input window, operand 50, single buffered']
    #allocation80 [shape = 'u8[1024]{0}', space=vmem, size = 0x400, scoped, tag = 'input window, operand 51, single buffered']
    #allocation81 [shape = 's32[1]{0}', space=sflag, size = 0x4, scoped, tag = 'scoped memory for fused_resnet_forward.1']
    #allocation82 [shape = 'u8[1024]{0}', space=vmem, size = 0x400, scoped, tag = 'input window, operand 52, single buffered']
    #allocation83 [shape = 'u8[131072]{0}', space=vmem, size = 0x20000, scoped, tag = 'input window, operand 53, single buffered']
    #allocation84 [shape = 's32[1]{0}', space=sflag, size = 0x4, scoped, tag = 'scoped memory for fused_resnet_forward.1']
    #allocation85 [shape = 'u8[131072]{0}', space=vmem, size = 0x20000, scoped, tag = 'input window, operand 54, single buffered']
    #allocation86 [shape = 'u8[1024]{0}', space=vmem, size = 0x400, scoped, tag = 'input window, operand 55, single buffered']
    #allocation87 [shape = 's32[1]{0}', space=sflag, size = 0x4, scoped, tag = 'scoped memory for fused_resnet_forward.1']
    #allocation88 [shape = 'u8[1024]{0}', space=vmem, size = 0x400, scoped, tag = 'input window, operand 56, single buffered']
    #allocation89 [shape = 'u8[131072]{0}', space=vmem, size = 0x20000, scoped, tag = 'input window, operand 57, single buffered']
    #allocation90 [shape = 's32[1]{0}', space=sflag, size = 0x4, scoped, tag = 'scoped memory for fused_resnet_forward.1']
    #allocation91 [shape = 'u8[131072]{0}', space=vmem, size = 0x20000, scoped, tag = 'input window, operand 58, single buffered']
    #allocation92 [shape = 'u8[262144]{0}', space=vmem, size = 0x40000, scoped, tag = 'input window, operand 62, single buffered']
    #allocation93 [shape = 's32[1]{0}', space=sflag, size = 0x4, scoped, tag = 'scoped memory for fused_resnet_forward.1']
    #allocation94 [shape = 'u8[524288]{0}', space=vmem, size = 0x80000, scoped, tag = 'input window, operand 63, single buffered']
    #allocation95 [shape = 'u8[262144]{0}', space=vmem, size = 0x40000, scoped, tag = 'input window, operand 64, single buffered']
    #allocation96 [shape = 's32[1]{0}', space=sflag, size = 0x4, scoped, tag = 'scoped memory for fused_resnet_forward.1']
    #allocation97 [shape = 'u8[524288]{0}', space=vmem, size = 0x80000, scoped, tag = 'input window, operand 67, single buffered']
    #allocation98 [shape = 'u8[524288]{0}', space=vmem, size = 0x80000, scoped, tag = 'input window, operand 68, single buffered']
    #allocation99 [shape = 's32[1]{0}', space=sflag, size = 0x4, scoped, tag = 'scoped memory for fused_resnet_forward.1']
    #allocation100 [shape = 'u8[2048]{0}', space=vmem, size = 0x800, scoped, tag = 'input window, operand 70, single buffered']
    #allocation101 [shape = 'u8[524288]{0}', space=vmem, size = 0x80000, scoped, tag = 'input window, operand 71, single buffered']
    #allocation102 [shape = 's32[1]{0}', space=sflag, size = 0x4, scoped, tag = 'scoped memory for fused_resnet_forward.1']
    #allocation103 [shape = 'u8[524288]{0}', space=vmem, size = 0x80000, scoped, tag = 'input window, operand 72, single buffered']
    #allocation104 [shape = 'u8[32768]{0}', space=vmem, size = 0x8000, scoped, tag = 'input window, operand 73, single buffered']
    #allocation105 [shape = 's32[1]{0}', space=sflag, size = 0x4, scoped, tag = 'scoped memory for fused_resnet_forward.1']
    #allocation106 [shape = 'u8[4096]{0}', space=vmem, size = 0x1000, scoped, tag = 'output window, operand 0, single buffered']
    %156 = vsyncpa [#allocation3], 0
    %157 = vsyncpa [#allocation6], 0
    %158 = vsyncpa [#allocation9], 0
    %159 = vsyncpa [#allocation12], 0
    %160 = vsyncpa [#allocation15], 0
    %161 = vsyncpa [#allocation18], 0
    %162 = vsyncpa [#allocation21], 0
    %163 = vsyncpa [#allocation24], 0
    %164 = vsyncpa [#allocation27], 0
    %165 = vsyncpa [#allocation30], 0
    %166 = vsyncpa [#allocation33], 0
    %167 = vsyncpa [#allocation36], 0
    %168 = vsyncpa [#allocation39], 0
    %169 = vsyncpa [#allocation42], 0
    %170 = vsyncpa [#allocation45], 0
    %171 = vsyncpa [#allocation48], 0
    %172 = vsyncpa [#allocation51], 0
    %173 = vsyncpa [#allocation54], 0
    %174 = vsyncpa [#allocation57], 0
    %175 = vsyncpa [#allocation60], 0
    %176 = vsyncpa [#allocation63], 0
    %177 = vsyncpa [#allocation66], 0
    %178 = vsyncpa [#allocation69], 0
    %179 = vsyncpa [#allocation72], 0
    %180 = vsyncpa [#allocation75], 0
    %181 = vsyncpa [#allocation78], 0
    %182 = vsyncpa [#allocation81], 0
    %183 = vsyncpa [#allocation84], 0
    %184 = vsyncpa [#allocation87], 0
    %185 = vsyncpa [#allocation90], 0
    %186 = vsyncpa [#allocation93], 0
    %187 = vsyncpa [#allocation96], 0
    %188 = vsyncpa [#allocation99], 0
    %189 = vsyncpa [#allocation102], 0
    %190 = vsyncpa [#allocation105], 0
    %191 = vsyncpa [#allocation4], 0
    // Predicated region
    $region2: #{fused_resnet_forward.1} parent=1 // pred_check
      _
    $region3: #{fused_resnet_forward.1} parent=1 // pred_check_branch
      %193 = sbr.rel (0) target = $region5
    $region4: #{fused_resnet_forward.1} parent=1 // pred_region
      %s195 = ssub.s32 128, 128
      %196 = vsyncadd [#allocation3], %s195
      %s198 = sshll.u32 [#allocation2], 4
      %s199 = int_to_ptr.vmem [resolvable:$true] %s198
      %201 = dma.hbm_to_vmem [thread:$0]  %s1, 128, %s199, [#allocation3]
    $region5: #{fused_resnet_forward.1} parent=1 // pred_fallthru
      _
    // Predicated region
    $region6: #{fused_resnet_forward.1} parent=1 // pred_check
      _
    $region7: #{fused_resnet_forward.1} parent=1 // pred_check_branch
      %203 = sbr.rel (0) target = $region9
    $region8: #{fused_resnet_forward.1} parent=1 // pred_region
      %s205 = ssub.s32 16, 16
      %206 = vsyncadd [#allocation6], %s205
      %s208 = sshll.u32 [#allocation5], 4
      %s209 = int_to_ptr.vmem [resolvable:$true] %s208
      %211 = dma.hbm_to_vmem [thread:$0]  %s3, 16, %s209, [#allocation6]
    $region9: #{fused_resnet_forward.1} parent=1 // pred_fallthru
      _
    // Predicated region
    $region10: #{fused_resnet_forward.1} parent=1 // pred_check
      _
    $region11: #{fused_resnet_forward.1} parent=1 // pred_check_branch
      %213 = sbr.rel (0) target = $region13
    $region12: #{fused_resnet_forward.1} parent=1 // pred_region
      %s215 = ssub.s32 16, 16
      %216 = vsyncadd [#allocation6], %s215
      %s218 = sshll.u32 [#allocation7], 4
      %s219 = int_to_ptr.vmem [resolvable:$true] %s218
      %221 = dma.hbm_to_vmem [thread:$0]  %s5, 16, %s219, [#allocation6]
    $region13: #{fused_resnet_forward.1} parent=1 // pred_fallthru
      _
    // Predicated region
    $region14: #{fused_resnet_forward.1} parent=1 // pred_check
      _
    $region15: #{fused_resnet_forward.1} parent=1 // pred_check_branch
      %223 = sbr.rel (0) target = $region17
    $region16: #{fused_resnet_forward.1} parent=1 // pred_region
      %s225 = ssub.s32 16, 16
      %226 = vsyncadd [#allocation9], %s225
      %s228 = sshll.u32 [#allocation8], 4
      %s229 = int_to_ptr.vmem [resolvable:$true] %s228
      %231 = dma.hbm_to_vmem [thread:$0]  %s7, 16, %s229, [#allocation9]
    $region17: #{fused_resnet_forward.1} parent=1 // pred_fallthru
      _
    // Predicated region
    $region18: #{fused_resnet_forward.1} parent=1 // pred_check
      _
    $region19: #{fused_resnet_forward.1} parent=1 // pred_check_branch
      %233 = sbr.rel (0) target = $region21
    $region20: #{fused_resnet_forward.1} parent=1 // pred_region
      %s235 = ssub.s32 16, 16
      %236 = vsyncadd [#allocation9], %s235
      %s238 = sshll.u32 [#allocation10], 4
      %s239 = int_to_ptr.vmem [resolvable:$true] %s238
      %241 = dma.hbm_to_vmem [thread:$0]  %s9, 16, %s239, [#allocation9]
    $region21: #{fused_resnet_forward.1} parent=1 // pred_fallthru
      _
    // Predicated region
    $region22: #{fused_resnet_forward.1} parent=1 // pred_check
      _
    $region23: #{fused_resnet_forward.1} parent=1 // pred_check_branch
      %243 = sbr.rel (0) target = $region25
    $region24: #{fused_resnet_forward.1} parent=1 // pred_region
      %s245 = ssub.s32 1024, 1024
      %246 = vsyncadd [#allocation12], %s245
      %s247 = sshll.u32 [#allocation11], 4
      %s248 = int_to_ptr.vmem [resolvable:$true] %s247
      %253 = dma.hbm_to_vmem [thread:$0]  %s11, 1024, %s248, [#allocation12], 64, 64, 4
    $region25: #{fused_resnet_forward.1} parent=1 // pred_fallthru
      _
    // Predicated region
    $region26: #{fused_resnet_forward.1} parent=1 // pred_check
      _
    $region27: #{fused_resnet_forward.1} parent=1 // pred_check_branch
      %255 = sbr.rel (0) target = $region29
    $region28: #{fused_resnet_forward.1} parent=1 // pred_region
      %s257 = ssub.s32 1024, 1024
      %258 = vsyncadd [#allocation12], %s257
      %s259 = sshll.u32 [#allocation13], 4
      %s260 = int_to_ptr.vmem [resolvable:$true] %s259
      %265 = dma.hbm_to_vmem [thread:$0]  %s13, 1024, %s260, [#allocation12], 64, 64, 4
    $region29: #{fused_resnet_forward.1} parent=1 // pred_fallthru
      _
    // Predicated region
    $region30: #{fused_resnet_forward.1} parent=1 // pred_check
      _
    $region31: #{fused_resnet_forward.1} parent=1 // pred_check_branch
      %267 = sbr.rel (0) target = $region33
    $region32: #{fused_resnet_forward.1} parent=1 // pred_region
      %s269 = ssub.s32 16, 16
      %270 = vsyncadd [#allocation15], %s269
      %s272 = sshll.u32 [#allocation14], 4
      %s273 = int_to_ptr.vmem [resolvable:$true] %s272
      %275 = dma.hbm_to_vmem [thread:$0]  %s15, 16, %s273, [#allocation15]
    $region33: #{fused_resnet_forward.1} parent=1 // pred_fallthru
      _
    // Predicated region
    $region34: #{fused_resnet_forward.1} parent=1 // pred_check
      _
    $region35: #{fused_resnet_forward.1} parent=1 // pred_check_branch
      %277 = sbr.rel (0) target = $region37
    $region36: #{fused_resnet_forward.1} parent=1 // pred_region
      %s279 = ssub.s32 16, 16
      %280 = vsyncadd [#allocation15], %s279
      %s282 = sshll.u32 [#allocation16], 4
      %s283 = int_to_ptr.vmem [resolvable:$true] %s282
      %285 = dma.hbm_to_vmem [thread:$0]  %s17, 16, %s283, [#allocation15]
    $region37: #{fused_resnet_forward.1} parent=1 // pred_fallthru
      _
    // Predicated region
    $region38: #{fused_resnet_forward.1} parent=1 // pred_check
      _
    $region39: #{fused_resnet_forward.1} parent=1 // pred_check_branch
      %287 = sbr.rel (0) target = $region41
    $region40: #{fused_resnet_forward.1} parent=1 // pred_region
      %s289 = ssub.s32 1024, 1024
      %290 = vsyncadd [#allocation18], %s289
      %s291 = sshll.u32 [#allocation17], 4
      %s292 = int_to_ptr.vmem [resolvable:$true] %s291
      %297 = dma.hbm_to_vmem [thread:$0]  %s19, 1024, %s292, [#allocation18], 64, 64, 4
    $region41: #{fused_resnet_forward.1} parent=1 // pred_fallthru
      _
    // Predicated region
    $region42: #{fused_resnet_forward.1} parent=1 // pred_check
      _
    $region43: #{fused_resnet_forward.1} parent=1 // pred_check_branch
      %299 = sbr.rel (0) target = $region45
    $region44: #{fused_resnet_forward.1} parent=1 // pred_region
      %s301 = ssub.s32 1024, 1024
      %302 = vsyncadd [#allocation18], %s301
      %s303 = sshll.u32 [#allocation19], 4
      %s304 = int_to_ptr.vmem [resolvable:$true] %s303
      %309 = dma.hbm_to_vmem [thread:$0]  %s21, 1024, %s304, [#allocation18], 64, 64, 4
    $region45: #{fused_resnet_forward.1} parent=1 // pred_fallthru
      _
    // Predicated region
    $region46: #{fused_resnet_forward.1} parent=1 // pred_check
      _
    $region47: #{fused_resnet_forward.1} parent=1 // pred_check_branch
      %311 = sbr.rel (0) target = $region49
    $region48: #{fused_resnet_forward.1} parent=1 // pred_region
      %s313 = ssub.s32 16, 16
      %314 = vsyncadd [#allocation21], %s313
      %s316 = sshll.u32 [#allocation20], 4
      %s317 = int_to_ptr.vmem [resolvable:$true] %s316
      %319 = dma.hbm_to_vmem [thread:$0]  %s23, 16, %s317, [#allocation21]
    $region49: #{fused_resnet_forward.1} parent=1 // pred_fallthru
      _
    // Predicated region
    $region50: #{fused_resnet_forward.1} parent=1 // pred_check
      _
    $region51: #{fused_resnet_forward.1} parent=1 // pred_check_branch
      %321 = sbr.rel (0) target = $region53
    $region52: #{fused_resnet_forward.1} parent=1 // pred_region
      %s323 = ssub.s32 16, 16
      %324 = vsyncadd [#allocation21], %s323
      %s326 = sshll.u32 [#allocation22], 4
      %s327 = int_to_ptr.vmem [resolvable:$true] %s326
      %329 = dma.hbm_to_vmem [thread:$0]  %s25, 16, %s327, [#allocation21]
    $region53: #{fused_resnet_forward.1} parent=1 // pred_fallthru
      _
    // Predicated region
    $region54: #{fused_resnet_forward.1} parent=1 // pred_check
      _
    $region55: #{fused_resnet_forward.1} parent=1 // pred_check_branch
      %331 = sbr.rel (0) target = $region57
    $region56: #{fused_resnet_forward.1} parent=1 // pred_region
      %s333 = ssub.s32 1024, 1024
      %334 = vsyncadd [#allocation24], %s333
      %s335 = sshll.u32 [#allocation23], 4
      %s336 = int_to_ptr.vmem [resolvable:$true] %s335
      %341 = dma.hbm_to_vmem [thread:$0]  %s27, 1024, %s336, [#allocation24], 64, 64, 4
    $region57: #{fused_resnet_forward.1} parent=1 // pred_fallthru
      _
    // Predicated region
    $region58: #{fused_resnet_forward.1} parent=1 // pred_check
      _
    $region59: #{fused_resnet_forward.1} parent=1 // pred_check_branch
      %343 = sbr.rel (0) target = $region61
    $region60: #{fused_resnet_forward.1} parent=1 // pred_region
      %s345 = ssub.s32 1024, 1024
      %346 = vsyncadd [#allocation24], %s345
      %s347 = sshll.u32 [#allocation25], 4
      %s348 = int_to_ptr.vmem [resolvable:$true] %s347
      %353 = dma.hbm_to_vmem [thread:$0]  %s29, 1024, %s348, [#allocation24], 64, 64, 4
    $region61: #{fused_resnet_forward.1} parent=1 // pred_fallthru
      _
    // Predicated region
    $region62: #{fused_resnet_forward.1} parent=1 // pred_check
      _
    $region63: #{fused_resnet_forward.1} parent=1 // pred_check_branch
      %355 = sbr.rel (0) target = $region65
    $region64: #{fused_resnet_forward.1} parent=1 // pred_region
      %s357 = ssub.s32 16, 16
      %358 = vsyncadd [#allocation27], %s357
      %s360 = sshll.u32 [#allocation26], 4
      %s361 = int_to_ptr.vmem [resolvable:$true] %s360
      %363 = dma.hbm_to_vmem [thread:$0]  %s31, 16, %s361, [#allocation27]
    $region65: #{fused_resnet_forward.1} parent=1 // pred_fallthru
      _
    // Predicated region
    $region66: #{fused_resnet_forward.1} parent=1 // pred_check
      _
    $region67: #{fused_resnet_forward.1} parent=1 // pred_check_branch
      %365 = sbr.rel (0) target = $region69
    $region68: #{fused_resnet_forward.1} parent=1 // pred_region
      %s367 = ssub.s32 16, 16
      %368 = vsyncadd [#allocation27], %s367
      %s370 = sshll.u32 [#allocation28], 4
      %s371 = int_to_ptr.vmem [resolvable:$true] %s370
      %373 = dma.hbm_to_vmem [thread:$0]  %s33, 16, %s371, [#allocation27]
    $region69: #{fused_resnet_forward.1} parent=1 // pred_fallthru
      _
    // Predicated region
    $region70: #{fused_resnet_forward.1} parent=1 // pred_check
      _
    $region71: #{fused_resnet_forward.1} parent=1 // pred_check_branch
      %375 = sbr.rel (0) target = $region73
    $region72: #{fused_resnet_forward.1} parent=1 // pred_region
      %s377 = ssub.s32 16, 16
      %378 = vsyncadd [#allocation30], %s377
      %s380 = sshll.u32 [#allocation29], 4
      %s381 = int_to_ptr.vmem [resolvable:$true] %s380
      %383 = dma.hbm_to_vmem [thread:$0]  %s35, 16, %s381, [#allocation30]
    $region73: #{fused_resnet_forward.1} parent=1 // pred_fallthru
      _
    // Predicated region
    $region74: #{fused_resnet_forward.1} parent=1 // pred_check
      _
    $region75: #{fused_resnet_forward.1} parent=1 // pred_check_branch
      %385 = sbr.rel (0) target = $region77
    $region76: #{fused_resnet_forward.1} parent=1 // pred_region
      %s387 = ssub.s32 1024, 1024
      %388 = vsyncadd [#allocation30], %s387
      %s389 = sshll.u32 [#allocation31], 4
      %s390 = int_to_ptr.vmem [resolvable:$true] %s389
      %395 = dma.hbm_to_vmem [thread:$0]  %s37, 1024, %s390, [#allocation30], 64, 64, 4
    $region77: #{fused_resnet_forward.1} parent=1 // pred_fallthru
      _
    // Predicated region
    $region78: #{fused_resnet_forward.1} parent=1 // pred_check
      _
    $region79: #{fused_resnet_forward.1} parent=1 // pred_check_branch
      %397 = sbr.rel (0) target = $region81
    $region80: #{fused_resnet_forward.1} parent=1 // pred_region
      %s399 = ssub.s32 1024, 1024
      %400 = vsyncadd [#allocation33], %s399
      %s401 = sshll.u32 [#allocation32], 4
      %s402 = int_to_ptr.vmem [resolvable:$true] %s401
      %407 = dma.hbm_to_vmem [thread:$0]  %s39, 1024, %s402, [#allocation33], 64, 64, 4
    $region81: #{fused_resnet_forward.1} parent=1 // pred_fallthru
      _
    // Predicated region
    $region82: #{fused_resnet_forward.1} parent=1 // pred_check
      _
    $region83: #{fused_resnet_forward.1} parent=1 // pred_check_branch
      %409 = sbr.rel (0) target = $region85
    $region84: #{fused_resnet_forward.1} parent=1 // pred_region
      %s411 = ssub.s32 1024, 1024
      %412 = vsyncadd [#allocation33], %s411
      %s413 = sshll.u32 [#allocation34], 4
      %s414 = int_to_ptr.vmem [resolvable:$true] %s413
      %419 = dma.hbm_to_vmem [thread:$0]  %s41, 1024, %s414, [#allocation33], 64, 64, 4
    $region85: #{fused_resnet_forward.1} parent=1 // pred_fallthru
      _
    // Predicated region
    $region86: #{fused_resnet_forward.1} parent=1 // pred_check
      _
    $region87: #{fused_resnet_forward.1} parent=1 // pred_check_branch
      %421 = sbr.rel (0) target = $region89
    $region88: #{fused_resnet_forward.1} parent=1 // pred_region
      %s423 = ssub.s32 16, 16
      %424 = vsyncadd [#allocation36], %s423
      %s426 = sshll.u32 [#allocation35], 4
      %s427 = int_to_ptr.vmem [resolvable:$true] %s426
      %429 = dma.hbm_to_vmem [thread:$0]  %s43, 16, %s427, [#allocation36]
    $region89: #{fused_resnet_forward.1} parent=1 // pred_fallthru
      _
    // Predicated region
    $region90: #{fused_resnet_forward.1} parent=1 // pred_check
      _
    $region91: #{fused_resnet_forward.1} parent=1 // pred_check_branch
      %431 = sbr.rel (0) target = $region93
    $region92: #{fused_resnet_forward.1} parent=1 // pred_region
      %s433 = ssub.s32 16, 16
      %434 = vsyncadd [#allocation36], %s433
      %s436 = sshll.u32 [#allocation37], 4
      %s437 = int_to_ptr.vmem [resolvable:$true] %s436
      %439 = dma.hbm_to_vmem [thread:$0]  %s45, 16, %s437, [#allocation36]
    $region93: #{fused_resnet_forward.1} parent=1 // pred_fallthru
      _
    // Predicated region
    $region94: #{fused_resnet_forward.1} parent=1 // pred_check
      _
    $region95: #{fused_resnet_forward.1} parent=1 // pred_check_branch
      %441 = sbr.rel (0) target = $region97
    $region96: #{fused_resnet_forward.1} parent=1 // pred_region
      %s443 = ssub.s32 1024, 1024
      %444 = vsyncadd [#allocation39], %s443
      %s445 = sshll.u32 [#allocation38], 4
      %s446 = int_to_ptr.vmem [resolvable:$true] %s445
      %451 = dma.hbm_to_vmem [thread:$0]  %s47, 1024, %s446, [#allocation39], 64, 64, 4
    $region97: #{fused_resnet_forward.1} parent=1 // pred_fallthru
      _
    // Predicated region
    $region98: #{fused_resnet_forward.1} parent=1 // pred_check
      _
    $region99: #{fused_resnet_forward.1} parent=1 // pred_check_branch
      %453 = sbr.rel (0) target = $region101
    $region100: #{fused_resnet_forward.1} parent=1 // pred_region
      %s455 = ssub.s32 1024, 1024
      %456 = vsyncadd [#allocation39], %s455
      %s457 = sshll.u32 [#allocation40], 4
      %s458 = int_to_ptr.vmem [resolvable:$true] %s457
      %463 = dma.hbm_to_vmem [thread:$0]  %s49, 1024, %s458, [#allocation39], 64, 64, 4
    $region101: #{fused_resnet_forward.1} parent=1 // pred_fallthru
      _
    // Predicated region
    $region102: #{fused_resnet_forward.1} parent=1 // pred_check
      _
    $region103: #{fused_resnet_forward.1} parent=1 // pred_check_branch
      %465 = sbr.rel (0) target = $region105
    $region104: #{fused_resnet_forward.1} parent=1 // pred_region
      %s467 = ssub.s32 16, 16
      %468 = vsyncadd [#allocation42], %s467
      %s470 = sshll.u32 [#allocation41], 4
      %s471 = int_to_ptr.vmem [resolvable:$true] %s470
      %473 = dma.hbm_to_vmem [thread:$0]  %s51, 16, %s471, [#allocation42]
    $region105: #{fused_resnet_forward.1} parent=1 // pred_fallthru
      _
    // Predicated region
    $region106: #{fused_resnet_forward.1} parent=1 // pred_check
      _
    $region107: #{fused_resnet_forward.1} parent=1 // pred_check_branch
      %475 = sbr.rel (0) target = $region109
    $region108: #{fused_resnet_forward.1} parent=1 // pred_region
      %s477 = ssub.s32 16, 16
      %478 = vsyncadd [#allocation42], %s477
      %s480 = sshll.u32 [#allocation43], 4
      %s481 = int_to_ptr.vmem [resolvable:$true] %s480
      %483 = dma.hbm_to_vmem [thread:$0]  %s53, 16, %s481, [#allocation42]
    $region109: #{fused_resnet_forward.1} parent=1 // pred_fallthru
      _
    // Predicated region
    $region110: #{fused_resnet_forward.1} parent=1 // pred_check
      _
    $region111: #{fused_resnet_forward.1} parent=1 // pred_check_branch
      %485 = sbr.rel (0) target = $region113
    $region112: #{fused_resnet_forward.1} parent=1 // pred_region
      %s487 = ssub.s32 1024, 1024
      %488 = vsyncadd [#allocation45], %s487
      %s489 = sshll.u32 [#allocation44], 4
      %s490 = int_to_ptr.vmem [resolvable:$true] %s489
      %495 = dma.hbm_to_vmem [thread:$0]  %s55, 1024, %s490, [#allocation45], 64, 64, 4
    $region113: #{fused_resnet_forward.1} parent=1 // pred_fallthru
      _
    // Predicated region
    $region114: #{fused_resnet_forward.1} parent=1 // pred_check
      _
    $region115: #{fused_resnet_forward.1} parent=1 // pred_check_branch
      %497 = sbr.rel (0) target = $region117
    $region116: #{fused_resnet_forward.1} parent=1 // pred_region
      %s499 = ssub.s32 1024, 1024
      %500 = vsyncadd [#allocation45], %s499
      %s501 = sshll.u32 [#allocation46], 4
      %s502 = int_to_ptr.vmem [resolvable:$true] %s501
      %507 = dma.hbm_to_vmem [thread:$0]  %s57, 1024, %s502, [#allocation45], 64, 64, 4
    $region117: #{fused_resnet_forward.1} parent=1 // pred_fallthru
      _
    // Predicated region
    $region118: #{fused_resnet_forward.1} parent=1 // pred_check
      _
    $region119: #{fused_resnet_forward.1} parent=1 // pred_check_branch
      %509 = sbr.rel (0) target = $region121
    $region120: #{fused_resnet_forward.1} parent=1 // pred_region
      %s511 = ssub.s32 16, 16
      %512 = vsyncadd [#allocation48], %s511
      %s514 = sshll.u32 [#allocation47], 4
      %s515 = int_to_ptr.vmem [resolvable:$true] %s514
      %517 = dma.hbm_to_vmem [thread:$0]  %s59, 16, %s515, [#allocation48]
    $region121: #{fused_resnet_forward.1} parent=1 // pred_fallthru
      _
    // Predicated region
    $region122: #{fused_resnet_forward.1} parent=1 // pred_check
      _
    $region123: #{fused_resnet_forward.1} parent=1 // pred_check_branch
      %519 = sbr.rel (0) target = $region125
    $region124: #{fused_resnet_forward.1} parent=1 // pred_region
      %s521 = ssub.s32 16, 16
      %522 = vsyncadd [#allocation48], %s521
      %s524 = sshll.u32 [#allocation49], 4
      %s525 = int_to_ptr.vmem [resolvable:$true] %s524
      %527 = dma.hbm_to_vmem [thread:$0]  %s61, 16, %s525, [#allocation48]
    $region125: #{fused_resnet_forward.1} parent=1 // pred_fallthru
      _
    // Predicated region
    $region126: #{fused_resnet_forward.1} parent=1 // pred_check
      _
    $region127: #{fused_resnet_forward.1} parent=1 // pred_check_branch
      %529 = sbr.rel (0) target = $region129
    $region128: #{fused_resnet_forward.1} parent=1 // pred_region
      %s531 = ssub.s32 1024, 1024
      %532 = vsyncadd [#allocation51], %s531
      %s533 = sshll.u32 [#allocation50], 4
      %s534 = int_to_ptr.vmem [resolvable:$true] %s533
      %539 = dma.hbm_to_vmem [thread:$0]  %s63, 1024, %s534, [#allocation51], 64, 64, 4
    $region129: #{fused_resnet_forward.1} parent=1 // pred_fallthru
      _
    // Predicated region
    $region130: #{fused_resnet_forward.1} parent=1 // pred_check
      _
    $region131: #{fused_resnet_forward.1} parent=1 // pred_check_branch
      %541 = sbr.rel (0) target = $region133
    $region132: #{fused_resnet_forward.1} parent=1 // pred_region
      %s543 = ssub.s32 1024, 1024
      %544 = vsyncadd [#allocation51], %s543
      %s545 = sshll.u32 [#allocation52], 4
      %s546 = int_to_ptr.vmem [resolvable:$true] %s545
      %551 = dma.hbm_to_vmem [thread:$0]  %s65, 1024, %s546, [#allocation51], 64, 64, 4
    $region133: #{fused_resnet_forward.1} parent=1 // pred_fallthru
      _
    // Predicated region
    $region134: #{fused_resnet_forward.1} parent=1 // pred_check
      _
    $region135: #{fused_resnet_forward.1} parent=1 // pred_check_branch
      %553 = sbr.rel (0) target = $region137
    $region136: #{fused_resnet_forward.1} parent=1 // pred_region
      %s555 = ssub.s32 32, 32
      %556 = vsyncadd [#allocation54], %s555
      %s558 = sshll.u32 [#allocation53], 4
      %s559 = int_to_ptr.vmem [resolvable:$true] %s558
      %561 = dma.hbm_to_vmem [thread:$0]  %s67, 32, %s559, [#allocation54]
    $region137: #{fused_resnet_forward.1} parent=1 // pred_fallthru
      _
    // Predicated region
    $region138: #{fused_resnet_forward.1} parent=1 // pred_check
      _
    $region139: #{fused_resnet_forward.1} parent=1 // pred_check_branch
      %563 = sbr.rel (0) target = $region141
    $region140: #{fused_resnet_forward.1} parent=1 // pred_region
      %s565 = ssub.s32 32, 32
      %566 = vsyncadd [#allocation54], %s565
      %s568 = sshll.u32 [#allocation55], 4
      %s569 = int_to_ptr.vmem [resolvable:$true] %s568
      %571 = dma.hbm_to_vmem [thread:$0]  %s69, 32, %s569, [#allocation54]
    $region141: #{fused_resnet_forward.1} parent=1 // pred_fallthru
      _
    // Predicated region
    $region142: #{fused_resnet_forward.1} parent=1 // pred_check
      _
    $region143: #{fused_resnet_forward.1} parent=1 // pred_check_branch
      %573 = sbr.rel (0) target = $region145
    $region144: #{fused_resnet_forward.1} parent=1 // pred_region
      %s575 = ssub.s32 32, 32
      %576 = vsyncadd [#allocation57], %s575
      %s578 = sshll.u32 [#allocation56], 4
      %s579 = int_to_ptr.vmem [resolvable:$true] %s578
      %581 = dma.hbm_to_vmem [thread:$0]  %s71, 32, %s579, [#allocation57]
    $region145: #{fused_resnet_forward.1} parent=1 // pred_fallthru
      _
    // Predicated region
    $region146: #{fused_resnet_forward.1} parent=1 // pred_check
      _
    $region147: #{fused_resnet_forward.1} parent=1 // pred_check_branch
      %583 = sbr.rel (0) target = $region149
    $region148: #{fused_resnet_forward.1} parent=1 // pred_region
      %s585 = ssub.s32 2048, 2048
      %586 = vsyncadd [#allocation57], %s585
      %s587 = sshll.u32 [#allocation58], 4
      %s588 = int_to_ptr.vmem [resolvable:$true] %s587
      %593 = dma.hbm_to_vmem [thread:$0]  %s73, 2048, %s588, [#allocation57], 128, 128, 8
    $region149: #{fused_resnet_forward.1} parent=1 // pred_fallthru
      _
    // Predicated region
    $region150: #{fused_resnet_forward.1} parent=1 // pred_check
      _
    $region151: #{fused_resnet_forward.1} parent=1 // pred_check_branch
      %595 = sbr.rel (0) target = $region153
    $region152: #{fused_resnet_forward.1} parent=1 // pred_region
      %s597 = ssub.s32 4096, 4096
      %598 = vsyncadd [#allocation60], %s597
      %s599 = sshll.u32 [#allocation59], 4
      %s600 = int_to_ptr.vmem [resolvable:$true] %s599
      %605 = dma.hbm_to_vmem [thread:$0]  %s75, 4096, %s600, [#allocation60], 128, 128, 8
    $region153: #{fused_resnet_forward.1} parent=1 // pred_fallthru
      _
    // Predicated region
    $region154: #{fused_resnet_forward.1} parent=1 // pred_check
      _
    $region155: #{fused_resnet_forward.1} parent=1 // pred_check_branch
      %607 = sbr.rel (0) target = $region157
    $region156: #{fused_resnet_forward.1} parent=1 // pred_region
      %s609 = ssub.s32 2048, 2048
      %610 = vsyncadd [#allocation60], %s609
      %s611 = sshll.u32 [#allocation61], 4
      %s612 = int_to_ptr.vmem [resolvable:$true] %s611
      %617 = dma.hbm_to_vmem [thread:$0]  %s77, 2048, %s612, [#allocation60], 128, 128, 8
    $region157: #{fused_resnet_forward.1} parent=1 // pred_fallthru
      _
    // Predicated region
    $region158: #{fused_resnet_forward.1} parent=1 // pred_check
      _
    $region159: #{fused_resnet_forward.1} parent=1 // pred_check_branch
      %619 = sbr.rel (0) target = $region161
    $region160: #{fused_resnet_forward.1} parent=1 // pred_region
      %s621 = ssub.s32 32, 32
      %622 = vsyncadd [#allocation63], %s621
      %s624 = sshll.u32 [#allocation62], 4
      %s625 = int_to_ptr.vmem [resolvable:$true] %s624
      %627 = dma.hbm_to_vmem [thread:$0]  %s79, 32, %s625, [#allocation63]
    $region161: #{fused_resnet_forward.1} parent=1 // pred_fallthru
      _
    // Predicated region
    $region162: #{fused_resnet_forward.1} parent=1 // pred_check
      _
    $region163: #{fused_resnet_forward.1} parent=1 // pred_check_branch
      %629 = sbr.rel (0) target = $region165
    $region164: #{fused_resnet_forward.1} parent=1 // pred_region
      %s631 = ssub.s32 32, 32
      %632 = vsyncadd [#allocation63], %s631
      %s634 = sshll.u32 [#allocation64], 4
      %s635 = int_to_ptr.vmem [resolvable:$true] %s634
      %637 = dma.hbm_to_vmem [thread:$0]  %s81, 32, %s635, [#allocation63]
    $region165: #{fused_resnet_forward.1} parent=1 // pred_fallthru
      _
    // Predicated region
    $region166: #{fused_resnet_forward.1} parent=1 // pred_check
      _
    $region167: #{fused_resnet_forward.1} parent=1 // pred_check_branch
      %639 = sbr.rel (0) target = $region169
    $region168: #{fused_resnet_forward.1} parent=1 // pred_region
      %s641 = ssub.s32 4096, 4096
      %642 = vsyncadd [#allocation66], %s641
      %s643 = sshll.u32 [#allocation65], 4
      %s644 = int_to_ptr.vmem [resolvable:$true] %s643
      %649 = dma.hbm_to_vmem [thread:$0]  %s83, 4096, %s644, [#allocation66], 128, 128, 8
    $region169: #{fused_resnet_forward.1} parent=1 // pred_fallthru
      _
    // Predicated region
    $region170: #{fused_resnet_forward.1} parent=1 // pred_check
      _
    $region171: #{fused_resnet_forward.1} parent=1 // pred_check_branch
      %651 = sbr.rel (0) target = $region173
    $region172: #{fused_resnet_forward.1} parent=1 // pred_region
      %s653 = ssub.s32 4096, 4096
      %654 = vsyncadd [#allocation66], %s653
      %s655 = sshll.u32 [#allocation67], 4
      %s656 = int_to_ptr.vmem [resolvable:$true] %s655
      %661 = dma.hbm_to_vmem [thread:$0]  %s85, 4096, %s656, [#allocation66], 128, 128, 8
    $region173: #{fused_resnet_forward.1} parent=1 // pred_fallthru
      _
    // Predicated region
    $region174: #{fused_resnet_forward.1} parent=1 // pred_check
      _
    $region175: #{fused_resnet_forward.1} parent=1 // pred_check_branch
      %663 = sbr.rel (0) target = $region177
    $region176: #{fused_resnet_forward.1} parent=1 // pred_region
      %s665 = ssub.s32 32, 32
      %666 = vsyncadd [#allocation69], %s665
      %s668 = sshll.u32 [#allocation68], 4
      %s669 = int_to_ptr.vmem [resolvable:$true] %s668
      %671 = dma.hbm_to_vmem [thread:$0]  %s87, 32, %s669, [#allocation69]
    $region177: #{fused_resnet_forward.1} parent=1 // pred_fallthru
      _
    // Predicated region
    $region178: #{fused_resnet_forward.1} parent=1 // pred_check
      _
    $region179: #{fused_resnet_forward.1} parent=1 // pred_check_branch
      %673 = sbr.rel (0) target = $region181
    $region180: #{fused_resnet_forward.1} parent=1 // pred_region
      %s675 = ssub.s32 32, 32
      %676 = vsyncadd [#allocation69], %s675
      %s678 = sshll.u32 [#allocation70], 4
      %s679 = int_to_ptr.vmem [resolvable:$true] %s678
      %681 = dma.hbm_to_vmem [thread:$0]  %s89, 32, %s679, [#allocation69]
    $region181: #{fused_resnet_forward.1} parent=1 // pred_fallthru
      _
    // Predicated region
    $region182: #{fused_resnet_forward.1} parent=1 // pred_check
      _
    $region183: #{fused_resnet_forward.1} parent=1 // pred_check_branch
      %683 = sbr.rel (0) target = $region185
    $region184: #{fused_resnet_forward.1} parent=1 // pred_region
      %s685 = ssub.s32 4096, 4096
      %686 = vsyncadd [#allocation72], %s685
      %s687 = sshll.u32 [#allocation71], 4
      %s688 = int_to_ptr.vmem [resolvable:$true] %s687
      %693 = dma.hbm_to_vmem [thread:$0]  %s91, 4096, %s688, [#allocation72], 128, 128, 8
    $region185: #{fused_resnet_forward.1} parent=1 // pred_fallthru
      _
    // Predicated region
    $region186: #{fused_resnet_forward.1} parent=1 // pred_check
      _
    $region187: #{fused_resnet_forward.1} parent=1 // pred_check_branch
      %695 = sbr.rel (0) target = $region189
    $region188: #{fused_resnet_forward.1} parent=1 // pred_region
      %s697 = ssub.s32 4096, 4096
      %698 = vsyncadd [#allocation72], %s697
      %s699 = sshll.u32 [#allocation73], 4
      %s700 = int_to_ptr.vmem [resolvable:$true] %s699
      %705 = dma.hbm_to_vmem [thread:$0]  %s93, 4096, %s700, [#allocation72], 128, 128, 8
    $region189: #{fused_resnet_forward.1} parent=1 // pred_fallthru
      _
    // Predicated region
    $region190: #{fused_resnet_forward.1} parent=1 // pred_check
      _
    $region191: #{fused_resnet_forward.1} parent=1 // pred_check_branch
      %707 = sbr.rel (0) target = $region193
    $region192: #{fused_resnet_forward.1} parent=1 // pred_region
      %s709 = ssub.s32 32, 32
      %710 = vsyncadd [#allocation75], %s709
      %s712 = sshll.u32 [#allocation74], 4
      %s713 = int_to_ptr.vmem [resolvable:$true] %s712
      %715 = dma.hbm_to_vmem [thread:$0]  %s95, 32, %s713, [#allocation75]
    $region193: #{fused_resnet_forward.1} parent=1 // pred_fallthru
      _
    // Predicated region
    $region194: #{fused_resnet_forward.1} parent=1 // pred_check
      _
    $region195: #{fused_resnet_forward.1} parent=1 // pred_check_branch
      %717 = sbr.rel (0) target = $region197
    $region196: #{fused_resnet_forward.1} parent=1 // pred_region
      %s719 = ssub.s32 32, 32
      %720 = vsyncadd [#allocation75], %s719
      %s722 = sshll.u32 [#allocation76], 4
      %s723 = int_to_ptr.vmem [resolvable:$true] %s722
      %725 = dma.hbm_to_vmem [thread:$0]  %s97, 32, %s723, [#allocation75]
    $region197: #{fused_resnet_forward.1} parent=1 // pred_fallthru
      _
    // Predicated region
    $region198: #{fused_resnet_forward.1} parent=1 // pred_check
      _
    $region199: #{fused_resnet_forward.1} parent=1 // pred_check_branch
      %727 = sbr.rel (0) target = $region201
    $region200: #{fused_resnet_forward.1} parent=1 // pred_region
      %s729 = ssub.s32 4096, 4096
      %730 = vsyncadd [#allocation78], %s729
      %s731 = sshll.u32 [#allocation77], 4
      %s732 = int_to_ptr.vmem [resolvable:$true] %s731
      %737 = dma.hbm_to_vmem [thread:$0]  %s99, 4096, %s732, [#allocation78], 128, 128, 8
    $region201: #{fused_resnet_forward.1} parent=1 // pred_fallthru
      _
    // Predicated region
    $region202: #{fused_resnet_forward.1} parent=1 // pred_check
      _
    $region203: #{fused_resnet_forward.1} parent=1 // pred_check_branch
      %739 = sbr.rel (0) target = $region205
    $region204: #{fused_resnet_forward.1} parent=1 // pred_region
      %s741 = ssub.s32 4096, 4096
      %742 = vsyncadd [#allocation78], %s741
      %s743 = sshll.u32 [#allocation79], 4
      %s744 = int_to_ptr.vmem [resolvable:$true] %s743
      %749 = dma.hbm_to_vmem [thread:$0]  %s101, 4096, %s744, [#allocation78], 128, 128, 8
    $region205: #{fused_resnet_forward.1} parent=1 // pred_fallthru
      _
    // Predicated region
    $region206: #{fused_resnet_forward.1} parent=1 // pred_check
      _
    $region207: #{fused_resnet_forward.1} parent=1 // pred_check_branch
      %751 = sbr.rel (0) target = $region209
    $region208: #{fused_resnet_forward.1} parent=1 // pred_region
      %s753 = ssub.s32 32, 32
      %754 = vsyncadd [#allocation81], %s753
      %s756 = sshll.u32 [#allocation80], 4
      %s757 = int_to_ptr.vmem [resolvable:$true] %s756
      %759 = dma.hbm_to_vmem [thread:$0]  %s103, 32, %s757, [#allocation81]
    $region209: #{fused_resnet_forward.1} parent=1 // pred_fallthru
      _
    // Predicated region
    $region210: #{fused_resnet_forward.1} parent=1 // pred_check
      _
    $region211: #{fused_resnet_forward.1} parent=1 // pred_check_branch
      %761 = sbr.rel (0) target = $region213
    $region212: #{fused_resnet_forward.1} parent=1 // pred_region
      %s763 = ssub.s32 32, 32
      %764 = vsyncadd [#allocation81], %s763
      %s766 = sshll.u32 [#allocation82], 4
      %s767 = int_to_ptr.vmem [resolvable:$true] %s766
      %769 = dma.hbm_to_vmem [thread:$0]  %s105, 32, %s767, [#allocation81]
    $region213: #{fused_resnet_forward.1} parent=1 // pred_fallthru
      _
    // Predicated region
    $region214: #{fused_resnet_forward.1} parent=1 // pred_check
      _
    $region215: #{fused_resnet_forward.1} parent=1 // pred_check_branch
      %771 = sbr.rel (0) target = $region217
    $region216: #{fused_resnet_forward.1} parent=1 // pred_region
      %s773 = ssub.s32 4096, 4096
      %774 = vsyncadd [#allocation84], %s773
      %s775 = sshll.u32 [#allocation83], 4
      %s776 = int_to_ptr.vmem [resolvable:$true] %s775
      %781 = dma.hbm_to_vmem [thread:$0]  %s107, 4096, %s776, [#allocation84], 128, 128, 8
    $region217: #{fused_resnet_forward.1} parent=1 // pred_fallthru
      _
    // Predicated region
    $region218: #{fused_resnet_forward.1} parent=1 // pred_check
      _
    $region219: #{fused_resnet_forward.1} parent=1 // pred_check_branch
      %783 = sbr.rel (0) target = $region221
    $region220: #{fused_resnet_forward.1} parent=1 // pred_region
      %s785 = ssub.s32 4096, 4096
      %786 = vsyncadd [#allocation84], %s785
      %s787 = sshll.u32 [#allocation85], 4
      %s788 = int_to_ptr.vmem [resolvable:$true] %s787
      %793 = dma.hbm_to_vmem [thread:$0]  %s109, 4096, %s788, [#allocation84], 128, 128, 8
    $region221: #{fused_resnet_forward.1} parent=1 // pred_fallthru
      _
    // Predicated region
    $region222: #{fused_resnet_forward.1} parent=1 // pred_check
      _
    $region223: #{fused_resnet_forward.1} parent=1 // pred_check_branch
      %795 = sbr.rel (0) target = $region225
    $region224: #{fused_resnet_forward.1} parent=1 // pred_region
      %s797 = ssub.s32 32, 32
      %798 = vsyncadd [#allocation87], %s797
      %s800 = sshll.u32 [#allocation86], 4
      %s801 = int_to_ptr.vmem [resolvable:$true] %s800
      %803 = dma.hbm_to_vmem [thread:$0]  %s111, 32, %s801, [#allocation87]
    $region225: #{fused_resnet_forward.1} parent=1 // pred_fallthru
      _
    // Predicated region
    $region226: #{fused_resnet_forward.1} parent=1 // pred_check
      _
    $region227: #{fused_resnet_forward.1} parent=1 // pred_check_branch
      %805 = sbr.rel (0) target = $region229
    $region228: #{fused_resnet_forward.1} parent=1 // pred_region
      %s807 = ssub.s32 32, 32
      %808 = vsyncadd [#allocation87], %s807
      %s810 = sshll.u32 [#allocation88], 4
      %s811 = int_to_ptr.vmem [resolvable:$true] %s810
      %813 = dma.hbm_to_vmem [thread:$0]  %s113, 32, %s811, [#allocation87]
    $region229: #{fused_resnet_forward.1} parent=1 // pred_fallthru
      _
    // Predicated region
    $region230: #{fused_resnet_forward.1} parent=1 // pred_check
      _
    $region231: #{fused_resnet_forward.1} parent=1 // pred_check_branch
      %815 = sbr.rel (0) target = $region233
    $region232: #{fused_resnet_forward.1} parent=1 // pred_region
      %s817 = ssub.s32 4096, 4096
      %818 = vsyncadd [#allocation90], %s817
      %s819 = sshll.u32 [#allocation89], 4
      %s820 = int_to_ptr.vmem [resolvable:$true] %s819
      %825 = dma.hbm_to_vmem [thread:$0]  %s115, 4096, %s820, [#allocation90], 128, 128, 8
    $region233: #{fused_resnet_forward.1} parent=1 // pred_fallthru
      _
    // Predicated region
    $region234: #{fused_resnet_forward.1} parent=1 // pred_check
      _
    $region235: #{fused_resnet_forward.1} parent=1 // pred_check_branch
      %827 = sbr.rel (0) target = $region237
    $region236: #{fused_resnet_forward.1} parent=1 // pred_region
      %s829 = ssub.s32 4096, 4096
      %830 = vsyncadd [#allocation90], %s829
      %s831 = sshll.u32 [#allocation91], 4
      %s832 = int_to_ptr.vmem [resolvable:$true] %s831
      %837 = dma.hbm_to_vmem [thread:$0]  %s117, 4096, %s832, [#allocation90], 128, 128, 8
    $region237: #{fused_resnet_forward.1} parent=1 // pred_fallthru
      _
    // Predicated region
    $region238: #{fused_resnet_forward.1} parent=1 // pred_check
      _
    $region239: #{fused_resnet_forward.1} parent=1 // pred_check_branch
      %839 = sbr.rel (0) target = $region241
    $region240: #{fused_resnet_forward.1} parent=1 // pred_region
      _
    $region241: #{fused_resnet_forward.1} parent=1 // pred_fallthru
      _
    // Predicated region
    $region242: #{fused_resnet_forward.1} parent=1 // pred_check
      _
    $region243: #{fused_resnet_forward.1} parent=1 // pred_check_branch
      %841 = sbr.rel (0) target = $region245
    $region244: #{fused_resnet_forward.1} parent=1 // pred_region
      _
    $region245: #{fused_resnet_forward.1} parent=1 // pred_fallthru
      _
    // Predicated region
    $region246: #{fused_resnet_forward.1} parent=1 // pred_check
      _
    $region247: #{fused_resnet_forward.1} parent=1 // pred_check_branch
      %843 = sbr.rel (0) target = $region249
    $region248: #{fused_resnet_forward.1} parent=1 // pred_region
      _
    $region249: #{fused_resnet_forward.1} parent=1 // pred_fallthru
      _
    // Predicated region
    $region250: #{fused_resnet_forward.1} parent=1 // pred_check
      _
    $region251: #{fused_resnet_forward.1} parent=1 // pred_check_branch
      %845 = sbr.rel (0) target = $region253
    $region252: #{fused_resnet_forward.1} parent=1 // pred_region
      %s847 = ssub.s32 8192, 8192
      %848 = vsyncadd [#allocation93], %s847
      %s849 = sshll.u32 [#allocation92], 4
      %s850 = int_to_ptr.vmem [resolvable:$true] %s849
      %855 = dma.hbm_to_vmem [thread:$0]  %s125, 8192, %s850, [#allocation93], 256, 256, 16
    $region253: #{fused_resnet_forward.1} parent=1 // pred_fallthru
      _
    // Predicated region
    $region254: #{fused_resnet_forward.1} parent=1 // pred_check
      _
    $region255: #{fused_resnet_forward.1} parent=1 // pred_check_branch
      %857 = sbr.rel (0) target = $region257
    $region256: #{fused_resnet_forward.1} parent=1 // pred_region
      %s859 = ssub.s32 16384, 16384
      %860 = vsyncadd [#allocation93], %s859
      %s861 = sshll.u32 [#allocation94], 4
      %s862 = int_to_ptr.vmem [resolvable:$true] %s861
      %867 = dma.hbm_to_vmem [thread:$0]  %s127, 16384, %s862, [#allocation93], 256, 256, 16
    $region257: #{fused_resnet_forward.1} parent=1 // pred_fallthru
      _
    // Predicated region
    $region258: #{fused_resnet_forward.1} parent=1 // pred_check
      _
    $region259: #{fused_resnet_forward.1} parent=1 // pred_check_branch
      %869 = sbr.rel (0) target = $region261
    $region260: #{fused_resnet_forward.1} parent=1 // pred_region
      %s871 = ssub.s32 8192, 8192
      %872 = vsyncadd [#allocation96], %s871
      %s873 = sshll.u32 [#allocation95], 4
      %s874 = int_to_ptr.vmem [resolvable:$true] %s873
      %879 = dma.hbm_to_vmem [thread:$0]  %s129, 8192, %s874, [#allocation96], 256, 256, 16
    $region261: #{fused_resnet_forward.1} parent=1 // pred_fallthru
      _
    // Predicated region
    $region262: #{fused_resnet_forward.1} parent=1 // pred_check
      _
    $region263: #{fused_resnet_forward.1} parent=1 // pred_check_branch
      %881 = sbr.rel (0) target = $region265
    $region264: #{fused_resnet_forward.1} parent=1 // pred_region
      _
    $region265: #{fused_resnet_forward.1} parent=1 // pred_fallthru
      _
    // Predicated region
    $region266: #{fused_resnet_forward.1} parent=1 // pred_check
      _
    $region267: #{fused_resnet_forward.1} parent=1 // pred_check_branch
      %883 = sbr.rel (0) target = $region269
    $region268: #{fused_resnet_forward.1} parent=1 // pred_region
      _
    $region269: #{fused_resnet_forward.1} parent=1 // pred_fallthru
      _
    // Predicated region
    $region270: #{fused_resnet_forward.1} parent=1 // pred_check
      _
    $region271: #{fused_resnet_forward.1} parent=1 // pred_check_branch
      %885 = sbr.rel (0) target = $region273
    $region272: #{fused_resnet_forward.1} parent=1 // pred_region
      %s887 = ssub.s32 16384, 16384
      %888 = vsyncadd [#allocation96], %s887
      %s889 = sshll.u32 [#allocation97], 4
      %s890 = int_to_ptr.vmem [resolvable:$true] %s889
      %895 = dma.hbm_to_vmem [thread:$0]  %s135, 16384, %s890, [#allocation96], 256, 256, 16
    $region273: #{fused_resnet_forward.1} parent=1 // pred_fallthru
      _
    // Predicated region
    $region274: #{fused_resnet_forward.1} parent=1 // pred_check
      _
    $region275: #{fused_resnet_forward.1} parent=1 // pred_check_branch
      %897 = sbr.rel (0) target = $region277
    $region276: #{fused_resnet_forward.1} parent=1 // pred_region
      %s899 = ssub.s32 16384, 16384
      %900 = vsyncadd [#allocation99], %s899
      %s901 = sshll.u32 [#allocation98], 4
      %s902 = int_to_ptr.vmem [resolvable:$true] %s901
      %907 = dma.hbm_to_vmem [thread:$0]  %s137, 16384, %s902, [#allocation99], 256, 256, 16
    $region277: #{fused_resnet_forward.1} parent=1 // pred_fallthru
      _
    // Predicated region
    $region278: #{fused_resnet_forward.1} parent=1 // pred_check
      _
    $region279: #{fused_resnet_forward.1} parent=1 // pred_check_branch
      %909 = sbr.rel (0) target = $region281
    $region280: #{fused_resnet_forward.1} parent=1 // pred_region
      _
    $region281: #{fused_resnet_forward.1} parent=1 // pred_fallthru
      _
    // Predicated region
    $region282: #{fused_resnet_forward.1} parent=1 // pred_check
      _
    $region283: #{fused_resnet_forward.1} parent=1 // pred_check_branch
      %911 = sbr.rel (0) target = $region285
    $region284: #{fused_resnet_forward.1} parent=1 // pred_region
      %s913 = ssub.s32 64, 64
      %914 = vsyncadd [#allocation99], %s913
      %s916 = sshll.u32 [#allocation100], 4
      %s917 = int_to_ptr.vmem [resolvable:$true] %s916
      %919 = dma.hbm_to_vmem [thread:$0]  %s141, 64, %s917, [#allocation99]
    $region285: #{fused_resnet_forward.1} parent=1 // pred_fallthru
      _
    // Predicated region
    $region286: #{fused_resnet_forward.1} parent=1 // pred_check
      _
    $region287: #{fused_resnet_forward.1} parent=1 // pred_check_branch
      %921 = sbr.rel (0) target = $region289
    $region288: #{fused_resnet_forward.1} parent=1 // pred_region
      %s923 = ssub.s32 16384, 16384
      %924 = vsyncadd [#allocation102], %s923
      %s925 = sshll.u32 [#allocation101], 4
      %s926 = int_to_ptr.vmem [resolvable:$true] %s925
      %931 = dma.hbm_to_vmem [thread:$0]  %s143, 16384, %s926, [#allocation102], 256, 256, 16
    $region289: #{fused_resnet_forward.1} parent=1 // pred_fallthru
      _
    // Predicated region
    $region290: #{fused_resnet_forward.1} parent=1 // pred_check
      _
    $region291: #{fused_resnet_forward.1} parent=1 // pred_check_branch
      %933 = sbr.rel (0) target = $region293
    $region292: #{fused_resnet_forward.1} parent=1 // pred_region
      %s935 = ssub.s32 16384, 16384
      %936 = vsyncadd [#allocation102], %s935
      %s937 = sshll.u32 [#allocation103], 4
      %s938 = int_to_ptr.vmem [resolvable:$true] %s937
      %943 = dma.hbm_to_vmem [thread:$0]  %s145, 16384, %s938, [#allocation102], 256, 256, 16
    $region293: #{fused_resnet_forward.1} parent=1 // pred_fallthru
      _
    // Predicated region
    $region294: #{fused_resnet_forward.1} parent=1 // pred_check
      _
    $region295: #{fused_resnet_forward.1} parent=1 // pred_check_branch
      %945 = sbr.rel (0) target = $region297
    $region296: #{fused_resnet_forward.1} parent=1 // pred_region
      %s947 = ssub.s32 1024, 1024
      %948 = vsyncadd [#allocation105], %s947
      %s949 = sshll.u32 [#allocation104], 4
      %s950 = int_to_ptr.vmem [resolvable:$true] %s949
      %955 = dma.hbm_to_vmem [thread:$0]  %s147, 1024, %s950, [#allocation105], 64, 64, 4
    $region297: #{fused_resnet_forward.1} parent=1 // pred_fallthru
      _
    // Predicated region
    $region298: #{fused_resnet_forward.1} parent=1 // pred_check
      _
    $region299: #{fused_resnet_forward.1} parent=1 // pred_check_branch
      %957 = sbr.rel (0) target = $region301
    $region300: #{fused_resnet_forward.1} parent=1 // pred_region
      _
    $region301: #{fused_resnet_forward.1} parent=1 // pred_fallthru
      _
    // Predicated region
    $region302: #{fused_resnet_forward.1} parent=1 // pred_check
      _
    $region303: #{fused_resnet_forward.1} parent=1 // pred_check_branch
      %959 = sbr.rel (0) target = $region305
    $region304: #{fused_resnet_forward.1} parent=1 // pred_region
      %960 = dma.done [#allocation3], 128
    $region305: #{fused_resnet_forward.1} parent=1 // pred_fallthru
      _
    // Predicated region
    $region306: #{fused_resnet_forward.1} parent=1 // pred_check
      _
    $region307: #{fused_resnet_forward.1} parent=1 // pred_check_branch
      %962 = sbr.rel (0) target = $region309
    $region308: #{fused_resnet_forward.1} parent=1 // pred_region
      %963 = dma.done [#allocation6], 16
    $region309: #{fused_resnet_forward.1} parent=1 // pred_fallthru
      _
    // Predicated region
    $region310: #{fused_resnet_forward.1} parent=1 // pred_check
      _
    $region311: #{fused_resnet_forward.1} parent=1 // pred_check_branch
      %965 = sbr.rel (0) target = $region313
    $region312: #{fused_resnet_forward.1} parent=1 // pred_region
      %966 = dma.done [#allocation6], 16
    $region313: #{fused_resnet_forward.1} parent=1 // pred_fallthru
      _
    // Predicated region
    $region314: #{fused_resnet_forward.1} parent=1 // pred_check
      _
    $region315: #{fused_resnet_forward.1} parent=1 // pred_check_branch
      %968 = sbr.rel (0) target = $region317
    $region316: #{fused_resnet_forward.1} parent=1 // pred_region
      %969 = dma.done [#allocation9], 16
    $region317: #{fused_resnet_forward.1} parent=1 // pred_fallthru
      _
    // Predicated region
    $region318: #{fused_resnet_forward.1} parent=1 // pred_check
      _
    $region319: #{fused_resnet_forward.1} parent=1 // pred_check_branch
      %971 = sbr.rel (0) target = $region321
    $region320: #{fused_resnet_forward.1} parent=1 // pred_region
      %972 = dma.done [#allocation9], 16
    $region321: #{fused_resnet_forward.1} parent=1 // pred_fallthru
      _
    // Predicated region
    $region322: #{fused_resnet_forward.1} parent=1 // pred_check
      _
    $region323: #{fused_resnet_forward.1} parent=1 // pred_check_branch
      %974 = sbr.rel (0) target = $region325
    $region324: #{fused_resnet_forward.1} parent=1 // pred_region
      %975 = dma.done [#allocation12], 1024
    $region325: #{fused_resnet_forward.1} parent=1 // pred_fallthru
      _
    // Predicated region
    $region326: #{fused_resnet_forward.1} parent=1 // pred_check
      _
    $region327: #{fused_resnet_forward.1} parent=1 // pred_check_branch
      %977 = sbr.rel (0) target = $region329
    $region328: #{fused_resnet_forward.1} parent=1 // pred_region
      %978 = dma.done [#allocation12], 1024
    $region329: #{fused_resnet_forward.1} parent=1 // pred_fallthru
      _
    // Predicated region
    $region330: #{fused_resnet_forward.1} parent=1 // pred_check
      _
    $region331: #{fused_resnet_forward.1} parent=1 // pred_check_branch
      %980 = sbr.rel (0) target = $region333
    $region332: #{fused_resnet_forward.1} parent=1 // pred_region
      %981 = dma.done [#allocation15], 16
    $region333: #{fused_resnet_forward.1} parent=1 // pred_fallthru
      _
    // Predicated region
    $region334: #{fused_resnet_forward.1} parent=1 // pred_check
      _
    $region335: #{fused_resnet_forward.1} parent=1 // pred_check_branch
      %983 = sbr.rel (0) target = $region337
    $region336: #{fused_resnet_forward.1} parent=1 // pred_region
      %984 = dma.done [#allocation15], 16
    $region337: #{fused_resnet_forward.1} parent=1 // pred_fallthru
      _
    // Predicated region
    $region338: #{fused_resnet_forward.1} parent=1 // pred_check
      _
    $region339: #{fused_resnet_forward.1} parent=1 // pred_check_branch
      %986 = sbr.rel (0) target = $region341
    $region340: #{fused_resnet_forward.1} parent=1 // pred_region
      %987 = dma.done [#allocation18], 1024
    $region341: #{fused_resnet_forward.1} parent=1 // pred_fallthru
      _
    // Predicated region
    $region342: #{fused_resnet_forward.1} parent=1 // pred_check
      _
    $region343: #{fused_resnet_forward.1} parent=1 // pred_check_branch
      %989 = sbr.rel (0) target = $region345
    $region344: #{fused_resnet_forward.1} parent=1 // pred_region
      %990 = dma.done [#allocation18], 1024
    $region345: #{fused_resnet_forward.1} parent=1 // pred_fallthru
      _
    // Predicated region
    $region346: #{fused_resnet_forward.1} parent=1 // pred_check
      _
    $region347: #{fused_resnet_forward.1} parent=1 // pred_check_branch
      %992 = sbr.rel (0) target = $region349
    $region348: #{fused_resnet_forward.1} parent=1 // pred_region
      %993 = dma.done [#allocation21], 16
    $region349: #{fused_resnet_forward.1} parent=1 // pred_fallthru
      _
    // Predicated region
    $region350: #{fused_resnet_forward.1} parent=1 // pred_check
      _
    $region351: #{fused_resnet_forward.1} parent=1 // pred_check_branch
      %995 = sbr.rel (0) target = $region353
    $region352: #{fused_resnet_forward.1} parent=1 // pred_region
      %996 = dma.done [#allocation21], 16
    $region353: #{fused_resnet_forward.1} parent=1 // pred_fallthru
      _
    // Predicated region
    $region354: #{fused_resnet_forward.1} parent=1 // pred_check
      _
    $region355: #{fused_resnet_forward.1} parent=1 // pred_check_branch
      %998 = sbr.rel (0) target = $region357
    $region356: #{fused_resnet_forward.1} parent=1 // pred_region
      %999 = dma.done [#allocation24], 1024
    $region357: #{fused_resnet_forward.1} parent=1 // pred_fallthru
      _
    // Predicated region
    $region358: #{fused_resnet_forward.1} parent=1 // pred_check
      _
    $region359: #{fused_resnet_forward.1} parent=1 // pred_check_branch
      %1001 = sbr.rel (0) target = $region361
    $region360: #{fused_resnet_forward.1} parent=1 // pred_region
      %1002 = dma.done [#allocation24], 1024
    $region361: #{fused_resnet_forward.1} parent=1 // pred_fallthru
      _
    // Predicated region
    $region362: #{fused_resnet_forward.1} parent=1 // pred_check
      _
    $region363: #{fused_resnet_forward.1} parent=1 // pred_check_branch
      %1004 = sbr.rel (0) target = $region365
    $region364: #{fused_resnet_forward.1} parent=1 // pred_region
      %1005 = dma.done [#allocation27], 16
    $region365: #{fused_resnet_forward.1} parent=1 // pred_fallthru
      _
    // Predicated region
    $region366: #{fused_resnet_forward.1} parent=1 // pred_check
      _
    $region367: #{fused_resnet_forward.1} parent=1 // pred_check_branch
      %1007 = sbr.rel (0) target = $region369
    $region368: #{fused_resnet_forward.1} parent=1 // pred_region
      %1008 = dma.done [#allocation27], 16
    $region369: #{fused_resnet_forward.1} parent=1 // pred_fallthru
      _
    // Predicated region
    $region370: #{fused_resnet_forward.1} parent=1 // pred_check
      _
    $region371: #{fused_resnet_forward.1} parent=1 // pred_check_branch
      %1010 = sbr.rel (0) target = $region373
    $region372: #{fused_resnet_forward.1} parent=1 // pred_region
      %1011 = dma.done [#allocation30], 16
    $region373: #{fused_resnet_forward.1} parent=1 // pred_fallthru
      _
    // Predicated region
    $region374: #{fused_resnet_forward.1} parent=1 // pred_check
      _
    $region375: #{fused_resnet_forward.1} parent=1 // pred_check_branch
      %1013 = sbr.rel (0) target = $region377
    $region376: #{fused_resnet_forward.1} parent=1 // pred_region
      %1014 = dma.done [#allocation30], 1024
    $region377: #{fused_resnet_forward.1} parent=1 // pred_fallthru
      _
    // Predicated region
    $region378: #{fused_resnet_forward.1} parent=1 // pred_check
      _
    $region379: #{fused_resnet_forward.1} parent=1 // pred_check_branch
      %1016 = sbr.rel (0) target = $region381
    $region380: #{fused_resnet_forward.1} parent=1 // pred_region
      %1017 = dma.done [#allocation33], 1024
    $region381: #{fused_resnet_forward.1} parent=1 // pred_fallthru
      _
    // Predicated region
    $region382: #{fused_resnet_forward.1} parent=1 // pred_check
      _
    $region383: #{fused_resnet_forward.1} parent=1 // pred_check_branch
      %1019 = sbr.rel (0) target = $region385
    $region384: #{fused_resnet_forward.1} parent=1 // pred_region
      %1020 = dma.done [#allocation33], 1024
    $region385: #{fused_resnet_forward.1} parent=1 // pred_fallthru
      _
    // Predicated region
    $region386: #{fused_resnet_forward.1} parent=1 // pred_check
      _
    $region387: #{fused_resnet_forward.1} parent=1 // pred_check_branch
      %1022 = sbr.rel (0) target = $region389
    $region388: #{fused_resnet_forward.1} parent=1 // pred_region
      %1023 = dma.done [#allocation36], 16
    $region389: #{fused_resnet_forward.1} parent=1 // pred_fallthru
      _
    // Predicated region
    $region390: #{fused_resnet_forward.1} parent=1 // pred_check
      _
    $region391: #{fused_resnet_forward.1} parent=1 // pred_check_branch
      %1025 = sbr.rel (0) target = $region393
    $region392: #{fused_resnet_forward.1} parent=1 // pred_region
      %1026 = dma.done [#allocation36], 16
    $region393: #{fused_resnet_forward.1} parent=1 // pred_fallthru
      _
    // Predicated region
    $region394: #{fused_resnet_forward.1} parent=1 // pred_check
      _
    $region395: #{fused_resnet_forward.1} parent=1 // pred_check_branch
      %1028 = sbr.rel (0) target = $region397
    $region396: #{fused_resnet_forward.1} parent=1 // pred_region
      %1029 = dma.done [#allocation39], 1024
    $region397: #{fused_resnet_forward.1} parent=1 // pred_fallthru
      _
    // Predicated region
    $region398: #{fused_resnet_forward.1} parent=1 // pred_check
      _
    $region399: #{fused_resnet_forward.1} parent=1 // pred_check_branch
      %1031 = sbr.rel (0) target = $region401
    $region400: #{fused_resnet_forward.1} parent=1 // pred_region
      %1032 = dma.done [#allocation39], 1024
    $region401: #{fused_resnet_forward.1} parent=1 // pred_fallthru
      _
    // Predicated region
    $region402: #{fused_resnet_forward.1} parent=1 // pred_check
      _
    $region403: #{fused_resnet_forward.1} parent=1 // pred_check_branch
      %1034 = sbr.rel (0) target = $region405
    $region404: #{fused_resnet_forward.1} parent=1 // pred_region
      %1035 = dma.done [#allocation42], 16
    $region405: #{fused_resnet_forward.1} parent=1 // pred_fallthru
      _
    // Predicated region
    $region406: #{fused_resnet_forward.1} parent=1 // pred_check
      _
    $region407: #{fused_resnet_forward.1} parent=1 // pred_check_branch
      %1037 = sbr.rel (0) target = $region409
    $region408: #{fused_resnet_forward.1} parent=1 // pred_region
      %1038 = dma.done [#allocation42], 16
    $region409: #{fused_resnet_forward.1} parent=1 // pred_fallthru
      _
    // Predicated region
    $region410: #{fused_resnet_forward.1} parent=1 // pred_check
      _
    $region411: #{fused_resnet_forward.1} parent=1 // pred_check_branch
      %1040 = sbr.rel (0) target = $region413
    $region412: #{fused_resnet_forward.1} parent=1 // pred_region
      %1041 = dma.done [#allocation45], 1024
    $region413: #{fused_resnet_forward.1} parent=1 // pred_fallthru
      _
    // Predicated region
    $region414: #{fused_resnet_forward.1} parent=1 // pred_check
      _
    $region415: #{fused_resnet_forward.1} parent=1 // pred_check_branch
      %1043 = sbr.rel (0) target = $region417
    $region416: #{fused_resnet_forward.1} parent=1 // pred_region
      %1044 = dma.done [#allocation45], 1024
    $region417: #{fused_resnet_forward.1} parent=1 // pred_fallthru
      _
    // Predicated region
    $region418: #{fused_resnet_forward.1} parent=1 // pred_check
      _
    $region419: #{fused_resnet_forward.1} parent=1 // pred_check_branch
      %1046 = sbr.rel (0) target = $region421
    $region420: #{fused_resnet_forward.1} parent=1 // pred_region
      %1047 = dma.done [#allocation48], 16
    $region421: #{fused_resnet_forward.1} parent=1 // pred_fallthru
      _
    // Predicated region
    $region422: #{fused_resnet_forward.1} parent=1 // pred_check
      _
    $region423: #{fused_resnet_forward.1} parent=1 // pred_check_branch
      %1049 = sbr.rel (0) target = $region425
    $region424: #{fused_resnet_forward.1} parent=1 // pred_region
      %1050 = dma.done [#allocation48], 16
    $region425: #{fused_resnet_forward.1} parent=1 // pred_fallthru
      _
    // Predicated region
    $region426: #{fused_resnet_forward.1} parent=1 // pred_check
      _
    $region427: #{fused_resnet_forward.1} parent=1 // pred_check_branch
      %1052 = sbr.rel (0) target = $region429
    $region428: #{fused_resnet_forward.1} parent=1 // pred_region
      %1053 = dma.done [#allocation51], 1024
    $region429: #{fused_resnet_forward.1} parent=1 // pred_fallthru
      _
    // Predicated region
    $region430: #{fused_resnet_forward.1} parent=1 // pred_check
      _
    $region431: #{fused_resnet_forward.1} parent=1 // pred_check_branch
      %1055 = sbr.rel (0) target = $region433
    $region432: #{fused_resnet_forward.1} parent=1 // pred_region
      %1056 = dma.done [#allocation51], 1024
    $region433: #{fused_resnet_forward.1} parent=1 // pred_fallthru
      _
    // Predicated region
    $region434: #{fused_resnet_forward.1} parent=1 // pred_check
      _
    $region435: #{fused_resnet_forward.1} parent=1 // pred_check_branch
      %1058 = sbr.rel (0) target = $region437
    $region436: #{fused_resnet_forward.1} parent=1 // pred_region
      %1059 = dma.done [#allocation54], 32
    $region437: #{fused_resnet_forward.1} parent=1 // pred_fallthru
      _
    // Predicated region
    $region438: #{fused_resnet_forward.1} parent=1 // pred_check
      _
    $region439: #{fused_resnet_forward.1} parent=1 // pred_check_branch
      %1061 = sbr.rel (0) target = $region441
    $region440: #{fused_resnet_forward.1} parent=1 // pred_region
      %1062 = dma.done [#allocation54], 32
    $region441: #{fused_resnet_forward.1} parent=1 // pred_fallthru
      _
    // Predicated region
    $region442: #{fused_resnet_forward.1} parent=1 // pred_check
      _
    $region443: #{fused_resnet_forward.1} parent=1 // pred_check_branch
      %1064 = sbr.rel (0) target = $region445
    $region444: #{fused_resnet_forward.1} parent=1 // pred_region
      %1065 = dma.done [#allocation57], 32
    $region445: #{fused_resnet_forward.1} parent=1 // pred_fallthru
      _
    // Predicated region
    $region446: #{fused_resnet_forward.1} parent=1 // pred_check
      _
    $region447: #{fused_resnet_forward.1} parent=1 // pred_check_branch
      %1067 = sbr.rel (0) target = $region449
    $region448: #{fused_resnet_forward.1} parent=1 // pred_region
      %1068 = dma.done [#allocation57], 2048
    $region449: #{fused_resnet_forward.1} parent=1 // pred_fallthru
      _
    // Predicated region
    $region450: #{fused_resnet_forward.1} parent=1 // pred_check
      _
    $region451: #{fused_resnet_forward.1} parent=1 // pred_check_branch
      %1070 = sbr.rel (0) target = $region453
    $region452: #{fused_resnet_forward.1} parent=1 // pred_region
      %1071 = dma.done [#allocation60], 4096
    $region453: #{fused_resnet_forward.1} parent=1 // pred_fallthru
      _
    // Predicated region
    $region454: #{fused_resnet_forward.1} parent=1 // pred_check
      _
    $region455: #{fused_resnet_forward.1} parent=1 // pred_check_branch
      %1073 = sbr.rel (0) target = $region457
    $region456: #{fused_resnet_forward.1} parent=1 // pred_region
      %1074 = dma.done [#allocation60], 2048
    $region457: #{fused_resnet_forward.1} parent=1 // pred_fallthru
      _
    // Predicated region
    $region458: #{fused_resnet_forward.1} parent=1 // pred_check
      _
    $region459: #{fused_resnet_forward.1} parent=1 // pred_check_branch
      %1076 = sbr.rel (0) target = $region461
    $region460: #{fused_resnet_forward.1} parent=1 // pred_region
      %1077 = dma.done [#allocation63], 32
    $region461: #{fused_resnet_forward.1} parent=1 // pred_fallthru
      _
    // Predicated region
    $region462: #{fused_resnet_forward.1} parent=1 // pred_check
      _
    $region463: #{fused_resnet_forward.1} parent=1 // pred_check_branch
      %1079 = sbr.rel (0) target = $region465
    $region464: #{fused_resnet_forward.1} parent=1 // pred_region
      %1080 = dma.done [#allocation63], 32
    $region465: #{fused_resnet_forward.1} parent=1 // pred_fallthru
      _
    // Predicated region
    $region466: #{fused_resnet_forward.1} parent=1 // pred_check
      _
    $region467: #{fused_resnet_forward.1} parent=1 // pred_check_branch
      %1082 = sbr.rel (0) target = $region469
    $region468: #{fused_resnet_forward.1} parent=1 // pred_region
      %1083 = dma.done [#allocation66], 4096
    $region469: #{fused_resnet_forward.1} parent=1 // pred_fallthru
      _
    // Predicated region
    $region470: #{fused_resnet_forward.1} parent=1 // pred_check
      _
    $region471: #{fused_resnet_forward.1} parent=1 // pred_check_branch
      %1085 = sbr.rel (0) target = $region473
    $region472: #{fused_resnet_forward.1} parent=1 // pred_region
      %1086 = dma.done [#allocation66], 4096
    $region473: #{fused_resnet_forward.1} parent=1 // pred_fallthru
      _
    // Predicated region
    $region474: #{fused_resnet_forward.1} parent=1 // pred_check
      _
    $region475: #{fused_resnet_forward.1} parent=1 // pred_check_branch
      %1088 = sbr.rel (0) target = $region477
    $region476: #{fused_resnet_forward.1} parent=1 // pred_region
      %1089 = dma.done [#allocation69], 32
    $region477: #{fused_resnet_forward.1} parent=1 // pred_fallthru
      _
    // Predicated region
    $region478: #{fused_resnet_forward.1} parent=1 // pred_check
      _
    $region479: #{fused_resnet_forward.1} parent=1 // pred_check_branch
      %1091 = sbr.rel (0) target = $region481
    $region480: #{fused_resnet_forward.1} parent=1 // pred_region
      %1092 = dma.done [#allocation69], 32
    $region481: #{fused_resnet_forward.1} parent=1 // pred_fallthru
      _
    // Predicated region
    $region482: #{fused_resnet_forward.1} parent=1 // pred_check
      _
    $region483: #{fused_resnet_forward.1} parent=1 // pred_check_branch
      %1094 = sbr.rel (0) target = $region485
    $region484: #{fused_resnet_forward.1} parent=1 // pred_region
      %1095 = dma.done [#allocation72], 4096
    $region485: #{fused_resnet_forward.1} parent=1 // pred_fallthru
      _
    // Predicated region
    $region486: #{fused_resnet_forward.1} parent=1 // pred_check
      _
    $region487: #{fused_resnet_forward.1} parent=1 // pred_check_branch
      %1097 = sbr.rel (0) target = $region489
    $region488: #{fused_resnet_forward.1} parent=1 // pred_region
      %1098 = dma.done [#allocation72], 4096
    $region489: #{fused_resnet_forward.1} parent=1 // pred_fallthru
      _
    // Predicated region
    $region490: #{fused_resnet_forward.1} parent=1 // pred_check
      _
    $region491: #{fused_resnet_forward.1} parent=1 // pred_check_branch
      %1100 = sbr.rel (0) target = $region493
    $region492: #{fused_resnet_forward.1} parent=1 // pred_region
      %1101 = dma.done [#allocation75], 32
    $region493: #{fused_resnet_forward.1} parent=1 // pred_fallthru
      _
    // Predicated region
    $region494: #{fused_resnet_forward.1} parent=1 // pred_check
      _
    $region495: #{fused_resnet_forward.1} parent=1 // pred_check_branch
      %1103 = sbr.rel (0) target = $region497
    $region496: #{fused_resnet_forward.1} parent=1 // pred_region
      %1104 = dma.done [#allocation75], 32
    $region497: #{fused_resnet_forward.1} parent=1 // pred_fallthru
      _
    // Predicated region
    $region498: #{fused_resnet_forward.1} parent=1 // pred_check
      _
    $region499: #{fused_resnet_forward.1} parent=1 // pred_check_branch
      %1106 = sbr.rel (0) target = $region501
    $region500: #{fused_resnet_forward.1} parent=1 // pred_region
      %1107 = dma.done [#allocation78], 4096
    $region501: #{fused_resnet_forward.1} parent=1 // pred_fallthru
      _
    // Predicated region
    $region502: #{fused_resnet_forward.1} parent=1 // pred_check
      _
    $region503: #{fused_resnet_forward.1} parent=1 // pred_check_branch
      %1109 = sbr.rel (0) target = $region505
    $region504: #{fused_resnet_forward.1} parent=1 // pred_region
      %1110 = dma.done [#allocation78], 4096
    $region505: #{fused_resnet_forward.1} parent=1 // pred_fallthru
      _
    // Predicated region
    $region506: #{fused_resnet_forward.1} parent=1 // pred_check
      _
    $region507: #{fused_resnet_forward.1} parent=1 // pred_check_branch
      %1112 = sbr.rel (0) target = $region509
    $region508: #{fused_resnet_forward.1} parent=1 // pred_region
      %1113 = dma.done [#allocation81], 32
    $region509: #{fused_resnet_forward.1} parent=1 // pred_fallthru
      _
    // Predicated region
    $region510: #{fused_resnet_forward.1} parent=1 // pred_check
      _
    $region511: #{fused_resnet_forward.1} parent=1 // pred_check_branch
      %1115 = sbr.rel (0) target = $region513
    $region512: #{fused_resnet_forward.1} parent=1 // pred_region
      %1116 = dma.done [#allocation81], 32
    $region513: #{fused_resnet_forward.1} parent=1 // pred_fallthru
      _
    // Predicated region
    $region514: #{fused_resnet_forward.1} parent=1 // pred_check
      _
    $region515: #{fused_resnet_forward.1} parent=1 // pred_check_branch
      %1118 = sbr.rel (0) target = $region517
    $region516: #{fused_resnet_forward.1} parent=1 // pred_region
      %1119 = dma.done [#allocation84], 4096
    $region517: #{fused_resnet_forward.1} parent=1 // pred_fallthru
      _
    // Predicated region
    $region518: #{fused_resnet_forward.1} parent=1 // pred_check
      _
    $region519: #{fused_resnet_forward.1} parent=1 // pred_check_branch
      %1121 = sbr.rel (0) target = $region521
    $region520: #{fused_resnet_forward.1} parent=1 // pred_region
      %1122 = dma.done [#allocation84], 4096
    $region521: #{fused_resnet_forward.1} parent=1 // pred_fallthru
      _
    // Predicated region
    $region522: #{fused_resnet_forward.1} parent=1 // pred_check
      _
    $region523: #{fused_resnet_forward.1} parent=1 // pred_check_branch
      %1124 = sbr.rel (0) target = $region525
    $region524: #{fused_resnet_forward.1} parent=1 // pred_region
      %1125 = dma.done [#allocation87], 32
    $region525: #{fused_resnet_forward.1} parent=1 // pred_fallthru
      _
    // Predicated region
    $region526: #{fused_resnet_forward.1} parent=1 // pred_check
      _
    $region527: #{fused_resnet_forward.1} parent=1 // pred_check_branch
      %1127 = sbr.rel (0) target = $region529
    $region528: #{fused_resnet_forward.1} parent=1 // pred_region
      %1128 = dma.done [#allocation87], 32
    $region529: #{fused_resnet_forward.1} parent=1 // pred_fallthru
      _
    // Predicated region
    $region530: #{fused_resnet_forward.1} parent=1 // pred_check
      _
    $region531: #{fused_resnet_forward.1} parent=1 // pred_check_branch
      %1130 = sbr.rel (0) target = $region533
    $region532: #{fused_resnet_forward.1} parent=1 // pred_region
      %1131 = dma.done [#allocation90], 4096
    $region533: #{fused_resnet_forward.1} parent=1 // pred_fallthru
      _
    // Predicated region
    $region534: #{fused_resnet_forward.1} parent=1 // pred_check
      _
    $region535: #{fused_resnet_forward.1} parent=1 // pred_check_branch
      %1133 = sbr.rel (0) target = $region537
    $region536: #{fused_resnet_forward.1} parent=1 // pred_region
      %1134 = dma.done [#allocation90], 4096
    $region537: #{fused_resnet_forward.1} parent=1 // pred_fallthru
      _
    // Predicated region
    $region538: #{fused_resnet_forward.1} parent=1 // pred_check
      _
    $region539: #{fused_resnet_forward.1} parent=1 // pred_check_branch
      %1136 = sbr.rel (0) target = $region541
    $region540: #{fused_resnet_forward.1} parent=1 // pred_region
      %1137 = dma.done [#allocation93], 8192
    $region541: #{fused_resnet_forward.1} parent=1 // pred_fallthru
      _
    // Predicated region
    $region542: #{fused_resnet_forward.1} parent=1 // pred_check
      _
    $region543: #{fused_resnet_forward.1} parent=1 // pred_check_branch
      %1139 = sbr.rel (0) target = $region545
    $region544: #{fused_resnet_forward.1} parent=1 // pred_region
      %1140 = dma.done [#allocation93], 16384
    $region545: #{fused_resnet_forward.1} parent=1 // pred_fallthru
      _
    // Predicated region
    $region546: #{fused_resnet_forward.1} parent=1 // pred_check
      _
    $region547: #{fused_resnet_forward.1} parent=1 // pred_check_branch
      %1142 = sbr.rel (0) target = $region549
    $region548: #{fused_resnet_forward.1} parent=1 // pred_region
      %1143 = dma.done [#allocation96], 8192
    $region549: #{fused_resnet_forward.1} parent=1 // pred_fallthru
      _
    // Predicated region
    $region550: #{fused_resnet_forward.1} parent=1 // pred_check
      _
    $region551: #{fused_resnet_forward.1} parent=1 // pred_check_branch
      %1145 = sbr.rel (0) target = $region553
    $region552: #{fused_resnet_forward.1} parent=1 // pred_region
      %1146 = dma.done [#allocation96], 16384
    $region553: #{fused_resnet_forward.1} parent=1 // pred_fallthru
      _
    // Predicated region
    $region554: #{fused_resnet_forward.1} parent=1 // pred_check
      _
    $region555: #{fused_resnet_forward.1} parent=1 // pred_check_branch
      %1148 = sbr.rel (0) target = $region557
    $region556: #{fused_resnet_forward.1} parent=1 // pred_region
      %1149 = dma.done [#allocation99], 16384
    $region557: #{fused_resnet_forward.1} parent=1 // pred_fallthru
      _
    // Predicated region
    $region558: #{fused_resnet_forward.1} parent=1 // pred_check
      _
    $region559: #{fused_resnet_forward.1} parent=1 // pred_check_branch
      %1151 = sbr.rel (0) target = $region561
    $region560: #{fused_resnet_forward.1} parent=1 // pred_region
      %1152 = dma.done [#allocation99], 64
    $region561: #{fused_resnet_forward.1} parent=1 // pred_fallthru
      _
    // Predicated region
    $region562: #{fused_resnet_forward.1} parent=1 // pred_check
      _
    $region563: #{fused_resnet_forward.1} parent=1 // pred_check_branch
      %1154 = sbr.rel (0) target = $region565
    $region564: #{fused_resnet_forward.1} parent=1 // pred_region
      %1155 = dma.done [#allocation102], 16384
    $region565: #{fused_resnet_forward.1} parent=1 // pred_fallthru
      _
    // Predicated region
    $region566: #{fused_resnet_forward.1} parent=1 // pred_check
      _
    $region567: #{fused_resnet_forward.1} parent=1 // pred_check_branch
      %1157 = sbr.rel (0) target = $region569
    $region568: #{fused_resnet_forward.1} parent=1 // pred_region
      %1158 = dma.done [#allocation102], 16384
    $region569: #{fused_resnet_forward.1} parent=1 // pred_fallthru
      _
    // Predicated region
    $region570: #{fused_resnet_forward.1} parent=1 // pred_check
      _
    $region571: #{fused_resnet_forward.1} parent=1 // pred_check_branch
      %1160 = sbr.rel (0) target = $region573
    $region572: #{fused_resnet_forward.1} parent=1 // pred_region
      %1161 = dma.done [#allocation105], 1024
    $region573: #{fused_resnet_forward.1} parent=1 // pred_fallthru
      _
    %v1163 = vld [vmem:[#allocation2] sm:$0xff]
    %v1164 = vpack.c.bf16 %v1163, %v1163
    %v1165 = vld [vmem:[#allocation104] sm:$0xf]
    %v1166 = vld [vmem:[#allocation104 + $0x4] sm:$0xf]
    %v1167 = vld [vmem:[#allocation104 + $0x8] sm:$0xf]
    %v1168 = vld [vmem:[#allocation104 + $0xc] sm:$0xf]
    %v1169 = vld [vmem:[#allocation104 + $0x10] sm:$0xf]
    %v1170 = vld [vmem:[#allocation104 + $0x14] sm:$0xf]
    %v1171 = vld [vmem:[#allocation104 + $0x18] sm:$0xf]
    %v1172 = vld [vmem:[#allocation104 + $0x1c] sm:$0xf]
    %v1173 = vld [vmem:[#allocation104 + $0x20] sm:$0xf]
    %v1174 = vld [vmem:[#allocation104 + $0x24] sm:$0xf]
    %v1175 = vld [vmem:[#allocation104 + $0x28] sm:$0xf]
    %v1176 = vld [vmem:[#allocation104 + $0x2c] sm:$0xf]
    %v1177 = vld [vmem:[#allocation104 + $0x30] sm:$0xf]
    %v1178 = vld [vmem:[#allocation104 + $0x34] sm:$0xf]
    %v1179 = vld [vmem:[#allocation104 + $0x38] sm:$0xf]
    %v1180 = vld [vmem:[#allocation104 + $0x3c] sm:$0xf]
    %v1181 = vld [vmem:[#allocation5] sm:$0x1]
    %v1183 = vlaneseq
    %v1184 = vshrl.u32 %v1183, 7
    %v1185 = vsub.s32 0, %v1184
    %v1186 = vrot.slane %v1181, %v1185
    %v1204 = vunpack.c.l.b16 %v1165
    %v1205 = vunpack.c.l.b16 %v1166
    %v1206 = vunpack.c.l.b16 %v1167
    %v1207 = vunpack.c.l.b16 %v1168
    %v1208 = vunpack.c.l.b16 %v1169
    %v1209 = vunpack.c.l.b16 %v1170
    %v1210 = vunpack.c.l.b16 %v1171
    %v1211 = vunpack.c.l.b16 %v1172
    %v1212 = vunpack.c.l.b16 %v1173
    %v1213 = vunpack.c.l.b16 %v1174
    %v1214 = vunpack.c.l.b16 %v1175
    %v1215 = vunpack.c.l.b16 %v1176
    %v1216 = vunpack.c.l.b16 %v1177
    %v1217 = vunpack.c.l.b16 %v1178
    %v1218 = vunpack.c.l.b16 %v1179
    %v1219 = vunpack.c.l.b16 %v1180
    %v1220 = vpack.c.b16 %v1205, %v1204
    %v1221 = vpack.c.b16 %v1207, %v1206
    %v1222 = vpack.c.b16 %v1209, %v1208
    %v1223 = vpack.c.b16 %v1211, %v1210
    %v1224 = vpack.c.b16 %v1213, %v1212
    %v1225 = vpack.c.b16 %v1215, %v1214
    %v1226 = vpack.c.b16 %v1217, %v1216
    %v1227 = vpack.c.b16 %v1219, %v1218
    %1236 = vmatprep.subr.bf16.mxu0 0
    %1237 = vmatpush1.bf16.msra.mxu0 %v1220
    %1238 = vmatprep.subr.bf16.mxu0 0
    %1239 = vmatpush1.bf16.msra.mxu0 %v1221
    %1240 = vmatprep.subr.bf16.mxu0 0
    %1241 = vmatpush1.bf16.msra.mxu0 %v1222
    %1242 = vmatprep.subr.bf16.mxu0 0
    %1243 = vmatpush1.bf16.msra.mxu0 %v1223
    %1244 = vmatprep.subr.bf16.mxu0 0
    %1245 = vmatpush1.bf16.msra.mxu0 %v1224
    %1246 = vmatprep.subr.bf16.mxu0 0
    %1247 = vmatpush1.bf16.msra.mxu0 %v1225
    %1248 = vmatprep.subr.bf16.mxu0 0
    %1249 = vmatpush1.bf16.msra.mxu0 %v1226
    %1250 = vmatprep.subr.bf16.mxu0 0
    %1251 = vmatpush1.bf16.msra.mxu0 %v1227
    %1252 = vmatprep.subr.bf16.mxu0 0
    %1253 = vmatpush1.bf16.msra.mxu0 0
    %1254 = vmatprep.subr.bf16.mxu0 0
    %1255 = vmatpush1.bf16.msra.mxu0 0
    %1256 = vmatprep.subr.bf16.mxu0 0
    %1257 = vmatpush1.bf16.msra.mxu0 0
    %1258 = vmatprep.subr.bf16.mxu0 0
    %1259 = vmatpush1.bf16.msra.mxu0 0
    %1260 = vmatprep.subr.bf16.mxu0 0
    %1261 = vmatpush1.bf16.msra.mxu0 0
    %1262 = vmatprep.subr.bf16.mxu0 0
    %1263 = vmatpush1.bf16.msra.mxu0 0
    %1264 = vmatprep.subr.bf16.mxu0 0
    %1265 = vmatpush1.bf16.msra.mxu0 0
    %1266 = vmatprep.subr.bf16.mxu0 0
    %1267 = vmatpush1.bf16.msra.mxu0 0
    %1268 = vmatprep.mubr.bf16.mxu0 0
    %1269 = vmatmul.mubr.bf16.gmra.mrb[0].mxu0 %v1164
    %v1270 = vpop.f32.mrb[0].mxu0
    %v1271 = vadd.f32 %v1186, %v1270
    %v1272 = vpop.f32.mrb[0].mxu0
    %v1273 = vpop.f32.mrb[0].mxu0
    %v1274 = vpop.f32.mrb[0].mxu0
    %1275 = vdwg.mxu0
    %v1276 = vmax.f32 %v1271, 0.0
    %v1277 = vpack.c.bf16 %v1276, %v1276
    %v1278 = vld [vmem:[#allocation11] sm:$0xf]
    %v1279 = vld [vmem:[#allocation11 + $0x4] sm:$0xf]
    %v1280 = vld [vmem:[#allocation11 + $0x8] sm:$0xf]
    %v1281 = vld [vmem:[#allocation11 + $0xc] sm:$0xf]
    %v1282 = vld [vmem:[#allocation11 + $0x10] sm:$0xf]
    %v1283 = vld [vmem:[#allocation11 + $0x14] sm:$0xf]
    %v1284 = vld [vmem:[#allocation11 + $0x18] sm:$0xf]
    %v1285 = vld [vmem:[#allocation11 + $0x1c] sm:$0xf]
    %v1286 = vld [vmem:[#allocation11 + $0x20] sm:$0xf]
    %v1287 = vld [vmem:[#allocation11 + $0x24] sm:$0xf]
    %v1288 = vld [vmem:[#allocation11 + $0x28] sm:$0xf]
    %v1289 = vld [vmem:[#allocation11 + $0x2c] sm:$0xf]
    %v1290 = vld [vmem:[#allocation11 + $0x30] sm:$0xf]
    %v1291 = vld [vmem:[#allocation11 + $0x34] sm:$0xf]
    %v1292 = vld [vmem:[#allocation11 + $0x38] sm:$0xf]
    %v1293 = vld [vmem:[#allocation11 + $0x3c] sm:$0xf]
    %v1294 = vld [vmem:[#allocation8] sm:$0x1]
    %v1296 = vlaneseq
    %v1297 = vshrl.u32 %v1296, 7
    %v1298 = vsub.s32 0, %v1297
    %v1299 = vrot.slane %v1294, %v1298
    %v1317 = vunpack.c.l.b16 %v1278
    %v1318 = vunpack.c.l.b16 %v1279
    %v1319 = vunpack.c.l.b16 %v1280
    %v1320 = vunpack.c.l.b16 %v1281
    %v1321 = vunpack.c.l.b16 %v1282
    %v1322 = vunpack.c.l.b16 %v1283
    %v1323 = vunpack.c.l.b16 %v1284
    %v1324 = vunpack.c.l.b16 %v1285
    %v1325 = vunpack.c.l.b16 %v1286
    %v1326 = vunpack.c.l.b16 %v1287
    %v1327 = vunpack.c.l.b16 %v1288
    %v1328 = vunpack.c.l.b16 %v1289
    %v1329 = vunpack.c.l.b16 %v1290
    %v1330 = vunpack.c.l.b16 %v1291
    %v1331 = vunpack.c.l.b16 %v1292
    %v1332 = vunpack.c.l.b16 %v1293
    %v1333 = vpack.c.b16 %v1318, %v1317
    %v1334 = vpack.c.b16 %v1320, %v1319
    %v1335 = vpack.c.b16 %v1322, %v1321
    %v1336 = vpack.c.b16 %v1324, %v1323
    %v1337 = vpack.c.b16 %v1326, %v1325
    %v1338 = vpack.c.b16 %v1328, %v1327
    %v1339 = vpack.c.b16 %v1330, %v1329
    %v1340 = vpack.c.b16 %v1332, %v1331
    %1349 = vmatprep.subr.bf16.mxu0 0
    %1350 = vmatpush1.bf16.msra.mxu0 %v1333
    %1351 = vmatprep.subr.bf16.mxu0 0
    %1352 = vmatpush1.bf16.msra.mxu0 %v1334
    %1353 = vmatprep.subr.bf16.mxu0 0
    %1354 = vmatpush1.bf16.msra.mxu0 %v1335
    %1355 = vmatprep.subr.bf16.mxu0 0
    %1356 = vmatpush1.bf16.msra.mxu0 %v1336
    %1357 = vmatprep.subr.bf16.mxu0 0
    %1358 = vmatpush1.bf16.msra.mxu0 %v1337
    %1359 = vmatprep.subr.bf16.mxu0 0
    %1360 = vmatpush1.bf16.msra.mxu0 %v1338
    %1361 = vmatprep.subr.bf16.mxu0 0
    %1362 = vmatpush1.bf16.msra.mxu0 %v1339
    %1363 = vmatprep.subr.bf16.mxu0 0
    %1364 = vmatpush1.bf16.msra.mxu0 %v1340
    %1365 = vmatprep.subr.bf16.mxu0 0
    %1366 = vmatpush1.bf16.msra.mxu0 0
    %1367 = vmatprep.subr.bf16.mxu0 0
    %1368 = vmatpush1.bf16.msra.mxu0 0
    %1369 = vmatprep.subr.bf16.mxu0 0
    %1370 = vmatpush1.bf16.msra.mxu0 0
    %1371 = vmatprep.subr.bf16.mxu0 0
    %1372 = vmatpush1.bf16.msra.mxu0 0
    %1373 = vmatprep.subr.bf16.mxu0 0
    %1374 = vmatpush1.bf16.msra.mxu0 0
    %1375 = vmatprep.subr.bf16.mxu0 0
    %1376 = vmatpush1.bf16.msra.mxu0 0
    %1377 = vmatprep.subr.bf16.mxu0 0
    %1378 = vmatpush1.bf16.msra.mxu0 0
    %1379 = vmatprep.subr.bf16.mxu0 0
    %1380 = vmatpush1.bf16.msra.mxu0 0
    %1381 = vmatprep.mubr.bf16.mxu0 0
    %1382 = vmatmul.mubr.bf16.gmra.mrb[0].mxu0 %v1277
    %v1383 = vpop.f32.mrb[0].mxu0
    %v1384 = vadd.f32 %v1299, %v1383
    %v1385 = vpop.f32.mrb[0].mxu0
    %v1386 = vpop.f32.mrb[0].mxu0
    %v1387 = vpop.f32.mrb[0].mxu0
    %1388 = vdwg.mxu0
    %v1389 = vmax.f32 %v1384, 0.0
    %v1390 = vpack.c.bf16 %v1389, %v1389
    %v1391 = vld [vmem:[#allocation13] sm:$0xf]
    %v1392 = vld [vmem:[#allocation13 + $0x4] sm:$0xf]
    %v1393 = vld [vmem:[#allocation13 + $0x8] sm:$0xf]
    %v1394 = vld [vmem:[#allocation13 + $0xc] sm:$0xf]
    %v1395 = vld [vmem:[#allocation13 + $0x10] sm:$0xf]
    %v1396 = vld [vmem:[#allocation13 + $0x14] sm:$0xf]
    %v1397 = vld [vmem:[#allocation13 + $0x18] sm:$0xf]
    %v1398 = vld [vmem:[#allocation13 + $0x1c] sm:$0xf]
    %v1399 = vld [vmem:[#allocation13 + $0x20] sm:$0xf]
    %v1400 = vld [vmem:[#allocation13 + $0x24] sm:$0xf]
    %v1401 = vld [vmem:[#allocation13 + $0x28] sm:$0xf]
    %v1402 = vld [vmem:[#allocation13 + $0x2c] sm:$0xf]
    %v1403 = vld [vmem:[#allocation13 + $0x30] sm:$0xf]
    %v1404 = vld [vmem:[#allocation13 + $0x34] sm:$0xf]
    %v1405 = vld [vmem:[#allocation13 + $0x38] sm:$0xf]
    %v1406 = vld [vmem:[#allocation13 + $0x3c] sm:$0xf]
    %v1407 = vld [vmem:[#allocation10] sm:$0x1]
    %v1409 = vlaneseq
    %v1410 = vshrl.u32 %v1409, 7
    %v1411 = vsub.s32 0, %v1410
    %v1412 = vrot.slane %v1407, %v1411
    %v1430 = vunpack.c.l.b16 %v1391
    %v1431 = vunpack.c.l.b16 %v1392
    %v1432 = vunpack.c.l.b16 %v1393
    %v1433 = vunpack.c.l.b16 %v1394
    %v1434 = vunpack.c.l.b16 %v1395
    %v1435 = vunpack.c.l.b16 %v1396
    %v1436 = vunpack.c.l.b16 %v1397
    %v1437 = vunpack.c.l.b16 %v1398
    %v1438 = vunpack.c.l.b16 %v1399
    %v1439 = vunpack.c.l.b16 %v1400
    %v1440 = vunpack.c.l.b16 %v1401
    %v1441 = vunpack.c.l.b16 %v1402
    %v1442 = vunpack.c.l.b16 %v1403
    %v1443 = vunpack.c.l.b16 %v1404
    %v1444 = vunpack.c.l.b16 %v1405
    %v1445 = vunpack.c.l.b16 %v1406
    %v1446 = vpack.c.b16 %v1431, %v1430
    %v1447 = vpack.c.b16 %v1433, %v1432
    %v1448 = vpack.c.b16 %v1435, %v1434
    %v1449 = vpack.c.b16 %v1437, %v1436
    %v1450 = vpack.c.b16 %v1439, %v1438
    %v1451 = vpack.c.b16 %v1441, %v1440
    %v1452 = vpack.c.b16 %v1443, %v1442
    %v1453 = vpack.c.b16 %v1445, %v1444
    %1462 = vmatprep.subr.bf16.mxu0 0
    %1463 = vmatpush1.bf16.msra.mxu0 %v1446
    %1464 = vmatprep.subr.bf16.mxu0 0
    %1465 = vmatpush1.bf16.msra.mxu0 %v1447
    %1466 = vmatprep.subr.bf16.mxu0 0
    %1467 = vmatpush1.bf16.msra.mxu0 %v1448
    %1468 = vmatprep.subr.bf16.mxu0 0
    %1469 = vmatpush1.bf16.msra.mxu0 %v1449
    %1470 = vmatprep.subr.bf16.mxu0 0
    %1471 = vmatpush1.bf16.msra.mxu0 %v1450
    %1472 = vmatprep.subr.bf16.mxu0 0
    %1473 = vmatpush1.bf16.msra.mxu0 %v1451
    %1474 = vmatprep.subr.bf16.mxu0 0
    %1475 = vmatpush1.bf16.msra.mxu0 %v1452
    %1476 = vmatprep.subr.bf16.mxu0 0
    %1477 = vmatpush1.bf16.msra.mxu0 %v1453
    %1478 = vmatprep.subr.bf16.mxu0 0
    %1479 = vmatpush1.bf16.msra.mxu0 0
    %1480 = vmatprep.subr.bf16.mxu0 0
    %1481 = vmatpush1.bf16.msra.mxu0 0
    %1482 = vmatprep.subr.bf16.mxu0 0
    %1483 = vmatpush1.bf16.msra.mxu0 0
    %1484 = vmatprep.subr.bf16.mxu0 0
    %1485 = vmatpush1.bf16.msra.mxu0 0
    %1486 = vmatprep.subr.bf16.mxu0 0
    %1487 = vmatpush1.bf16.msra.mxu0 0
    %1488 = vmatprep.subr.bf16.mxu0 0
    %1489 = vmatpush1.bf16.msra.mxu0 0
    %1490 = vmatprep.subr.bf16.mxu0 0
    %1491 = vmatpush1.bf16.msra.mxu0 0
    %1492 = vmatprep.subr.bf16.mxu0 0
    %1493 = vmatpush1.bf16.msra.mxu0 0
    %1494 = vmatprep.mubr.bf16.mxu0 0
    %1495 = vmatmul.mubr.bf16.gmra.mrb[0].mxu0 %v1390
    %v1496 = vpop.f32.mrb[0].mxu0
    %v1497 = vadd.f32 %v1412, %v1496
    %v1498 = vpop.f32.mrb[0].mxu0
    %v1499 = vpop.f32.mrb[0].mxu0
    %v1500 = vpop.f32.mrb[0].mxu0
    %1501 = vdwg.mxu0
    %v1502 = vadd.f32 %v1497, %v1276
    %v1503 = vmax.f32 %v1502, 0.0
    %v1504 = vpack.c.bf16 %v1503, %v1503
    %v1505 = vld [vmem:[#allocation17] sm:$0xf]
    %v1506 = vld [vmem:[#allocation17 + $0x4] sm:$0xf]
    %v1507 = vld [vmem:[#allocation17 + $0x8] sm:$0xf]
    %v1508 = vld [vmem:[#allocation17 + $0xc] sm:$0xf]
    %v1509 = vld [vmem:[#allocation17 + $0x10] sm:$0xf]
    %v1510 = vld [vmem:[#allocation17 + $0x14] sm:$0xf]
    %v1511 = vld [vmem:[#allocation17 + $0x18] sm:$0xf]
    %v1512 = vld [vmem:[#allocation17 + $0x1c] sm:$0xf]
    %v1513 = vld [vmem:[#allocation17 + $0x20] sm:$0xf]
    %v1514 = vld [vmem:[#allocation17 + $0x24] sm:$0xf]
    %v1515 = vld [vmem:[#allocation17 + $0x28] sm:$0xf]
    %v1516 = vld [vmem:[#allocation17 + $0x2c] sm:$0xf]
    %v1517 = vld [vmem:[#allocation17 + $0x30] sm:$0xf]
    %v1518 = vld [vmem:[#allocation17 + $0x34] sm:$0xf]
    %v1519 = vld [vmem:[#allocation17 + $0x38] sm:$0xf]
    %v1520 = vld [vmem:[#allocation17 + $0x3c] sm:$0xf]
    %v1521 = vld [vmem:[#allocation14] sm:$0x1]
    %v1523 = vlaneseq
    %v1524 = vshrl.u32 %v1523, 7
    %v1525 = vsub.s32 0, %v1524
    %v1526 = vrot.slane %v1521, %v1525
    %v1544 = vunpack.c.l.b16 %v1505
    %v1545 = vunpack.c.l.b16 %v1506
    %v1546 = vunpack.c.l.b16 %v1507
    %v1547 = vunpack.c.l.b16 %v1508
    %v1548 = vunpack.c.l.b16 %v1509
    %v1549 = vunpack.c.l.b16 %v1510
    %v1550 = vunpack.c.l.b16 %v1511
    %v1551 = vunpack.c.l.b16 %v1512
    %v1552 = vunpack.c.l.b16 %v1513
    %v1553 = vunpack.c.l.b16 %v1514
    %v1554 = vunpack.c.l.b16 %v1515
    %v1555 = vunpack.c.l.b16 %v1516
    %v1556 = vunpack.c.l.b16 %v1517
    %v1557 = vunpack.c.l.b16 %v1518
    %v1558 = vunpack.c.l.b16 %v1519
    %v1559 = vunpack.c.l.b16 %v1520
    %v1560 = vpack.c.b16 %v1545, %v1544
    %v1561 = vpack.c.b16 %v1547, %v1546
    %v1562 = vpack.c.b16 %v1549, %v1548
    %v1563 = vpack.c.b16 %v1551, %v1550
    %v1564 = vpack.c.b16 %v1553, %v1552
    %v1565 = vpack.c.b16 %v1555, %v1554
    %v1566 = vpack.c.b16 %v1557, %v1556
    %v1567 = vpack.c.b16 %v1559, %v1558
    %1576 = vmatprep.subr.bf16.mxu0 0
    %1577 = vmatpush1.bf16.msra.mxu0 %v1560
    %1578 = vmatprep.subr.bf16.mxu0 0
    %1579 = vmatpush1.bf16.msra.mxu0 %v1561
    %1580 = vmatprep.subr.bf16.mxu0 0
    %1581 = vmatpush1.bf16.msra.mxu0 %v1562
    %1582 = vmatprep.subr.bf16.mxu0 0
    %1583 = vmatpush1.bf16.msra.mxu0 %v1563
    %1584 = vmatprep.subr.bf16.mxu0 0
    %1585 = vmatpush1.bf16.msra.mxu0 %v1564
    %1586 = vmatprep.subr.bf16.mxu0 0
    %1587 = vmatpush1.bf16.msra.mxu0 %v1565
    %1588 = vmatprep.subr.bf16.mxu0 0
    %1589 = vmatpush1.bf16.msra.mxu0 %v1566
    %1590 = vmatprep.subr.bf16.mxu0 0
    %1591 = vmatpush1.bf16.msra.mxu0 %v1567
    %1592 = vmatprep.subr.bf16.mxu0 0
    %1593 = vmatpush1.bf16.msra.mxu0 0
    %1594 = vmatprep.subr.bf16.mxu0 0
    %1595 = vmatpush1.bf16.msra.mxu0 0
    %1596 = vmatprep.subr.bf16.mxu0 0
    %1597 = vmatpush1.bf16.msra.mxu0 0
    %1598 = vmatprep.subr.bf16.mxu0 0
    %1599 = vmatpush1.bf16.msra.mxu0 0
    %1600 = vmatprep.subr.bf16.mxu0 0
    %1601 = vmatpush1.bf16.msra.mxu0 0
    %1602 = vmatprep.subr.bf16.mxu0 0
    %1603 = vmatpush1.bf16.msra.mxu0 0
    %1604 = vmatprep.subr.bf16.mxu0 0
    %1605 = vmatpush1.bf16.msra.mxu0 0
    %1606 = vmatprep.subr.bf16.mxu0 0
    %1607 = vmatpush1.bf16.msra.mxu0 0
    %1608 = vmatprep.mubr.bf16.mxu0 0
    %1609 = vmatmul.mubr.bf16.gmra.mrb[0].mxu0 %v1504
    %v1610 = vpop.f32.mrb[0].mxu0
    %v1611 = vadd.f32 %v1526, %v1610
    %v1612 = vpop.f32.mrb[0].mxu0
    %v1613 = vpop.f32.mrb[0].mxu0
    %v1614 = vpop.f32.mrb[0].mxu0
    %1615 = vdwg.mxu0
    %v1616 = vmax.f32 %v1611, 0.0
    %v1617 = vpack.c.bf16 %v1616, %v1616
    %v1618 = vld [vmem:[#allocation19] sm:$0xf]
    %v1619 = vld [vmem:[#allocation19 + $0x4] sm:$0xf]
    %v1620 = vld [vmem:[#allocation19 + $0x8] sm:$0xf]
    %v1621 = vld [vmem:[#allocation19 + $0xc] sm:$0xf]
    %v1622 = vld [vmem:[#allocation19 + $0x10] sm:$0xf]
    %v1623 = vld [vmem:[#allocation19 + $0x14] sm:$0xf]
    %v1624 = vld [vmem:[#allocation19 + $0x18] sm:$0xf]
    %v1625 = vld [vmem:[#allocation19 + $0x1c] sm:$0xf]
    %v1626 = vld [vmem:[#allocation19 + $0x20] sm:$0xf]
    %v1627 = vld [vmem:[#allocation19 + $0x24] sm:$0xf]
    %v1628 = vld [vmem:[#allocation19 + $0x28] sm:$0xf]
    %v1629 = vld [vmem:[#allocation19 + $0x2c] sm:$0xf]
    %v1630 = vld [vmem:[#allocation19 + $0x30] sm:$0xf]
    %v1631 = vld [vmem:[#allocation19 + $0x34] sm:$0xf]
    %v1632 = vld [vmem:[#allocation19 + $0x38] sm:$0xf]
    %v1633 = vld [vmem:[#allocation19 + $0x3c] sm:$0xf]
    %v1634 = vld [vmem:[#allocation16] sm:$0x1]
    %v1636 = vlaneseq
    %v1637 = vshrl.u32 %v1636, 7
    %v1638 = vsub.s32 0, %v1637
    %v1639 = vrot.slane %v1634, %v1638
    %v1657 = vunpack.c.l.b16 %v1618
    %v1658 = vunpack.c.l.b16 %v1619
    %v1659 = vunpack.c.l.b16 %v1620
    %v1660 = vunpack.c.l.b16 %v1621
    %v1661 = vunpack.c.l.b16 %v1622
    %v1662 = vunpack.c.l.b16 %v1623
    %v1663 = vunpack.c.l.b16 %v1624
    %v1664 = vunpack.c.l.b16 %v1625
    %v1665 = vunpack.c.l.b16 %v1626
    %v1666 = vunpack.c.l.b16 %v1627
    %v1667 = vunpack.c.l.b16 %v1628
    %v1668 = vunpack.c.l.b16 %v1629
    %v1669 = vunpack.c.l.b16 %v1630
    %v1670 = vunpack.c.l.b16 %v1631
    %v1671 = vunpack.c.l.b16 %v1632
    %v1672 = vunpack.c.l.b16 %v1633
    %v1673 = vpack.c.b16 %v1658, %v1657
    %v1674 = vpack.c.b16 %v1660, %v1659
    %v1675 = vpack.c.b16 %v1662, %v1661
    %v1676 = vpack.c.b16 %v1664, %v1663
    %v1677 = vpack.c.b16 %v1666, %v1665
    %v1678 = vpack.c.b16 %v1668, %v1667
    %v1679 = vpack.c.b16 %v1670, %v1669
    %v1680 = vpack.c.b16 %v1672, %v1671
    %1689 = vmatprep.subr.bf16.mxu0 0
    %1690 = vmatpush1.bf16.msra.mxu0 %v1673
    %1691 = vmatprep.subr.bf16.mxu0 0
    %1692 = vmatpush1.bf16.msra.mxu0 %v1674
    %1693 = vmatprep.subr.bf16.mxu0 0
    %1694 = vmatpush1.bf16.msra.mxu0 %v1675
    %1695 = vmatprep.subr.bf16.mxu0 0
    %1696 = vmatpush1.bf16.msra.mxu0 %v1676
    %1697 = vmatprep.subr.bf16.mxu0 0
    %1698 = vmatpush1.bf16.msra.mxu0 %v1677
    %1699 = vmatprep.subr.bf16.mxu0 0
    %1700 = vmatpush1.bf16.msra.mxu0 %v1678
    %1701 = vmatprep.subr.bf16.mxu0 0
    %1702 = vmatpush1.bf16.msra.mxu0 %v1679
    %1703 = vmatprep.subr.bf16.mxu0 0
    %1704 = vmatpush1.bf16.msra.mxu0 %v1680
    %1705 = vmatprep.subr.bf16.mxu0 0
    %1706 = vmatpush1.bf16.msra.mxu0 0
    %1707 = vmatprep.subr.bf16.mxu0 0
    %1708 = vmatpush1.bf16.msra.mxu0 0
    %1709 = vmatprep.subr.bf16.mxu0 0
    %1710 = vmatpush1.bf16.msra.mxu0 0
    %1711 = vmatprep.subr.bf16.mxu0 0
    %1712 = vmatpush1.bf16.msra.mxu0 0
    %1713 = vmatprep.subr.bf16.mxu0 0
    %1714 = vmatpush1.bf16.msra.mxu0 0
    %1715 = vmatprep.subr.bf16.mxu0 0
    %1716 = vmatpush1.bf16.msra.mxu0 0
    %1717 = vmatprep.subr.bf16.mxu0 0
    %1718 = vmatpush1.bf16.msra.mxu0 0
    %1719 = vmatprep.subr.bf16.mxu0 0
    %1720 = vmatpush1.bf16.msra.mxu0 0
    %1721 = vmatprep.mubr.bf16.mxu0 0
    %1722 = vmatmul.mubr.bf16.gmra.mrb[0].mxu0 %v1617
    %v1723 = vpop.f32.mrb[0].mxu0
    %v1724 = vadd.f32 %v1639, %v1723
    %v1725 = vpop.f32.mrb[0].mxu0
    %v1726 = vpop.f32.mrb[0].mxu0
    %v1727 = vpop.f32.mrb[0].mxu0
    %1728 = vdwg.mxu0
    %v1729 = vadd.f32 %v1724, %v1503
    %v1730 = vmax.f32 %v1729, 0.0
    %v1731 = vpack.c.bf16 %v1730, %v1730
    %v1732 = vld [vmem:[#allocation23] sm:$0xf]
    %v1733 = vld [vmem:[#allocation23 + $0x4] sm:$0xf]
    %v1734 = vld [vmem:[#allocation23 + $0x8] sm:$0xf]
    %v1735 = vld [vmem:[#allocation23 + $0xc] sm:$0xf]
    %v1736 = vld [vmem:[#allocation23 + $0x10] sm:$0xf]
    %v1737 = vld [vmem:[#allocation23 + $0x14] sm:$0xf]
    %v1738 = vld [vmem:[#allocation23 + $0x18] sm:$0xf]
    %v1739 = vld [vmem:[#allocation23 + $0x1c] sm:$0xf]
    %v1740 = vld [vmem:[#allocation23 + $0x20] sm:$0xf]
    %v1741 = vld [vmem:[#allocation23 + $0x24] sm:$0xf]
    %v1742 = vld [vmem:[#allocation23 + $0x28] sm:$0xf]
    %v1743 = vld [vmem:[#allocation23 + $0x2c] sm:$0xf]
    %v1744 = vld [vmem:[#allocation23 + $0x30] sm:$0xf]
    %v1745 = vld [vmem:[#allocation23 + $0x34] sm:$0xf]
    %v1746 = vld [vmem:[#allocation23 + $0x38] sm:$0xf]
    %v1747 = vld [vmem:[#allocation23 + $0x3c] sm:$0xf]
    %v1748 = vld [vmem:[#allocation20] sm:$0x1]
    %v1750 = vlaneseq
    %v1751 = vshrl.u32 %v1750, 7
    %v1752 = vsub.s32 0, %v1751
    %v1753 = vrot.slane %v1748, %v1752
    %v1771 = vunpack.c.l.b16 %v1732
    %v1772 = vunpack.c.l.b16 %v1733
    %v1773 = vunpack.c.l.b16 %v1734
    %v1774 = vunpack.c.l.b16 %v1735
    %v1775 = vunpack.c.l.b16 %v1736
    %v1776 = vunpack.c.l.b16 %v1737
    %v1777 = vunpack.c.l.b16 %v1738
    %v1778 = vunpack.c.l.b16 %v1739
    %v1779 = vunpack.c.l.b16 %v1740
    %v1780 = vunpack.c.l.b16 %v1741
    %v1781 = vunpack.c.l.b16 %v1742
    %v1782 = vunpack.c.l.b16 %v1743
    %v1783 = vunpack.c.l.b16 %v1744
    %v1784 = vunpack.c.l.b16 %v1745
    %v1785 = vunpack.c.l.b16 %v1746
    %v1786 = vunpack.c.l.b16 %v1747
    %v1787 = vpack.c.b16 %v1772, %v1771
    %v1788 = vpack.c.b16 %v1774, %v1773
    %v1789 = vpack.c.b16 %v1776, %v1775
    %v1790 = vpack.c.b16 %v1778, %v1777
    %v1791 = vpack.c.b16 %v1780, %v1779
    %v1792 = vpack.c.b16 %v1782, %v1781
    %v1793 = vpack.c.b16 %v1784, %v1783
    %v1794 = vpack.c.b16 %v1786, %v1785
    %1803 = vmatprep.subr.bf16.mxu0 0
    %1804 = vmatpush1.bf16.msra.mxu0 %v1787
    %1805 = vmatprep.subr.bf16.mxu0 0
    %1806 = vmatpush1.bf16.msra.mxu0 %v1788
    %1807 = vmatprep.subr.bf16.mxu0 0
    %1808 = vmatpush1.bf16.msra.mxu0 %v1789
    %1809 = vmatprep.subr.bf16.mxu0 0
    %1810 = vmatpush1.bf16.msra.mxu0 %v1790
    %1811 = vmatprep.subr.bf16.mxu0 0
    %1812 = vmatpush1.bf16.msra.mxu0 %v1791
    %1813 = vmatprep.subr.bf16.mxu0 0
    %1814 = vmatpush1.bf16.msra.mxu0 %v1792
    %1815 = vmatprep.subr.bf16.mxu0 0
    %1816 = vmatpush1.bf16.msra.mxu0 %v1793
    %1817 = vmatprep.subr.bf16.mxu0 0
    %1818 = vmatpush1.bf16.msra.mxu0 %v1794
    %1819 = vmatprep.subr.bf16.mxu0 0
    %1820 = vmatpush1.bf16.msra.mxu0 0
    %1821 = vmatprep.subr.bf16.mxu0 0
    %1822 = vmatpush1.bf16.msra.mxu0 0
    %1823 = vmatprep.subr.bf16.mxu0 0
    %1824 = vmatpush1.bf16.msra.mxu0 0
    %1825 = vmatprep.subr.bf16.mxu0 0
    %1826 = vmatpush1.bf16.msra.mxu0 0
    %1827 = vmatprep.subr.bf16.mxu0 0
    %1828 = vmatpush1.bf16.msra.mxu0 0
    %1829 = vmatprep.subr.bf16.mxu0 0
    %1830 = vmatpush1.bf16.msra.mxu0 0
    %1831 = vmatprep.subr.bf16.mxu0 0
    %1832 = vmatpush1.bf16.msra.mxu0 0
    %1833 = vmatprep.subr.bf16.mxu0 0
    %1834 = vmatpush1.bf16.msra.mxu0 0
    %1835 = vmatprep.mubr.bf16.mxu0 0
    %1836 = vmatmul.mubr.bf16.gmra.mrb[0].mxu0 %v1731
    %v1837 = vpop.f32.mrb[0].mxu0
    %v1838 = vadd.f32 %v1753, %v1837
    %v1839 = vpop.f32.mrb[0].mxu0
    %v1840 = vpop.f32.mrb[0].mxu0
    %v1841 = vpop.f32.mrb[0].mxu0
    %1842 = vdwg.mxu0
    %v1843 = vmax.f32 %v1838, 0.0
    %v1844 = vpack.c.bf16 %v1843, %v1843
    %v1845 = vld [vmem:[#allocation25] sm:$0xf]
    %v1846 = vld [vmem:[#allocation25 + $0x4] sm:$0xf]
    %v1847 = vld [vmem:[#allocation25 + $0x8] sm:$0xf]
    %v1848 = vld [vmem:[#allocation25 + $0xc] sm:$0xf]
    %v1849 = vld [vmem:[#allocation25 + $0x10] sm:$0xf]
    %v1850 = vld [vmem:[#allocation25 + $0x14] sm:$0xf]
    %v1851 = vld [vmem:[#allocation25 + $0x18] sm:$0xf]
    %v1852 = vld [vmem:[#allocation25 + $0x1c] sm:$0xf]
    %v1853 = vld [vmem:[#allocation25 + $0x20] sm:$0xf]
    %v1854 = vld [vmem:[#allocation25 + $0x24] sm:$0xf]
    %v1855 = vld [vmem:[#allocation25 + $0x28] sm:$0xf]
    %v1856 = vld [vmem:[#allocation25 + $0x2c] sm:$0xf]
    %v1857 = vld [vmem:[#allocation25 + $0x30] sm:$0xf]
    %v1858 = vld [vmem:[#allocation25 + $0x34] sm:$0xf]
    %v1859 = vld [vmem:[#allocation25 + $0x38] sm:$0xf]
    %v1860 = vld [vmem:[#allocation25 + $0x3c] sm:$0xf]
    %v1861 = vld [vmem:[#allocation22] sm:$0x1]
    %v1863 = vlaneseq
    %v1864 = vshrl.u32 %v1863, 7
    %v1865 = vsub.s32 0, %v1864
    %v1866 = vrot.slane %v1861, %v1865
    %v1884 = vunpack.c.l.b16 %v1845
    %v1885 = vunpack.c.l.b16 %v1846
    %v1886 = vunpack.c.l.b16 %v1847
    %v1887 = vunpack.c.l.b16 %v1848
    %v1888 = vunpack.c.l.b16 %v1849
    %v1889 = vunpack.c.l.b16 %v1850
    %v1890 = vunpack.c.l.b16 %v1851
    %v1891 = vunpack.c.l.b16 %v1852
    %v1892 = vunpack.c.l.b16 %v1853
    %v1893 = vunpack.c.l.b16 %v1854
    %v1894 = vunpack.c.l.b16 %v1855
    %v1895 = vunpack.c.l.b16 %v1856
    %v1896 = vunpack.c.l.b16 %v1857
    %v1897 = vunpack.c.l.b16 %v1858
    %v1898 = vunpack.c.l.b16 %v1859
    %v1899 = vunpack.c.l.b16 %v1860
    %v1900 = vpack.c.b16 %v1885, %v1884
    %v1901 = vpack.c.b16 %v1887, %v1886
    %v1902 = vpack.c.b16 %v1889, %v1888
    %v1903 = vpack.c.b16 %v1891, %v1890
    %v1904 = vpack.c.b16 %v1893, %v1892
    %v1905 = vpack.c.b16 %v1895, %v1894
    %v1906 = vpack.c.b16 %v1897, %v1896
    %v1907 = vpack.c.b16 %v1899, %v1898
    %1916 = vmatprep.subr.bf16.mxu0 0
    %1917 = vmatpush1.bf16.msra.mxu0 %v1900
    %1918 = vmatprep.subr.bf16.mxu0 0
    %1919 = vmatpush1.bf16.msra.mxu0 %v1901
    %1920 = vmatprep.subr.bf16.mxu0 0
    %1921 = vmatpush1.bf16.msra.mxu0 %v1902
    %1922 = vmatprep.subr.bf16.mxu0 0
    %1923 = vmatpush1.bf16.msra.mxu0 %v1903
    %1924 = vmatprep.subr.bf16.mxu0 0
    %1925 = vmatpush1.bf16.msra.mxu0 %v1904
    %1926 = vmatprep.subr.bf16.mxu0 0
    %1927 = vmatpush1.bf16.msra.mxu0 %v1905
    %1928 = vmatprep.subr.bf16.mxu0 0
    %1929 = vmatpush1.bf16.msra.mxu0 %v1906
    %1930 = vmatprep.subr.bf16.mxu0 0
    %1931 = vmatpush1.bf16.msra.mxu0 %v1907
    %1932 = vmatprep.subr.bf16.mxu0 0
    %1933 = vmatpush1.bf16.msra.mxu0 0
    %1934 = vmatprep.subr.bf16.mxu0 0
    %1935 = vmatpush1.bf16.msra.mxu0 0
    %1936 = vmatprep.subr.bf16.mxu0 0
    %1937 = vmatpush1.bf16.msra.mxu0 0
    %1938 = vmatprep.subr.bf16.mxu0 0
    %1939 = vmatpush1.bf16.msra.mxu0 0
    %1940 = vmatprep.subr.bf16.mxu0 0
    %1941 = vmatpush1.bf16.msra.mxu0 0
    %1942 = vmatprep.subr.bf16.mxu0 0
    %1943 = vmatpush1.bf16.msra.mxu0 0
    %1944 = vmatprep.subr.bf16.mxu0 0
    %1945 = vmatpush1.bf16.msra.mxu0 0
    %1946 = vmatprep.subr.bf16.mxu0 0
    %1947 = vmatpush1.bf16.msra.mxu0 0
    %1948 = vmatprep.mubr.bf16.mxu0 0
    %1949 = vmatmul.mubr.bf16.gmra.mrb[0].mxu0 %v1844
    %v1950 = vpop.f32.mrb[0].mxu0
    %v1951 = vadd.f32 %v1866, %v1950
    %v1952 = vpop.f32.mrb[0].mxu0
    %v1953 = vpop.f32.mrb[0].mxu0
    %v1954 = vpop.f32.mrb[0].mxu0
    %1955 = vdwg.mxu0
    %v1956 = vadd.f32 %v1951, %v1730
    %v1957 = vmax.f32 %v1956, 0.0
    %v1958 = vpack.c.bf16 %v1957, %v1957
    %v1959 = vld [vmem:[#allocation31] sm:$0xf]
    %v1960 = vld [vmem:[#allocation31 + $0x4] sm:$0xf]
    %v1961 = vld [vmem:[#allocation31 + $0x8] sm:$0xf]
    %v1962 = vld [vmem:[#allocation31 + $0xc] sm:$0xf]
    %v1963 = vld [vmem:[#allocation31 + $0x10] sm:$0xf]
    %v1964 = vld [vmem:[#allocation31 + $0x14] sm:$0xf]
    %v1965 = vld [vmem:[#allocation31 + $0x18] sm:$0xf]
    %v1966 = vld [vmem:[#allocation31 + $0x1c] sm:$0xf]
    %v1967 = vld [vmem:[#allocation31 + $0x20] sm:$0xf]
    %v1968 = vld [vmem:[#allocation31 + $0x24] sm:$0xf]
    %v1969 = vld [vmem:[#allocation31 + $0x28] sm:$0xf]
    %v1970 = vld [vmem:[#allocation31 + $0x2c] sm:$0xf]
    %v1971 = vld [vmem:[#allocation31 + $0x30] sm:$0xf]
    %v1972 = vld [vmem:[#allocation31 + $0x34] sm:$0xf]
    %v1973 = vld [vmem:[#allocation31 + $0x38] sm:$0xf]
    %v1974 = vld [vmem:[#allocation31 + $0x3c] sm:$0xf]
    %v1975 = vld [vmem:[#allocation26] sm:$0x1]
    %v1977 = vlaneseq
    %v1978 = vshrl.u32 %v1977, 7
    %v1979 = vsub.s32 0, %v1978
    %v1980 = vrot.slane %v1975, %v1979
    %v1998 = vunpack.c.l.b16 %v1959
    %v1999 = vunpack.c.l.b16 %v1960
    %v2000 = vunpack.c.l.b16 %v1961
    %v2001 = vunpack.c.l.b16 %v1962
    %v2002 = vunpack.c.l.b16 %v1963
    %v2003 = vunpack.c.l.b16 %v1964
    %v2004 = vunpack.c.l.b16 %v1965
    %v2005 = vunpack.c.l.b16 %v1966
    %v2006 = vunpack.c.l.b16 %v1967
    %v2007 = vunpack.c.l.b16 %v1968
    %v2008 = vunpack.c.l.b16 %v1969
    %v2009 = vunpack.c.l.b16 %v1970
    %v2010 = vunpack.c.l.b16 %v1971
    %v2011 = vunpack.c.l.b16 %v1972
    %v2012 = vunpack.c.l.b16 %v1973
    %v2013 = vunpack.c.l.b16 %v1974
    %v2014 = vpack.c.b16 %v1999, %v1998
    %v2015 = vpack.c.b16 %v2001, %v2000
    %v2016 = vpack.c.b16 %v2003, %v2002
    %v2017 = vpack.c.b16 %v2005, %v2004
    %v2018 = vpack.c.b16 %v2007, %v2006
    %v2019 = vpack.c.b16 %v2009, %v2008
    %v2020 = vpack.c.b16 %v2011, %v2010
    %v2021 = vpack.c.b16 %v2013, %v2012
    %2030 = vmatprep.subr.bf16.mxu0 0
    %2031 = vmatpush1.bf16.msra.mxu0 %v2014
    %2032 = vmatprep.subr.bf16.mxu0 0
    %2033 = vmatpush1.bf16.msra.mxu0 %v2015
    %2034 = vmatprep.subr.bf16.mxu0 0
    %2035 = vmatpush1.bf16.msra.mxu0 %v2016
    %2036 = vmatprep.subr.bf16.mxu0 0
    %2037 = vmatpush1.bf16.msra.mxu0 %v2017
    %2038 = vmatprep.subr.bf16.mxu0 0
    %2039 = vmatpush1.bf16.msra.mxu0 %v2018
    %2040 = vmatprep.subr.bf16.mxu0 0
    %2041 = vmatpush1.bf16.msra.mxu0 %v2019
    %2042 = vmatprep.subr.bf16.mxu0 0
    %2043 = vmatpush1.bf16.msra.mxu0 %v2020
    %2044 = vmatprep.subr.bf16.mxu0 0
    %2045 = vmatpush1.bf16.msra.mxu0 %v2021
    %2046 = vmatprep.subr.bf16.mxu0 0
    %2047 = vmatpush1.bf16.msra.mxu0 0
    %2048 = vmatprep.subr.bf16.mxu0 0
    %2049 = vmatpush1.bf16.msra.mxu0 0
    %2050 = vmatprep.subr.bf16.mxu0 0
    %2051 = vmatpush1.bf16.msra.mxu0 0
    %2052 = vmatprep.subr.bf16.mxu0 0
    %2053 = vmatpush1.bf16.msra.mxu0 0
    %2054 = vmatprep.subr.bf16.mxu0 0
    %2055 = vmatpush1.bf16.msra.mxu0 0
    %2056 = vmatprep.subr.bf16.mxu0 0
    %2057 = vmatpush1.bf16.msra.mxu0 0
    %2058 = vmatprep.subr.bf16.mxu0 0
    %2059 = vmatpush1.bf16.msra.mxu0 0
    %2060 = vmatprep.subr.bf16.mxu0 0
    %2061 = vmatpush1.bf16.msra.mxu0 0
    %2062 = vmatprep.mubr.bf16.mxu0 0
    %2063 = vmatmul.mubr.bf16.gmra.mrb[0].mxu0 %v1958
    %v2064 = vpop.f32.mrb[0].mxu0
    %v2065 = vadd.f32 %v1980, %v2064
    %v2066 = vpop.f32.mrb[0].mxu0
    %v2067 = vpop.f32.mrb[0].mxu0
    %v2068 = vpop.f32.mrb[0].mxu0
    %2069 = vdwg.mxu0
    %v2070 = vmax.f32 %v2065, 0.0
    %v2071 = vld [vmem:[#allocation34] sm:$0xf]
    %v2072 = vld [vmem:[#allocation34 + $0x4] sm:$0xf]
    %v2073 = vld [vmem:[#allocation34 + $0x8] sm:$0xf]
    %v2074 = vld [vmem:[#allocation34 + $0xc] sm:$0xf]
    %v2075 = vld [vmem:[#allocation34 + $0x10] sm:$0xf]
    %v2076 = vld [vmem:[#allocation34 + $0x14] sm:$0xf]
    %v2077 = vld [vmem:[#allocation34 + $0x18] sm:$0xf]
    %v2078 = vld [vmem:[#allocation34 + $0x1c] sm:$0xf]
    %v2079 = vld [vmem:[#allocation34 + $0x20] sm:$0xf]
    %v2080 = vld [vmem:[#allocation34 + $0x24] sm:$0xf]
    %v2081 = vld [vmem:[#allocation34 + $0x28] sm:$0xf]
    %v2082 = vld [vmem:[#allocation34 + $0x2c] sm:$0xf]
    %v2083 = vld [vmem:[#allocation34 + $0x30] sm:$0xf]
    %v2084 = vld [vmem:[#allocation34 + $0x34] sm:$0xf]
    %v2085 = vld [vmem:[#allocation34 + $0x38] sm:$0xf]
    %v2086 = vld [vmem:[#allocation34 + $0x3c] sm:$0xf]
    %v2087 = vld [vmem:[#allocation29] sm:$0x1]
    %v2089 = vlaneseq
    %v2090 = vshrl.u32 %v2089, 7
    %v2091 = vsub.s32 0, %v2090
    %v2092 = vrot.slane %v2087, %v2091
    %v2110 = vunpack.c.l.b16 %v2071
    %v2111 = vunpack.c.l.b16 %v2072
    %v2112 = vunpack.c.l.b16 %v2073
    %v2113 = vunpack.c.l.b16 %v2074
    %v2114 = vunpack.c.l.b16 %v2075
    %v2115 = vunpack.c.l.b16 %v2076
    %v2116 = vunpack.c.l.b16 %v2077
    %v2117 = vunpack.c.l.b16 %v2078
    %v2118 = vunpack.c.l.b16 %v2079
    %v2119 = vunpack.c.l.b16 %v2080
    %v2120 = vunpack.c.l.b16 %v2081
    %v2121 = vunpack.c.l.b16 %v2082
    %v2122 = vunpack.c.l.b16 %v2083
    %v2123 = vunpack.c.l.b16 %v2084
    %v2124 = vunpack.c.l.b16 %v2085
    %v2125 = vunpack.c.l.b16 %v2086
    %v2126 = vpack.c.b16 %v2111, %v2110
    %v2127 = vpack.c.b16 %v2113, %v2112
    %v2128 = vpack.c.b16 %v2115, %v2114
    %v2129 = vpack.c.b16 %v2117, %v2116
    %v2130 = vpack.c.b16 %v2119, %v2118
    %v2131 = vpack.c.b16 %v2121, %v2120
    %v2132 = vpack.c.b16 %v2123, %v2122
    %v2133 = vpack.c.b16 %v2125, %v2124
    %2142 = vmatprep.subr.bf16.mxu0 0
    %2143 = vmatpush1.bf16.msra.mxu0 %v2126
    %2144 = vmatprep.subr.bf16.mxu0 0
    %2145 = vmatpush1.bf16.msra.mxu0 %v2127
    %2146 = vmatprep.subr.bf16.mxu0 0
    %2147 = vmatpush1.bf16.msra.mxu0 %v2128
    %2148 = vmatprep.subr.bf16.mxu0 0
    %2149 = vmatpush1.bf16.msra.mxu0 %v2129
    %2150 = vmatprep.subr.bf16.mxu0 0
    %2151 = vmatpush1.bf16.msra.mxu0 %v2130
    %2152 = vmatprep.subr.bf16.mxu0 0
    %2153 = vmatpush1.bf16.msra.mxu0 %v2131
    %2154 = vmatprep.subr.bf16.mxu0 0
    %2155 = vmatpush1.bf16.msra.mxu0 %v2132
    %2156 = vmatprep.subr.bf16.mxu0 0
    %2157 = vmatpush1.bf16.msra.mxu0 %v2133
    %2158 = vmatprep.subr.bf16.mxu0 0
    %2159 = vmatpush1.bf16.msra.mxu0 0
    %2160 = vmatprep.subr.bf16.mxu0 0
    %2161 = vmatpush1.bf16.msra.mxu0 0
    %2162 = vmatprep.subr.bf16.mxu0 0
    %2163 = vmatpush1.bf16.msra.mxu0 0
    %2164 = vmatprep.subr.bf16.mxu0 0
    %2165 = vmatpush1.bf16.msra.mxu0 0
    %2166 = vmatprep.subr.bf16.mxu0 0
    %2167 = vmatpush1.bf16.msra.mxu0 0
    %2168 = vmatprep.subr.bf16.mxu0 0
    %2169 = vmatpush1.bf16.msra.mxu0 0
    %2170 = vmatprep.subr.bf16.mxu0 0
    %2171 = vmatpush1.bf16.msra.mxu0 0
    %2172 = vmatprep.subr.bf16.mxu0 0
    %2173 = vmatpush1.bf16.msra.mxu0 0
    %2174 = vmatprep.mubr.bf16.mxu0 0
    %2175 = vmatmul.mubr.bf16.gmra.mrb[0].mxu0 %v1958
    %v2176 = vpop.f32.mrb[0].mxu0
    %v2177 = vadd.f32 %v2092, %v2176
    %v2178 = vpop.f32.mrb[0].mxu0
    %v2179 = vpop.f32.mrb[0].mxu0
    %v2180 = vpop.f32.mrb[0].mxu0
    %2181 = vdwg.mxu0
    %v2182 = vpack.c.bf16 %v2070, %v2070
    %v2183 = vld [vmem:[#allocation32] sm:$0xf]
    %v2184 = vld [vmem:[#allocation32 + $0x4] sm:$0xf]
    %v2185 = vld [vmem:[#allocation32 + $0x8] sm:$0xf]
    %v2186 = vld [vmem:[#allocation32 + $0xc] sm:$0xf]
    %v2187 = vld [vmem:[#allocation32 + $0x10] sm:$0xf]
    %v2188 = vld [vmem:[#allocation32 + $0x14] sm:$0xf]
    %v2189 = vld [vmem:[#allocation32 + $0x18] sm:$0xf]
    %v2190 = vld [vmem:[#allocation32 + $0x1c] sm:$0xf]
    %v2191 = vld [vmem:[#allocation32 + $0x20] sm:$0xf]
    %v2192 = vld [vmem:[#allocation32 + $0x24] sm:$0xf]
    %v2193 = vld [vmem:[#allocation32 + $0x28] sm:$0xf]
    %v2194 = vld [vmem:[#allocation32 + $0x2c] sm:$0xf]
    %v2195 = vld [vmem:[#allocation32 + $0x30] sm:$0xf]
    %v2196 = vld [vmem:[#allocation32 + $0x34] sm:$0xf]
    %v2197 = vld [vmem:[#allocation32 + $0x38] sm:$0xf]
    %v2198 = vld [vmem:[#allocation32 + $0x3c] sm:$0xf]
    %v2199 = vld [vmem:[#allocation28] sm:$0x1]
    %v2201 = vlaneseq
    %v2202 = vshrl.u32 %v2201, 7
    %v2203 = vsub.s32 0, %v2202
    %v2204 = vrot.slane %v2199, %v2203
    %v2222 = vunpack.c.l.b16 %v2183
    %v2223 = vunpack.c.l.b16 %v2184
    %v2224 = vunpack.c.l.b16 %v2185
    %v2225 = vunpack.c.l.b16 %v2186
    %v2226 = vunpack.c.l.b16 %v2187
    %v2227 = vunpack.c.l.b16 %v2188
    %v2228 = vunpack.c.l.b16 %v2189
    %v2229 = vunpack.c.l.b16 %v2190
    %v2230 = vunpack.c.l.b16 %v2191
    %v2231 = vunpack.c.l.b16 %v2192
    %v2232 = vunpack.c.l.b16 %v2193
    %v2233 = vunpack.c.l.b16 %v2194
    %v2234 = vunpack.c.l.b16 %v2195
    %v2235 = vunpack.c.l.b16 %v2196
    %v2236 = vunpack.c.l.b16 %v2197
    %v2237 = vunpack.c.l.b16 %v2198
    %v2238 = vpack.c.b16 %v2223, %v2222
    %v2239 = vpack.c.b16 %v2225, %v2224
    %v2240 = vpack.c.b16 %v2227, %v2226
    %v2241 = vpack.c.b16 %v2229, %v2228
    %v2242 = vpack.c.b16 %v2231, %v2230
    %v2243 = vpack.c.b16 %v2233, %v2232
    %v2244 = vpack.c.b16 %v2235, %v2234
    %v2245 = vpack.c.b16 %v2237, %v2236
    %2254 = vmatprep.subr.bf16.mxu0 0
    %2255 = vmatpush1.bf16.msra.mxu0 %v2238
    %2256 = vmatprep.subr.bf16.mxu0 0
    %2257 = vmatpush1.bf16.msra.mxu0 %v2239
    %2258 = vmatprep.subr.bf16.mxu0 0
    %2259 = vmatpush1.bf16.msra.mxu0 %v2240
    %2260 = vmatprep.subr.bf16.mxu0 0
    %2261 = vmatpush1.bf16.msra.mxu0 %v2241
    %2262 = vmatprep.subr.bf16.mxu0 0
    %2263 = vmatpush1.bf16.msra.mxu0 %v2242
    %2264 = vmatprep.subr.bf16.mxu0 0
    %2265 = vmatpush1.bf16.msra.mxu0 %v2243
    %2266 = vmatprep.subr.bf16.mxu0 0
    %2267 = vmatpush1.bf16.msra.mxu0 %v2244
    %2268 = vmatprep.subr.bf16.mxu0 0
    %2269 = vmatpush1.bf16.msra.mxu0 %v2245
    %2270 = vmatprep.subr.bf16.mxu0 0
    %2271 = vmatpush1.bf16.msra.mxu0 0
    %2272 = vmatprep.subr.bf16.mxu0 0
    %2273 = vmatpush1.bf16.msra.mxu0 0
    %2274 = vmatprep.subr.bf16.mxu0 0
    %2275 = vmatpush1.bf16.msra.mxu0 0
    %2276 = vmatprep.subr.bf16.mxu0 0
    %2277 = vmatpush1.bf16.msra.mxu0 0
    %2278 = vmatprep.subr.bf16.mxu0 0
    %2279 = vmatpush1.bf16.msra.mxu0 0
    %2280 = vmatprep.subr.bf16.mxu0 0
    %2281 = vmatpush1.bf16.msra.mxu0 0
    %2282 = vmatprep.subr.bf16.mxu0 0
    %2283 = vmatpush1.bf16.msra.mxu0 0
    %2284 = vmatprep.subr.bf16.mxu0 0
    %2285 = vmatpush1.bf16.msra.mxu0 0
    %2286 = vmatprep.mubr.bf16.mxu0 0
    %2287 = vmatmul.mubr.bf16.gmra.mrb[0].mxu0 %v2182
    %v2288 = vpop.f32.mrb[0].mxu0
    %v2289 = vadd.f32 %v2204, %v2288
    %v2290 = vpop.f32.mrb[0].mxu0
    %v2291 = vpop.f32.mrb[0].mxu0
    %v2292 = vpop.f32.mrb[0].mxu0
    %2293 = vdwg.mxu0
    %v2294 = vadd.f32 %v2289, %v2177
    %v2295 = vmax.f32 %v2294, 0.0
    %v2296 = vpack.c.bf16 %v2295, %v2295
    %v2297 = vld [vmem:[#allocation38] sm:$0xf]
    %v2298 = vld [vmem:[#allocation38 + $0x4] sm:$0xf]
    %v2299 = vld [vmem:[#allocation38 + $0x8] sm:$0xf]
    %v2300 = vld [vmem:[#allocation38 + $0xc] sm:$0xf]
    %v2301 = vld [vmem:[#allocation38 + $0x10] sm:$0xf]
    %v2302 = vld [vmem:[#allocation38 + $0x14] sm:$0xf]
    %v2303 = vld [vmem:[#allocation38 + $0x18] sm:$0xf]
    %v2304 = vld [vmem:[#allocation38 + $0x1c] sm:$0xf]
    %v2305 = vld [vmem:[#allocation38 + $0x20] sm:$0xf]
    %v2306 = vld [vmem:[#allocation38 + $0x24] sm:$0xf]
    %v2307 = vld [vmem:[#allocation38 + $0x28] sm:$0xf]
    %v2308 = vld [vmem:[#allocation38 + $0x2c] sm:$0xf]
    %v2309 = vld [vmem:[#allocation38 + $0x30] sm:$0xf]
    %v2310 = vld [vmem:[#allocation38 + $0x34] sm:$0xf]
    %v2311 = vld [vmem:[#allocation38 + $0x38] sm:$0xf]
    %v2312 = vld [vmem:[#allocation38 + $0x3c] sm:$0xf]
    %v2313 = vld [vmem:[#allocation35] sm:$0x1]
    %v2315 = vlaneseq
    %v2316 = vshrl.u32 %v2315, 7
    %v2317 = vsub.s32 0, %v2316
    %v2318 = vrot.slane %v2313, %v2317
    %v2336 = vunpack.c.l.b16 %v2297
    %v2337 = vunpack.c.l.b16 %v2298
    %v2338 = vunpack.c.l.b16 %v2299
    %v2339 = vunpack.c.l.b16 %v2300
    %v2340 = vunpack.c.l.b16 %v2301
    %v2341 = vunpack.c.l.b16 %v2302
    %v2342 = vunpack.c.l.b16 %v2303
    %v2343 = vunpack.c.l.b16 %v2304
    %v2344 = vunpack.c.l.b16 %v2305
    %v2345 = vunpack.c.l.b16 %v2306
    %v2346 = vunpack.c.l.b16 %v2307
    %v2347 = vunpack.c.l.b16 %v2308
    %v2348 = vunpack.c.l.b16 %v2309
    %v2349 = vunpack.c.l.b16 %v2310
    %v2350 = vunpack.c.l.b16 %v2311
    %v2351 = vunpack.c.l.b16 %v2312
    %v2352 = vpack.c.b16 %v2337, %v2336
    %v2353 = vpack.c.b16 %v2339, %v2338
    %v2354 = vpack.c.b16 %v2341, %v2340
    %v2355 = vpack.c.b16 %v2343, %v2342
    %v2356 = vpack.c.b16 %v2345, %v2344
    %v2357 = vpack.c.b16 %v2347, %v2346
    %v2358 = vpack.c.b16 %v2349, %v2348
    %v2359 = vpack.c.b16 %v2351, %v2350
    %2368 = vmatprep.subr.bf16.mxu0 0
    %2369 = vmatpush1.bf16.msra.mxu0 %v2352
    %2370 = vmatprep.subr.bf16.mxu0 0
    %2371 = vmatpush1.bf16.msra.mxu0 %v2353
    %2372 = vmatprep.subr.bf16.mxu0 0
    %2373 = vmatpush1.bf16.msra.mxu0 %v2354
    %2374 = vmatprep.subr.bf16.mxu0 0
    %2375 = vmatpush1.bf16.msra.mxu0 %v2355
    %2376 = vmatprep.subr.bf16.mxu0 0
    %2377 = vmatpush1.bf16.msra.mxu0 %v2356
    %2378 = vmatprep.subr.bf16.mxu0 0
    %2379 = vmatpush1.bf16.msra.mxu0 %v2357
    %2380 = vmatprep.subr.bf16.mxu0 0
    %2381 = vmatpush1.bf16.msra.mxu0 %v2358
    %2382 = vmatprep.subr.bf16.mxu0 0
    %2383 = vmatpush1.bf16.msra.mxu0 %v2359
    %2384 = vmatprep.subr.bf16.mxu0 0
    %2385 = vmatpush1.bf16.msra.mxu0 0
    %2386 = vmatprep.subr.bf16.mxu0 0
    %2387 = vmatpush1.bf16.msra.mxu0 0
    %2388 = vmatprep.subr.bf16.mxu0 0
    %2389 = vmatpush1.bf16.msra.mxu0 0
    %2390 = vmatprep.subr.bf16.mxu0 0
    %2391 = vmatpush1.bf16.msra.mxu0 0
    %2392 = vmatprep.subr.bf16.mxu0 0
    %2393 = vmatpush1.bf16.msra.mxu0 0
    %2394 = vmatprep.subr.bf16.mxu0 0
    %2395 = vmatpush1.bf16.msra.mxu0 0
    %2396 = vmatprep.subr.bf16.mxu0 0
    %2397 = vmatpush1.bf16.msra.mxu0 0
    %2398 = vmatprep.subr.bf16.mxu0 0
    %2399 = vmatpush1.bf16.msra.mxu0 0
    %2400 = vmatprep.mubr.bf16.mxu0 0
    %2401 = vmatmul.mubr.bf16.gmra.mrb[0].mxu0 %v2296
    %v2402 = vpop.f32.mrb[0].mxu0
    %v2403 = vadd.f32 %v2318, %v2402
    %v2404 = vpop.f32.mrb[0].mxu0
    %v2405 = vpop.f32.mrb[0].mxu0
    %v2406 = vpop.f32.mrb[0].mxu0
    %2407 = vdwg.mxu0
    %v2408 = vmax.f32 %v2403, 0.0
    %v2409 = vpack.c.bf16 %v2408, %v2408
    %v2410 = vld [vmem:[#allocation40] sm:$0xf]
    %v2411 = vld [vmem:[#allocation40 + $0x4] sm:$0xf]
    %v2412 = vld [vmem:[#allocation40 + $0x8] sm:$0xf]
    %v2413 = vld [vmem:[#allocation40 + $0xc] sm:$0xf]
    %v2414 = vld [vmem:[#allocation40 + $0x10] sm:$0xf]
    %v2415 = vld [vmem:[#allocation40 + $0x14] sm:$0xf]
    %v2416 = vld [vmem:[#allocation40 + $0x18] sm:$0xf]
    %v2417 = vld [vmem:[#allocation40 + $0x1c] sm:$0xf]
    %v2418 = vld [vmem:[#allocation40 + $0x20] sm:$0xf]
    %v2419 = vld [vmem:[#allocation40 + $0x24] sm:$0xf]
    %v2420 = vld [vmem:[#allocation40 + $0x28] sm:$0xf]
    %v2421 = vld [vmem:[#allocation40 + $0x2c] sm:$0xf]
    %v2422 = vld [vmem:[#allocation40 + $0x30] sm:$0xf]
    %v2423 = vld [vmem:[#allocation40 + $0x34] sm:$0xf]
    %v2424 = vld [vmem:[#allocation40 + $0x38] sm:$0xf]
    %v2425 = vld [vmem:[#allocation40 + $0x3c] sm:$0xf]
    %v2426 = vld [vmem:[#allocation37] sm:$0x1]
    %v2428 = vlaneseq
    %v2429 = vshrl.u32 %v2428, 7
    %v2430 = vsub.s32 0, %v2429
    %v2431 = vrot.slane %v2426, %v2430
    %v2449 = vunpack.c.l.b16 %v2410
    %v2450 = vunpack.c.l.b16 %v2411
    %v2451 = vunpack.c.l.b16 %v2412
    %v2452 = vunpack.c.l.b16 %v2413
    %v2453 = vunpack.c.l.b16 %v2414
    %v2454 = vunpack.c.l.b16 %v2415
    %v2455 = vunpack.c.l.b16 %v2416
    %v2456 = vunpack.c.l.b16 %v2417
    %v2457 = vunpack.c.l.b16 %v2418
    %v2458 = vunpack.c.l.b16 %v2419
    %v2459 = vunpack.c.l.b16 %v2420
    %v2460 = vunpack.c.l.b16 %v2421
    %v2461 = vunpack.c.l.b16 %v2422
    %v2462 = vunpack.c.l.b16 %v2423
    %v2463 = vunpack.c.l.b16 %v2424
    %v2464 = vunpack.c.l.b16 %v2425
    %v2465 = vpack.c.b16 %v2450, %v2449
    %v2466 = vpack.c.b16 %v2452, %v2451
    %v2467 = vpack.c.b16 %v2454, %v2453
    %v2468 = vpack.c.b16 %v2456, %v2455
    %v2469 = vpack.c.b16 %v2458, %v2457
    %v2470 = vpack.c.b16 %v2460, %v2459
    %v2471 = vpack.c.b16 %v2462, %v2461
    %v2472 = vpack.c.b16 %v2464, %v2463
    %2481 = vmatprep.subr.bf16.mxu0 0
    %2482 = vmatpush1.bf16.msra.mxu0 %v2465
    %2483 = vmatprep.subr.bf16.mxu0 0
    %2484 = vmatpush1.bf16.msra.mxu0 %v2466
    %2485 = vmatprep.subr.bf16.mxu0 0
    %2486 = vmatpush1.bf16.msra.mxu0 %v2467
    %2487 = vmatprep.subr.bf16.mxu0 0
    %2488 = vmatpush1.bf16.msra.mxu0 %v2468
    %2489 = vmatprep.subr.bf16.mxu0 0
    %2490 = vmatpush1.bf16.msra.mxu0 %v2469
    %2491 = vmatprep.subr.bf16.mxu0 0
    %2492 = vmatpush1.bf16.msra.mxu0 %v2470
    %2493 = vmatprep.subr.bf16.mxu0 0
    %2494 = vmatpush1.bf16.msra.mxu0 %v2471
    %2495 = vmatprep.subr.bf16.mxu0 0
    %2496 = vmatpush1.bf16.msra.mxu0 %v2472
    %2497 = vmatprep.subr.bf16.mxu0 0
    %2498 = vmatpush1.bf16.msra.mxu0 0
    %2499 = vmatprep.subr.bf16.mxu0 0
    %2500 = vmatpush1.bf16.msra.mxu0 0
    %2501 = vmatprep.subr.bf16.mxu0 0
    %2502 = vmatpush1.bf16.msra.mxu0 0
    %2503 = vmatprep.subr.bf16.mxu0 0
    %2504 = vmatpush1.bf16.msra.mxu0 0
    %2505 = vmatprep.subr.bf16.mxu0 0
    %2506 = vmatpush1.bf16.msra.mxu0 0
    %2507 = vmatprep.subr.bf16.mxu0 0
    %2508 = vmatpush1.bf16.msra.mxu0 0
    %2509 = vmatprep.subr.bf16.mxu0 0
    %2510 = vmatpush1.bf16.msra.mxu0 0
    %2511 = vmatprep.subr.bf16.mxu0 0
    %2512 = vmatpush1.bf16.msra.mxu0 0
    %2513 = vmatprep.mubr.bf16.mxu0 0
    %2514 = vmatmul.mubr.bf16.gmra.mrb[0].mxu0 %v2409
    %v2515 = vpop.f32.mrb[0].mxu0
    %v2516 = vadd.f32 %v2431, %v2515
    %v2517 = vpop.f32.mrb[0].mxu0
    %v2518 = vpop.f32.mrb[0].mxu0
    %v2519 = vpop.f32.mrb[0].mxu0
    %2520 = vdwg.mxu0
    %v2521 = vadd.f32 %v2516, %v2295
    %v2522 = vmax.f32 %v2521, 0.0
    %v2523 = vpack.c.bf16 %v2522, %v2522
    %v2524 = vld [vmem:[#allocation44] sm:$0xf]
    %v2525 = vld [vmem:[#allocation44 + $0x4] sm:$0xf]
    %v2526 = vld [vmem:[#allocation44 + $0x8] sm:$0xf]
    %v2527 = vld [vmem:[#allocation44 + $0xc] sm:$0xf]
    %v2528 = vld [vmem:[#allocation44 + $0x10] sm:$0xf]
    %v2529 = vld [vmem:[#allocation44 + $0x14] sm:$0xf]
    %v2530 = vld [vmem:[#allocation44 + $0x18] sm:$0xf]
    %v2531 = vld [vmem:[#allocation44 + $0x1c] sm:$0xf]
    %v2532 = vld [vmem:[#allocation44 + $0x20] sm:$0xf]
    %v2533 = vld [vmem:[#allocation44 + $0x24] sm:$0xf]
    %v2534 = vld [vmem:[#allocation44 + $0x28] sm:$0xf]
    %v2535 = vld [vmem:[#allocation44 + $0x2c] sm:$0xf]
    %v2536 = vld [vmem:[#allocation44 + $0x30] sm:$0xf]
    %v2537 = vld [vmem:[#allocation44 + $0x34] sm:$0xf]
    %v2538 = vld [vmem:[#allocation44 + $0x38] sm:$0xf]
    %v2539 = vld [vmem:[#allocation44 + $0x3c] sm:$0xf]
    %v2540 = vld [vmem:[#allocation41] sm:$0x1]
    %v2542 = vlaneseq
    %v2543 = vshrl.u32 %v2542, 7
    %v2544 = vsub.s32 0, %v2543
    %v2545 = vrot.slane %v2540, %v2544
    %v2563 = vunpack.c.l.b16 %v2524
    %v2564 = vunpack.c.l.b16 %v2525
    %v2565 = vunpack.c.l.b16 %v2526
    %v2566 = vunpack.c.l.b16 %v2527
    %v2567 = vunpack.c.l.b16 %v2528
    %v2568 = vunpack.c.l.b16 %v2529
    %v2569 = vunpack.c.l.b16 %v2530
    %v2570 = vunpack.c.l.b16 %v2531
    %v2571 = vunpack.c.l.b16 %v2532
    %v2572 = vunpack.c.l.b16 %v2533
    %v2573 = vunpack.c.l.b16 %v2534
    %v2574 = vunpack.c.l.b16 %v2535
    %v2575 = vunpack.c.l.b16 %v2536
    %v2576 = vunpack.c.l.b16 %v2537
    %v2577 = vunpack.c.l.b16 %v2538
    %v2578 = vunpack.c.l.b16 %v2539
    %v2579 = vpack.c.b16 %v2564, %v2563
    %v2580 = vpack.c.b16 %v2566, %v2565
    %v2581 = vpack.c.b16 %v2568, %v2567
    %v2582 = vpack.c.b16 %v2570, %v2569
    %v2583 = vpack.c.b16 %v2572, %v2571
    %v2584 = vpack.c.b16 %v2574, %v2573
    %v2585 = vpack.c.b16 %v2576, %v2575
    %v2586 = vpack.c.b16 %v2578, %v2577
    %2595 = vmatprep.subr.bf16.mxu0 0
    %2596 = vmatpush1.bf16.msra.mxu0 %v2579
    %2597 = vmatprep.subr.bf16.mxu0 0
    %2598 = vmatpush1.bf16.msra.mxu0 %v2580
    %2599 = vmatprep.subr.bf16.mxu0 0
    %2600 = vmatpush1.bf16.msra.mxu0 %v2581
    %2601 = vmatprep.subr.bf16.mxu0 0
    %2602 = vmatpush1.bf16.msra.mxu0 %v2582
    %2603 = vmatprep.subr.bf16.mxu0 0
    %2604 = vmatpush1.bf16.msra.mxu0 %v2583
    %2605 = vmatprep.subr.bf16.mxu0 0
    %2606 = vmatpush1.bf16.msra.mxu0 %v2584
    %2607 = vmatprep.subr.bf16.mxu0 0
    %2608 = vmatpush1.bf16.msra.mxu0 %v2585
    %2609 = vmatprep.subr.bf16.mxu0 0
    %2610 = vmatpush1.bf16.msra.mxu0 %v2586
    %2611 = vmatprep.subr.bf16.mxu0 0
    %2612 = vmatpush1.bf16.msra.mxu0 0
    %2613 = vmatprep.subr.bf16.mxu0 0
    %2614 = vmatpush1.bf16.msra.mxu0 0
    %2615 = vmatprep.subr.bf16.mxu0 0
    %2616 = vmatpush1.bf16.msra.mxu0 0
    %2617 = vmatprep.subr.bf16.mxu0 0
    %2618 = vmatpush1.bf16.msra.mxu0 0
    %2619 = vmatprep.subr.bf16.mxu0 0
    %2620 = vmatpush1.bf16.msra.mxu0 0
    %2621 = vmatprep.subr.bf16.mxu0 0
    %2622 = vmatpush1.bf16.msra.mxu0 0
    %2623 = vmatprep.subr.bf16.mxu0 0
    %2624 = vmatpush1.bf16.msra.mxu0 0
    %2625 = vmatprep.subr.bf16.mxu0 0
    %2626 = vmatpush1.bf16.msra.mxu0 0
    %2627 = vmatprep.mubr.bf16.mxu0 0
    %2628 = vmatmul.mubr.bf16.gmra.mrb[0].mxu0 %v2523
    %v2629 = vpop.f32.mrb[0].mxu0
    %v2630 = vadd.f32 %v2545, %v2629
    %v2631 = vpop.f32.mrb[0].mxu0
    %v2632 = vpop.f32.mrb[0].mxu0
    %v2633 = vpop.f32.mrb[0].mxu0
    %2634 = vdwg.mxu0
    %v2635 = vmax.f32 %v2630, 0.0
    %v2636 = vpack.c.bf16 %v2635, %v2635
    %v2637 = vld [vmem:[#allocation46] sm:$0xf]
    %v2638 = vld [vmem:[#allocation46 + $0x4] sm:$0xf]
    %v2639 = vld [vmem:[#allocation46 + $0x8] sm:$0xf]
    %v2640 = vld [vmem:[#allocation46 + $0xc] sm:$0xf]
    %v2641 = vld [vmem:[#allocation46 + $0x10] sm:$0xf]
    %v2642 = vld [vmem:[#allocation46 + $0x14] sm:$0xf]
    %v2643 = vld [vmem:[#allocation46 + $0x18] sm:$0xf]
    %v2644 = vld [vmem:[#allocation46 + $0x1c] sm:$0xf]
    %v2645 = vld [vmem:[#allocation46 + $0x20] sm:$0xf]
    %v2646 = vld [vmem:[#allocation46 + $0x24] sm:$0xf]
    %v2647 = vld [vmem:[#allocation46 + $0x28] sm:$0xf]
    %v2648 = vld [vmem:[#allocation46 + $0x2c] sm:$0xf]
    %v2649 = vld [vmem:[#allocation46 + $0x30] sm:$0xf]
    %v2650 = vld [vmem:[#allocation46 + $0x34] sm:$0xf]
    %v2651 = vld [vmem:[#allocation46 + $0x38] sm:$0xf]
    %v2652 = vld [vmem:[#allocation46 + $0x3c] sm:$0xf]
    %v2653 = vld [vmem:[#allocation43] sm:$0x1]
    %v2655 = vlaneseq
    %v2656 = vshrl.u32 %v2655, 7
    %v2657 = vsub.s32 0, %v2656
    %v2658 = vrot.slane %v2653, %v2657
    %v2676 = vunpack.c.l.b16 %v2637
    %v2677 = vunpack.c.l.b16 %v2638
    %v2678 = vunpack.c.l.b16 %v2639
    %v2679 = vunpack.c.l.b16 %v2640
    %v2680 = vunpack.c.l.b16 %v2641
    %v2681 = vunpack.c.l.b16 %v2642
    %v2682 = vunpack.c.l.b16 %v2643
    %v2683 = vunpack.c.l.b16 %v2644
    %v2684 = vunpack.c.l.b16 %v2645
    %v2685 = vunpack.c.l.b16 %v2646
    %v2686 = vunpack.c.l.b16 %v2647
    %v2687 = vunpack.c.l.b16 %v2648
    %v2688 = vunpack.c.l.b16 %v2649
    %v2689 = vunpack.c.l.b16 %v2650
    %v2690 = vunpack.c.l.b16 %v2651
    %v2691 = vunpack.c.l.b16 %v2652
    %v2692 = vpack.c.b16 %v2677, %v2676
    %v2693 = vpack.c.b16 %v2679, %v2678
    %v2694 = vpack.c.b16 %v2681, %v2680
    %v2695 = vpack.c.b16 %v2683, %v2682
    %v2696 = vpack.c.b16 %v2685, %v2684
    %v2697 = vpack.c.b16 %v2687, %v2686
    %v2698 = vpack.c.b16 %v2689, %v2688
    %v2699 = vpack.c.b16 %v2691, %v2690
    %2708 = vmatprep.subr.bf16.mxu0 0
    %2709 = vmatpush1.bf16.msra.mxu0 %v2692
    %2710 = vmatprep.subr.bf16.mxu0 0
    %2711 = vmatpush1.bf16.msra.mxu0 %v2693
    %2712 = vmatprep.subr.bf16.mxu0 0
    %2713 = vmatpush1.bf16.msra.mxu0 %v2694
    %2714 = vmatprep.subr.bf16.mxu0 0
    %2715 = vmatpush1.bf16.msra.mxu0 %v2695
    %2716 = vmatprep.subr.bf16.mxu0 0
    %2717 = vmatpush1.bf16.msra.mxu0 %v2696
    %2718 = vmatprep.subr.bf16.mxu0 0
    %2719 = vmatpush1.bf16.msra.mxu0 %v2697
    %2720 = vmatprep.subr.bf16.mxu0 0
    %2721 = vmatpush1.bf16.msra.mxu0 %v2698
    %2722 = vmatprep.subr.bf16.mxu0 0
    %2723 = vmatpush1.bf16.msra.mxu0 %v2699
    %2724 = vmatprep.subr.bf16.mxu0 0
    %2725 = vmatpush1.bf16.msra.mxu0 0
    %2726 = vmatprep.subr.bf16.mxu0 0
    %2727 = vmatpush1.bf16.msra.mxu0 0
    %2728 = vmatprep.subr.bf16.mxu0 0
    %2729 = vmatpush1.bf16.msra.mxu0 0
    %2730 = vmatprep.subr.bf16.mxu0 0
    %2731 = vmatpush1.bf16.msra.mxu0 0
    %2732 = vmatprep.subr.bf16.mxu0 0
    %2733 = vmatpush1.bf16.msra.mxu0 0
    %2734 = vmatprep.subr.bf16.mxu0 0
    %2735 = vmatpush1.bf16.msra.mxu0 0
    %2736 = vmatprep.subr.bf16.mxu0 0
    %2737 = vmatpush1.bf16.msra.mxu0 0
    %2738 = vmatprep.subr.bf16.mxu0 0
    %2739 = vmatpush1.bf16.msra.mxu0 0
    %2740 = vmatprep.mubr.bf16.mxu0 0
    %2741 = vmatmul.mubr.bf16.gmra.mrb[0].mxu0 %v2636
    %v2742 = vpop.f32.mrb[0].mxu0
    %v2743 = vadd.f32 %v2658, %v2742
    %v2744 = vpop.f32.mrb[0].mxu0
    %v2745 = vpop.f32.mrb[0].mxu0
    %v2746 = vpop.f32.mrb[0].mxu0
    %2747 = vdwg.mxu0
    %v2748 = vadd.f32 %v2743, %v2522
    %v2749 = vmax.f32 %v2748, 0.0
    %v2750 = vpack.c.bf16 %v2749, %v2749
    %v2751 = vld [vmem:[#allocation50] sm:$0xf]
    %v2752 = vld [vmem:[#allocation50 + $0x4] sm:$0xf]
    %v2753 = vld [vmem:[#allocation50 + $0x8] sm:$0xf]
    %v2754 = vld [vmem:[#allocation50 + $0xc] sm:$0xf]
    %v2755 = vld [vmem:[#allocation50 + $0x10] sm:$0xf]
    %v2756 = vld [vmem:[#allocation50 + $0x14] sm:$0xf]
    %v2757 = vld [vmem:[#allocation50 + $0x18] sm:$0xf]
    %v2758 = vld [vmem:[#allocation50 + $0x1c] sm:$0xf]
    %v2759 = vld [vmem:[#allocation50 + $0x20] sm:$0xf]
    %v2760 = vld [vmem:[#allocation50 + $0x24] sm:$0xf]
    %v2761 = vld [vmem:[#allocation50 + $0x28] sm:$0xf]
    %v2762 = vld [vmem:[#allocation50 + $0x2c] sm:$0xf]
    %v2763 = vld [vmem:[#allocation50 + $0x30] sm:$0xf]
    %v2764 = vld [vmem:[#allocation50 + $0x34] sm:$0xf]
    %v2765 = vld [vmem:[#allocation50 + $0x38] sm:$0xf]
    %v2766 = vld [vmem:[#allocation50 + $0x3c] sm:$0xf]
    %v2767 = vld [vmem:[#allocation47] sm:$0x1]
    %v2769 = vlaneseq
    %v2770 = vshrl.u32 %v2769, 7
    %v2771 = vsub.s32 0, %v2770
    %v2772 = vrot.slane %v2767, %v2771
    %v2790 = vunpack.c.l.b16 %v2751
    %v2791 = vunpack.c.l.b16 %v2752
    %v2792 = vunpack.c.l.b16 %v2753
    %v2793 = vunpack.c.l.b16 %v2754
    %v2794 = vunpack.c.l.b16 %v2755
    %v2795 = vunpack.c.l.b16 %v2756
    %v2796 = vunpack.c.l.b16 %v2757
    %v2797 = vunpack.c.l.b16 %v2758
    %v2798 = vunpack.c.l.b16 %v2759
    %v2799 = vunpack.c.l.b16 %v2760
    %v2800 = vunpack.c.l.b16 %v2761
    %v2801 = vunpack.c.l.b16 %v2762
    %v2802 = vunpack.c.l.b16 %v2763
    %v2803 = vunpack.c.l.b16 %v2764
    %v2804 = vunpack.c.l.b16 %v2765
    %v2805 = vunpack.c.l.b16 %v2766
    %v2806 = vpack.c.b16 %v2791, %v2790
    %v2807 = vpack.c.b16 %v2793, %v2792
    %v2808 = vpack.c.b16 %v2795, %v2794
    %v2809 = vpack.c.b16 %v2797, %v2796
    %v2810 = vpack.c.b16 %v2799, %v2798
    %v2811 = vpack.c.b16 %v2801, %v2800
    %v2812 = vpack.c.b16 %v2803, %v2802
    %v2813 = vpack.c.b16 %v2805, %v2804
    %2822 = vmatprep.subr.bf16.mxu0 0
    %2823 = vmatpush1.bf16.msra.mxu0 %v2806
    %2824 = vmatprep.subr.bf16.mxu0 0
    %2825 = vmatpush1.bf16.msra.mxu0 %v2807
    %2826 = vmatprep.subr.bf16.mxu0 0
    %2827 = vmatpush1.bf16.msra.mxu0 %v2808
    %2828 = vmatprep.subr.bf16.mxu0 0
    %2829 = vmatpush1.bf16.msra.mxu0 %v2809
    %2830 = vmatprep.subr.bf16.mxu0 0
    %2831 = vmatpush1.bf16.msra.mxu0 %v2810
    %2832 = vmatprep.subr.bf16.mxu0 0
    %2833 = vmatpush1.bf16.msra.mxu0 %v2811
    %2834 = vmatprep.subr.bf16.mxu0 0
    %2835 = vmatpush1.bf16.msra.mxu0 %v2812
    %2836 = vmatprep.subr.bf16.mxu0 0
    %2837 = vmatpush1.bf16.msra.mxu0 %v2813
    %2838 = vmatprep.subr.bf16.mxu0 0
    %2839 = vmatpush1.bf16.msra.mxu0 0
    %2840 = vmatprep.subr.bf16.mxu0 0
    %2841 = vmatpush1.bf16.msra.mxu0 0
    %2842 = vmatprep.subr.bf16.mxu0 0
    %2843 = vmatpush1.bf16.msra.mxu0 0
    %2844 = vmatprep.subr.bf16.mxu0 0
    %2845 = vmatpush1.bf16.msra.mxu0 0
    %2846 = vmatprep.subr.bf16.mxu0 0
    %2847 = vmatpush1.bf16.msra.mxu0 0
    %2848 = vmatprep.subr.bf16.mxu0 0
    %2849 = vmatpush1.bf16.msra.mxu0 0
    %2850 = vmatprep.subr.bf16.mxu0 0
    %2851 = vmatpush1.bf16.msra.mxu0 0
    %2852 = vmatprep.subr.bf16.mxu0 0
    %2853 = vmatpush1.bf16.msra.mxu0 0
    %2854 = vmatprep.mubr.bf16.mxu0 0
    %2855 = vmatmul.mubr.bf16.gmra.mrb[0].mxu0 %v2750
    %v2856 = vpop.f32.mrb[0].mxu0
    %v2857 = vadd.f32 %v2772, %v2856
    %v2858 = vpop.f32.mrb[0].mxu0
    %v2859 = vpop.f32.mrb[0].mxu0
    %v2860 = vpop.f32.mrb[0].mxu0
    %2861 = vdwg.mxu0
    %v2862 = vmax.f32 %v2857, 0.0
    %v2863 = vpack.c.bf16 %v2862, %v2862
    %v2864 = vld [vmem:[#allocation52] sm:$0xf]
    %v2865 = vld [vmem:[#allocation52 + $0x4] sm:$0xf]
    %v2866 = vld [vmem:[#allocation52 + $0x8] sm:$0xf]
    %v2867 = vld [vmem:[#allocation52 + $0xc] sm:$0xf]
    %v2868 = vld [vmem:[#allocation52 + $0x10] sm:$0xf]
    %v2869 = vld [vmem:[#allocation52 + $0x14] sm:$0xf]
    %v2870 = vld [vmem:[#allocation52 + $0x18] sm:$0xf]
    %v2871 = vld [vmem:[#allocation52 + $0x1c] sm:$0xf]
    %v2872 = vld [vmem:[#allocation52 + $0x20] sm:$0xf]
    %v2873 = vld [vmem:[#allocation52 + $0x24] sm:$0xf]
    %v2874 = vld [vmem:[#allocation52 + $0x28] sm:$0xf]
    %v2875 = vld [vmem:[#allocation52 + $0x2c] sm:$0xf]
    %v2876 = vld [vmem:[#allocation52 + $0x30] sm:$0xf]
    %v2877 = vld [vmem:[#allocation52 + $0x34] sm:$0xf]
    %v2878 = vld [vmem:[#allocation52 + $0x38] sm:$0xf]
    %v2879 = vld [vmem:[#allocation52 + $0x3c] sm:$0xf]
    %v2880 = vld [vmem:[#allocation49] sm:$0x1]
    %v2882 = vlaneseq
    %v2883 = vshrl.u32 %v2882, 7
    %v2884 = vsub.s32 0, %v2883
    %v2885 = vrot.slane %v2880, %v2884
    %v2903 = vunpack.c.l.b16 %v2864
    %v2904 = vunpack.c.l.b16 %v2865
    %v2905 = vunpack.c.l.b16 %v2866
    %v2906 = vunpack.c.l.b16 %v2867
    %v2907 = vunpack.c.l.b16 %v2868
    %v2908 = vunpack.c.l.b16 %v2869
    %v2909 = vunpack.c.l.b16 %v2870
    %v2910 = vunpack.c.l.b16 %v2871
    %v2911 = vunpack.c.l.b16 %v2872
    %v2912 = vunpack.c.l.b16 %v2873
    %v2913 = vunpack.c.l.b16 %v2874
    %v2914 = vunpack.c.l.b16 %v2875
    %v2915 = vunpack.c.l.b16 %v2876
    %v2916 = vunpack.c.l.b16 %v2877
    %v2917 = vunpack.c.l.b16 %v2878
    %v2918 = vunpack.c.l.b16 %v2879
    %v2919 = vpack.c.b16 %v2904, %v2903
    %v2920 = vpack.c.b16 %v2906, %v2905
    %v2921 = vpack.c.b16 %v2908, %v2907
    %v2922 = vpack.c.b16 %v2910, %v2909
    %v2923 = vpack.c.b16 %v2912, %v2911
    %v2924 = vpack.c.b16 %v2914, %v2913
    %v2925 = vpack.c.b16 %v2916, %v2915
    %v2926 = vpack.c.b16 %v2918, %v2917
    %2935 = vmatprep.subr.bf16.mxu0 0
    %2936 = vmatpush1.bf16.msra.mxu0 %v2919
    %2937 = vmatprep.subr.bf16.mxu0 0
    %2938 = vmatpush1.bf16.msra.mxu0 %v2920
    %2939 = vmatprep.subr.bf16.mxu0 0
    %2940 = vmatpush1.bf16.msra.mxu0 %v2921
    %2941 = vmatprep.subr.bf16.mxu0 0
    %2942 = vmatpush1.bf16.msra.mxu0 %v2922
    %2943 = vmatprep.subr.bf16.mxu0 0
    %2944 = vmatpush1.bf16.msra.mxu0 %v2923
    %2945 = vmatprep.subr.bf16.mxu0 0
    %2946 = vmatpush1.bf16.msra.mxu0 %v2924
    %2947 = vmatprep.subr.bf16.mxu0 0
    %2948 = vmatpush1.bf16.msra.mxu0 %v2925
    %2949 = vmatprep.subr.bf16.mxu0 0
    %2950 = vmatpush1.bf16.msra.mxu0 %v2926
    %2951 = vmatprep.subr.bf16.mxu0 0
    %2952 = vmatpush1.bf16.msra.mxu0 0
    %2953 = vmatprep.subr.bf16.mxu0 0
    %2954 = vmatpush1.bf16.msra.mxu0 0
    %2955 = vmatprep.subr.bf16.mxu0 0
    %2956 = vmatpush1.bf16.msra.mxu0 0
    %2957 = vmatprep.subr.bf16.mxu0 0
    %2958 = vmatpush1.bf16.msra.mxu0 0
    %2959 = vmatprep.subr.bf16.mxu0 0
    %2960 = vmatpush1.bf16.msra.mxu0 0
    %2961 = vmatprep.subr.bf16.mxu0 0
    %2962 = vmatpush1.bf16.msra.mxu0 0
    %2963 = vmatprep.subr.bf16.mxu0 0
    %2964 = vmatpush1.bf16.msra.mxu0 0
    %2965 = vmatprep.subr.bf16.mxu0 0
    %2966 = vmatpush1.bf16.msra.mxu0 0
    %2967 = vmatprep.mubr.bf16.mxu0 0
    %2968 = vmatmul.mubr.bf16.gmra.mrb[0].mxu0 %v2863
    %v2969 = vpop.f32.mrb[0].mxu0
    %v2970 = vadd.f32 %v2885, %v2969
    %v2971 = vpop.f32.mrb[0].mxu0
    %v2972 = vpop.f32.mrb[0].mxu0
    %v2973 = vpop.f32.mrb[0].mxu0
    %2974 = vdwg.mxu0
    %v2975 = vadd.f32 %v2970, %v2749
    %v2976 = vmax.f32 %v2975, 0.0
    %v2977 = vpack.c.bf16 %v2976, %v2976
    %v2978 = vld [vmem:[#allocation58] sm:$0xff]
    %v2979 = vld [vmem:[#allocation58 + $0x8] sm:$0xff]
    %v2980 = vld [vmem:[#allocation58 + $0x10] sm:$0xff]
    %v2981 = vld [vmem:[#allocation58 + $0x18] sm:$0xff]
    %v2982 = vld [vmem:[#allocation58 + $0x20] sm:$0xff]
    %v2983 = vld [vmem:[#allocation58 + $0x28] sm:$0xff]
    %v2984 = vld [vmem:[#allocation58 + $0x30] sm:$0xff]
    %v2985 = vld [vmem:[#allocation58 + $0x38] sm:$0xff]
    %v2986 = vld [vmem:[#allocation58 + $0x40] sm:$0xff]
    %v2987 = vld [vmem:[#allocation58 + $0x48] sm:$0xff]
    %v2988 = vld [vmem:[#allocation58 + $0x50] sm:$0xff]
    %v2989 = vld [vmem:[#allocation58 + $0x58] sm:$0xff]
    %v2990 = vld [vmem:[#allocation58 + $0x60] sm:$0xff]
    %v2991 = vld [vmem:[#allocation58 + $0x68] sm:$0xff]
    %v2992 = vld [vmem:[#allocation58 + $0x70] sm:$0xff]
    %v2993 = vld [vmem:[#allocation58 + $0x78] sm:$0xff]
    %v2994 = vld [vmem:[#allocation53] sm:$0x3]
    %v2996 = vlaneseq
    %v2997 = vshrl.u32 %v2996, 7
    %v2998 = vsub.s32 0, %v2997
    %v2999 = vrot.slane %v2994, %v2998
    %v3000 = vlaneseq
    %v3001 = vshrl.u32 %v3000, 7
    %v3002 = vsub.s32 1, %v3001
    %v3003 = vrot.slane %v2994, %v3002
    %v3022 = vunpack.c.l.b16 %v2978
    %v3023 = vunpack.c.h.b16 %v2978
    %v3024 = vunpack.c.l.b16 %v2979
    %v3025 = vunpack.c.h.b16 %v2979
    %v3026 = vunpack.c.l.b16 %v2980
    %v3027 = vunpack.c.h.b16 %v2980
    %v3028 = vunpack.c.l.b16 %v2981
    %v3029 = vunpack.c.h.b16 %v2981
    %v3030 = vunpack.c.l.b16 %v2982
    %v3031 = vunpack.c.h.b16 %v2982
    %v3032 = vunpack.c.l.b16 %v2983
    %v3033 = vunpack.c.h.b16 %v2983
    %v3034 = vunpack.c.l.b16 %v2984
    %v3035 = vunpack.c.h.b16 %v2984
    %v3036 = vunpack.c.l.b16 %v2985
    %v3037 = vunpack.c.h.b16 %v2985
    %v3038 = vunpack.c.l.b16 %v2986
    %v3039 = vunpack.c.h.b16 %v2986
    %v3040 = vunpack.c.l.b16 %v2987
    %v3041 = vunpack.c.h.b16 %v2987
    %v3042 = vunpack.c.l.b16 %v2988
    %v3043 = vunpack.c.h.b16 %v2988
    %v3044 = vunpack.c.l.b16 %v2989
    %v3045 = vunpack.c.h.b16 %v2989
    %v3046 = vunpack.c.l.b16 %v2990
    %v3047 = vunpack.c.h.b16 %v2990
    %v3048 = vunpack.c.l.b16 %v2991
    %v3049 = vunpack.c.h.b16 %v2991
    %v3050 = vunpack.c.l.b16 %v2992
    %v3051 = vunpack.c.h.b16 %v2992
    %v3052 = vunpack.c.l.b16 %v2993
    %v3053 = vunpack.c.h.b16 %v2993
    %v3054 = vpack.c.b16 %v3024, %v3022
    %v3055 = vpack.c.b16 %v3025, %v3023
    %v3056 = vpack.c.b16 %v3028, %v3026
    %v3057 = vpack.c.b16 %v3029, %v3027
    %v3058 = vpack.c.b16 %v3032, %v3030
    %v3059 = vpack.c.b16 %v3033, %v3031
    %v3060 = vpack.c.b16 %v3036, %v3034
    %v3061 = vpack.c.b16 %v3037, %v3035
    %v3062 = vpack.c.b16 %v3040, %v3038
    %v3063 = vpack.c.b16 %v3041, %v3039
    %v3064 = vpack.c.b16 %v3044, %v3042
    %v3065 = vpack.c.b16 %v3045, %v3043
    %v3066 = vpack.c.b16 %v3048, %v3046
    %v3067 = vpack.c.b16 %v3049, %v3047
    %v3068 = vpack.c.b16 %v3052, %v3050
    %v3069 = vpack.c.b16 %v3053, %v3051
    %3086 = vmatprep.subr.bf16.mxu0 %v3055
    %3087 = vmatpush1.bf16.msra.mxu0 %v3054
    %3088 = vmatprep.subr.bf16.mxu0 %v3057
    %3089 = vmatpush1.bf16.msra.mxu0 %v3056
    %3090 = vmatprep.subr.bf16.mxu0 %v3059
    %3091 = vmatpush1.bf16.msra.mxu0 %v3058
    %3092 = vmatprep.subr.bf16.mxu0 %v3061
    %3093 = vmatpush1.bf16.msra.mxu0 %v3060
    %3094 = vmatprep.subr.bf16.mxu0 %v3063
    %3095 = vmatpush1.bf16.msra.mxu0 %v3062
    %3096 = vmatprep.subr.bf16.mxu0 %v3065
    %3097 = vmatpush1.bf16.msra.mxu0 %v3064
    %3098 = vmatprep.subr.bf16.mxu0 %v3067
    %3099 = vmatpush1.bf16.msra.mxu0 %v3066
    %3100 = vmatprep.subr.bf16.mxu0 %v3069
    %3101 = vmatpush1.bf16.msra.mxu0 %v3068
    %3102 = vmatprep.subr.bf16.mxu0 0
    %3103 = vmatpush1.bf16.msra.mxu0 0
    %3104 = vmatprep.subr.bf16.mxu0 0
    %3105 = vmatpush1.bf16.msra.mxu0 0
    %3106 = vmatprep.subr.bf16.mxu0 0
    %3107 = vmatpush1.bf16.msra.mxu0 0
    %3108 = vmatprep.subr.bf16.mxu0 0
    %3109 = vmatpush1.bf16.msra.mxu0 0
    %3110 = vmatprep.subr.bf16.mxu0 0
    %3111 = vmatpush1.bf16.msra.mxu0 0
    %3112 = vmatprep.subr.bf16.mxu0 0
    %3113 = vmatpush1.bf16.msra.mxu0 0
    %3114 = vmatprep.subr.bf16.mxu0 0
    %3115 = vmatpush1.bf16.msra.mxu0 0
    %3116 = vmatprep.subr.bf16.mxu0 0
    %3117 = vmatpush1.bf16.msra.mxu0 0
    %3118 = vmatprep.mubr.bf16.mxu0 0
    %3119 = vmatmul.mubr.bf16.gmra.mrb[0].mxu0 %v2977
    %v3120 = vpop.f32.mrb[0].mxu0
    %v3121 = vadd.f32 %v2999, %v3120
    %v3122 = vpop.f32.mrb[0].mxu0
    %v3123 = vadd.f32 %v3003, %v3122
    %v3124 = vpop.f32.mrb[0].mxu0
    %v3125 = vpop.f32.mrb[0].mxu0
    %3126 = vdwg.mxu0
    %v3127 = vmax.f32 %v3121, 0.0
    %v3128 = vmax.f32 %v3123, 0.0
    %v3129 = vld [vmem:[#allocation61] sm:$0xff]
    %v3130 = vld [vmem:[#allocation61 + $0x8] sm:$0xff]
    %v3131 = vld [vmem:[#allocation61 + $0x10] sm:$0xff]
    %v3132 = vld [vmem:[#allocation61 + $0x18] sm:$0xff]
    %v3133 = vld [vmem:[#allocation61 + $0x20] sm:$0xff]
    %v3134 = vld [vmem:[#allocation61 + $0x28] sm:$0xff]
    %v3135 = vld [vmem:[#allocation61 + $0x30] sm:$0xff]
    %v3136 = vld [vmem:[#allocation61 + $0x38] sm:$0xff]
    %v3137 = vld [vmem:[#allocation61 + $0x40] sm:$0xff]
    %v3138 = vld [vmem:[#allocation61 + $0x48] sm:$0xff]
    %v3139 = vld [vmem:[#allocation61 + $0x50] sm:$0xff]
    %v3140 = vld [vmem:[#allocation61 + $0x58] sm:$0xff]
    %v3141 = vld [vmem:[#allocation61 + $0x60] sm:$0xff]
    %v3142 = vld [vmem:[#allocation61 + $0x68] sm:$0xff]
    %v3143 = vld [vmem:[#allocation61 + $0x70] sm:$0xff]
    %v3144 = vld [vmem:[#allocation61 + $0x78] sm:$0xff]
    %v3145 = vld [vmem:[#allocation56] sm:$0x3]
    %v3147 = vlaneseq
    %v3148 = vshrl.u32 %v3147, 7
    %v3149 = vsub.s32 0, %v3148
    %v3150 = vrot.slane %v3145, %v3149
    %v3151 = vlaneseq
    %v3152 = vshrl.u32 %v3151, 7
    %v3153 = vsub.s32 1, %v3152
    %v3154 = vrot.slane %v3145, %v3153
    %v3173 = vunpack.c.l.b16 %v3129
    %v3174 = vunpack.c.h.b16 %v3129
    %v3175 = vunpack.c.l.b16 %v3130
    %v3176 = vunpack.c.h.b16 %v3130
    %v3177 = vunpack.c.l.b16 %v3131
    %v3178 = vunpack.c.h.b16 %v3131
    %v3179 = vunpack.c.l.b16 %v3132
    %v3180 = vunpack.c.h.b16 %v3132
    %v3181 = vunpack.c.l.b16 %v3133
    %v3182 = vunpack.c.h.b16 %v3133
    %v3183 = vunpack.c.l.b16 %v3134
    %v3184 = vunpack.c.h.b16 %v3134
    %v3185 = vunpack.c.l.b16 %v3135
    %v3186 = vunpack.c.h.b16 %v3135
    %v3187 = vunpack.c.l.b16 %v3136
    %v3188 = vunpack.c.h.b16 %v3136
    %v3189 = vunpack.c.l.b16 %v3137
    %v3190 = vunpack.c.h.b16 %v3137
    %v3191 = vunpack.c.l.b16 %v3138
    %v3192 = vunpack.c.h.b16 %v3138
    %v3193 = vunpack.c.l.b16 %v3139
    %v3194 = vunpack.c.h.b16 %v3139
    %v3195 = vunpack.c.l.b16 %v3140
    %v3196 = vunpack.c.h.b16 %v3140
    %v3197 = vunpack.c.l.b16 %v3141
    %v3198 = vunpack.c.h.b16 %v3141
    %v3199 = vunpack.c.l.b16 %v3142
    %v3200 = vunpack.c.h.b16 %v3142
    %v3201 = vunpack.c.l.b16 %v3143
    %v3202 = vunpack.c.h.b16 %v3143
    %v3203 = vunpack.c.l.b16 %v3144
    %v3204 = vunpack.c.h.b16 %v3144
    %v3205 = vpack.c.b16 %v3175, %v3173
    %v3206 = vpack.c.b16 %v3176, %v3174
    %v3207 = vpack.c.b16 %v3179, %v3177
    %v3208 = vpack.c.b16 %v3180, %v3178
    %v3209 = vpack.c.b16 %v3183, %v3181
    %v3210 = vpack.c.b16 %v3184, %v3182
    %v3211 = vpack.c.b16 %v3187, %v3185
    %v3212 = vpack.c.b16 %v3188, %v3186
    %v3213 = vpack.c.b16 %v3191, %v3189
    %v3214 = vpack.c.b16 %v3192, %v3190
    %v3215 = vpack.c.b16 %v3195, %v3193
    %v3216 = vpack.c.b16 %v3196, %v3194
    %v3217 = vpack.c.b16 %v3199, %v3197
    %v3218 = vpack.c.b16 %v3200, %v3198
    %v3219 = vpack.c.b16 %v3203, %v3201
    %v3220 = vpack.c.b16 %v3204, %v3202
    %3237 = vmatprep.subr.bf16.mxu0 %v3206
    %3238 = vmatpush1.bf16.msra.mxu0 %v3205
    %3239 = vmatprep.subr.bf16.mxu0 %v3208
    %3240 = vmatpush1.bf16.msra.mxu0 %v3207
    %3241 = vmatprep.subr.bf16.mxu0 %v3210
    %3242 = vmatpush1.bf16.msra.mxu0 %v3209
    %3243 = vmatprep.subr.bf16.mxu0 %v3212
    %3244 = vmatpush1.bf16.msra.mxu0 %v3211
    %3245 = vmatprep.subr.bf16.mxu0 %v3214
    %3246 = vmatpush1.bf16.msra.mxu0 %v3213
    %3247 = vmatprep.subr.bf16.mxu0 %v3216
    %3248 = vmatpush1.bf16.msra.mxu0 %v3215
    %3249 = vmatprep.subr.bf16.mxu0 %v3218
    %3250 = vmatpush1.bf16.msra.mxu0 %v3217
    %3251 = vmatprep.subr.bf16.mxu0 %v3220
    %3252 = vmatpush1.bf16.msra.mxu0 %v3219
    %3253 = vmatprep.subr.bf16.mxu0 0
    %3254 = vmatpush1.bf16.msra.mxu0 0
    %3255 = vmatprep.subr.bf16.mxu0 0
    %3256 = vmatpush1.bf16.msra.mxu0 0
    %3257 = vmatprep.subr.bf16.mxu0 0
    %3258 = vmatpush1.bf16.msra.mxu0 0
    %3259 = vmatprep.subr.bf16.mxu0 0
    %3260 = vmatpush1.bf16.msra.mxu0 0
    %3261 = vmatprep.subr.bf16.mxu0 0
    %3262 = vmatpush1.bf16.msra.mxu0 0
    %3263 = vmatprep.subr.bf16.mxu0 0
    %3264 = vmatpush1.bf16.msra.mxu0 0
    %3265 = vmatprep.subr.bf16.mxu0 0
    %3266 = vmatpush1.bf16.msra.mxu0 0
    %3267 = vmatprep.subr.bf16.mxu0 0
    %3268 = vmatpush1.bf16.msra.mxu0 0
    %3269 = vmatprep.mubr.bf16.mxu0 0
    %3270 = vmatmul.mubr.bf16.gmra.mrb[0].mxu0 %v2977
    %v3271 = vpop.f32.mrb[0].mxu0
    %v3272 = vadd.f32 %v3150, %v3271
    %v3273 = vpop.f32.mrb[0].mxu0
    %v3274 = vadd.f32 %v3154, %v3273
    %v3275 = vpop.f32.mrb[0].mxu0
    %v3276 = vpop.f32.mrb[0].mxu0
    %3277 = vdwg.mxu0
    %v3278 = vpack.c.bf16 %v3127, %v3127
    %v3279 = vpack.c.bf16 %v3128, %v3128
    %v3280 = vld [vmem:[#allocation59] sm:$0xff]
    %v3281 = vld [vmem:[#allocation59 + $0x8] sm:$0xff]
    %v3282 = vld [vmem:[#allocation59 + $0x10] sm:$0xff]
    %v3283 = vld [vmem:[#allocation59 + $0x18] sm:$0xff]
    %v3284 = vld [vmem:[#allocation59 + $0x20] sm:$0xff]
    %v3285 = vld [vmem:[#allocation59 + $0x28] sm:$0xff]
    %v3286 = vld [vmem:[#allocation59 + $0x30] sm:$0xff]
    %v3287 = vld [vmem:[#allocation59 + $0x38] sm:$0xff]
    %v3288 = vld [vmem:[#allocation59 + $0x40] sm:$0xff]
    %v3289 = vld [vmem:[#allocation59 + $0x48] sm:$0xff]
    %v3290 = vld [vmem:[#allocation59 + $0x50] sm:$0xff]
    %v3291 = vld [vmem:[#allocation59 + $0x58] sm:$0xff]
    %v3292 = vld [vmem:[#allocation59 + $0x60] sm:$0xff]
    %v3293 = vld [vmem:[#allocation59 + $0x68] sm:$0xff]
    %v3294 = vld [vmem:[#allocation59 + $0x70] sm:$0xff]
    %v3295 = vld [vmem:[#allocation59 + $0x78] sm:$0xff]
    %v3296 = vld [vmem:[#allocation59 + $0x80] sm:$0xff]
    %v3297 = vld [vmem:[#allocation59 + $0x88] sm:$0xff]
    %v3298 = vld [vmem:[#allocation59 + $0x90] sm:$0xff]
    %v3299 = vld [vmem:[#allocation59 + $0x98] sm:$0xff]
    %v3300 = vld [vmem:[#allocation59 + $0xa0] sm:$0xff]
    %v3301 = vld [vmem:[#allocation59 + $0xa8] sm:$0xff]
    %v3302 = vld [vmem:[#allocation59 + $0xb0] sm:$0xff]
    %v3303 = vld [vmem:[#allocation59 + $0xb8] sm:$0xff]
    %v3304 = vld [vmem:[#allocation59 + $0xc0] sm:$0xff]
    %v3305 = vld [vmem:[#allocation59 + $0xc8] sm:$0xff]
    %v3306 = vld [vmem:[#allocation59 + $0xd0] sm:$0xff]
    %v3307 = vld [vmem:[#allocation59 + $0xd8] sm:$0xff]
    %v3308 = vld [vmem:[#allocation59 + $0xe0] sm:$0xff]
    %v3309 = vld [vmem:[#allocation59 + $0xe8] sm:$0xff]
    %v3310 = vld [vmem:[#allocation59 + $0xf0] sm:$0xff]
    %v3311 = vld [vmem:[#allocation59 + $0xf8] sm:$0xff]
    %v3312 = vld [vmem:[#allocation55] sm:$0x3]
    %v3314 = vlaneseq
    %v3315 = vshrl.u32 %v3314, 7
    %v3316 = vsub.s32 0, %v3315
    %v3317 = vrot.slane %v3312, %v3316
    %v3318 = vlaneseq
    %v3319 = vshrl.u32 %v3318, 7
    %v3320 = vsub.s32 1, %v3319
    %v3321 = vrot.slane %v3312, %v3320
    %v3356 = vunpack.c.l.b16 %v3280
    %v3357 = vunpack.c.h.b16 %v3280
    %v3358 = vunpack.c.l.b16 %v3281
    %v3359 = vunpack.c.h.b16 %v3281
    %v3360 = vunpack.c.l.b16 %v3282
    %v3361 = vunpack.c.h.b16 %v3282
    %v3362 = vunpack.c.l.b16 %v3283
    %v3363 = vunpack.c.h.b16 %v3283
    %v3364 = vunpack.c.l.b16 %v3284
    %v3365 = vunpack.c.h.b16 %v3284
    %v3366 = vunpack.c.l.b16 %v3285
    %v3367 = vunpack.c.h.b16 %v3285
    %v3368 = vunpack.c.l.b16 %v3286
    %v3369 = vunpack.c.h.b16 %v3286
    %v3370 = vunpack.c.l.b16 %v3287
    %v3371 = vunpack.c.h.b16 %v3287
    %v3372 = vunpack.c.l.b16 %v3288
    %v3373 = vunpack.c.h.b16 %v3288
    %v3374 = vunpack.c.l.b16 %v3289
    %v3375 = vunpack.c.h.b16 %v3289
    %v3376 = vunpack.c.l.b16 %v3290
    %v3377 = vunpack.c.h.b16 %v3290
    %v3378 = vunpack.c.l.b16 %v3291
    %v3379 = vunpack.c.h.b16 %v3291
    %v3380 = vunpack.c.l.b16 %v3292
    %v3381 = vunpack.c.h.b16 %v3292
    %v3382 = vunpack.c.l.b16 %v3293
    %v3383 = vunpack.c.h.b16 %v3293
    %v3384 = vunpack.c.l.b16 %v3294
    %v3385 = vunpack.c.h.b16 %v3294
    %v3386 = vunpack.c.l.b16 %v3295
    %v3387 = vunpack.c.h.b16 %v3295
    %v3388 = vunpack.c.l.b16 %v3296
    %v3389 = vunpack.c.h.b16 %v3296
    %v3390 = vunpack.c.l.b16 %v3297
    %v3391 = vunpack.c.h.b16 %v3297
    %v3392 = vunpack.c.l.b16 %v3298
    %v3393 = vunpack.c.h.b16 %v3298
    %v3394 = vunpack.c.l.b16 %v3299
    %v3395 = vunpack.c.h.b16 %v3299
    %v3396 = vunpack.c.l.b16 %v3300
    %v3397 = vunpack.c.h.b16 %v3300
    %v3398 = vunpack.c.l.b16 %v3301
    %v3399 = vunpack.c.h.b16 %v3301
    %v3400 = vunpack.c.l.b16 %v3302
    %v3401 = vunpack.c.h.b16 %v3302
    %v3402 = vunpack.c.l.b16 %v3303
    %v3403 = vunpack.c.h.b16 %v3303
    %v3404 = vunpack.c.l.b16 %v3304
    %v3405 = vunpack.c.h.b16 %v3304
    %v3406 = vunpack.c.l.b16 %v3305
    %v3407 = vunpack.c.h.b16 %v3305
    %v3408 = vunpack.c.l.b16 %v3306
    %v3409 = vunpack.c.h.b16 %v3306
    %v3410 = vunpack.c.l.b16 %v3307
    %v3411 = vunpack.c.h.b16 %v3307
    %v3412 = vunpack.c.l.b16 %v3308
    %v3413 = vunpack.c.h.b16 %v3308
    %v3414 = vunpack.c.l.b16 %v3309
    %v3415 = vunpack.c.h.b16 %v3309
    %v3416 = vunpack.c.l.b16 %v3310
    %v3417 = vunpack.c.h.b16 %v3310
    %v3418 = vunpack.c.l.b16 %v3311
    %v3419 = vunpack.c.h.b16 %v3311
    %v3420 = vpack.c.b16 %v3358, %v3356
    %v3421 = vpack.c.b16 %v3359, %v3357
    %v3422 = vpack.c.b16 %v3362, %v3360
    %v3423 = vpack.c.b16 %v3363, %v3361
    %v3424 = vpack.c.b16 %v3366, %v3364
    %v3425 = vpack.c.b16 %v3367, %v3365
    %v3426 = vpack.c.b16 %v3370, %v3368
    %v3427 = vpack.c.b16 %v3371, %v3369
    %v3428 = vpack.c.b16 %v3374, %v3372
    %v3429 = vpack.c.b16 %v3375, %v3373
    %v3430 = vpack.c.b16 %v3378, %v3376
    %v3431 = vpack.c.b16 %v3379, %v3377
    %v3432 = vpack.c.b16 %v3382, %v3380
    %v3433 = vpack.c.b16 %v3383, %v3381
    %v3434 = vpack.c.b16 %v3386, %v3384
    %v3435 = vpack.c.b16 %v3387, %v3385
    %v3436 = vpack.c.b16 %v3390, %v3388
    %v3437 = vpack.c.b16 %v3391, %v3389
    %v3438 = vpack.c.b16 %v3394, %v3392
    %v3439 = vpack.c.b16 %v3395, %v3393
    %v3440 = vpack.c.b16 %v3398, %v3396
    %v3441 = vpack.c.b16 %v3399, %v3397
    %v3442 = vpack.c.b16 %v3402, %v3400
    %v3443 = vpack.c.b16 %v3403, %v3401
    %v3444 = vpack.c.b16 %v3406, %v3404
    %v3445 = vpack.c.b16 %v3407, %v3405
    %v3446 = vpack.c.b16 %v3410, %v3408
    %v3447 = vpack.c.b16 %v3411, %v3409
    %v3448 = vpack.c.b16 %v3414, %v3412
    %v3449 = vpack.c.b16 %v3415, %v3413
    %v3450 = vpack.c.b16 %v3418, %v3416
    %v3451 = vpack.c.b16 %v3419, %v3417
    %3484 = vmatprep.subr.bf16.mxu0 %v3421
    %3485 = vmatpush1.bf16.msra.mxu0 %v3420
    %3486 = vmatprep.subr.bf16.mxu0 %v3423
    %3487 = vmatpush1.bf16.msra.mxu0 %v3422
    %3488 = vmatprep.subr.bf16.mxu0 %v3425
    %3489 = vmatpush1.bf16.msra.mxu0 %v3424
    %3490 = vmatprep.subr.bf16.mxu0 %v3427
    %3491 = vmatpush1.bf16.msra.mxu0 %v3426
    %3492 = vmatprep.subr.bf16.mxu0 %v3429
    %3493 = vmatpush1.bf16.msra.mxu0 %v3428
    %3494 = vmatprep.subr.bf16.mxu0 %v3431
    %3495 = vmatpush1.bf16.msra.mxu0 %v3430
    %3496 = vmatprep.subr.bf16.mxu0 %v3433
    %3497 = vmatpush1.bf16.msra.mxu0 %v3432
    %3498 = vmatprep.subr.bf16.mxu0 %v3435
    %3499 = vmatpush1.bf16.msra.mxu0 %v3434
    %3500 = vmatprep.subr.bf16.mxu0 %v3437
    %3501 = vmatpush1.bf16.msra.mxu0 %v3436
    %3502 = vmatprep.subr.bf16.mxu0 %v3439
    %3503 = vmatpush1.bf16.msra.mxu0 %v3438
    %3504 = vmatprep.subr.bf16.mxu0 %v3441
    %3505 = vmatpush1.bf16.msra.mxu0 %v3440
    %3506 = vmatprep.subr.bf16.mxu0 %v3443
    %3507 = vmatpush1.bf16.msra.mxu0 %v3442
    %3508 = vmatprep.subr.bf16.mxu0 %v3445
    %3509 = vmatpush1.bf16.msra.mxu0 %v3444
    %3510 = vmatprep.subr.bf16.mxu0 %v3447
    %3511 = vmatpush1.bf16.msra.mxu0 %v3446
    %3512 = vmatprep.subr.bf16.mxu0 %v3449
    %3513 = vmatpush1.bf16.msra.mxu0 %v3448
    %3514 = vmatprep.subr.bf16.mxu0 %v3451
    %3515 = vmatpush1.bf16.msra.mxu0 %v3450
    %3516 = vmatprep.mubr.bf16.mxu0 %v3279
    %3517 = vmatmul.mubr.bf16.gmra.mrb[0].mxu0 %v3278
    %v3518 = vpop.f32.mrb[0].mxu0
    %v3519 = vadd.f32 %v3317, %v3518
    %v3520 = vpop.f32.mrb[0].mxu0
    %v3521 = vadd.f32 %v3321, %v3520
    %v3522 = vpop.f32.mrb[0].mxu0
    %v3523 = vpop.f32.mrb[0].mxu0
    %3524 = vdwg.mxu0
    %v3525 = vadd.f32 %v3519, %v3272
    %v3526 = vadd.f32 %v3521, %v3274
    %v3527 = vmax.f32 %v3525, 0.0
    %v3528 = vmax.f32 %v3526, 0.0
    %v3529 = vpack.c.bf16 %v3527, %v3527
    %v3530 = vpack.c.bf16 %v3528, %v3528
    %v3531 = vld [vmem:[#allocation65] sm:$0xff]
    %v3532 = vld [vmem:[#allocation65 + $0x8] sm:$0xff]
    %v3533 = vld [vmem:[#allocation65 + $0x10] sm:$0xff]
    %v3534 = vld [vmem:[#allocation65 + $0x18] sm:$0xff]
    %v3535 = vld [vmem:[#allocation65 + $0x20] sm:$0xff]
    %v3536 = vld [vmem:[#allocation65 + $0x28] sm:$0xff]
    %v3537 = vld [vmem:[#allocation65 + $0x30] sm:$0xff]
    %v3538 = vld [vmem:[#allocation65 + $0x38] sm:$0xff]
    %v3539 = vld [vmem:[#allocation65 + $0x40] sm:$0xff]
    %v3540 = vld [vmem:[#allocation65 + $0x48] sm:$0xff]
    %v3541 = vld [vmem:[#allocation65 + $0x50] sm:$0xff]
    %v3542 = vld [vmem:[#allocation65 + $0x58] sm:$0xff]
    %v3543 = vld [vmem:[#allocation65 + $0x60] sm:$0xff]
    %v3544 = vld [vmem:[#allocation65 + $0x68] sm:$0xff]
    %v3545 = vld [vmem:[#allocation65 + $0x70] sm:$0xff]
    %v3546 = vld [vmem:[#allocation65 + $0x78] sm:$0xff]
    %v3547 = vld [vmem:[#allocation65 + $0x80] sm:$0xff]
    %v3548 = vld [vmem:[#allocation65 + $0x88] sm:$0xff]
    %v3549 = vld [vmem:[#allocation65 + $0x90] sm:$0xff]
    %v3550 = vld [vmem:[#allocation65 + $0x98] sm:$0xff]
    %v3551 = vld [vmem:[#allocation65 + $0xa0] sm:$0xff]
    %v3552 = vld [vmem:[#allocation65 + $0xa8] sm:$0xff]
    %v3553 = vld [vmem:[#allocation65 + $0xb0] sm:$0xff]
    %v3554 = vld [vmem:[#allocation65 + $0xb8] sm:$0xff]
    %v3555 = vld [vmem:[#allocation65 + $0xc0] sm:$0xff]
    %v3556 = vld [vmem:[#allocation65 + $0xc8] sm:$0xff]
    %v3557 = vld [vmem:[#allocation65 + $0xd0] sm:$0xff]
    %v3558 = vld [vmem:[#allocation65 + $0xd8] sm:$0xff]
    %v3559 = vld [vmem:[#allocation65 + $0xe0] sm:$0xff]
    %v3560 = vld [vmem:[#allocation65 + $0xe8] sm:$0xff]
    %v3561 = vld [vmem:[#allocation65 + $0xf0] sm:$0xff]
    %v3562 = vld [vmem:[#allocation65 + $0xf8] sm:$0xff]
    %v3563 = vld [vmem:[#allocation62] sm:$0x3]
    %v3565 = vlaneseq
    %v3566 = vshrl.u32 %v3565, 7
    %v3567 = vsub.s32 0, %v3566
    %v3568 = vrot.slane %v3563, %v3567
    %v3569 = vlaneseq
    %v3570 = vshrl.u32 %v3569, 7
    %v3571 = vsub.s32 1, %v3570
    %v3572 = vrot.slane %v3563, %v3571
    %v3607 = vunpack.c.l.b16 %v3531
    %v3608 = vunpack.c.h.b16 %v3531
    %v3609 = vunpack.c.l.b16 %v3532
    %v3610 = vunpack.c.h.b16 %v3532
    %v3611 = vunpack.c.l.b16 %v3533
    %v3612 = vunpack.c.h.b16 %v3533
    %v3613 = vunpack.c.l.b16 %v3534
    %v3614 = vunpack.c.h.b16 %v3534
    %v3615 = vunpack.c.l.b16 %v3535
    %v3616 = vunpack.c.h.b16 %v3535
    %v3617 = vunpack.c.l.b16 %v3536
    %v3618 = vunpack.c.h.b16 %v3536
    %v3619 = vunpack.c.l.b16 %v3537
    %v3620 = vunpack.c.h.b16 %v3537
    %v3621 = vunpack.c.l.b16 %v3538
    %v3622 = vunpack.c.h.b16 %v3538
    %v3623 = vunpack.c.l.b16 %v3539
    %v3624 = vunpack.c.h.b16 %v3539
    %v3625 = vunpack.c.l.b16 %v3540
    %v3626 = vunpack.c.h.b16 %v3540
    %v3627 = vunpack.c.l.b16 %v3541
    %v3628 = vunpack.c.h.b16 %v3541
    %v3629 = vunpack.c.l.b16 %v3542
    %v3630 = vunpack.c.h.b16 %v3542
    %v3631 = vunpack.c.l.b16 %v3543
    %v3632 = vunpack.c.h.b16 %v3543
    %v3633 = vunpack.c.l.b16 %v3544
    %v3634 = vunpack.c.h.b16 %v3544
    %v3635 = vunpack.c.l.b16 %v3545
    %v3636 = vunpack.c.h.b16 %v3545
    %v3637 = vunpack.c.l.b16 %v3546
    %v3638 = vunpack.c.h.b16 %v3546
    %v3639 = vunpack.c.l.b16 %v3547
    %v3640 = vunpack.c.h.b16 %v3547
    %v3641 = vunpack.c.l.b16 %v3548
    %v3642 = vunpack.c.h.b16 %v3548
    %v3643 = vunpack.c.l.b16 %v3549
    %v3644 = vunpack.c.h.b16 %v3549
    %v3645 = vunpack.c.l.b16 %v3550
    %v3646 = vunpack.c.h.b16 %v3550
    %v3647 = vunpack.c.l.b16 %v3551
    %v3648 = vunpack.c.h.b16 %v3551
    %v3649 = vunpack.c.l.b16 %v3552
    %v3650 = vunpack.c.h.b16 %v3552
    %v3651 = vunpack.c.l.b16 %v3553
    %v3652 = vunpack.c.h.b16 %v3553
    %v3653 = vunpack.c.l.b16 %v3554
    %v3654 = vunpack.c.h.b16 %v3554
    %v3655 = vunpack.c.l.b16 %v3555
    %v3656 = vunpack.c.h.b16 %v3555
    %v3657 = vunpack.c.l.b16 %v3556
    %v3658 = vunpack.c.h.b16 %v3556
    %v3659 = vunpack.c.l.b16 %v3557
    %v3660 = vunpack.c.h.b16 %v3557
    %v3661 = vunpack.c.l.b16 %v3558
    %v3662 = vunpack.c.h.b16 %v3558
    %v3663 = vunpack.c.l.b16 %v3559
    %v3664 = vunpack.c.h.b16 %v3559
    %v3665 = vunpack.c.l.b16 %v3560
    %v3666 = vunpack.c.h.b16 %v3560
    %v3667 = vunpack.c.l.b16 %v3561
    %v3668 = vunpack.c.h.b16 %v3561
    %v3669 = vunpack.c.l.b16 %v3562
    %v3670 = vunpack.c.h.b16 %v3562
    %v3671 = vpack.c.b16 %v3609, %v3607
    %v3672 = vpack.c.b16 %v3610, %v3608
    %v3673 = vpack.c.b16 %v3613, %v3611
    %v3674 = vpack.c.b16 %v3614, %v3612
    %v3675 = vpack.c.b16 %v3617, %v3615
    %v3676 = vpack.c.b16 %v3618, %v3616
    %v3677 = vpack.c.b16 %v3621, %v3619
    %v3678 = vpack.c.b16 %v3622, %v3620
    %v3679 = vpack.c.b16 %v3625, %v3623
    %v3680 = vpack.c.b16 %v3626, %v3624
    %v3681 = vpack.c.b16 %v3629, %v3627
    %v3682 = vpack.c.b16 %v3630, %v3628
    %v3683 = vpack.c.b16 %v3633, %v3631
    %v3684 = vpack.c.b16 %v3634, %v3632
    %v3685 = vpack.c.b16 %v3637, %v3635
    %v3686 = vpack.c.b16 %v3638, %v3636
    %v3687 = vpack.c.b16 %v3641, %v3639
    %v3688 = vpack.c.b16 %v3642, %v3640
    %v3689 = vpack.c.b16 %v3645, %v3643
    %v3690 = vpack.c.b16 %v3646, %v3644
    %v3691 = vpack.c.b16 %v3649, %v3647
    %v3692 = vpack.c.b16 %v3650, %v3648
    %v3693 = vpack.c.b16 %v3653, %v3651
    %v3694 = vpack.c.b16 %v3654, %v3652
    %v3695 = vpack.c.b16 %v3657, %v3655
    %v3696 = vpack.c.b16 %v3658, %v3656
    %v3697 = vpack.c.b16 %v3661, %v3659
    %v3698 = vpack.c.b16 %v3662, %v3660
    %v3699 = vpack.c.b16 %v3665, %v3663
    %v3700 = vpack.c.b16 %v3666, %v3664
    %v3701 = vpack.c.b16 %v3669, %v3667
    %v3702 = vpack.c.b16 %v3670, %v3668
    %3735 = vmatprep.subr.bf16.mxu0 %v3672
    %3736 = vmatpush1.bf16.msra.mxu0 %v3671
    %3737 = vmatprep.subr.bf16.mxu0 %v3674
    %3738 = vmatpush1.bf16.msra.mxu0 %v3673
    %3739 = vmatprep.subr.bf16.mxu0 %v3676
    %3740 = vmatpush1.bf16.msra.mxu0 %v3675
    %3741 = vmatprep.subr.bf16.mxu0 %v3678
    %3742 = vmatpush1.bf16.msra.mxu0 %v3677
    %3743 = vmatprep.subr.bf16.mxu0 %v3680
    %3744 = vmatpush1.bf16.msra.mxu0 %v3679
    %3745 = vmatprep.subr.bf16.mxu0 %v3682
    %3746 = vmatpush1.bf16.msra.mxu0 %v3681
    %3747 = vmatprep.subr.bf16.mxu0 %v3684
    %3748 = vmatpush1.bf16.msra.mxu0 %v3683
    %3749 = vmatprep.subr.bf16.mxu0 %v3686
    %3750 = vmatpush1.bf16.msra.mxu0 %v3685
    %3751 = vmatprep.subr.bf16.mxu0 %v3688
    %3752 = vmatpush1.bf16.msra.mxu0 %v3687
    %3753 = vmatprep.subr.bf16.mxu0 %v3690
    %3754 = vmatpush1.bf16.msra.mxu0 %v3689
    %3755 = vmatprep.subr.bf16.mxu0 %v3692
    %3756 = vmatpush1.bf16.msra.mxu0 %v3691
    %3757 = vmatprep.subr.bf16.mxu0 %v3694
    %3758 = vmatpush1.bf16.msra.mxu0 %v3693
    %3759 = vmatprep.subr.bf16.mxu0 %v3696
    %3760 = vmatpush1.bf16.msra.mxu0 %v3695
    %3761 = vmatprep.subr.bf16.mxu0 %v3698
    %3762 = vmatpush1.bf16.msra.mxu0 %v3697
    %3763 = vmatprep.subr.bf16.mxu0 %v3700
    %3764 = vmatpush1.bf16.msra.mxu0 %v3699
    %3765 = vmatprep.subr.bf16.mxu0 %v3702
    %3766 = vmatpush1.bf16.msra.mxu0 %v3701
    %3767 = vmatprep.mubr.bf16.mxu0 %v3530
    %3768 = vmatmul.mubr.bf16.gmra.mrb[0].mxu0 %v3529
    %v3769 = vpop.f32.mrb[0].mxu0
    %v3770 = vadd.f32 %v3568, %v3769
    %v3771 = vpop.f32.mrb[0].mxu0
    %v3772 = vadd.f32 %v3572, %v3771
    %v3773 = vpop.f32.mrb[0].mxu0
    %v3774 = vpop.f32.mrb[0].mxu0
    %3775 = vdwg.mxu0
    %v3776 = vmax.f32 %v3770, 0.0
    %v3777 = vmax.f32 %v3772, 0.0
    %v3778 = vpack.c.bf16 %v3776, %v3776
    %v3779 = vpack.c.bf16 %v3777, %v3777
    %v3780 = vld [vmem:[#allocation67] sm:$0xff]
    %v3781 = vld [vmem:[#allocation67 + $0x8] sm:$0xff]
    %v3782 = vld [vmem:[#allocation67 + $0x10] sm:$0xff]
    %v3783 = vld [vmem:[#allocation67 + $0x18] sm:$0xff]
    %v3784 = vld [vmem:[#allocation67 + $0x20] sm:$0xff]
    %v3785 = vld [vmem:[#allocation67 + $0x28] sm:$0xff]
    %v3786 = vld [vmem:[#allocation67 + $0x30] sm:$0xff]
    %v3787 = vld [vmem:[#allocation67 + $0x38] sm:$0xff]
    %v3788 = vld [vmem:[#allocation67 + $0x40] sm:$0xff]
    %v3789 = vld [vmem:[#allocation67 + $0x48] sm:$0xff]
    %v3790 = vld [vmem:[#allocation67 + $0x50] sm:$0xff]
    %v3791 = vld [vmem:[#allocation67 + $0x58] sm:$0xff]
    %v3792 = vld [vmem:[#allocation67 + $0x60] sm:$0xff]
    %v3793 = vld [vmem:[#allocation67 + $0x68] sm:$0xff]
    %v3794 = vld [vmem:[#allocation67 + $0x70] sm:$0xff]
    %v3795 = vld [vmem:[#allocation67 + $0x78] sm:$0xff]
    %v3796 = vld [vmem:[#allocation67 + $0x80] sm:$0xff]
    %v3797 = vld [vmem:[#allocation67 + $0x88] sm:$0xff]
    %v3798 = vld [vmem:[#allocation67 + $0x90] sm:$0xff]
    %v3799 = vld [vmem:[#allocation67 + $0x98] sm:$0xff]
    %v3800 = vld [vmem:[#allocation67 + $0xa0] sm:$0xff]
    %v3801 = vld [vmem:[#allocation67 + $0xa8] sm:$0xff]
    %v3802 = vld [vmem:[#allocation67 + $0xb0] sm:$0xff]
    %v3803 = vld [vmem:[#allocation67 + $0xb8] sm:$0xff]
    %v3804 = vld [vmem:[#allocation67 + $0xc0] sm:$0xff]
    %v3805 = vld [vmem:[#allocation67 + $0xc8] sm:$0xff]
    %v3806 = vld [vmem:[#allocation67 + $0xd0] sm:$0xff]
    %v3807 = vld [vmem:[#allocation67 + $0xd8] sm:$0xff]
    %v3808 = vld [vmem:[#allocation67 + $0xe0] sm:$0xff]
    %v3809 = vld [vmem:[#allocation67 + $0xe8] sm:$0xff]
    %v3810 = vld [vmem:[#allocation67 + $0xf0] sm:$0xff]
    %v3811 = vld [vmem:[#allocation67 + $0xf8] sm:$0xff]
    %v3812 = vld [vmem:[#allocation64] sm:$0x3]
    %v3814 = vlaneseq
    %v3815 = vshrl.u32 %v3814, 7
    %v3816 = vsub.s32 0, %v3815
    %v3817 = vrot.slane %v3812, %v3816
    %v3818 = vlaneseq
    %v3819 = vshrl.u32 %v3818, 7
    %v3820 = vsub.s32 1, %v3819
    %v3821 = vrot.slane %v3812, %v3820
    %v3856 = vunpack.c.l.b16 %v3780
    %v3857 = vunpack.c.h.b16 %v3780
    %v3858 = vunpack.c.l.b16 %v3781
    %v3859 = vunpack.c.h.b16 %v3781
    %v3860 = vunpack.c.l.b16 %v3782
    %v3861 = vunpack.c.h.b16 %v3782
    %v3862 = vunpack.c.l.b16 %v3783
    %v3863 = vunpack.c.h.b16 %v3783
    %v3864 = vunpack.c.l.b16 %v3784
    %v3865 = vunpack.c.h.b16 %v3784
    %v3866 = vunpack.c.l.b16 %v3785
    %v3867 = vunpack.c.h.b16 %v3785
    %v3868 = vunpack.c.l.b16 %v3786
    %v3869 = vunpack.c.h.b16 %v3786
    %v3870 = vunpack.c.l.b16 %v3787
    %v3871 = vunpack.c.h.b16 %v3787
    %v3872 = vunpack.c.l.b16 %v3788
    %v3873 = vunpack.c.h.b16 %v3788
    %v3874 = vunpack.c.l.b16 %v3789
    %v3875 = vunpack.c.h.b16 %v3789
    %v3876 = vunpack.c.l.b16 %v3790
    %v3877 = vunpack.c.h.b16 %v3790
    %v3878 = vunpack.c.l.b16 %v3791
    %v3879 = vunpack.c.h.b16 %v3791
    %v3880 = vunpack.c.l.b16 %v3792
    %v3881 = vunpack.c.h.b16 %v3792
    %v3882 = vunpack.c.l.b16 %v3793
    %v3883 = vunpack.c.h.b16 %v3793
    %v3884 = vunpack.c.l.b16 %v3794
    %v3885 = vunpack.c.h.b16 %v3794
    %v3886 = vunpack.c.l.b16 %v3795
    %v3887 = vunpack.c.h.b16 %v3795
    %v3888 = vunpack.c.l.b16 %v3796
    %v3889 = vunpack.c.h.b16 %v3796
    %v3890 = vunpack.c.l.b16 %v3797
    %v3891 = vunpack.c.h.b16 %v3797
    %v3892 = vunpack.c.l.b16 %v3798
    %v3893 = vunpack.c.h.b16 %v3798
    %v3894 = vunpack.c.l.b16 %v3799
    %v3895 = vunpack.c.h.b16 %v3799
    %v3896 = vunpack.c.l.b16 %v3800
    %v3897 = vunpack.c.h.b16 %v3800
    %v3898 = vunpack.c.l.b16 %v3801
    %v3899 = vunpack.c.h.b16 %v3801
    %v3900 = vunpack.c.l.b16 %v3802
    %v3901 = vunpack.c.h.b16 %v3802
    %v3902 = vunpack.c.l.b16 %v3803
    %v3903 = vunpack.c.h.b16 %v3803
    %v3904 = vunpack.c.l.b16 %v3804
    %v3905 = vunpack.c.h.b16 %v3804
    %v3906 = vunpack.c.l.b16 %v3805
    %v3907 = vunpack.c.h.b16 %v3805
    %v3908 = vunpack.c.l.b16 %v3806
    %v3909 = vunpack.c.h.b16 %v3806
    %v3910 = vunpack.c.l.b16 %v3807
    %v3911 = vunpack.c.h.b16 %v3807
    %v3912 = vunpack.c.l.b16 %v3808
    %v3913 = vunpack.c.h.b16 %v3808
    %v3914 = vunpack.c.l.b16 %v3809
    %v3915 = vunpack.c.h.b16 %v3809
    %v3916 = vunpack.c.l.b16 %v3810
    %v3917 = vunpack.c.h.b16 %v3810
    %v3918 = vunpack.c.l.b16 %v3811
    %v3919 = vunpack.c.h.b16 %v3811
    %v3920 = vpack.c.b16 %v3858, %v3856
    %v3921 = vpack.c.b16 %v3859, %v3857
    %v3922 = vpack.c.b16 %v3862, %v3860
    %v3923 = vpack.c.b16 %v3863, %v3861
    %v3924 = vpack.c.b16 %v3866, %v3864
    %v3925 = vpack.c.b16 %v3867, %v3865
    %v3926 = vpack.c.b16 %v3870, %v3868
    %v3927 = vpack.c.b16 %v3871, %v3869
    %v3928 = vpack.c.b16 %v3874, %v3872
    %v3929 = vpack.c.b16 %v3875, %v3873
    %v3930 = vpack.c.b16 %v3878, %v3876
    %v3931 = vpack.c.b16 %v3879, %v3877
    %v3932 = vpack.c.b16 %v3882, %v3880
    %v3933 = vpack.c.b16 %v3883, %v3881
    %v3934 = vpack.c.b16 %v3886, %v3884
    %v3935 = vpack.c.b16 %v3887, %v3885
    %v3936 = vpack.c.b16 %v3890, %v3888
    %v3937 = vpack.c.b16 %v3891, %v3889
    %v3938 = vpack.c.b16 %v3894, %v3892
    %v3939 = vpack.c.b16 %v3895, %v3893
    %v3940 = vpack.c.b16 %v3898, %v3896
    %v3941 = vpack.c.b16 %v3899, %v3897
    %v3942 = vpack.c.b16 %v3902, %v3900
    %v3943 = vpack.c.b16 %v3903, %v3901
    %v3944 = vpack.c.b16 %v3906, %v3904
    %v3945 = vpack.c.b16 %v3907, %v3905
    %v3946 = vpack.c.b16 %v3910, %v3908
    %v3947 = vpack.c.b16 %v3911, %v3909
    %v3948 = vpack.c.b16 %v3914, %v3912
    %v3949 = vpack.c.b16 %v3915, %v3913
    %v3950 = vpack.c.b16 %v3918, %v3916
    %v3951 = vpack.c.b16 %v3919, %v3917
    %3984 = vmatprep.subr.bf16.mxu0 %v3921
    %3985 = vmatpush1.bf16.msra.mxu0 %v3920
    %3986 = vmatprep.subr.bf16.mxu0 %v3923
    %3987 = vmatpush1.bf16.msra.mxu0 %v3922
    %3988 = vmatprep.subr.bf16.mxu0 %v3925
    %3989 = vmatpush1.bf16.msra.mxu0 %v3924
    %3990 = vmatprep.subr.bf16.mxu0 %v3927
    %3991 = vmatpush1.bf16.msra.mxu0 %v3926
    %3992 = vmatprep.subr.bf16.mxu0 %v3929
    %3993 = vmatpush1.bf16.msra.mxu0 %v3928
    %3994 = vmatprep.subr.bf16.mxu0 %v3931
    %3995 = vmatpush1.bf16.msra.mxu0 %v3930
    %3996 = vmatprep.subr.bf16.mxu0 %v3933
    %3997 = vmatpush1.bf16.msra.mxu0 %v3932
    %3998 = vmatprep.subr.bf16.mxu0 %v3935
    %3999 = vmatpush1.bf16.msra.mxu0 %v3934
    %4000 = vmatprep.subr.bf16.mxu0 %v3937
    %4001 = vmatpush1.bf16.msra.mxu0 %v3936
    %4002 = vmatprep.subr.bf16.mxu0 %v3939
    %4003 = vmatpush1.bf16.msra.mxu0 %v3938
    %4004 = vmatprep.subr.bf16.mxu0 %v3941
    %4005 = vmatpush1.bf16.msra.mxu0 %v3940
    %4006 = vmatprep.subr.bf16.mxu0 %v3943
    %4007 = vmatpush1.bf16.msra.mxu0 %v3942
    %4008 = vmatprep.subr.bf16.mxu0 %v3945
    %4009 = vmatpush1.bf16.msra.mxu0 %v3944
    %4010 = vmatprep.subr.bf16.mxu0 %v3947
    %4011 = vmatpush1.bf16.msra.mxu0 %v3946
    %4012 = vmatprep.subr.bf16.mxu0 %v3949
    %4013 = vmatpush1.bf16.msra.mxu0 %v3948
    %4014 = vmatprep.subr.bf16.mxu0 %v3951
    %4015 = vmatpush1.bf16.msra.mxu0 %v3950
    %4016 = vmatprep.mubr.bf16.mxu0 %v3779
    %4017 = vmatmul.mubr.bf16.gmra.mrb[0].mxu0 %v3778
    %v4018 = vpop.f32.mrb[0].mxu0
    %v4019 = vadd.f32 %v3817, %v4018
    %v4020 = vpop.f32.mrb[0].mxu0
    %v4021 = vadd.f32 %v3821, %v4020
    %v4022 = vpop.f32.mrb[0].mxu0
    %v4023 = vpop.f32.mrb[0].mxu0
    %4024 = vdwg.mxu0
    %v4025 = vadd.f32 %v4019, %v3527
    %v4026 = vadd.f32 %v4021, %v3528
    %v4027 = vmax.f32 %v4025, 0.0
    %v4028 = vmax.f32 %v4026, 0.0
    %v4029 = vpack.c.bf16 %v4027, %v4027
    %v4030 = vpack.c.bf16 %v4028, %v4028
    %v4031 = vld [vmem:[#allocation71] sm:$0xff]
    %v4032 = vld [vmem:[#allocation71 + $0x8] sm:$0xff]
    %v4033 = vld [vmem:[#allocation71 + $0x10] sm:$0xff]
    %v4034 = vld [vmem:[#allocation71 + $0x18] sm:$0xff]
    %v4035 = vld [vmem:[#allocation71 + $0x20] sm:$0xff]
    %v4036 = vld [vmem:[#allocation71 + $0x28] sm:$0xff]
    %v4037 = vld [vmem:[#allocation71 + $0x30] sm:$0xff]
    %v4038 = vld [vmem:[#allocation71 + $0x38] sm:$0xff]
    %v4039 = vld [vmem:[#allocation71 + $0x40] sm:$0xff]
    %v4040 = vld [vmem:[#allocation71 + $0x48] sm:$0xff]
    %v4041 = vld [vmem:[#allocation71 + $0x50] sm:$0xff]
    %v4042 = vld [vmem:[#allocation71 + $0x58] sm:$0xff]
    %v4043 = vld [vmem:[#allocation71 + $0x60] sm:$0xff]
    %v4044 = vld [vmem:[#allocation71 + $0x68] sm:$0xff]
    %v4045 = vld [vmem:[#allocation71 + $0x70] sm:$0xff]
    %v4046 = vld [vmem:[#allocation71 + $0x78] sm:$0xff]
    %v4047 = vld [vmem:[#allocation71 + $0x80] sm:$0xff]
    %v4048 = vld [vmem:[#allocation71 + $0x88] sm:$0xff]
    %v4049 = vld [vmem:[#allocation71 + $0x90] sm:$0xff]
    %v4050 = vld [vmem:[#allocation71 + $0x98] sm:$0xff]
    %v4051 = vld [vmem:[#allocation71 + $0xa0] sm:$0xff]
    %v4052 = vld [vmem:[#allocation71 + $0xa8] sm:$0xff]
    %v4053 = vld [vmem:[#allocation71 + $0xb0] sm:$0xff]
    %v4054 = vld [vmem:[#allocation71 + $0xb8] sm:$0xff]
    %v4055 = vld [vmem:[#allocation71 + $0xc0] sm:$0xff]
    %v4056 = vld [vmem:[#allocation71 + $0xc8] sm:$0xff]
    %v4057 = vld [vmem:[#allocation71 + $0xd0] sm:$0xff]
    %v4058 = vld [vmem:[#allocation71 + $0xd8] sm:$0xff]
    %v4059 = vld [vmem:[#allocation71 + $0xe0] sm:$0xff]
    %v4060 = vld [vmem:[#allocation71 + $0xe8] sm:$0xff]
    %v4061 = vld [vmem:[#allocation71 + $0xf0] sm:$0xff]
    %v4062 = vld [vmem:[#allocation71 + $0xf8] sm:$0xff]
    %v4063 = vld [vmem:[#allocation68] sm:$0x3]
    %v4065 = vlaneseq
    %v4066 = vshrl.u32 %v4065, 7
    %v4067 = vsub.s32 0, %v4066
    %v4068 = vrot.slane %v4063, %v4067
    %v4069 = vlaneseq
    %v4070 = vshrl.u32 %v4069, 7
    %v4071 = vsub.s32 1, %v4070
    %v4072 = vrot.slane %v4063, %v4071
    %v4107 = vunpack.c.l.b16 %v4031
    %v4108 = vunpack.c.h.b16 %v4031
    %v4109 = vunpack.c.l.b16 %v4032
    %v4110 = vunpack.c.h.b16 %v4032
    %v4111 = vunpack.c.l.b16 %v4033
    %v4112 = vunpack.c.h.b16 %v4033
    %v4113 = vunpack.c.l.b16 %v4034
    %v4114 = vunpack.c.h.b16 %v4034
    %v4115 = vunpack.c.l.b16 %v4035
    %v4116 = vunpack.c.h.b16 %v4035
    %v4117 = vunpack.c.l.b16 %v4036
    %v4118 = vunpack.c.h.b16 %v4036
    %v4119 = vunpack.c.l.b16 %v4037
    %v4120 = vunpack.c.h.b16 %v4037
    %v4121 = vunpack.c.l.b16 %v4038
    %v4122 = vunpack.c.h.b16 %v4038
    %v4123 = vunpack.c.l.b16 %v4039
    %v4124 = vunpack.c.h.b16 %v4039
    %v4125 = vunpack.c.l.b16 %v4040
    %v4126 = vunpack.c.h.b16 %v4040
    %v4127 = vunpack.c.l.b16 %v4041
    %v4128 = vunpack.c.h.b16 %v4041
    %v4129 = vunpack.c.l.b16 %v4042
    %v4130 = vunpack.c.h.b16 %v4042
    %v4131 = vunpack.c.l.b16 %v4043
    %v4132 = vunpack.c.h.b16 %v4043
    %v4133 = vunpack.c.l.b16 %v4044
    %v4134 = vunpack.c.h.b16 %v4044
    %v4135 = vunpack.c.l.b16 %v4045
    %v4136 = vunpack.c.h.b16 %v4045
    %v4137 = vunpack.c.l.b16 %v4046
    %v4138 = vunpack.c.h.b16 %v4046
    %v4139 = vunpack.c.l.b16 %v4047
    %v4140 = vunpack.c.h.b16 %v4047
    %v4141 = vunpack.c.l.b16 %v4048
    %v4142 = vunpack.c.h.b16 %v4048
    %v4143 = vunpack.c.l.b16 %v4049
    %v4144 = vunpack.c.h.b16 %v4049
    %v4145 = vunpack.c.l.b16 %v4050
    %v4146 = vunpack.c.h.b16 %v4050
    %v4147 = vunpack.c.l.b16 %v4051
    %v4148 = vunpack.c.h.b16 %v4051
    %v4149 = vunpack.c.l.b16 %v4052
    %v4150 = vunpack.c.h.b16 %v4052
    %v4151 = vunpack.c.l.b16 %v4053
    %v4152 = vunpack.c.h.b16 %v4053
    %v4153 = vunpack.c.l.b16 %v4054
    %v4154 = vunpack.c.h.b16 %v4054
    %v4155 = vunpack.c.l.b16 %v4055
    %v4156 = vunpack.c.h.b16 %v4055
    %v4157 = vunpack.c.l.b16 %v4056
    %v4158 = vunpack.c.h.b16 %v4056
    %v4159 = vunpack.c.l.b16 %v4057
    %v4160 = vunpack.c.h.b16 %v4057
    %v4161 = vunpack.c.l.b16 %v4058
    %v4162 = vunpack.c.h.b16 %v4058
    %v4163 = vunpack.c.l.b16 %v4059
    %v4164 = vunpack.c.h.b16 %v4059
    %v4165 = vunpack.c.l.b16 %v4060
    %v4166 = vunpack.c.h.b16 %v4060
    %v4167 = vunpack.c.l.b16 %v4061
    %v4168 = vunpack.c.h.b16 %v4061
    %v4169 = vunpack.c.l.b16 %v4062
    %v4170 = vunpack.c.h.b16 %v4062
    %v4171 = vpack.c.b16 %v4109, %v4107
    %v4172 = vpack.c.b16 %v4110, %v4108
    %v4173 = vpack.c.b16 %v4113, %v4111
    %v4174 = vpack.c.b16 %v4114, %v4112
    %v4175 = vpack.c.b16 %v4117, %v4115
    %v4176 = vpack.c.b16 %v4118, %v4116
    %v4177 = vpack.c.b16 %v4121, %v4119
    %v4178 = vpack.c.b16 %v4122, %v4120
    %v4179 = vpack.c.b16 %v4125, %v4123
    %v4180 = vpack.c.b16 %v4126, %v4124
    %v4181 = vpack.c.b16 %v4129, %v4127
    %v4182 = vpack.c.b16 %v4130, %v4128
    %v4183 = vpack.c.b16 %v4133, %v4131
    %v4184 = vpack.c.b16 %v4134, %v4132
    %v4185 = vpack.c.b16 %v4137, %v4135
    %v4186 = vpack.c.b16 %v4138, %v4136
    %v4187 = vpack.c.b16 %v4141, %v4139
    %v4188 = vpack.c.b16 %v4142, %v4140
    %v4189 = vpack.c.b16 %v4145, %v4143
    %v4190 = vpack.c.b16 %v4146, %v4144
    %v4191 = vpack.c.b16 %v4149, %v4147
    %v4192 = vpack.c.b16 %v4150, %v4148
    %v4193 = vpack.c.b16 %v4153, %v4151
    %v4194 = vpack.c.b16 %v4154, %v4152
    %v4195 = vpack.c.b16 %v4157, %v4155
    %v4196 = vpack.c.b16 %v4158, %v4156
    %v4197 = vpack.c.b16 %v4161, %v4159
    %v4198 = vpack.c.b16 %v4162, %v4160
    %v4199 = vpack.c.b16 %v4165, %v4163
    %v4200 = vpack.c.b16 %v4166, %v4164
    %v4201 = vpack.c.b16 %v4169, %v4167
    %v4202 = vpack.c.b16 %v4170, %v4168
    %4235 = vmatprep.subr.bf16.mxu0 %v4172
    %4236 = vmatpush1.bf16.msra.mxu0 %v4171
    %4237 = vmatprep.subr.bf16.mxu0 %v4174
    %4238 = vmatpush1.bf16.msra.mxu0 %v4173
    %4239 = vmatprep.subr.bf16.mxu0 %v4176
    %4240 = vmatpush1.bf16.msra.mxu0 %v4175
    %4241 = vmatprep.subr.bf16.mxu0 %v4178
    %4242 = vmatpush1.bf16.msra.mxu0 %v4177
    %4243 = vmatprep.subr.bf16.mxu0 %v4180
    %4244 = vmatpush1.bf16.msra.mxu0 %v4179
    %4245 = vmatprep.subr.bf16.mxu0 %v4182
    %4246 = vmatpush1.bf16.msra.mxu0 %v4181
    %4247 = vmatprep.subr.bf16.mxu0 %v4184
    %4248 = vmatpush1.bf16.msra.mxu0 %v4183
    %4249 = vmatprep.subr.bf16.mxu0 %v4186
    %4250 = vmatpush1.bf16.msra.mxu0 %v4185
    %4251 = vmatprep.subr.bf16.mxu0 %v4188
    %4252 = vmatpush1.bf16.msra.mxu0 %v4187
    %4253 = vmatprep.subr.bf16.mxu0 %v4190
    %4254 = vmatpush1.bf16.msra.mxu0 %v4189
    %4255 = vmatprep.subr.bf16.mxu0 %v4192
    %4256 = vmatpush1.bf16.msra.mxu0 %v4191
    %4257 = vmatprep.subr.bf16.mxu0 %v4194
    %4258 = vmatpush1.bf16.msra.mxu0 %v4193
    %4259 = vmatprep.subr.bf16.mxu0 %v4196
    %4260 = vmatpush1.bf16.msra.mxu0 %v4195
    %4261 = vmatprep.subr.bf16.mxu0 %v4198
    %4262 = vmatpush1.bf16.msra.mxu0 %v4197
    %4263 = vmatprep.subr.bf16.mxu0 %v4200
    %4264 = vmatpush1.bf16.msra.mxu0 %v4199
    %4265 = vmatprep.subr.bf16.mxu0 %v4202
    %4266 = vmatpush1.bf16.msra.mxu0 %v4201
    %4267 = vmatprep.mubr.bf16.mxu0 %v4030
    %4268 = vmatmul.mubr.bf16.gmra.mrb[0].mxu0 %v4029
    %v4269 = vpop.f32.mrb[0].mxu0
    %v4270 = vadd.f32 %v4068, %v4269
    %v4271 = vpop.f32.mrb[0].mxu0
    %v4272 = vadd.f32 %v4072, %v4271
    %v4273 = vpop.f32.mrb[0].mxu0
    %v4274 = vpop.f32.mrb[0].mxu0
    %4275 = vdwg.mxu0
    %v4276 = vmax.f32 %v4270, 0.0
    %v4277 = vmax.f32 %v4272, 0.0
    %v4278 = vpack.c.bf16 %v4276, %v4276
    %v4279 = vpack.c.bf16 %v4277, %v4277
    %v4280 = vld [vmem:[#allocation73] sm:$0xff]
    %v4281 = vld [vmem:[#allocation73 + $0x8] sm:$0xff]
    %v4282 = vld [vmem:[#allocation73 + $0x10] sm:$0xff]
    %v4283 = vld [vmem:[#allocation73 + $0x18] sm:$0xff]
    %v4284 = vld [vmem:[#allocation73 + $0x20] sm:$0xff]
    %v4285 = vld [vmem:[#allocation73 + $0x28] sm:$0xff]
    %v4286 = vld [vmem:[#allocation73 + $0x30] sm:$0xff]
    %v4287 = vld [vmem:[#allocation73 + $0x38] sm:$0xff]
    %v4288 = vld [vmem:[#allocation73 + $0x40] sm:$0xff]
    %v4289 = vld [vmem:[#allocation73 + $0x48] sm:$0xff]
    %v4290 = vld [vmem:[#allocation73 + $0x50] sm:$0xff]
    %v4291 = vld [vmem:[#allocation73 + $0x58] sm:$0xff]
    %v4292 = vld [vmem:[#allocation73 + $0x60] sm:$0xff]
    %v4293 = vld [vmem:[#allocation73 + $0x68] sm:$0xff]
    %v4294 = vld [vmem:[#allocation73 + $0x70] sm:$0xff]
    %v4295 = vld [vmem:[#allocation73 + $0x78] sm:$0xff]
    %v4296 = vld [vmem:[#allocation73 + $0x80] sm:$0xff]
    %v4297 = vld [vmem:[#allocation73 + $0x88] sm:$0xff]
    %v4298 = vld [vmem:[#allocation73 + $0x90] sm:$0xff]
    %v4299 = vld [vmem:[#allocation73 + $0x98] sm:$0xff]
    %v4300 = vld [vmem:[#allocation73 + $0xa0] sm:$0xff]
    %v4301 = vld [vmem:[#allocation73 + $0xa8] sm:$0xff]
    %v4302 = vld [vmem:[#allocation73 + $0xb0] sm:$0xff]
    %v4303 = vld [vmem:[#allocation73 + $0xb8] sm:$0xff]
    %v4304 = vld [vmem:[#allocation73 + $0xc0] sm:$0xff]
    %v4305 = vld [vmem:[#allocation73 + $0xc8] sm:$0xff]
    %v4306 = vld [vmem:[#allocation73 + $0xd0] sm:$0xff]
    %v4307 = vld [vmem:[#allocation73 + $0xd8] sm:$0xff]
    %v4308 = vld [vmem:[#allocation73 + $0xe0] sm:$0xff]
    %v4309 = vld [vmem:[#allocation73 + $0xe8] sm:$0xff]
    %v4310 = vld [vmem:[#allocation73 + $0xf0] sm:$0xff]
    %v4311 = vld [vmem:[#allocation73 + $0xf8] sm:$0xff]
    %v4312 = vld [vmem:[#allocation70] sm:$0x3]
    %v4314 = vlaneseq
    %v4315 = vshrl.u32 %v4314, 7
    %v4316 = vsub.s32 0, %v4315
    %v4317 = vrot.slane %v4312, %v4316
    %v4318 = vlaneseq
    %v4319 = vshrl.u32 %v4318, 7
    %v4320 = vsub.s32 1, %v4319
    %v4321 = vrot.slane %v4312, %v4320
    %v4356 = vunpack.c.l.b16 %v4280
    %v4357 = vunpack.c.h.b16 %v4280
    %v4358 = vunpack.c.l.b16 %v4281
    %v4359 = vunpack.c.h.b16 %v4281
    %v4360 = vunpack.c.l.b16 %v4282
    %v4361 = vunpack.c.h.b16 %v4282
    %v4362 = vunpack.c.l.b16 %v4283
    %v4363 = vunpack.c.h.b16 %v4283
    %v4364 = vunpack.c.l.b16 %v4284
    %v4365 = vunpack.c.h.b16 %v4284
    %v4366 = vunpack.c.l.b16 %v4285
    %v4367 = vunpack.c.h.b16 %v4285
    %v4368 = vunpack.c.l.b16 %v4286
    %v4369 = vunpack.c.h.b16 %v4286
    %v4370 = vunpack.c.l.b16 %v4287
    %v4371 = vunpack.c.h.b16 %v4287
    %v4372 = vunpack.c.l.b16 %v4288
    %v4373 = vunpack.c.h.b16 %v4288
    %v4374 = vunpack.c.l.b16 %v4289
    %v4375 = vunpack.c.h.b16 %v4289
    %v4376 = vunpack.c.l.b16 %v4290
    %v4377 = vunpack.c.h.b16 %v4290
    %v4378 = vunpack.c.l.b16 %v4291
    %v4379 = vunpack.c.h.b16 %v4291
    %v4380 = vunpack.c.l.b16 %v4292
    %v4381 = vunpack.c.h.b16 %v4292
    %v4382 = vunpack.c.l.b16 %v4293
    %v4383 = vunpack.c.h.b16 %v4293
    %v4384 = vunpack.c.l.b16 %v4294
    %v4385 = vunpack.c.h.b16 %v4294
    %v4386 = vunpack.c.l.b16 %v4295
    %v4387 = vunpack.c.h.b16 %v4295
    %v4388 = vunpack.c.l.b16 %v4296
    %v4389 = vunpack.c.h.b16 %v4296
    %v4390 = vunpack.c.l.b16 %v4297
    %v4391 = vunpack.c.h.b16 %v4297
    %v4392 = vunpack.c.l.b16 %v4298
    %v4393 = vunpack.c.h.b16 %v4298
    %v4394 = vunpack.c.l.b16 %v4299
    %v4395 = vunpack.c.h.b16 %v4299
    %v4396 = vunpack.c.l.b16 %v4300
    %v4397 = vunpack.c.h.b16 %v4300
    %v4398 = vunpack.c.l.b16 %v4301
    %v4399 = vunpack.c.h.b16 %v4301
    %v4400 = vunpack.c.l.b16 %v4302
    %v4401 = vunpack.c.h.b16 %v4302
    %v4402 = vunpack.c.l.b16 %v4303
    %v4403 = vunpack.c.h.b16 %v4303
    %v4404 = vunpack.c.l.b16 %v4304
    %v4405 = vunpack.c.h.b16 %v4304
    %v4406 = vunpack.c.l.b16 %v4305
    %v4407 = vunpack.c.h.b16 %v4305
    %v4408 = vunpack.c.l.b16 %v4306
    %v4409 = vunpack.c.h.b16 %v4306
    %v4410 = vunpack.c.l.b16 %v4307
    %v4411 = vunpack.c.h.b16 %v4307
    %v4412 = vunpack.c.l.b16 %v4308
    %v4413 = vunpack.c.h.b16 %v4308
    %v4414 = vunpack.c.l.b16 %v4309
    %v4415 = vunpack.c.h.b16 %v4309
    %v4416 = vunpack.c.l.b16 %v4310
    %v4417 = vunpack.c.h.b16 %v4310
    %v4418 = vunpack.c.l.b16 %v4311
    %v4419 = vunpack.c.h.b16 %v4311
    %v4420 = vpack.c.b16 %v4358, %v4356
    %v4421 = vpack.c.b16 %v4359, %v4357
    %v4422 = vpack.c.b16 %v4362, %v4360
    %v4423 = vpack.c.b16 %v4363, %v4361
    %v4424 = vpack.c.b16 %v4366, %v4364
    %v4425 = vpack.c.b16 %v4367, %v4365
    %v4426 = vpack.c.b16 %v4370, %v4368
    %v4427 = vpack.c.b16 %v4371, %v4369
    %v4428 = vpack.c.b16 %v4374, %v4372
    %v4429 = vpack.c.b16 %v4375, %v4373
    %v4430 = vpack.c.b16 %v4378, %v4376
    %v4431 = vpack.c.b16 %v4379, %v4377
    %v4432 = vpack.c.b16 %v4382, %v4380
    %v4433 = vpack.c.b16 %v4383, %v4381
    %v4434 = vpack.c.b16 %v4386, %v4384
    %v4435 = vpack.c.b16 %v4387, %v4385
    %v4436 = vpack.c.b16 %v4390, %v4388
    %v4437 = vpack.c.b16 %v4391, %v4389
    %v4438 = vpack.c.b16 %v4394, %v4392
    %v4439 = vpack.c.b16 %v4395, %v4393
    %v4440 = vpack.c.b16 %v4398, %v4396
    %v4441 = vpack.c.b16 %v4399, %v4397
    %v4442 = vpack.c.b16 %v4402, %v4400
    %v4443 = vpack.c.b16 %v4403, %v4401
    %v4444 = vpack.c.b16 %v4406, %v4404
    %v4445 = vpack.c.b16 %v4407, %v4405
    %v4446 = vpack.c.b16 %v4410, %v4408
    %v4447 = vpack.c.b16 %v4411, %v4409
    %v4448 = vpack.c.b16 %v4414, %v4412
    %v4449 = vpack.c.b16 %v4415, %v4413
    %v4450 = vpack.c.b16 %v4418, %v4416
    %v4451 = vpack.c.b16 %v4419, %v4417
    %4484 = vmatprep.subr.bf16.mxu0 %v4421
    %4485 = vmatpush1.bf16.msra.mxu0 %v4420
    %4486 = vmatprep.subr.bf16.mxu0 %v4423
    %4487 = vmatpush1.bf16.msra.mxu0 %v4422
    %4488 = vmatprep.subr.bf16.mxu0 %v4425
    %4489 = vmatpush1.bf16.msra.mxu0 %v4424
    %4490 = vmatprep.subr.bf16.mxu0 %v4427
    %4491 = vmatpush1.bf16.msra.mxu0 %v4426
    %4492 = vmatprep.subr.bf16.mxu0 %v4429
    %4493 = vmatpush1.bf16.msra.mxu0 %v4428
    %4494 = vmatprep.subr.bf16.mxu0 %v4431
    %4495 = vmatpush1.bf16.msra.mxu0 %v4430
    %4496 = vmatprep.subr.bf16.mxu0 %v4433
    %4497 = vmatpush1.bf16.msra.mxu0 %v4432
    %4498 = vmatprep.subr.bf16.mxu0 %v4435
    %4499 = vmatpush1.bf16.msra.mxu0 %v4434
    %4500 = vmatprep.subr.bf16.mxu0 %v4437
    %4501 = vmatpush1.bf16.msra.mxu0 %v4436
    %4502 = vmatprep.subr.bf16.mxu0 %v4439
    %4503 = vmatpush1.bf16.msra.mxu0 %v4438
    %4504 = vmatprep.subr.bf16.mxu0 %v4441
    %4505 = vmatpush1.bf16.msra.mxu0 %v4440
    %4506 = vmatprep.subr.bf16.mxu0 %v4443
    %4507 = vmatpush1.bf16.msra.mxu0 %v4442
    %4508 = vmatprep.subr.bf16.mxu0 %v4445
    %4509 = vmatpush1.bf16.msra.mxu0 %v4444
    %4510 = vmatprep.subr.bf16.mxu0 %v4447
    %4511 = vmatpush1.bf16.msra.mxu0 %v4446
    %4512 = vmatprep.subr.bf16.mxu0 %v4449
    %4513 = vmatpush1.bf16.msra.mxu0 %v4448
    %4514 = vmatprep.subr.bf16.mxu0 %v4451
    %4515 = vmatpush1.bf16.msra.mxu0 %v4450
    %4516 = vmatprep.mubr.bf16.mxu0 %v4279
    %4517 = vmatmul.mubr.bf16.gmra.mrb[0].mxu0 %v4278
    %v4518 = vpop.f32.mrb[0].mxu0
    %v4519 = vadd.f32 %v4317, %v4518
    %v4520 = vpop.f32.mrb[0].mxu0
    %v4521 = vadd.f32 %v4321, %v4520
    %v4522 = vpop.f32.mrb[0].mxu0
    %v4523 = vpop.f32.mrb[0].mxu0
    %4524 = vdwg.mxu0
    %v4525 = vadd.f32 %v4519, %v4027
    %v4526 = vadd.f32 %v4521, %v4028
    %v4527 = vmax.f32 %v4525, 0.0
    %v4528 = vmax.f32 %v4526, 0.0
    %v4529 = vpack.c.bf16 %v4527, %v4527
    %v4530 = vpack.c.bf16 %v4528, %v4528
    %v4531 = vld [vmem:[#allocation77] sm:$0xff]
    %v4532 = vld [vmem:[#allocation77 + $0x8] sm:$0xff]
    %v4533 = vld [vmem:[#allocation77 + $0x10] sm:$0xff]
    %v4534 = vld [vmem:[#allocation77 + $0x18] sm:$0xff]
    %v4535 = vld [vmem:[#allocation77 + $0x20] sm:$0xff]
    %v4536 = vld [vmem:[#allocation77 + $0x28] sm:$0xff]
    %v4537 = vld [vmem:[#allocation77 + $0x30] sm:$0xff]
    %v4538 = vld [vmem:[#allocation77 + $0x38] sm:$0xff]
    %v4539 = vld [vmem:[#allocation77 + $0x40] sm:$0xff]
    %v4540 = vld [vmem:[#allocation77 + $0x48] sm:$0xff]
    %v4541 = vld [vmem:[#allocation77 + $0x50] sm:$0xff]
    %v4542 = vld [vmem:[#allocation77 + $0x58] sm:$0xff]
    %v4543 = vld [vmem:[#allocation77 + $0x60] sm:$0xff]
    %v4544 = vld [vmem:[#allocation77 + $0x68] sm:$0xff]
    %v4545 = vld [vmem:[#allocation77 + $0x70] sm:$0xff]
    %v4546 = vld [vmem:[#allocation77 + $0x78] sm:$0xff]
    %v4547 = vld [vmem:[#allocation77 + $0x80] sm:$0xff]
    %v4548 = vld [vmem:[#allocation77 + $0x88] sm:$0xff]
    %v4549 = vld [vmem:[#allocation77 + $0x90] sm:$0xff]
    %v4550 = vld [vmem:[#allocation77 + $0x98] sm:$0xff]
    %v4551 = vld [vmem:[#allocation77 + $0xa0] sm:$0xff]
    %v4552 = vld [vmem:[#allocation77 + $0xa8] sm:$0xff]
    %v4553 = vld [vmem:[#allocation77 + $0xb0] sm:$0xff]
    %v4554 = vld [vmem:[#allocation77 + $0xb8] sm:$0xff]
    %v4555 = vld [vmem:[#allocation77 + $0xc0] sm:$0xff]
    %v4556 = vld [vmem:[#allocation77 + $0xc8] sm:$0xff]
    %v4557 = vld [vmem:[#allocation77 + $0xd0] sm:$0xff]
    %v4558 = vld [vmem:[#allocation77 + $0xd8] sm:$0xff]
    %v4559 = vld [vmem:[#allocation77 + $0xe0] sm:$0xff]
    %v4560 = vld [vmem:[#allocation77 + $0xe8] sm:$0xff]
    %v4561 = vld [vmem:[#allocation77 + $0xf0] sm:$0xff]
    %v4562 = vld [vmem:[#allocation77 + $0xf8] sm:$0xff]
    %v4563 = vld [vmem:[#allocation74] sm:$0x3]
    %v4565 = vlaneseq
    %v4566 = vshrl.u32 %v4565, 7
    %v4567 = vsub.s32 0, %v4566
    %v4568 = vrot.slane %v4563, %v4567
    %v4569 = vlaneseq
    %v4570 = vshrl.u32 %v4569, 7
    %v4571 = vsub.s32 1, %v4570
    %v4572 = vrot.slane %v4563, %v4571
    %v4607 = vunpack.c.l.b16 %v4531
    %v4608 = vunpack.c.h.b16 %v4531
    %v4609 = vunpack.c.l.b16 %v4532
    %v4610 = vunpack.c.h.b16 %v4532
    %v4611 = vunpack.c.l.b16 %v4533
    %v4612 = vunpack.c.h.b16 %v4533
    %v4613 = vunpack.c.l.b16 %v4534
    %v4614 = vunpack.c.h.b16 %v4534
    %v4615 = vunpack.c.l.b16 %v4535
    %v4616 = vunpack.c.h.b16 %v4535
    %v4617 = vunpack.c.l.b16 %v4536
    %v4618 = vunpack.c.h.b16 %v4536
    %v4619 = vunpack.c.l.b16 %v4537
    %v4620 = vunpack.c.h.b16 %v4537
    %v4621 = vunpack.c.l.b16 %v4538
    %v4622 = vunpack.c.h.b16 %v4538
    %v4623 = vunpack.c.l.b16 %v4539
    %v4624 = vunpack.c.h.b16 %v4539
    %v4625 = vunpack.c.l.b16 %v4540
    %v4626 = vunpack.c.h.b16 %v4540
    %v4627 = vunpack.c.l.b16 %v4541
    %v4628 = vunpack.c.h.b16 %v4541
    %v4629 = vunpack.c.l.b16 %v4542
    %v4630 = vunpack.c.h.b16 %v4542
    %v4631 = vunpack.c.l.b16 %v4543
    %v4632 = vunpack.c.h.b16 %v4543
    %v4633 = vunpack.c.l.b16 %v4544
    %v4634 = vunpack.c.h.b16 %v4544
    %v4635 = vunpack.c.l.b16 %v4545
    %v4636 = vunpack.c.h.b16 %v4545
    %v4637 = vunpack.c.l.b16 %v4546
    %v4638 = vunpack.c.h.b16 %v4546
    %v4639 = vunpack.c.l.b16 %v4547
    %v4640 = vunpack.c.h.b16 %v4547
    %v4641 = vunpack.c.l.b16 %v4548
    %v4642 = vunpack.c.h.b16 %v4548
    %v4643 = vunpack.c.l.b16 %v4549
    %v4644 = vunpack.c.h.b16 %v4549
    %v4645 = vunpack.c.l.b16 %v4550
    %v4646 = vunpack.c.h.b16 %v4550
    %v4647 = vunpack.c.l.b16 %v4551
    %v4648 = vunpack.c.h.b16 %v4551
    %v4649 = vunpack.c.l.b16 %v4552
    %v4650 = vunpack.c.h.b16 %v4552
    %v4651 = vunpack.c.l.b16 %v4553
    %v4652 = vunpack.c.h.b16 %v4553
    %v4653 = vunpack.c.l.b16 %v4554
    %v4654 = vunpack.c.h.b16 %v4554
    %v4655 = vunpack.c.l.b16 %v4555
    %v4656 = vunpack.c.h.b16 %v4555
    %v4657 = vunpack.c.l.b16 %v4556
    %v4658 = vunpack.c.h.b16 %v4556
    %v4659 = vunpack.c.l.b16 %v4557
    %v4660 = vunpack.c.h.b16 %v4557
    %v4661 = vunpack.c.l.b16 %v4558
    %v4662 = vunpack.c.h.b16 %v4558
    %v4663 = vunpack.c.l.b16 %v4559
    %v4664 = vunpack.c.h.b16 %v4559
    %v4665 = vunpack.c.l.b16 %v4560
    %v4666 = vunpack.c.h.b16 %v4560
    %v4667 = vunpack.c.l.b16 %v4561
    %v4668 = vunpack.c.h.b16 %v4561
    %v4669 = vunpack.c.l.b16 %v4562
    %v4670 = vunpack.c.h.b16 %v4562
    %v4671 = vpack.c.b16 %v4609, %v4607
    %v4672 = vpack.c.b16 %v4610, %v4608
    %v4673 = vpack.c.b16 %v4613, %v4611
    %v4674 = vpack.c.b16 %v4614, %v4612
    %v4675 = vpack.c.b16 %v4617, %v4615
    %v4676 = vpack.c.b16 %v4618, %v4616
    %v4677 = vpack.c.b16 %v4621, %v4619
    %v4678 = vpack.c.b16 %v4622, %v4620
    %v4679 = vpack.c.b16 %v4625, %v4623
    %v4680 = vpack.c.b16 %v4626, %v4624
    %v4681 = vpack.c.b16 %v4629, %v4627
    %v4682 = vpack.c.b16 %v4630, %v4628
    %v4683 = vpack.c.b16 %v4633, %v4631
    %v4684 = vpack.c.b16 %v4634, %v4632
    %v4685 = vpack.c.b16 %v4637, %v4635
    %v4686 = vpack.c.b16 %v4638, %v4636
    %v4687 = vpack.c.b16 %v4641, %v4639
    %v4688 = vpack.c.b16 %v4642, %v4640
    %v4689 = vpack.c.b16 %v4645, %v4643
    %v4690 = vpack.c.b16 %v4646, %v4644
    %v4691 = vpack.c.b16 %v4649, %v4647
    %v4692 = vpack.c.b16 %v4650, %v4648
    %v4693 = vpack.c.b16 %v4653, %v4651
    %v4694 = vpack.c.b16 %v4654, %v4652
    %v4695 = vpack.c.b16 %v4657, %v4655
    %v4696 = vpack.c.b16 %v4658, %v4656
    %v4697 = vpack.c.b16 %v4661, %v4659
    %v4698 = vpack.c.b16 %v4662, %v4660
    %v4699 = vpack.c.b16 %v4665, %v4663
    %v4700 = vpack.c.b16 %v4666, %v4664
    %v4701 = vpack.c.b16 %v4669, %v4667
    %v4702 = vpack.c.b16 %v4670, %v4668
    %4735 = vmatprep.subr.bf16.mxu0 %v4672
    %4736 = vmatpush1.bf16.msra.mxu0 %v4671
    %4737 = vmatprep.subr.bf16.mxu0 %v4674
    %4738 = vmatpush1.bf16.msra.mxu0 %v4673
    %4739 = vmatprep.subr.bf16.mxu0 %v4676
    %4740 = vmatpush1.bf16.msra.mxu0 %v4675
    %4741 = vmatprep.subr.bf16.mxu0 %v4678
    %4742 = vmatpush1.bf16.msra.mxu0 %v4677
    %4743 = vmatprep.subr.bf16.mxu0 %v4680
    %4744 = vmatpush1.bf16.msra.mxu0 %v4679
    %4745 = vmatprep.subr.bf16.mxu0 %v4682
    %4746 = vmatpush1.bf16.msra.mxu0 %v4681
    %4747 = vmatprep.subr.bf16.mxu0 %v4684
    %4748 = vmatpush1.bf16.msra.mxu0 %v4683
    %4749 = vmatprep.subr.bf16.mxu0 %v4686
    %4750 = vmatpush1.bf16.msra.mxu0 %v4685
    %4751 = vmatprep.subr.bf16.mxu0 %v4688
    %4752 = vmatpush1.bf16.msra.mxu0 %v4687
    %4753 = vmatprep.subr.bf16.mxu0 %v4690
    %4754 = vmatpush1.bf16.msra.mxu0 %v4689
    %4755 = vmatprep.subr.bf16.mxu0 %v4692
    %4756 = vmatpush1.bf16.msra.mxu0 %v4691
    %4757 = vmatprep.subr.bf16.mxu0 %v4694
    %4758 = vmatpush1.bf16.msra.mxu0 %v4693
    %4759 = vmatprep.subr.bf16.mxu0 %v4696
    %4760 = vmatpush1.bf16.msra.mxu0 %v4695
    %4761 = vmatprep.subr.bf16.mxu0 %v4698
    %4762 = vmatpush1.bf16.msra.mxu0 %v4697
    %4763 = vmatprep.subr.bf16.mxu0 %v4700
    %4764 = vmatpush1.bf16.msra.mxu0 %v4699
    %4765 = vmatprep.subr.bf16.mxu0 %v4702
    %4766 = vmatpush1.bf16.msra.mxu0 %v4701
    %4767 = vmatprep.mubr.bf16.mxu0 %v4530
    %4768 = vmatmul.mubr.bf16.gmra.mrb[0].mxu0 %v4529
    %v4769 = vpop.f32.mrb[0].mxu0
    %v4770 = vadd.f32 %v4568, %v4769
    %v4771 = vpop.f32.mrb[0].mxu0
    %v4772 = vadd.f32 %v4572, %v4771
    %v4773 = vpop.f32.mrb[0].mxu0
    %v4774 = vpop.f32.mrb[0].mxu0
    %4775 = vdwg.mxu0
    %v4776 = vmax.f32 %v4770, 0.0
    %v4777 = vmax.f32 %v4772, 0.0
    %v4778 = vpack.c.bf16 %v4776, %v4776
    %v4779 = vpack.c.bf16 %v4777, %v4777
    %v4780 = vld [vmem:[#allocation79] sm:$0xff]
    %v4781 = vld [vmem:[#allocation79 + $0x8] sm:$0xff]
    %v4782 = vld [vmem:[#allocation79 + $0x10] sm:$0xff]
    %v4783 = vld [vmem:[#allocation79 + $0x18] sm:$0xff]
    %v4784 = vld [vmem:[#allocation79 + $0x20] sm:$0xff]
    %v4785 = vld [vmem:[#allocation79 + $0x28] sm:$0xff]
    %v4786 = vld [vmem:[#allocation79 + $0x30] sm:$0xff]
    %v4787 = vld [vmem:[#allocation79 + $0x38] sm:$0xff]
    %v4788 = vld [vmem:[#allocation79 + $0x40] sm:$0xff]
    %v4789 = vld [vmem:[#allocation79 + $0x48] sm:$0xff]
    %v4790 = vld [vmem:[#allocation79 + $0x50] sm:$0xff]
    %v4791 = vld [vmem:[#allocation79 + $0x58] sm:$0xff]
    %v4792 = vld [vmem:[#allocation79 + $0x60] sm:$0xff]
    %v4793 = vld [vmem:[#allocation79 + $0x68] sm:$0xff]
    %v4794 = vld [vmem:[#allocation79 + $0x70] sm:$0xff]
    %v4795 = vld [vmem:[#allocation79 + $0x78] sm:$0xff]
    %v4796 = vld [vmem:[#allocation79 + $0x80] sm:$0xff]
    %v4797 = vld [vmem:[#allocation79 + $0x88] sm:$0xff]
    %v4798 = vld [vmem:[#allocation79 + $0x90] sm:$0xff]
    %v4799 = vld [vmem:[#allocation79 + $0x98] sm:$0xff]
    %v4800 = vld [vmem:[#allocation79 + $0xa0] sm:$0xff]
    %v4801 = vld [vmem:[#allocation79 + $0xa8] sm:$0xff]
    %v4802 = vld [vmem:[#allocation79 + $0xb0] sm:$0xff]
    %v4803 = vld [vmem:[#allocation79 + $0xb8] sm:$0xff]
    %v4804 = vld [vmem:[#allocation79 + $0xc0] sm:$0xff]
    %v4805 = vld [vmem:[#allocation79 + $0xc8] sm:$0xff]
    %v4806 = vld [vmem:[#allocation79 + $0xd0] sm:$0xff]
    %v4807 = vld [vmem:[#allocation79 + $0xd8] sm:$0xff]
    %v4808 = vld [vmem:[#allocation79 + $0xe0] sm:$0xff]
    %v4809 = vld [vmem:[#allocation79 + $0xe8] sm:$0xff]
    %v4810 = vld [vmem:[#allocation79 + $0xf0] sm:$0xff]
    %v4811 = vld [vmem:[#allocation79 + $0xf8] sm:$0xff]
    %v4812 = vld [vmem:[#allocation76] sm:$0x3]
    %v4814 = vlaneseq
    %v4815 = vshrl.u32 %v4814, 7
    %v4816 = vsub.s32 0, %v4815
    %v4817 = vrot.slane %v4812, %v4816
    %v4818 = vlaneseq
    %v4819 = vshrl.u32 %v4818, 7
    %v4820 = vsub.s32 1, %v4819
    %v4821 = vrot.slane %v4812, %v4820
    %v4856 = vunpack.c.l.b16 %v4780
    %v4857 = vunpack.c.h.b16 %v4780
    %v4858 = vunpack.c.l.b16 %v4781
    %v4859 = vunpack.c.h.b16 %v4781
    %v4860 = vunpack.c.l.b16 %v4782
    %v4861 = vunpack.c.h.b16 %v4782
    %v4862 = vunpack.c.l.b16 %v4783
    %v4863 = vunpack.c.h.b16 %v4783
    %v4864 = vunpack.c.l.b16 %v4784
    %v4865 = vunpack.c.h.b16 %v4784
    %v4866 = vunpack.c.l.b16 %v4785
    %v4867 = vunpack.c.h.b16 %v4785
    %v4868 = vunpack.c.l.b16 %v4786
    %v4869 = vunpack.c.h.b16 %v4786
    %v4870 = vunpack.c.l.b16 %v4787
    %v4871 = vunpack.c.h.b16 %v4787
    %v4872 = vunpack.c.l.b16 %v4788
    %v4873 = vunpack.c.h.b16 %v4788
    %v4874 = vunpack.c.l.b16 %v4789
    %v4875 = vunpack.c.h.b16 %v4789
    %v4876 = vunpack.c.l.b16 %v4790
    %v4877 = vunpack.c.h.b16 %v4790
    %v4878 = vunpack.c.l.b16 %v4791
    %v4879 = vunpack.c.h.b16 %v4791
    %v4880 = vunpack.c.l.b16 %v4792
    %v4881 = vunpack.c.h.b16 %v4792
    %v4882 = vunpack.c.l.b16 %v4793
    %v4883 = vunpack.c.h.b16 %v4793
    %v4884 = vunpack.c.l.b16 %v4794
    %v4885 = vunpack.c.h.b16 %v4794
    %v4886 = vunpack.c.l.b16 %v4795
    %v4887 = vunpack.c.h.b16 %v4795
    %v4888 = vunpack.c.l.b16 %v4796
    %v4889 = vunpack.c.h.b16 %v4796
    %v4890 = vunpack.c.l.b16 %v4797
    %v4891 = vunpack.c.h.b16 %v4797
    %v4892 = vunpack.c.l.b16 %v4798
    %v4893 = vunpack.c.h.b16 %v4798
    %v4894 = vunpack.c.l.b16 %v4799
    %v4895 = vunpack.c.h.b16 %v4799
    %v4896 = vunpack.c.l.b16 %v4800
    %v4897 = vunpack.c.h.b16 %v4800
    %v4898 = vunpack.c.l.b16 %v4801
    %v4899 = vunpack.c.h.b16 %v4801
    %v4900 = vunpack.c.l.b16 %v4802
    %v4901 = vunpack.c.h.b16 %v4802
    %v4902 = vunpack.c.l.b16 %v4803
    %v4903 = vunpack.c.h.b16 %v4803
    %v4904 = vunpack.c.l.b16 %v4804
    %v4905 = vunpack.c.h.b16 %v4804
    %v4906 = vunpack.c.l.b16 %v4805
    %v4907 = vunpack.c.h.b16 %v4805
    %v4908 = vunpack.c.l.b16 %v4806
    %v4909 = vunpack.c.h.b16 %v4806
    %v4910 = vunpack.c.l.b16 %v4807
    %v4911 = vunpack.c.h.b16 %v4807
    %v4912 = vunpack.c.l.b16 %v4808
    %v4913 = vunpack.c.h.b16 %v4808
    %v4914 = vunpack.c.l.b16 %v4809
    %v4915 = vunpack.c.h.b16 %v4809
    %v4916 = vunpack.c.l.b16 %v4810
    %v4917 = vunpack.c.h.b16 %v4810
    %v4918 = vunpack.c.l.b16 %v4811
    %v4919 = vunpack.c.h.b16 %v4811
    %v4920 = vpack.c.b16 %v4858, %v4856
    %v4921 = vpack.c.b16 %v4859, %v4857
    %v4922 = vpack.c.b16 %v4862, %v4860
    %v4923 = vpack.c.b16 %v4863, %v4861
    %v4924 = vpack.c.b16 %v4866, %v4864
    %v4925 = vpack.c.b16 %v4867, %v4865
    %v4926 = vpack.c.b16 %v4870, %v4868
    %v4927 = vpack.c.b16 %v4871, %v4869
    %v4928 = vpack.c.b16 %v4874, %v4872
    %v4929 = vpack.c.b16 %v4875, %v4873
    %v4930 = vpack.c.b16 %v4878, %v4876
    %v4931 = vpack.c.b16 %v4879, %v4877
    %v4932 = vpack.c.b16 %v4882, %v4880
    %v4933 = vpack.c.b16 %v4883, %v4881
    %v4934 = vpack.c.b16 %v4886, %v4884
    %v4935 = vpack.c.b16 %v4887, %v4885
    %v4936 = vpack.c.b16 %v4890, %v4888
    %v4937 = vpack.c.b16 %v4891, %v4889
    %v4938 = vpack.c.b16 %v4894, %v4892
    %v4939 = vpack.c.b16 %v4895, %v4893
    %v4940 = vpack.c.b16 %v4898, %v4896
    %v4941 = vpack.c.b16 %v4899, %v4897
    %v4942 = vpack.c.b16 %v4902, %v4900
    %v4943 = vpack.c.b16 %v4903, %v4901
    %v4944 = vpack.c.b16 %v4906, %v4904
    %v4945 = vpack.c.b16 %v4907, %v4905
    %v4946 = vpack.c.b16 %v4910, %v4908
    %v4947 = vpack.c.b16 %v4911, %v4909
    %v4948 = vpack.c.b16 %v4914, %v4912
    %v4949 = vpack.c.b16 %v4915, %v4913
    %v4950 = vpack.c.b16 %v4918, %v4916
    %v4951 = vpack.c.b16 %v4919, %v4917
    %4984 = vmatprep.subr.bf16.mxu0 %v4921
    %4985 = vmatpush1.bf16.msra.mxu0 %v4920
    %4986 = vmatprep.subr.bf16.mxu0 %v4923
    %4987 = vmatpush1.bf16.msra.mxu0 %v4922
    %4988 = vmatprep.subr.bf16.mxu0 %v4925
    %4989 = vmatpush1.bf16.msra.mxu0 %v4924
    %4990 = vmatprep.subr.bf16.mxu0 %v4927
    %4991 = vmatpush1.bf16.msra.mxu0 %v4926
    %4992 = vmatprep.subr.bf16.mxu0 %v4929
    %4993 = vmatpush1.bf16.msra.mxu0 %v4928
    %4994 = vmatprep.subr.bf16.mxu0 %v4931
    %4995 = vmatpush1.bf16.msra.mxu0 %v4930
    %4996 = vmatprep.subr.bf16.mxu0 %v4933
    %4997 = vmatpush1.bf16.msra.mxu0 %v4932
    %4998 = vmatprep.subr.bf16.mxu0 %v4935
    %4999 = vmatpush1.bf16.msra.mxu0 %v4934
    %5000 = vmatprep.subr.bf16.mxu0 %v4937
    %5001 = vmatpush1.bf16.msra.mxu0 %v4936
    %5002 = vmatprep.subr.bf16.mxu0 %v4939
    %5003 = vmatpush1.bf16.msra.mxu0 %v4938
    %5004 = vmatprep.subr.bf16.mxu0 %v4941
    %5005 = vmatpush1.bf16.msra.mxu0 %v4940
    %5006 = vmatprep.subr.bf16.mxu0 %v4943
    %5007 = vmatpush1.bf16.msra.mxu0 %v4942
    %5008 = vmatprep.subr.bf16.mxu0 %v4945
    %5009 = vmatpush1.bf16.msra.mxu0 %v4944
    %5010 = vmatprep.subr.bf16.mxu0 %v4947
    %5011 = vmatpush1.bf16.msra.mxu0 %v4946
    %5012 = vmatprep.subr.bf16.mxu0 %v4949
    %5013 = vmatpush1.bf16.msra.mxu0 %v4948
    %5014 = vmatprep.subr.bf16.mxu0 %v4951
    %5015 = vmatpush1.bf16.msra.mxu0 %v4950
    %5016 = vmatprep.mubr.bf16.mxu0 %v4779
    %5017 = vmatmul.mubr.bf16.gmra.mrb[0].mxu0 %v4778
    %v5018 = vpop.f32.mrb[0].mxu0
    %v5019 = vadd.f32 %v4817, %v5018
    %v5020 = vpop.f32.mrb[0].mxu0
    %v5021 = vadd.f32 %v4821, %v5020
    %v5022 = vpop.f32.mrb[0].mxu0
    %v5023 = vpop.f32.mrb[0].mxu0
    %5024 = vdwg.mxu0
    %v5025 = vadd.f32 %v5019, %v4527
    %v5026 = vadd.f32 %v5021, %v4528
    %v5027 = vmax.f32 %v5025, 0.0
    %v5028 = vmax.f32 %v5026, 0.0
    %v5029 = vpack.c.bf16 %v5027, %v5027
    %v5030 = vpack.c.bf16 %v5028, %v5028
    %v5031 = vld [vmem:[#allocation83] sm:$0xff]
    %v5032 = vld [vmem:[#allocation83 + $0x8] sm:$0xff]
    %v5033 = vld [vmem:[#allocation83 + $0x10] sm:$0xff]
    %v5034 = vld [vmem:[#allocation83 + $0x18] sm:$0xff]
    %v5035 = vld [vmem:[#allocation83 + $0x20] sm:$0xff]
    %v5036 = vld [vmem:[#allocation83 + $0x28] sm:$0xff]
    %v5037 = vld [vmem:[#allocation83 + $0x30] sm:$0xff]
    %v5038 = vld [vmem:[#allocation83 + $0x38] sm:$0xff]
    %v5039 = vld [vmem:[#allocation83 + $0x40] sm:$0xff]
    %v5040 = vld [vmem:[#allocation83 + $0x48] sm:$0xff]
    %v5041 = vld [vmem:[#allocation83 + $0x50] sm:$0xff]
    %v5042 = vld [vmem:[#allocation83 + $0x58] sm:$0xff]
    %v5043 = vld [vmem:[#allocation83 + $0x60] sm:$0xff]
    %v5044 = vld [vmem:[#allocation83 + $0x68] sm:$0xff]
    %v5045 = vld [vmem:[#allocation83 + $0x70] sm:$0xff]
    %v5046 = vld [vmem:[#allocation83 + $0x78] sm:$0xff]
    %v5047 = vld [vmem:[#allocation83 + $0x80] sm:$0xff]
    %v5048 = vld [vmem:[#allocation83 + $0x88] sm:$0xff]
    %v5049 = vld [vmem:[#allocation83 + $0x90] sm:$0xff]
    %v5050 = vld [vmem:[#allocation83 + $0x98] sm:$0xff]
    %v5051 = vld [vmem:[#allocation83 + $0xa0] sm:$0xff]
    %v5052 = vld [vmem:[#allocation83 + $0xa8] sm:$0xff]
    %v5053 = vld [vmem:[#allocation83 + $0xb0] sm:$0xff]
    %v5054 = vld [vmem:[#allocation83 + $0xb8] sm:$0xff]
    %v5055 = vld [vmem:[#allocation83 + $0xc0] sm:$0xff]
    %v5056 = vld [vmem:[#allocation83 + $0xc8] sm:$0xff]
    %v5057 = vld [vmem:[#allocation83 + $0xd0] sm:$0xff]
    %v5058 = vld [vmem:[#allocation83 + $0xd8] sm:$0xff]
    %v5059 = vld [vmem:[#allocation83 + $0xe0] sm:$0xff]
    %v5060 = vld [vmem:[#allocation83 + $0xe8] sm:$0xff]
    %v5061 = vld [vmem:[#allocation83 + $0xf0] sm:$0xff]
    %v5062 = vld [vmem:[#allocation83 + $0xf8] sm:$0xff]
    %v5063 = vld [vmem:[#allocation80] sm:$0x3]
    %v5065 = vlaneseq
    %v5066 = vshrl.u32 %v5065, 7
    %v5067 = vsub.s32 0, %v5066
    %v5068 = vrot.slane %v5063, %v5067
    %v5069 = vlaneseq
    %v5070 = vshrl.u32 %v5069, 7
    %v5071 = vsub.s32 1, %v5070
    %v5072 = vrot.slane %v5063, %v5071
    %v5107 = vunpack.c.l.b16 %v5031
    %v5108 = vunpack.c.h.b16 %v5031
    %v5109 = vunpack.c.l.b16 %v5032
    %v5110 = vunpack.c.h.b16 %v5032
    %v5111 = vunpack.c.l.b16 %v5033
    %v5112 = vunpack.c.h.b16 %v5033
    %v5113 = vunpack.c.l.b16 %v5034
    %v5114 = vunpack.c.h.b16 %v5034
    %v5115 = vunpack.c.l.b16 %v5035
    %v5116 = vunpack.c.h.b16 %v5035
    %v5117 = vunpack.c.l.b16 %v5036
    %v5118 = vunpack.c.h.b16 %v5036
    %v5119 = vunpack.c.l.b16 %v5037
    %v5120 = vunpack.c.h.b16 %v5037
    %v5121 = vunpack.c.l.b16 %v5038
    %v5122 = vunpack.c.h.b16 %v5038
    %v5123 = vunpack.c.l.b16 %v5039
    %v5124 = vunpack.c.h.b16 %v5039
    %v5125 = vunpack.c.l.b16 %v5040
    %v5126 = vunpack.c.h.b16 %v5040
    %v5127 = vunpack.c.l.b16 %v5041
    %v5128 = vunpack.c.h.b16 %v5041
    %v5129 = vunpack.c.l.b16 %v5042
    %v5130 = vunpack.c.h.b16 %v5042
    %v5131 = vunpack.c.l.b16 %v5043
    %v5132 = vunpack.c.h.b16 %v5043
    %v5133 = vunpack.c.l.b16 %v5044
    %v5134 = vunpack.c.h.b16 %v5044
    %v5135 = vunpack.c.l.b16 %v5045
    %v5136 = vunpack.c.h.b16 %v5045
    %v5137 = vunpack.c.l.b16 %v5046
    %v5138 = vunpack.c.h.b16 %v5046
    %v5139 = vunpack.c.l.b16 %v5047
    %v5140 = vunpack.c.h.b16 %v5047
    %v5141 = vunpack.c.l.b16 %v5048
    %v5142 = vunpack.c.h.b16 %v5048
    %v5143 = vunpack.c.l.b16 %v5049
    %v5144 = vunpack.c.h.b16 %v5049
    %v5145 = vunpack.c.l.b16 %v5050
    %v5146 = vunpack.c.h.b16 %v5050
    %v5147 = vunpack.c.l.b16 %v5051
    %v5148 = vunpack.c.h.b16 %v5051
    %v5149 = vunpack.c.l.b16 %v5052
    %v5150 = vunpack.c.h.b16 %v5052
    %v5151 = vunpack.c.l.b16 %v5053
    %v5152 = vunpack.c.h.b16 %v5053
    %v5153 = vunpack.c.l.b16 %v5054
    %v5154 = vunpack.c.h.b16 %v5054
    %v5155 = vunpack.c.l.b16 %v5055
    %v5156 = vunpack.c.h.b16 %v5055
    %v5157 = vunpack.c.l.b16 %v5056
    %v5158 = vunpack.c.h.b16 %v5056
    %v5159 = vunpack.c.l.b16 %v5057
    %v5160 = vunpack.c.h.b16 %v5057
    %v5161 = vunpack.c.l.b16 %v5058
    %v5162 = vunpack.c.h.b16 %v5058
    %v5163 = vunpack.c.l.b16 %v5059
    %v5164 = vunpack.c.h.b16 %v5059
    %v5165 = vunpack.c.l.b16 %v5060
    %v5166 = vunpack.c.h.b16 %v5060
    %v5167 = vunpack.c.l.b16 %v5061
    %v5168 = vunpack.c.h.b16 %v5061
    %v5169 = vunpack.c.l.b16 %v5062
    %v5170 = vunpack.c.h.b16 %v5062
    %v5171 = vpack.c.b16 %v5109, %v5107
    %v5172 = vpack.c.b16 %v5110, %v5108
    %v5173 = vpack.c.b16 %v5113, %v5111
    %v5174 = vpack.c.b16 %v5114, %v5112
    %v5175 = vpack.c.b16 %v5117, %v5115
    %v5176 = vpack.c.b16 %v5118, %v5116
    %v5177 = vpack.c.b16 %v5121, %v5119
    %v5178 = vpack.c.b16 %v5122, %v5120
    %v5179 = vpack.c.b16 %v5125, %v5123
    %v5180 = vpack.c.b16 %v5126, %v5124
    %v5181 = vpack.c.b16 %v5129, %v5127
    %v5182 = vpack.c.b16 %v5130, %v5128
    %v5183 = vpack.c.b16 %v5133, %v5131
    %v5184 = vpack.c.b16 %v5134, %v5132
    %v5185 = vpack.c.b16 %v5137, %v5135
    %v5186 = vpack.c.b16 %v5138, %v5136
    %v5187 = vpack.c.b16 %v5141, %v5139
    %v5188 = vpack.c.b16 %v5142, %v5140
    %v5189 = vpack.c.b16 %v5145, %v5143
    %v5190 = vpack.c.b16 %v5146, %v5144
    %v5191 = vpack.c.b16 %v5149, %v5147
    %v5192 = vpack.c.b16 %v5150, %v5148
    %v5193 = vpack.c.b16 %v5153, %v5151
    %v5194 = vpack.c.b16 %v5154, %v5152
    %v5195 = vpack.c.b16 %v5157, %v5155
    %v5196 = vpack.c.b16 %v5158, %v5156
    %v5197 = vpack.c.b16 %v5161, %v5159
    %v5198 = vpack.c.b16 %v5162, %v5160
    %v5199 = vpack.c.b16 %v5165, %v5163
    %v5200 = vpack.c.b16 %v5166, %v5164
    %v5201 = vpack.c.b16 %v5169, %v5167
    %v5202 = vpack.c.b16 %v5170, %v5168
    %5235 = vmatprep.subr.bf16.mxu0 %v5172
    %5236 = vmatpush1.bf16.msra.mxu0 %v5171
    %5237 = vmatprep.subr.bf16.mxu0 %v5174
    %5238 = vmatpush1.bf16.msra.mxu0 %v5173
    %5239 = vmatprep.subr.bf16.mxu0 %v5176
    %5240 = vmatpush1.bf16.msra.mxu0 %v5175
    %5241 = vmatprep.subr.bf16.mxu0 %v5178
    %5242 = vmatpush1.bf16.msra.mxu0 %v5177
    %5243 = vmatprep.subr.bf16.mxu0 %v5180
    %5244 = vmatpush1.bf16.msra.mxu0 %v5179
    %5245 = vmatprep.subr.bf16.mxu0 %v5182
    %5246 = vmatpush1.bf16.msra.mxu0 %v5181
    %5247 = vmatprep.subr.bf16.mxu0 %v5184
    %5248 = vmatpush1.bf16.msra.mxu0 %v5183
    %5249 = vmatprep.subr.bf16.mxu0 %v5186
    %5250 = vmatpush1.bf16.msra.mxu0 %v5185
    %5251 = vmatprep.subr.bf16.mxu0 %v5188
    %5252 = vmatpush1.bf16.msra.mxu0 %v5187
    %5253 = vmatprep.subr.bf16.mxu0 %v5190
    %5254 = vmatpush1.bf16.msra.mxu0 %v5189
    %5255 = vmatprep.subr.bf16.mxu0 %v5192
    %5256 = vmatpush1.bf16.msra.mxu0 %v5191
    %5257 = vmatprep.subr.bf16.mxu0 %v5194
    %5258 = vmatpush1.bf16.msra.mxu0 %v5193
    %5259 = vmatprep.subr.bf16.mxu0 %v5196
    %5260 = vmatpush1.bf16.msra.mxu0 %v5195
    %5261 = vmatprep.subr.bf16.mxu0 %v5198
    %5262 = vmatpush1.bf16.msra.mxu0 %v5197
    %5263 = vmatprep.subr.bf16.mxu0 %v5200
    %5264 = vmatpush1.bf16.msra.mxu0 %v5199
    %5265 = vmatprep.subr.bf16.mxu0 %v5202
    %5266 = vmatpush1.bf16.msra.mxu0 %v5201
    %5267 = vmatprep.mubr.bf16.mxu0 %v5030
    %5268 = vmatmul.mubr.bf16.gmra.mrb[0].mxu0 %v5029
    %v5269 = vpop.f32.mrb[0].mxu0
    %v5270 = vadd.f32 %v5068, %v5269
    %v5271 = vpop.f32.mrb[0].mxu0
    %v5272 = vadd.f32 %v5072, %v5271
    %v5273 = vpop.f32.mrb[0].mxu0
    %v5274 = vpop.f32.mrb[0].mxu0
    %5275 = vdwg.mxu0
    %v5276 = vmax.f32 %v5270, 0.0
    %v5277 = vmax.f32 %v5272, 0.0
    %v5278 = vpack.c.bf16 %v5276, %v5276
    %v5279 = vpack.c.bf16 %v5277, %v5277
    %v5280 = vld [vmem:[#allocation85] sm:$0xff]
    %v5281 = vld [vmem:[#allocation85 + $0x8] sm:$0xff]
    %v5282 = vld [vmem:[#allocation85 + $0x10] sm:$0xff]
    %v5283 = vld [vmem:[#allocation85 + $0x18] sm:$0xff]
    %v5284 = vld [vmem:[#allocation85 + $0x20] sm:$0xff]
    %v5285 = vld [vmem:[#allocation85 + $0x28] sm:$0xff]
    %v5286 = vld [vmem:[#allocation85 + $0x30] sm:$0xff]
    %v5287 = vld [vmem:[#allocation85 + $0x38] sm:$0xff]
    %v5288 = vld [vmem:[#allocation85 + $0x40] sm:$0xff]
    %v5289 = vld [vmem:[#allocation85 + $0x48] sm:$0xff]
    %v5290 = vld [vmem:[#allocation85 + $0x50] sm:$0xff]
    %v5291 = vld [vmem:[#allocation85 + $0x58] sm:$0xff]
    %v5292 = vld [vmem:[#allocation85 + $0x60] sm:$0xff]
    %v5293 = vld [vmem:[#allocation85 + $0x68] sm:$0xff]
    %v5294 = vld [vmem:[#allocation85 + $0x70] sm:$0xff]
    %v5295 = vld [vmem:[#allocation85 + $0x78] sm:$0xff]
    %v5296 = vld [vmem:[#allocation85 + $0x80] sm:$0xff]
    %v5297 = vld [vmem:[#allocation85 + $0x88] sm:$0xff]
    %v5298 = vld [vmem:[#allocation85 + $0x90] sm:$0xff]
    %v5299 = vld [vmem:[#allocation85 + $0x98] sm:$0xff]
    %v5300 = vld [vmem:[#allocation85 + $0xa0] sm:$0xff]
    %v5301 = vld [vmem:[#allocation85 + $0xa8] sm:$0xff]
    %v5302 = vld [vmem:[#allocation85 + $0xb0] sm:$0xff]
    %v5303 = vld [vmem:[#allocation85 + $0xb8] sm:$0xff]
    %v5304 = vld [vmem:[#allocation85 + $0xc0] sm:$0xff]
    %v5305 = vld [vmem:[#allocation85 + $0xc8] sm:$0xff]
    %v5306 = vld [vmem:[#allocation85 + $0xd0] sm:$0xff]
    %v5307 = vld [vmem:[#allocation85 + $0xd8] sm:$0xff]
    %v5308 = vld [vmem:[#allocation85 + $0xe0] sm:$0xff]
    %v5309 = vld [vmem:[#allocation85 + $0xe8] sm:$0xff]
    %v5310 = vld [vmem:[#allocation85 + $0xf0] sm:$0xff]
    %v5311 = vld [vmem:[#allocation85 + $0xf8] sm:$0xff]
    %v5312 = vld [vmem:[#allocation82] sm:$0x3]
    %v5314 = vlaneseq
    %v5315 = vshrl.u32 %v5314, 7
    %v5316 = vsub.s32 0, %v5315
    %v5317 = vrot.slane %v5312, %v5316
    %v5318 = vlaneseq
    %v5319 = vshrl.u32 %v5318, 7
    %v5320 = vsub.s32 1, %v5319
    %v5321 = vrot.slane %v5312, %v5320
    %v5356 = vunpack.c.l.b16 %v5280
    %v5357 = vunpack.c.h.b16 %v5280
    %v5358 = vunpack.c.l.b16 %v5281
    %v5359 = vunpack.c.h.b16 %v5281
    %v5360 = vunpack.c.l.b16 %v5282
    %v5361 = vunpack.c.h.b16 %v5282
    %v5362 = vunpack.c.l.b16 %v5283
    %v5363 = vunpack.c.h.b16 %v5283
    %v5364 = vunpack.c.l.b16 %v5284
    %v5365 = vunpack.c.h.b16 %v5284
    %v5366 = vunpack.c.l.b16 %v5285
    %v5367 = vunpack.c.h.b16 %v5285
    %v5368 = vunpack.c.l.b16 %v5286
    %v5369 = vunpack.c.h.b16 %v5286
    %v5370 = vunpack.c.l.b16 %v5287
    %v5371 = vunpack.c.h.b16 %v5287
    %v5372 = vunpack.c.l.b16 %v5288
    %v5373 = vunpack.c.h.b16 %v5288
    %v5374 = vunpack.c.l.b16 %v5289
    %v5375 = vunpack.c.h.b16 %v5289
    %v5376 = vunpack.c.l.b16 %v5290
    %v5377 = vunpack.c.h.b16 %v5290
    %v5378 = vunpack.c.l.b16 %v5291
    %v5379 = vunpack.c.h.b16 %v5291
    %v5380 = vunpack.c.l.b16 %v5292
    %v5381 = vunpack.c.h.b16 %v5292
    %v5382 = vunpack.c.l.b16 %v5293
    %v5383 = vunpack.c.h.b16 %v5293
    %v5384 = vunpack.c.l.b16 %v5294
    %v5385 = vunpack.c.h.b16 %v5294
    %v5386 = vunpack.c.l.b16 %v5295
    %v5387 = vunpack.c.h.b16 %v5295
    %v5388 = vunpack.c.l.b16 %v5296
    %v5389 = vunpack.c.h.b16 %v5296
    %v5390 = vunpack.c.l.b16 %v5297
    %v5391 = vunpack.c.h.b16 %v5297
    %v5392 = vunpack.c.l.b16 %v5298
    %v5393 = vunpack.c.h.b16 %v5298
    %v5394 = vunpack.c.l.b16 %v5299
    %v5395 = vunpack.c.h.b16 %v5299
    %v5396 = vunpack.c.l.b16 %v5300
    %v5397 = vunpack.c.h.b16 %v5300
    %v5398 = vunpack.c.l.b16 %v5301
    %v5399 = vunpack.c.h.b16 %v5301
    %v5400 = vunpack.c.l.b16 %v5302
    %v5401 = vunpack.c.h.b16 %v5302
    %v5402 = vunpack.c.l.b16 %v5303
    %v5403 = vunpack.c.h.b16 %v5303
    %v5404 = vunpack.c.l.b16 %v5304
    %v5405 = vunpack.c.h.b16 %v5304
    %v5406 = vunpack.c.l.b16 %v5305
    %v5407 = vunpack.c.h.b16 %v5305
    %v5408 = vunpack.c.l.b16 %v5306
    %v5409 = vunpack.c.h.b16 %v5306
    %v5410 = vunpack.c.l.b16 %v5307
    %v5411 = vunpack.c.h.b16 %v5307
    %v5412 = vunpack.c.l.b16 %v5308
    %v5413 = vunpack.c.h.b16 %v5308
    %v5414 = vunpack.c.l.b16 %v5309
    %v5415 = vunpack.c.h.b16 %v5309
    %v5416 = vunpack.c.l.b16 %v5310
    %v5417 = vunpack.c.h.b16 %v5310
    %v5418 = vunpack.c.l.b16 %v5311
    %v5419 = vunpack.c.h.b16 %v5311
    %v5420 = vpack.c.b16 %v5358, %v5356
    %v5421 = vpack.c.b16 %v5359, %v5357
    %v5422 = vpack.c.b16 %v5362, %v5360
    %v5423 = vpack.c.b16 %v5363, %v5361
    %v5424 = vpack.c.b16 %v5366, %v5364
    %v5425 = vpack.c.b16 %v5367, %v5365
    %v5426 = vpack.c.b16 %v5370, %v5368
    %v5427 = vpack.c.b16 %v5371, %v5369
    %v5428 = vpack.c.b16 %v5374, %v5372
    %v5429 = vpack.c.b16 %v5375, %v5373
    %v5430 = vpack.c.b16 %v5378, %v5376
    %v5431 = vpack.c.b16 %v5379, %v5377
    %v5432 = vpack.c.b16 %v5382, %v5380
    %v5433 = vpack.c.b16 %v5383, %v5381
    %v5434 = vpack.c.b16 %v5386, %v5384
    %v5435 = vpack.c.b16 %v5387, %v5385
    %v5436 = vpack.c.b16 %v5390, %v5388
    %v5437 = vpack.c.b16 %v5391, %v5389
    %v5438 = vpack.c.b16 %v5394, %v5392
    %v5439 = vpack.c.b16 %v5395, %v5393
    %v5440 = vpack.c.b16 %v5398, %v5396
    %v5441 = vpack.c.b16 %v5399, %v5397
    %v5442 = vpack.c.b16 %v5402, %v5400
    %v5443 = vpack.c.b16 %v5403, %v5401
    %v5444 = vpack.c.b16 %v5406, %v5404
    %v5445 = vpack.c.b16 %v5407, %v5405
    %v5446 = vpack.c.b16 %v5410, %v5408
    %v5447 = vpack.c.b16 %v5411, %v5409
    %v5448 = vpack.c.b16 %v5414, %v5412
    %v5449 = vpack.c.b16 %v5415, %v5413
    %v5450 = vpack.c.b16 %v5418, %v5416
    %v5451 = vpack.c.b16 %v5419, %v5417
    %5484 = vmatprep.subr.bf16.mxu0 %v5421
    %5485 = vmatpush1.bf16.msra.mxu0 %v5420
    %5486 = vmatprep.subr.bf16.mxu0 %v5423
    %5487 = vmatpush1.bf16.msra.mxu0 %v5422
    %5488 = vmatprep.subr.bf16.mxu0 %v5425
    %5489 = vmatpush1.bf16.msra.mxu0 %v5424
    %5490 = vmatprep.subr.bf16.mxu0 %v5427
    %5491 = vmatpush1.bf16.msra.mxu0 %v5426
    %5492 = vmatprep.subr.bf16.mxu0 %v5429
    %5493 = vmatpush1.bf16.msra.mxu0 %v5428
    %5494 = vmatprep.subr.bf16.mxu0 %v5431
    %5495 = vmatpush1.bf16.msra.mxu0 %v5430
    %5496 = vmatprep.subr.bf16.mxu0 %v5433
    %5497 = vmatpush1.bf16.msra.mxu0 %v5432
    %5498 = vmatprep.subr.bf16.mxu0 %v5435
    %5499 = vmatpush1.bf16.msra.mxu0 %v5434
    %5500 = vmatprep.subr.bf16.mxu0 %v5437
    %5501 = vmatpush1.bf16.msra.mxu0 %v5436
    %5502 = vmatprep.subr.bf16.mxu0 %v5439
    %5503 = vmatpush1.bf16.msra.mxu0 %v5438
    %5504 = vmatprep.subr.bf16.mxu0 %v5441
    %5505 = vmatpush1.bf16.msra.mxu0 %v5440
    %5506 = vmatprep.subr.bf16.mxu0 %v5443
    %5507 = vmatpush1.bf16.msra.mxu0 %v5442
    %5508 = vmatprep.subr.bf16.mxu0 %v5445
    %5509 = vmatpush1.bf16.msra.mxu0 %v5444
    %5510 = vmatprep.subr.bf16.mxu0 %v5447
    %5511 = vmatpush1.bf16.msra.mxu0 %v5446
    %5512 = vmatprep.subr.bf16.mxu0 %v5449
    %5513 = vmatpush1.bf16.msra.mxu0 %v5448
    %5514 = vmatprep.subr.bf16.mxu0 %v5451
    %5515 = vmatpush1.bf16.msra.mxu0 %v5450
    %5516 = vmatprep.mubr.bf16.mxu0 %v5279
    %5517 = vmatmul.mubr.bf16.gmra.mrb[0].mxu0 %v5278
    %v5518 = vpop.f32.mrb[0].mxu0
    %v5519 = vadd.f32 %v5317, %v5518
    %v5520 = vpop.f32.mrb[0].mxu0
    %v5521 = vadd.f32 %v5321, %v5520
    %v5522 = vpop.f32.mrb[0].mxu0
    %v5523 = vpop.f32.mrb[0].mxu0
    %5524 = vdwg.mxu0
    %v5525 = vadd.f32 %v5519, %v5027
    %v5526 = vadd.f32 %v5521, %v5028
    %v5527 = vmax.f32 %v5525, 0.0
    %v5528 = vmax.f32 %v5526, 0.0
    %v5529 = vpack.c.bf16 %v5527, %v5527
    %v5530 = vpack.c.bf16 %v5528, %v5528
    %v5531 = vld [vmem:[#allocation89] sm:$0xff]
    %v5532 = vld [vmem:[#allocation89 + $0x8] sm:$0xff]
    %v5533 = vld [vmem:[#allocation89 + $0x10] sm:$0xff]
    %v5534 = vld [vmem:[#allocation89 + $0x18] sm:$0xff]
    %v5535 = vld [vmem:[#allocation89 + $0x20] sm:$0xff]
    %v5536 = vld [vmem:[#allocation89 + $0x28] sm:$0xff]
    %v5537 = vld [vmem:[#allocation89 + $0x30] sm:$0xff]
    %v5538 = vld [vmem:[#allocation89 + $0x38] sm:$0xff]
    %v5539 = vld [vmem:[#allocation89 + $0x40] sm:$0xff]
    %v5540 = vld [vmem:[#allocation89 + $0x48] sm:$0xff]
    %v5541 = vld [vmem:[#allocation89 + $0x50] sm:$0xff]
    %v5542 = vld [vmem:[#allocation89 + $0x58] sm:$0xff]
    %v5543 = vld [vmem:[#allocation89 + $0x60] sm:$0xff]
    %v5544 = vld [vmem:[#allocation89 + $0x68] sm:$0xff]
    %v5545 = vld [vmem:[#allocation89 + $0x70] sm:$0xff]
    %v5546 = vld [vmem:[#allocation89 + $0x78] sm:$0xff]
    %v5547 = vld [vmem:[#allocation89 + $0x80] sm:$0xff]
    %v5548 = vld [vmem:[#allocation89 + $0x88] sm:$0xff]
    %v5549 = vld [vmem:[#allocation89 + $0x90] sm:$0xff]
    %v5550 = vld [vmem:[#allocation89 + $0x98] sm:$0xff]
    %v5551 = vld [vmem:[#allocation89 + $0xa0] sm:$0xff]
    %v5552 = vld [vmem:[#allocation89 + $0xa8] sm:$0xff]
    %v5553 = vld [vmem:[#allocation89 + $0xb0] sm:$0xff]
    %v5554 = vld [vmem:[#allocation89 + $0xb8] sm:$0xff]
    %v5555 = vld [vmem:[#allocation89 + $0xc0] sm:$0xff]
    %v5556 = vld [vmem:[#allocation89 + $0xc8] sm:$0xff]
    %v5557 = vld [vmem:[#allocation89 + $0xd0] sm:$0xff]
    %v5558 = vld [vmem:[#allocation89 + $0xd8] sm:$0xff]
    %v5559 = vld [vmem:[#allocation89 + $0xe0] sm:$0xff]
    %v5560 = vld [vmem:[#allocation89 + $0xe8] sm:$0xff]
    %v5561 = vld [vmem:[#allocation89 + $0xf0] sm:$0xff]
    %v5562 = vld [vmem:[#allocation89 + $0xf8] sm:$0xff]
    %v5563 = vld [vmem:[#allocation86] sm:$0x3]
    %v5565 = vlaneseq
    %v5566 = vshrl.u32 %v5565, 7
    %v5567 = vsub.s32 0, %v5566
    %v5568 = vrot.slane %v5563, %v5567
    %v5569 = vlaneseq
    %v5570 = vshrl.u32 %v5569, 7
    %v5571 = vsub.s32 1, %v5570
    %v5572 = vrot.slane %v5563, %v5571
    %v5607 = vunpack.c.l.b16 %v5531
    %v5608 = vunpack.c.h.b16 %v5531
    %v5609 = vunpack.c.l.b16 %v5532
    %v5610 = vunpack.c.h.b16 %v5532
    %v5611 = vunpack.c.l.b16 %v5533
    %v5612 = vunpack.c.h.b16 %v5533
    %v5613 = vunpack.c.l.b16 %v5534
    %v5614 = vunpack.c.h.b16 %v5534
    %v5615 = vunpack.c.l.b16 %v5535
    %v5616 = vunpack.c.h.b16 %v5535
    %v5617 = vunpack.c.l.b16 %v5536
    %v5618 = vunpack.c.h.b16 %v5536
    %v5619 = vunpack.c.l.b16 %v5537
    %v5620 = vunpack.c.h.b16 %v5537
    %v5621 = vunpack.c.l.b16 %v5538
    %v5622 = vunpack.c.h.b16 %v5538
    %v5623 = vunpack.c.l.b16 %v5539
    %v5624 = vunpack.c.h.b16 %v5539
    %v5625 = vunpack.c.l.b16 %v5540
    %v5626 = vunpack.c.h.b16 %v5540
    %v5627 = vunpack.c.l.b16 %v5541
    %v5628 = vunpack.c.h.b16 %v5541
    %v5629 = vunpack.c.l.b16 %v5542
    %v5630 = vunpack.c.h.b16 %v5542
    %v5631 = vunpack.c.l.b16 %v5543
    %v5632 = vunpack.c.h.b16 %v5543
    %v5633 = vunpack.c.l.b16 %v5544
    %v5634 = vunpack.c.h.b16 %v5544
    %v5635 = vunpack.c.l.b16 %v5545
    %v5636 = vunpack.c.h.b16 %v5545
    %v5637 = vunpack.c.l.b16 %v5546
    %v5638 = vunpack.c.h.b16 %v5546
    %v5639 = vunpack.c.l.b16 %v5547
    %v5640 = vunpack.c.h.b16 %v5547
    %v5641 = vunpack.c.l.b16 %v5548
    %v5642 = vunpack.c.h.b16 %v5548
    %v5643 = vunpack.c.l.b16 %v5549
    %v5644 = vunpack.c.h.b16 %v5549
    %v5645 = vunpack.c.l.b16 %v5550
    %v5646 = vunpack.c.h.b16 %v5550
    %v5647 = vunpack.c.l.b16 %v5551
    %v5648 = vunpack.c.h.b16 %v5551
    %v5649 = vunpack.c.l.b16 %v5552
    %v5650 = vunpack.c.h.b16 %v5552
    %v5651 = vunpack.c.l.b16 %v5553
    %v5652 = vunpack.c.h.b16 %v5553
    %v5653 = vunpack.c.l.b16 %v5554
    %v5654 = vunpack.c.h.b16 %v5554
    %v5655 = vunpack.c.l.b16 %v5555
    %v5656 = vunpack.c.h.b16 %v5555
    %v5657 = vunpack.c.l.b16 %v5556
    %v5658 = vunpack.c.h.b16 %v5556
    %v5659 = vunpack.c.l.b16 %v5557
    %v5660 = vunpack.c.h.b16 %v5557
    %v5661 = vunpack.c.l.b16 %v5558
    %v5662 = vunpack.c.h.b16 %v5558
    %v5663 = vunpack.c.l.b16 %v5559
    %v5664 = vunpack.c.h.b16 %v5559
    %v5665 = vunpack.c.l.b16 %v5560
    %v5666 = vunpack.c.h.b16 %v5560
    %v5667 = vunpack.c.l.b16 %v5561
    %v5668 = vunpack.c.h.b16 %v5561
    %v5669 = vunpack.c.l.b16 %v5562
    %v5670 = vunpack.c.h.b16 %v5562
    %v5671 = vpack.c.b16 %v5609, %v5607
    %v5672 = vpack.c.b16 %v5610, %v5608
    %v5673 = vpack.c.b16 %v5613, %v5611
    %v5674 = vpack.c.b16 %v5614, %v5612
    %v5675 = vpack.c.b16 %v5617, %v5615
    %v5676 = vpack.c.b16 %v5618, %v5616
    %v5677 = vpack.c.b16 %v5621, %v5619
    %v5678 = vpack.c.b16 %v5622, %v5620
    %v5679 = vpack.c.b16 %v5625, %v5623
    %v5680 = vpack.c.b16 %v5626, %v5624
    %v5681 = vpack.c.b16 %v5629, %v5627
    %v5682 = vpack.c.b16 %v5630, %v5628
    %v5683 = vpack.c.b16 %v5633, %v5631
    %v5684 = vpack.c.b16 %v5634, %v5632
    %v5685 = vpack.c.b16 %v5637, %v5635
    %v5686 = vpack.c.b16 %v5638, %v5636
    %v5687 = vpack.c.b16 %v5641, %v5639
    %v5688 = vpack.c.b16 %v5642, %v5640
    %v5689 = vpack.c.b16 %v5645, %v5643
    %v5690 = vpack.c.b16 %v5646, %v5644
    %v5691 = vpack.c.b16 %v5649, %v5647
    %v5692 = vpack.c.b16 %v5650, %v5648
    %v5693 = vpack.c.b16 %v5653, %v5651
    %v5694 = vpack.c.b16 %v5654, %v5652
    %v5695 = vpack.c.b16 %v5657, %v5655
    %v5696 = vpack.c.b16 %v5658, %v5656
    %v5697 = vpack.c.b16 %v5661, %v5659
    %v5698 = vpack.c.b16 %v5662, %v5660
    %v5699 = vpack.c.b16 %v5665, %v5663
    %v5700 = vpack.c.b16 %v5666, %v5664
    %v5701 = vpack.c.b16 %v5669, %v5667
    %v5702 = vpack.c.b16 %v5670, %v5668
    %5735 = vmatprep.subr.bf16.mxu0 %v5672
    %5736 = vmatpush1.bf16.msra.mxu0 %v5671
    %5737 = vmatprep.subr.bf16.mxu0 %v5674
    %5738 = vmatpush1.bf16.msra.mxu0 %v5673
    %5739 = vmatprep.subr.bf16.mxu0 %v5676
    %5740 = vmatpush1.bf16.msra.mxu0 %v5675
    %5741 = vmatprep.subr.bf16.mxu0 %v5678
    %5742 = vmatpush1.bf16.msra.mxu0 %v5677
    %5743 = vmatprep.subr.bf16.mxu0 %v5680
    %5744 = vmatpush1.bf16.msra.mxu0 %v5679
    %5745 = vmatprep.subr.bf16.mxu0 %v5682
    %5746 = vmatpush1.bf16.msra.mxu0 %v5681
    %5747 = vmatprep.subr.bf16.mxu0 %v5684
    %5748 = vmatpush1.bf16.msra.mxu0 %v5683
    %5749 = vmatprep.subr.bf16.mxu0 %v5686
    %5750 = vmatpush1.bf16.msra.mxu0 %v5685
    %5751 = vmatprep.subr.bf16.mxu0 %v5688
    %5752 = vmatpush1.bf16.msra.mxu0 %v5687
    %5753 = vmatprep.subr.bf16.mxu0 %v5690
    %5754 = vmatpush1.bf16.msra.mxu0 %v5689
    %5755 = vmatprep.subr.bf16.mxu0 %v5692
    %5756 = vmatpush1.bf16.msra.mxu0 %v5691
    %5757 = vmatprep.subr.bf16.mxu0 %v5694
    %5758 = vmatpush1.bf16.msra.mxu0 %v5693
    %5759 = vmatprep.subr.bf16.mxu0 %v5696
    %5760 = vmatpush1.bf16.msra.mxu0 %v5695
    %5761 = vmatprep.subr.bf16.mxu0 %v5698
    %5762 = vmatpush1.bf16.msra.mxu0 %v5697
    %5763 = vmatprep.subr.bf16.mxu0 %v5700
    %5764 = vmatpush1.bf16.msra.mxu0 %v5699
    %5765 = vmatprep.subr.bf16.mxu0 %v5702
    %5766 = vmatpush1.bf16.msra.mxu0 %v5701
    %5767 = vmatprep.mubr.bf16.mxu0 %v5530
    %5768 = vmatmul.mubr.bf16.gmra.mrb[0].mxu0 %v5529
    %v5769 = vpop.f32.mrb[0].mxu0
    %v5770 = vadd.f32 %v5568, %v5769
    %v5771 = vpop.f32.mrb[0].mxu0
    %v5772 = vadd.f32 %v5572, %v5771
    %v5773 = vpop.f32.mrb[0].mxu0
    %v5774 = vpop.f32.mrb[0].mxu0
    %5775 = vdwg.mxu0
    %v5776 = vmax.f32 %v5770, 0.0
    %v5777 = vmax.f32 %v5772, 0.0
    %v5778 = vpack.c.bf16 %v5776, %v5776
    %v5779 = vpack.c.bf16 %v5777, %v5777
    %v5780 = vld [vmem:[#allocation91] sm:$0xff]
    %v5781 = vld [vmem:[#allocation91 + $0x8] sm:$0xff]
    %v5782 = vld [vmem:[#allocation91 + $0x10] sm:$0xff]
    %v5783 = vld [vmem:[#allocation91 + $0x18] sm:$0xff]
    %v5784 = vld [vmem:[#allocation91 + $0x20] sm:$0xff]
    %v5785 = vld [vmem:[#allocation91 + $0x28] sm:$0xff]
    %v5786 = vld [vmem:[#allocation91 + $0x30] sm:$0xff]
    %v5787 = vld [vmem:[#allocation91 + $0x38] sm:$0xff]
    %v5788 = vld [vmem:[#allocation91 + $0x40] sm:$0xff]
    %v5789 = vld [vmem:[#allocation91 + $0x48] sm:$0xff]
    %v5790 = vld [vmem:[#allocation91 + $0x50] sm:$0xff]
    %v5791 = vld [vmem:[#allocation91 + $0x58] sm:$0xff]
    %v5792 = vld [vmem:[#allocation91 + $0x60] sm:$0xff]
    %v5793 = vld [vmem:[#allocation91 + $0x68] sm:$0xff]
    %v5794 = vld [vmem:[#allocation91 + $0x70] sm:$0xff]
    %v5795 = vld [vmem:[#allocation91 + $0x78] sm:$0xff]
    %v5796 = vld [vmem:[#allocation91 + $0x80] sm:$0xff]
    %v5797 = vld [vmem:[#allocation91 + $0x88] sm:$0xff]
    %v5798 = vld [vmem:[#allocation91 + $0x90] sm:$0xff]
    %v5799 = vld [vmem:[#allocation91 + $0x98] sm:$0xff]
    %v5800 = vld [vmem:[#allocation91 + $0xa0] sm:$0xff]
    %v5801 = vld [vmem:[#allocation91 + $0xa8] sm:$0xff]
    %v5802 = vld [vmem:[#allocation91 + $0xb0] sm:$0xff]
    %v5803 = vld [vmem:[#allocation91 + $0xb8] sm:$0xff]
    %v5804 = vld [vmem:[#allocation91 + $0xc0] sm:$0xff]
    %v5805 = vld [vmem:[#allocation91 + $0xc8] sm:$0xff]
    %v5806 = vld [vmem:[#allocation91 + $0xd0] sm:$0xff]
    %v5807 = vld [vmem:[#allocation91 + $0xd8] sm:$0xff]
    %v5808 = vld [vmem:[#allocation91 + $0xe0] sm:$0xff]
    %v5809 = vld [vmem:[#allocation91 + $0xe8] sm:$0xff]
    %v5810 = vld [vmem:[#allocation91 + $0xf0] sm:$0xff]
    %v5811 = vld [vmem:[#allocation91 + $0xf8] sm:$0xff]
    %v5812 = vld [vmem:[#allocation88] sm:$0x3]
    %v5814 = vlaneseq
    %v5815 = vshrl.u32 %v5814, 7
    %v5816 = vsub.s32 0, %v5815
    %v5817 = vrot.slane %v5812, %v5816
    %v5818 = vlaneseq
    %v5819 = vshrl.u32 %v5818, 7
    %v5820 = vsub.s32 1, %v5819
    %v5821 = vrot.slane %v5812, %v5820
    %v5856 = vunpack.c.l.b16 %v5780
    %v5857 = vunpack.c.h.b16 %v5780
    %v5858 = vunpack.c.l.b16 %v5781
    %v5859 = vunpack.c.h.b16 %v5781
    %v5860 = vunpack.c.l.b16 %v5782
    %v5861 = vunpack.c.h.b16 %v5782
    %v5862 = vunpack.c.l.b16 %v5783
    %v5863 = vunpack.c.h.b16 %v5783
    %v5864 = vunpack.c.l.b16 %v5784
    %v5865 = vunpack.c.h.b16 %v5784
    %v5866 = vunpack.c.l.b16 %v5785
    %v5867 = vunpack.c.h.b16 %v5785
    %v5868 = vunpack.c.l.b16 %v5786
    %v5869 = vunpack.c.h.b16 %v5786
    %v5870 = vunpack.c.l.b16 %v5787
    %v5871 = vunpack.c.h.b16 %v5787
    %v5872 = vunpack.c.l.b16 %v5788
    %v5873 = vunpack.c.h.b16 %v5788
    %v5874 = vunpack.c.l.b16 %v5789
    %v5875 = vunpack.c.h.b16 %v5789
    %v5876 = vunpack.c.l.b16 %v5790
    %v5877 = vunpack.c.h.b16 %v5790
    %v5878 = vunpack.c.l.b16 %v5791
    %v5879 = vunpack.c.h.b16 %v5791
    %v5880 = vunpack.c.l.b16 %v5792
    %v5881 = vunpack.c.h.b16 %v5792
    %v5882 = vunpack.c.l.b16 %v5793
    %v5883 = vunpack.c.h.b16 %v5793
    %v5884 = vunpack.c.l.b16 %v5794
    %v5885 = vunpack.c.h.b16 %v5794
    %v5886 = vunpack.c.l.b16 %v5795
    %v5887 = vunpack.c.h.b16 %v5795
    %v5888 = vunpack.c.l.b16 %v5796
    %v5889 = vunpack.c.h.b16 %v5796
    %v5890 = vunpack.c.l.b16 %v5797
    %v5891 = vunpack.c.h.b16 %v5797
    %v5892 = vunpack.c.l.b16 %v5798
    %v5893 = vunpack.c.h.b16 %v5798
    %v5894 = vunpack.c.l.b16 %v5799
    %v5895 = vunpack.c.h.b16 %v5799
    %v5896 = vunpack.c.l.b16 %v5800
    %v5897 = vunpack.c.h.b16 %v5800
    %v5898 = vunpack.c.l.b16 %v5801
    %v5899 = vunpack.c.h.b16 %v5801
    %v5900 = vunpack.c.l.b16 %v5802
    %v5901 = vunpack.c.h.b16 %v5802
    %v5902 = vunpack.c.l.b16 %v5803
    %v5903 = vunpack.c.h.b16 %v5803
    %v5904 = vunpack.c.l.b16 %v5804
    %v5905 = vunpack.c.h.b16 %v5804
    %v5906 = vunpack.c.l.b16 %v5805
    %v5907 = vunpack.c.h.b16 %v5805
    %v5908 = vunpack.c.l.b16 %v5806
    %v5909 = vunpack.c.h.b16 %v5806
    %v5910 = vunpack.c.l.b16 %v5807
    %v5911 = vunpack.c.h.b16 %v5807
    %v5912 = vunpack.c.l.b16 %v5808
    %v5913 = vunpack.c.h.b16 %v5808
    %v5914 = vunpack.c.l.b16 %v5809
    %v5915 = vunpack.c.h.b16 %v5809
    %v5916 = vunpack.c.l.b16 %v5810
    %v5917 = vunpack.c.h.b16 %v5810
    %v5918 = vunpack.c.l.b16 %v5811
    %v5919 = vunpack.c.h.b16 %v5811
    %v5920 = vpack.c.b16 %v5858, %v5856
    %v5921 = vpack.c.b16 %v5859, %v5857
    %v5922 = vpack.c.b16 %v5862, %v5860
    %v5923 = vpack.c.b16 %v5863, %v5861
    %v5924 = vpack.c.b16 %v5866, %v5864
    %v5925 = vpack.c.b16 %v5867, %v5865
    %v5926 = vpack.c.b16 %v5870, %v5868
    %v5927 = vpack.c.b16 %v5871, %v5869
    %v5928 = vpack.c.b16 %v5874, %v5872
    %v5929 = vpack.c.b16 %v5875, %v5873
    %v5930 = vpack.c.b16 %v5878, %v5876
    %v5931 = vpack.c.b16 %v5879, %v5877
    %v5932 = vpack.c.b16 %v5882, %v5880
    %v5933 = vpack.c.b16 %v5883, %v5881
    %v5934 = vpack.c.b16 %v5886, %v5884
    %v5935 = vpack.c.b16 %v5887, %v5885
    %v5936 = vpack.c.b16 %v5890, %v5888
    %v5937 = vpack.c.b16 %v5891, %v5889
    %v5938 = vpack.c.b16 %v5894, %v5892
    %v5939 = vpack.c.b16 %v5895, %v5893
    %v5940 = vpack.c.b16 %v5898, %v5896
    %v5941 = vpack.c.b16 %v5899, %v5897
    %v5942 = vpack.c.b16 %v5902, %v5900
    %v5943 = vpack.c.b16 %v5903, %v5901
    %v5944 = vpack.c.b16 %v5906, %v5904
    %v5945 = vpack.c.b16 %v5907, %v5905
    %v5946 = vpack.c.b16 %v5910, %v5908
    %v5947 = vpack.c.b16 %v5911, %v5909
    %v5948 = vpack.c.b16 %v5914, %v5912
    %v5949 = vpack.c.b16 %v5915, %v5913
    %v5950 = vpack.c.b16 %v5918, %v5916
    %v5951 = vpack.c.b16 %v5919, %v5917
    %5984 = vmatprep.subr.bf16.mxu0 %v5921
    %5985 = vmatpush1.bf16.msra.mxu0 %v5920
    %5986 = vmatprep.subr.bf16.mxu0 %v5923
    %5987 = vmatpush1.bf16.msra.mxu0 %v5922
    %5988 = vmatprep.subr.bf16.mxu0 %v5925
    %5989 = vmatpush1.bf16.msra.mxu0 %v5924
    %5990 = vmatprep.subr.bf16.mxu0 %v5927
    %5991 = vmatpush1.bf16.msra.mxu0 %v5926
    %5992 = vmatprep.subr.bf16.mxu0 %v5929
    %5993 = vmatpush1.bf16.msra.mxu0 %v5928
    %5994 = vmatprep.subr.bf16.mxu0 %v5931
    %5995 = vmatpush1.bf16.msra.mxu0 %v5930
    %5996 = vmatprep.subr.bf16.mxu0 %v5933
    %5997 = vmatpush1.bf16.msra.mxu0 %v5932
    %5998 = vmatprep.subr.bf16.mxu0 %v5935
    %5999 = vmatpush1.bf16.msra.mxu0 %v5934
    %6000 = vmatprep.subr.bf16.mxu0 %v5937
    %6001 = vmatpush1.bf16.msra.mxu0 %v5936
    %6002 = vmatprep.subr.bf16.mxu0 %v5939
    %6003 = vmatpush1.bf16.msra.mxu0 %v5938
    %6004 = vmatprep.subr.bf16.mxu0 %v5941
    %6005 = vmatpush1.bf16.msra.mxu0 %v5940
    %6006 = vmatprep.subr.bf16.mxu0 %v5943
    %6007 = vmatpush1.bf16.msra.mxu0 %v5942
    %6008 = vmatprep.subr.bf16.mxu0 %v5945
    %6009 = vmatpush1.bf16.msra.mxu0 %v5944
    %6010 = vmatprep.subr.bf16.mxu0 %v5947
    %6011 = vmatpush1.bf16.msra.mxu0 %v5946
    %6012 = vmatprep.subr.bf16.mxu0 %v5949
    %6013 = vmatpush1.bf16.msra.mxu0 %v5948
    %6014 = vmatprep.subr.bf16.mxu0 %v5951
    %6015 = vmatpush1.bf16.msra.mxu0 %v5950
    %6016 = vmatprep.mubr.bf16.mxu0 %v5779
    %6017 = vmatmul.mubr.bf16.gmra.mrb[0].mxu0 %v5778
    %v6018 = vpop.f32.mrb[0].mxu0
    %v6019 = vadd.f32 %v5817, %v6018
    %v6020 = vpop.f32.mrb[0].mxu0
    %v6021 = vadd.f32 %v5821, %v6020
    %v6022 = vpop.f32.mrb[0].mxu0
    %v6023 = vpop.f32.mrb[0].mxu0
    %6024 = vdwg.mxu0
    %v6025 = vadd.f32 %v6019, %v5527
    %v6026 = vadd.f32 %v6021, %v5528
    %v6027 = vmax.f32 %v6025, 0.0
    %v6028 = vmax.f32 %v6026, 0.0
    %v6029 = vpack.c.bf16 %v6027, %v6027
    %v6030 = vpack.c.bf16 %v6028, %v6028
    %v6031 = vld [vmem:[#allocation92] sm:$0xff]
    %v6032 = vld [vmem:[#allocation92 + $0x8] sm:$0xff]
    %v6033 = vld [vmem:[#allocation92 + $0x10] sm:$0xff]
    %v6034 = vld [vmem:[#allocation92 + $0x18] sm:$0xff]
    %v6035 = vld [vmem:[#allocation92 + $0x20] sm:$0xff]
    %v6036 = vld [vmem:[#allocation92 + $0x28] sm:$0xff]
    %v6037 = vld [vmem:[#allocation92 + $0x30] sm:$0xff]
    %v6038 = vld [vmem:[#allocation92 + $0x38] sm:$0xff]
    %v6039 = vld [vmem:[#allocation92 + $0x40] sm:$0xff]
    %v6040 = vld [vmem:[#allocation92 + $0x48] sm:$0xff]
    %v6041 = vld [vmem:[#allocation92 + $0x50] sm:$0xff]
    %v6042 = vld [vmem:[#allocation92 + $0x58] sm:$0xff]
    %v6043 = vld [vmem:[#allocation92 + $0x60] sm:$0xff]
    %v6044 = vld [vmem:[#allocation92 + $0x68] sm:$0xff]
    %v6045 = vld [vmem:[#allocation92 + $0x70] sm:$0xff]
    %v6046 = vld [vmem:[#allocation92 + $0x78] sm:$0xff]
    %v6047 = vld [vmem:[#allocation92 + $0x80] sm:$0xff]
    %v6048 = vld [vmem:[#allocation92 + $0x88] sm:$0xff]
    %v6049 = vld [vmem:[#allocation92 + $0x90] sm:$0xff]
    %v6050 = vld [vmem:[#allocation92 + $0x98] sm:$0xff]
    %v6051 = vld [vmem:[#allocation92 + $0xa0] sm:$0xff]
    %v6052 = vld [vmem:[#allocation92 + $0xa8] sm:$0xff]
    %v6053 = vld [vmem:[#allocation92 + $0xb0] sm:$0xff]
    %v6054 = vld [vmem:[#allocation92 + $0xb8] sm:$0xff]
    %v6055 = vld [vmem:[#allocation92 + $0xc0] sm:$0xff]
    %v6056 = vld [vmem:[#allocation92 + $0xc8] sm:$0xff]
    %v6057 = vld [vmem:[#allocation92 + $0xd0] sm:$0xff]
    %v6058 = vld [vmem:[#allocation92 + $0xd8] sm:$0xff]
    %v6059 = vld [vmem:[#allocation92 + $0xe0] sm:$0xff]
    %v6060 = vld [vmem:[#allocation92 + $0xe8] sm:$0xff]
    %v6061 = vld [vmem:[#allocation92 + $0xf0] sm:$0xff]
    %v6062 = vld [vmem:[#allocation92 + $0xf8] sm:$0xff]
    %v6063 = vld [vmem:[#allocation92 + $0x100] sm:$0xff]
    %v6064 = vld [vmem:[#allocation92 + $0x108] sm:$0xff]
    %v6065 = vld [vmem:[#allocation92 + $0x110] sm:$0xff]
    %v6066 = vld [vmem:[#allocation92 + $0x118] sm:$0xff]
    %v6067 = vld [vmem:[#allocation92 + $0x120] sm:$0xff]
    %v6068 = vld [vmem:[#allocation92 + $0x128] sm:$0xff]
    %v6069 = vld [vmem:[#allocation92 + $0x130] sm:$0xff]
    %v6070 = vld [vmem:[#allocation92 + $0x138] sm:$0xff]
    %v6071 = vld [vmem:[#allocation92 + $0x140] sm:$0xff]
    %v6072 = vld [vmem:[#allocation92 + $0x148] sm:$0xff]
    %v6073 = vld [vmem:[#allocation92 + $0x150] sm:$0xff]
    %v6074 = vld [vmem:[#allocation92 + $0x158] sm:$0xff]
    %v6075 = vld [vmem:[#allocation92 + $0x160] sm:$0xff]
    %v6076 = vld [vmem:[#allocation92 + $0x168] sm:$0xff]
    %v6077 = vld [vmem:[#allocation92 + $0x170] sm:$0xff]
    %v6078 = vld [vmem:[#allocation92 + $0x178] sm:$0xff]
    %v6079 = vld [vmem:[#allocation92 + $0x180] sm:$0xff]
    %v6080 = vld [vmem:[#allocation92 + $0x188] sm:$0xff]
    %v6081 = vld [vmem:[#allocation92 + $0x190] sm:$0xff]
    %v6082 = vld [vmem:[#allocation92 + $0x198] sm:$0xff]
    %v6083 = vld [vmem:[#allocation92 + $0x1a0] sm:$0xff]
    %v6084 = vld [vmem:[#allocation92 + $0x1a8] sm:$0xff]
    %v6085 = vld [vmem:[#allocation92 + $0x1b0] sm:$0xff]
    %v6086 = vld [vmem:[#allocation92 + $0x1b8] sm:$0xff]
    %v6087 = vld [vmem:[#allocation92 + $0x1c0] sm:$0xff]
    %v6088 = vld [vmem:[#allocation92 + $0x1c8] sm:$0xff]
    %v6089 = vld [vmem:[#allocation92 + $0x1d0] sm:$0xff]
    %v6090 = vld [vmem:[#allocation92 + $0x1d8] sm:$0xff]
    %v6091 = vld [vmem:[#allocation92 + $0x1e0] sm:$0xff]
    %v6092 = vld [vmem:[#allocation92 + $0x1e8] sm:$0xff]
    %v6093 = vld [vmem:[#allocation92 + $0x1f0] sm:$0xff]
    %v6094 = vld [vmem:[#allocation92 + $0x1f8] sm:$0xff]
    %v6095 = vld [vmem:[%s119] sm:$0xf]
    %v6097 = vlaneseq
    %v6098 = vshrl.u32 %v6097, 7
    %v6099 = vsub.s32 0, %v6098
    %v6100 = vrot.slane %v6095, %v6099
    %v6101 = vlaneseq
    %v6102 = vshrl.u32 %v6101, 7
    %v6103 = vsub.s32 1, %v6102
    %v6104 = vrot.slane %v6095, %v6103
    %v6105 = vlaneseq
    %v6106 = vshrl.u32 %v6105, 7
    %v6107 = vsub.s32 2, %v6106
    %v6108 = vrot.slane %v6095, %v6107
    %v6109 = vlaneseq
    %v6110 = vshrl.u32 %v6109, 7
    %v6111 = vsub.s32 3, %v6110
    %v6112 = vrot.slane %v6095, %v6111
    %v6181 = vunpack.c.l.b16 %v6031
    %v6182 = vunpack.c.h.b16 %v6031
    %v6183 = vunpack.c.l.b16 %v6032
    %v6184 = vunpack.c.h.b16 %v6032
    %v6185 = vunpack.c.l.b16 %v6033
    %v6186 = vunpack.c.h.b16 %v6033
    %v6187 = vunpack.c.l.b16 %v6034
    %v6188 = vunpack.c.h.b16 %v6034
    %v6189 = vunpack.c.l.b16 %v6035
    %v6190 = vunpack.c.h.b16 %v6035
    %v6191 = vunpack.c.l.b16 %v6036
    %v6192 = vunpack.c.h.b16 %v6036
    %v6193 = vunpack.c.l.b16 %v6037
    %v6194 = vunpack.c.h.b16 %v6037
    %v6195 = vunpack.c.l.b16 %v6038
    %v6196 = vunpack.c.h.b16 %v6038
    %v6197 = vunpack.c.l.b16 %v6039
    %v6198 = vunpack.c.h.b16 %v6039
    %v6199 = vunpack.c.l.b16 %v6040
    %v6200 = vunpack.c.h.b16 %v6040
    %v6201 = vunpack.c.l.b16 %v6041
    %v6202 = vunpack.c.h.b16 %v6041
    %v6203 = vunpack.c.l.b16 %v6042
    %v6204 = vunpack.c.h.b16 %v6042
    %v6205 = vunpack.c.l.b16 %v6043
    %v6206 = vunpack.c.h.b16 %v6043
    %v6207 = vunpack.c.l.b16 %v6044
    %v6208 = vunpack.c.h.b16 %v6044
    %v6209 = vunpack.c.l.b16 %v6045
    %v6210 = vunpack.c.h.b16 %v6045
    %v6211 = vunpack.c.l.b16 %v6046
    %v6212 = vunpack.c.h.b16 %v6046
    %v6213 = vunpack.c.l.b16 %v6047
    %v6214 = vunpack.c.h.b16 %v6047
    %v6215 = vunpack.c.l.b16 %v6048
    %v6216 = vunpack.c.h.b16 %v6048
    %v6217 = vunpack.c.l.b16 %v6049
    %v6218 = vunpack.c.h.b16 %v6049
    %v6219 = vunpack.c.l.b16 %v6050
    %v6220 = vunpack.c.h.b16 %v6050
    %v6221 = vunpack.c.l.b16 %v6051
    %v6222 = vunpack.c.h.b16 %v6051
    %v6223 = vunpack.c.l.b16 %v6052
    %v6224 = vunpack.c.h.b16 %v6052
    %v6225 = vunpack.c.l.b16 %v6053
    %v6226 = vunpack.c.h.b16 %v6053
    %v6227 = vunpack.c.l.b16 %v6054
    %v6228 = vunpack.c.h.b16 %v6054
    %v6229 = vunpack.c.l.b16 %v6055
    %v6230 = vunpack.c.h.b16 %v6055
    %v6231 = vunpack.c.l.b16 %v6056
    %v6232 = vunpack.c.h.b16 %v6056
    %v6233 = vunpack.c.l.b16 %v6057
    %v6234 = vunpack.c.h.b16 %v6057
    %v6235 = vunpack.c.l.b16 %v6058
    %v6236 = vunpack.c.h.b16 %v6058
    %v6237 = vunpack.c.l.b16 %v6059
    %v6238 = vunpack.c.h.b16 %v6059
    %v6239 = vunpack.c.l.b16 %v6060
    %v6240 = vunpack.c.h.b16 %v6060
    %v6241 = vunpack.c.l.b16 %v6061
    %v6242 = vunpack.c.h.b16 %v6061
    %v6243 = vunpack.c.l.b16 %v6062
    %v6244 = vunpack.c.h.b16 %v6062
    %v6245 = vunpack.c.l.b16 %v6063
    %v6246 = vunpack.c.h.b16 %v6063
    %v6247 = vunpack.c.l.b16 %v6064
    %v6248 = vunpack.c.h.b16 %v6064
    %v6249 = vunpack.c.l.b16 %v6065
    %v6250 = vunpack.c.h.b16 %v6065
    %v6251 = vunpack.c.l.b16 %v6066
    %v6252 = vunpack.c.h.b16 %v6066
    %v6253 = vunpack.c.l.b16 %v6067
    %v6254 = vunpack.c.h.b16 %v6067
    %v6255 = vunpack.c.l.b16 %v6068
    %v6256 = vunpack.c.h.b16 %v6068
    %v6257 = vunpack.c.l.b16 %v6069
    %v6258 = vunpack.c.h.b16 %v6069
    %v6259 = vunpack.c.l.b16 %v6070
    %v6260 = vunpack.c.h.b16 %v6070
    %v6261 = vunpack.c.l.b16 %v6071
    %v6262 = vunpack.c.h.b16 %v6071
    %v6263 = vunpack.c.l.b16 %v6072
    %v6264 = vunpack.c.h.b16 %v6072
    %v6265 = vunpack.c.l.b16 %v6073
    %v6266 = vunpack.c.h.b16 %v6073
    %v6267 = vunpack.c.l.b16 %v6074
    %v6268 = vunpack.c.h.b16 %v6074
    %v6269 = vunpack.c.l.b16 %v6075
    %v6270 = vunpack.c.h.b16 %v6075
    %v6271 = vunpack.c.l.b16 %v6076
    %v6272 = vunpack.c.h.b16 %v6076
    %v6273 = vunpack.c.l.b16 %v6077
    %v6274 = vunpack.c.h.b16 %v6077
    %v6275 = vunpack.c.l.b16 %v6078
    %v6276 = vunpack.c.h.b16 %v6078
    %v6277 = vunpack.c.l.b16 %v6079
    %v6278 = vunpack.c.h.b16 %v6079
    %v6279 = vunpack.c.l.b16 %v6080
    %v6280 = vunpack.c.h.b16 %v6080
    %v6281 = vunpack.c.l.b16 %v6081
    %v6282 = vunpack.c.h.b16 %v6081
    %v6283 = vunpack.c.l.b16 %v6082
    %v6284 = vunpack.c.h.b16 %v6082
    %v6285 = vunpack.c.l.b16 %v6083
    %v6286 = vunpack.c.h.b16 %v6083
    %v6287 = vunpack.c.l.b16 %v6084
    %v6288 = vunpack.c.h.b16 %v6084
    %v6289 = vunpack.c.l.b16 %v6085
    %v6290 = vunpack.c.h.b16 %v6085
    %v6291 = vunpack.c.l.b16 %v6086
    %v6292 = vunpack.c.h.b16 %v6086
    %v6293 = vunpack.c.l.b16 %v6087
    %v6294 = vunpack.c.h.b16 %v6087
    %v6295 = vunpack.c.l.b16 %v6088
    %v6296 = vunpack.c.h.b16 %v6088
    %v6297 = vunpack.c.l.b16 %v6089
    %v6298 = vunpack.c.h.b16 %v6089
    %v6299 = vunpack.c.l.b16 %v6090
    %v6300 = vunpack.c.h.b16 %v6090
    %v6301 = vunpack.c.l.b16 %v6091
    %v6302 = vunpack.c.h.b16 %v6091
    %v6303 = vunpack.c.l.b16 %v6092
    %v6304 = vunpack.c.h.b16 %v6092
    %v6305 = vunpack.c.l.b16 %v6093
    %v6306 = vunpack.c.h.b16 %v6093
    %v6307 = vunpack.c.l.b16 %v6094
    %v6308 = vunpack.c.h.b16 %v6094
    %v6309 = vpack.c.b16 %v6185, %v6181
    %v6310 = vpack.c.b16 %v6186, %v6182
    %v6311 = vpack.c.b16 %v6187, %v6183
    %v6312 = vpack.c.b16 %v6188, %v6184
    %v6313 = vpack.c.b16 %v6193, %v6189
    %v6314 = vpack.c.b16 %v6194, %v6190
    %v6315 = vpack.c.b16 %v6195, %v6191
    %v6316 = vpack.c.b16 %v6196, %v6192
    %v6317 = vpack.c.b16 %v6201, %v6197
    %v6318 = vpack.c.b16 %v6202, %v6198
    %v6319 = vpack.c.b16 %v6203, %v6199
    %v6320 = vpack.c.b16 %v6204, %v6200
    %v6321 = vpack.c.b16 %v6209, %v6205
    %v6322 = vpack.c.b16 %v6210, %v6206
    %v6323 = vpack.c.b16 %v6211, %v6207
    %v6324 = vpack.c.b16 %v6212, %v6208
    %v6325 = vpack.c.b16 %v6217, %v6213
    %v6326 = vpack.c.b16 %v6218, %v6214
    %v6327 = vpack.c.b16 %v6219, %v6215
    %v6328 = vpack.c.b16 %v6220, %v6216
    %v6329 = vpack.c.b16 %v6225, %v6221
    %v6330 = vpack.c.b16 %v6226, %v6222
    %v6331 = vpack.c.b16 %v6227, %v6223
    %v6332 = vpack.c.b16 %v6228, %v6224
    %v6333 = vpack.c.b16 %v6233, %v6229
    %v6334 = vpack.c.b16 %v6234, %v6230
    %v6335 = vpack.c.b16 %v6235, %v6231
    %v6336 = vpack.c.b16 %v6236, %v6232
    %v6337 = vpack.c.b16 %v6241, %v6237
    %v6338 = vpack.c.b16 %v6242, %v6238
    %v6339 = vpack.c.b16 %v6243, %v6239
    %v6340 = vpack.c.b16 %v6244, %v6240
    %v6341 = vpack.c.b16 %v6249, %v6245
    %v6342 = vpack.c.b16 %v6250, %v6246
    %v6343 = vpack.c.b16 %v6251, %v6247
    %v6344 = vpack.c.b16 %v6252, %v6248
    %v6345 = vpack.c.b16 %v6257, %v6253
    %v6346 = vpack.c.b16 %v6258, %v6254
    %v6347 = vpack.c.b16 %v6259, %v6255
    %v6348 = vpack.c.b16 %v6260, %v6256
    %v6349 = vpack.c.b16 %v6265, %v6261
    %v6350 = vpack.c.b16 %v6266, %v6262
    %v6351 = vpack.c.b16 %v6267, %v6263
    %v6352 = vpack.c.b16 %v6268, %v6264
    %v6353 = vpack.c.b16 %v6273, %v6269
    %v6354 = vpack.c.b16 %v6274, %v6270
    %v6355 = vpack.c.b16 %v6275, %v6271
    %v6356 = vpack.c.b16 %v6276, %v6272
    %v6357 = vpack.c.b16 %v6281, %v6277
    %v6358 = vpack.c.b16 %v6282, %v6278
    %v6359 = vpack.c.b16 %v6283, %v6279
    %v6360 = vpack.c.b16 %v6284, %v6280
    %v6361 = vpack.c.b16 %v6289, %v6285
    %v6362 = vpack.c.b16 %v6290, %v6286
    %v6363 = vpack.c.b16 %v6291, %v6287
    %v6364 = vpack.c.b16 %v6292, %v6288
    %v6365 = vpack.c.b16 %v6297, %v6293
    %v6366 = vpack.c.b16 %v6298, %v6294
    %v6367 = vpack.c.b16 %v6299, %v6295
    %v6368 = vpack.c.b16 %v6300, %v6296
    %v6369 = vpack.c.b16 %v6305, %v6301
    %v6370 = vpack.c.b16 %v6306, %v6302
    %v6371 = vpack.c.b16 %v6307, %v6303
    %v6372 = vpack.c.b16 %v6308, %v6304
    %6437 = vmatprep.subr.bf16.mxu0 %v6310
    %6438 = vmatpush1.bf16.msra.mxu0 %v6309
    %6439 = vmatprep.subr.bf16.mxu0 %v6314
    %6440 = vmatpush1.bf16.msra.mxu0 %v6313
    %6441 = vmatprep.subr.bf16.mxu0 %v6318
    %6442 = vmatpush1.bf16.msra.mxu0 %v6317
    %6443 = vmatprep.subr.bf16.mxu0 %v6322
    %6444 = vmatpush1.bf16.msra.mxu0 %v6321
    %6445 = vmatprep.subr.bf16.mxu0 %v6326
    %6446 = vmatpush1.bf16.msra.mxu0 %v6325
    %6447 = vmatprep.subr.bf16.mxu0 %v6330
    %6448 = vmatpush1.bf16.msra.mxu0 %v6329
    %6449 = vmatprep.subr.bf16.mxu0 %v6334
    %6450 = vmatpush1.bf16.msra.mxu0 %v6333
    %6451 = vmatprep.subr.bf16.mxu0 %v6338
    %6452 = vmatpush1.bf16.msra.mxu0 %v6337
    %6453 = vmatprep.subr.bf16.mxu0 %v6342
    %6454 = vmatpush1.bf16.msra.mxu0 %v6341
    %6455 = vmatprep.subr.bf16.mxu0 %v6346
    %6456 = vmatpush1.bf16.msra.mxu0 %v6345
    %6457 = vmatprep.subr.bf16.mxu0 %v6350
    %6458 = vmatpush1.bf16.msra.mxu0 %v6349
    %6459 = vmatprep.subr.bf16.mxu0 %v6354
    %6460 = vmatpush1.bf16.msra.mxu0 %v6353
    %6461 = vmatprep.subr.bf16.mxu0 %v6358
    %6462 = vmatpush1.bf16.msra.mxu0 %v6357
    %6463 = vmatprep.subr.bf16.mxu0 %v6362
    %6464 = vmatpush1.bf16.msra.mxu0 %v6361
    %6465 = vmatprep.subr.bf16.mxu0 %v6366
    %6466 = vmatpush1.bf16.msra.mxu0 %v6365
    %6467 = vmatprep.subr.bf16.mxu0 %v6370
    %6468 = vmatpush1.bf16.msra.mxu0 %v6369
    %6469 = vmatprep.mubr.bf16.mxu0 %v6030
    %6470 = vmatmul.mubr.bf16.gmra.mrb[0].mxu0 %v6029
    %v6471 = vpop.f32.mrb[0].mxu0
    %v6472 = vadd.f32 %v6100, %v6471
    %v6473 = vpop.f32.mrb[0].mxu0
    %v6474 = vadd.f32 %v6104, %v6473
    %v6475 = vpop.f32.mrb[0].mxu0
    %v6476 = vpop.f32.mrb[0].mxu0
    %6477 = vdwg.mxu0
    %6478 = vmatprep.subr.bf16.mxu0 %v6312
    %6479 = vmatpush1.bf16.msra.mxu0 %v6311
    %6480 = vmatprep.subr.bf16.mxu0 %v6316
    %6481 = vmatpush1.bf16.msra.mxu0 %v6315
    %6482 = vmatprep.subr.bf16.mxu0 %v6320
    %6483 = vmatpush1.bf16.msra.mxu0 %v6319
    %6484 = vmatprep.subr.bf16.mxu0 %v6324
    %6485 = vmatpush1.bf16.msra.mxu0 %v6323
    %6486 = vmatprep.subr.bf16.mxu0 %v6328
    %6487 = vmatpush1.bf16.msra.mxu0 %v6327
    %6488 = vmatprep.subr.bf16.mxu0 %v6332
    %6489 = vmatpush1.bf16.msra.mxu0 %v6331
    %6490 = vmatprep.subr.bf16.mxu0 %v6336
    %6491 = vmatpush1.bf16.msra.mxu0 %v6335
    %6492 = vmatprep.subr.bf16.mxu0 %v6340
    %6493 = vmatpush1.bf16.msra.mxu0 %v6339
    %6494 = vmatprep.subr.bf16.mxu0 %v6344
    %6495 = vmatpush1.bf16.msra.mxu0 %v6343
    %6496 = vmatprep.subr.bf16.mxu0 %v6348
    %6497 = vmatpush1.bf16.msra.mxu0 %v6347
    %6498 = vmatprep.subr.bf16.mxu0 %v6352
    %6499 = vmatpush1.bf16.msra.mxu0 %v6351
    %6500 = vmatprep.subr.bf16.mxu0 %v6356
    %6501 = vmatpush1.bf16.msra.mxu0 %v6355
    %6502 = vmatprep.subr.bf16.mxu0 %v6360
    %6503 = vmatpush1.bf16.msra.mxu0 %v6359
    %6504 = vmatprep.subr.bf16.mxu0 %v6364
    %6505 = vmatpush1.bf16.msra.mxu0 %v6363
    %6506 = vmatprep.subr.bf16.mxu0 %v6368
    %6507 = vmatpush1.bf16.msra.mxu0 %v6367
    %6508 = vmatprep.subr.bf16.mxu0 %v6372
    %6509 = vmatpush1.bf16.msra.mxu0 %v6371
    %6510 = vmatprep.mubr.bf16.mxu0 %v6030
    %6511 = vmatmul.mubr.bf16.gmra.mrb[0].mxu0 %v6029
    %v6512 = vpop.f32.mrb[0].mxu0
    %v6513 = vadd.f32 %v6108, %v6512
    %v6514 = vpop.f32.mrb[0].mxu0
    %v6515 = vadd.f32 %v6112, %v6514
    %v6516 = vpop.f32.mrb[0].mxu0
    %v6517 = vpop.f32.mrb[0].mxu0
    %6518 = vdwg.mxu0
    %v6519 = vmax.f32 %v6472, 0.0
    %v6520 = vmax.f32 %v6474, 0.0
    %v6521 = vmax.f32 %v6513, 0.0
    %v6522 = vmax.f32 %v6515, 0.0
    %v6523 = vld [vmem:[#allocation95] sm:$0xff]
    %v6524 = vld [vmem:[#allocation95 + $0x8] sm:$0xff]
    %v6525 = vld [vmem:[#allocation95 + $0x10] sm:$0xff]
    %v6526 = vld [vmem:[#allocation95 + $0x18] sm:$0xff]
    %v6527 = vld [vmem:[#allocation95 + $0x20] sm:$0xff]
    %v6528 = vld [vmem:[#allocation95 + $0x28] sm:$0xff]
    %v6529 = vld [vmem:[#allocation95 + $0x30] sm:$0xff]
    %v6530 = vld [vmem:[#allocation95 + $0x38] sm:$0xff]
    %v6531 = vld [vmem:[#allocation95 + $0x40] sm:$0xff]
    %v6532 = vld [vmem:[#allocation95 + $0x48] sm:$0xff]
    %v6533 = vld [vmem:[#allocation95 + $0x50] sm:$0xff]
    %v6534 = vld [vmem:[#allocation95 + $0x58] sm:$0xff]
    %v6535 = vld [vmem:[#allocation95 + $0x60] sm:$0xff]
    %v6536 = vld [vmem:[#allocation95 + $0x68] sm:$0xff]
    %v6537 = vld [vmem:[#allocation95 + $0x70] sm:$0xff]
    %v6538 = vld [vmem:[#allocation95 + $0x78] sm:$0xff]
    %v6539 = vld [vmem:[#allocation95 + $0x80] sm:$0xff]
    %v6540 = vld [vmem:[#allocation95 + $0x88] sm:$0xff]
    %v6541 = vld [vmem:[#allocation95 + $0x90] sm:$0xff]
    %v6542 = vld [vmem:[#allocation95 + $0x98] sm:$0xff]
    %v6543 = vld [vmem:[#allocation95 + $0xa0] sm:$0xff]
    %v6544 = vld [vmem:[#allocation95 + $0xa8] sm:$0xff]
    %v6545 = vld [vmem:[#allocation95 + $0xb0] sm:$0xff]
    %v6546 = vld [vmem:[#allocation95 + $0xb8] sm:$0xff]
    %v6547 = vld [vmem:[#allocation95 + $0xc0] sm:$0xff]
    %v6548 = vld [vmem:[#allocation95 + $0xc8] sm:$0xff]
    %v6549 = vld [vmem:[#allocation95 + $0xd0] sm:$0xff]
    %v6550 = vld [vmem:[#allocation95 + $0xd8] sm:$0xff]
    %v6551 = vld [vmem:[#allocation95 + $0xe0] sm:$0xff]
    %v6552 = vld [vmem:[#allocation95 + $0xe8] sm:$0xff]
    %v6553 = vld [vmem:[#allocation95 + $0xf0] sm:$0xff]
    %v6554 = vld [vmem:[#allocation95 + $0xf8] sm:$0xff]
    %v6555 = vld [vmem:[#allocation95 + $0x100] sm:$0xff]
    %v6556 = vld [vmem:[#allocation95 + $0x108] sm:$0xff]
    %v6557 = vld [vmem:[#allocation95 + $0x110] sm:$0xff]
    %v6558 = vld [vmem:[#allocation95 + $0x118] sm:$0xff]
    %v6559 = vld [vmem:[#allocation95 + $0x120] sm:$0xff]
    %v6560 = vld [vmem:[#allocation95 + $0x128] sm:$0xff]
    %v6561 = vld [vmem:[#allocation95 + $0x130] sm:$0xff]
    %v6562 = vld [vmem:[#allocation95 + $0x138] sm:$0xff]
    %v6563 = vld [vmem:[#allocation95 + $0x140] sm:$0xff]
    %v6564 = vld [vmem:[#allocation95 + $0x148] sm:$0xff]
    %v6565 = vld [vmem:[#allocation95 + $0x150] sm:$0xff]
    %v6566 = vld [vmem:[#allocation95 + $0x158] sm:$0xff]
    %v6567 = vld [vmem:[#allocation95 + $0x160] sm:$0xff]
    %v6568 = vld [vmem:[#allocation95 + $0x168] sm:$0xff]
    %v6569 = vld [vmem:[#allocation95 + $0x170] sm:$0xff]
    %v6570 = vld [vmem:[#allocation95 + $0x178] sm:$0xff]
    %v6571 = vld [vmem:[#allocation95 + $0x180] sm:$0xff]
    %v6572 = vld [vmem:[#allocation95 + $0x188] sm:$0xff]
    %v6573 = vld [vmem:[#allocation95 + $0x190] sm:$0xff]
    %v6574 = vld [vmem:[#allocation95 + $0x198] sm:$0xff]
    %v6575 = vld [vmem:[#allocation95 + $0x1a0] sm:$0xff]
    %v6576 = vld [vmem:[#allocation95 + $0x1a8] sm:$0xff]
    %v6577 = vld [vmem:[#allocation95 + $0x1b0] sm:$0xff]
    %v6578 = vld [vmem:[#allocation95 + $0x1b8] sm:$0xff]
    %v6579 = vld [vmem:[#allocation95 + $0x1c0] sm:$0xff]
    %v6580 = vld [vmem:[#allocation95 + $0x1c8] sm:$0xff]
    %v6581 = vld [vmem:[#allocation95 + $0x1d0] sm:$0xff]
    %v6582 = vld [vmem:[#allocation95 + $0x1d8] sm:$0xff]
    %v6583 = vld [vmem:[#allocation95 + $0x1e0] sm:$0xff]
    %v6584 = vld [vmem:[#allocation95 + $0x1e8] sm:$0xff]
    %v6585 = vld [vmem:[#allocation95 + $0x1f0] sm:$0xff]
    %v6586 = vld [vmem:[#allocation95 + $0x1f8] sm:$0xff]
    %v6587 = vld [vmem:[%s123] sm:$0xf]
    %v6589 = vlaneseq
    %v6590 = vshrl.u32 %v6589, 7
    %v6591 = vsub.s32 0, %v6590
    %v6592 = vrot.slane %v6587, %v6591
    %v6593 = vlaneseq
    %v6594 = vshrl.u32 %v6593, 7
    %v6595 = vsub.s32 1, %v6594
    %v6596 = vrot.slane %v6587, %v6595
    %v6597 = vlaneseq
    %v6598 = vshrl.u32 %v6597, 7
    %v6599 = vsub.s32 2, %v6598
    %v6600 = vrot.slane %v6587, %v6599
    %v6601 = vlaneseq
    %v6602 = vshrl.u32 %v6601, 7
    %v6603 = vsub.s32 3, %v6602
    %v6604 = vrot.slane %v6587, %v6603
    %v6673 = vunpack.c.l.b16 %v6523
    %v6674 = vunpack.c.h.b16 %v6523
    %v6675 = vunpack.c.l.b16 %v6524
    %v6676 = vunpack.c.h.b16 %v6524
    %v6677 = vunpack.c.l.b16 %v6525
    %v6678 = vunpack.c.h.b16 %v6525
    %v6679 = vunpack.c.l.b16 %v6526
    %v6680 = vunpack.c.h.b16 %v6526
    %v6681 = vunpack.c.l.b16 %v6527
    %v6682 = vunpack.c.h.b16 %v6527
    %v6683 = vunpack.c.l.b16 %v6528
    %v6684 = vunpack.c.h.b16 %v6528
    %v6685 = vunpack.c.l.b16 %v6529
    %v6686 = vunpack.c.h.b16 %v6529
    %v6687 = vunpack.c.l.b16 %v6530
    %v6688 = vunpack.c.h.b16 %v6530
    %v6689 = vunpack.c.l.b16 %v6531
    %v6690 = vunpack.c.h.b16 %v6531
    %v6691 = vunpack.c.l.b16 %v6532
    %v6692 = vunpack.c.h.b16 %v6532
    %v6693 = vunpack.c.l.b16 %v6533
    %v6694 = vunpack.c.h.b16 %v6533
    %v6695 = vunpack.c.l.b16 %v6534
    %v6696 = vunpack.c.h.b16 %v6534
    %v6697 = vunpack.c.l.b16 %v6535
    %v6698 = vunpack.c.h.b16 %v6535
    %v6699 = vunpack.c.l.b16 %v6536
    %v6700 = vunpack.c.h.b16 %v6536
    %v6701 = vunpack.c.l.b16 %v6537
    %v6702 = vunpack.c.h.b16 %v6537
    %v6703 = vunpack.c.l.b16 %v6538
    %v6704 = vunpack.c.h.b16 %v6538
    %v6705 = vunpack.c.l.b16 %v6539
    %v6706 = vunpack.c.h.b16 %v6539
    %v6707 = vunpack.c.l.b16 %v6540
    %v6708 = vunpack.c.h.b16 %v6540
    %v6709 = vunpack.c.l.b16 %v6541
    %v6710 = vunpack.c.h.b16 %v6541
    %v6711 = vunpack.c.l.b16 %v6542
    %v6712 = vunpack.c.h.b16 %v6542
    %v6713 = vunpack.c.l.b16 %v6543
    %v6714 = vunpack.c.h.b16 %v6543
    %v6715 = vunpack.c.l.b16 %v6544
    %v6716 = vunpack.c.h.b16 %v6544
    %v6717 = vunpack.c.l.b16 %v6545
    %v6718 = vunpack.c.h.b16 %v6545
    %v6719 = vunpack.c.l.b16 %v6546
    %v6720 = vunpack.c.h.b16 %v6546
    %v6721 = vunpack.c.l.b16 %v6547
    %v6722 = vunpack.c.h.b16 %v6547
    %v6723 = vunpack.c.l.b16 %v6548
    %v6724 = vunpack.c.h.b16 %v6548
    %v6725 = vunpack.c.l.b16 %v6549
    %v6726 = vunpack.c.h.b16 %v6549
    %v6727 = vunpack.c.l.b16 %v6550
    %v6728 = vunpack.c.h.b16 %v6550
    %v6729 = vunpack.c.l.b16 %v6551
    %v6730 = vunpack.c.h.b16 %v6551
    %v6731 = vunpack.c.l.b16 %v6552
    %v6732 = vunpack.c.h.b16 %v6552
    %v6733 = vunpack.c.l.b16 %v6553
    %v6734 = vunpack.c.h.b16 %v6553
    %v6735 = vunpack.c.l.b16 %v6554
    %v6736 = vunpack.c.h.b16 %v6554
    %v6737 = vunpack.c.l.b16 %v6555
    %v6738 = vunpack.c.h.b16 %v6555
    %v6739 = vunpack.c.l.b16 %v6556
    %v6740 = vunpack.c.h.b16 %v6556
    %v6741 = vunpack.c.l.b16 %v6557
    %v6742 = vunpack.c.h.b16 %v6557
    %v6743 = vunpack.c.l.b16 %v6558
    %v6744 = vunpack.c.h.b16 %v6558
    %v6745 = vunpack.c.l.b16 %v6559
    %v6746 = vunpack.c.h.b16 %v6559
    %v6747 = vunpack.c.l.b16 %v6560
    %v6748 = vunpack.c.h.b16 %v6560
    %v6749 = vunpack.c.l.b16 %v6561
    %v6750 = vunpack.c.h.b16 %v6561
    %v6751 = vunpack.c.l.b16 %v6562
    %v6752 = vunpack.c.h.b16 %v6562
    %v6753 = vunpack.c.l.b16 %v6563
    %v6754 = vunpack.c.h.b16 %v6563
    %v6755 = vunpack.c.l.b16 %v6564
    %v6756 = vunpack.c.h.b16 %v6564
    %v6757 = vunpack.c.l.b16 %v6565
    %v6758 = vunpack.c.h.b16 %v6565
    %v6759 = vunpack.c.l.b16 %v6566
    %v6760 = vunpack.c.h.b16 %v6566
    %v6761 = vunpack.c.l.b16 %v6567
    %v6762 = vunpack.c.h.b16 %v6567
    %v6763 = vunpack.c.l.b16 %v6568
    %v6764 = vunpack.c.h.b16 %v6568
    %v6765 = vunpack.c.l.b16 %v6569
    %v6766 = vunpack.c.h.b16 %v6569
    %v6767 = vunpack.c.l.b16 %v6570
    %v6768 = vunpack.c.h.b16 %v6570
    %v6769 = vunpack.c.l.b16 %v6571
    %v6770 = vunpack.c.h.b16 %v6571
    %v6771 = vunpack.c.l.b16 %v6572
    %v6772 = vunpack.c.h.b16 %v6572
    %v6773 = vunpack.c.l.b16 %v6573
    %v6774 = vunpack.c.h.b16 %v6573
    %v6775 = vunpack.c.l.b16 %v6574
    %v6776 = vunpack.c.h.b16 %v6574
    %v6777 = vunpack.c.l.b16 %v6575
    %v6778 = vunpack.c.h.b16 %v6575
    %v6779 = vunpack.c.l.b16 %v6576
    %v6780 = vunpack.c.h.b16 %v6576
    %v6781 = vunpack.c.l.b16 %v6577
    %v6782 = vunpack.c.h.b16 %v6577
    %v6783 = vunpack.c.l.b16 %v6578
    %v6784 = vunpack.c.h.b16 %v6578
    %v6785 = vunpack.c.l.b16 %v6579
    %v6786 = vunpack.c.h.b16 %v6579
    %v6787 = vunpack.c.l.b16 %v6580
    %v6788 = vunpack.c.h.b16 %v6580
    %v6789 = vunpack.c.l.b16 %v6581
    %v6790 = vunpack.c.h.b16 %v6581
    %v6791 = vunpack.c.l.b16 %v6582
    %v6792 = vunpack.c.h.b16 %v6582
    %v6793 = vunpack.c.l.b16 %v6583
    %v6794 = vunpack.c.h.b16 %v6583
    %v6795 = vunpack.c.l.b16 %v6584
    %v6796 = vunpack.c.h.b16 %v6584
    %v6797 = vunpack.c.l.b16 %v6585
    %v6798 = vunpack.c.h.b16 %v6585
    %v6799 = vunpack.c.l.b16 %v6586
    %v6800 = vunpack.c.h.b16 %v6586
    %v6801 = vpack.c.b16 %v6677, %v6673
    %v6802 = vpack.c.b16 %v6678, %v6674
    %v6803 = vpack.c.b16 %v6679, %v6675
    %v6804 = vpack.c.b16 %v6680, %v6676
    %v6805 = vpack.c.b16 %v6685, %v6681
    %v6806 = vpack.c.b16 %v6686, %v6682
    %v6807 = vpack.c.b16 %v6687, %v6683
    %v6808 = vpack.c.b16 %v6688, %v6684
    %v6809 = vpack.c.b16 %v6693, %v6689
    %v6810 = vpack.c.b16 %v6694, %v6690
    %v6811 = vpack.c.b16 %v6695, %v6691
    %v6812 = vpack.c.b16 %v6696, %v6692
    %v6813 = vpack.c.b16 %v6701, %v6697
    %v6814 = vpack.c.b16 %v6702, %v6698
    %v6815 = vpack.c.b16 %v6703, %v6699
    %v6816 = vpack.c.b16 %v6704, %v6700
    %v6817 = vpack.c.b16 %v6709, %v6705
    %v6818 = vpack.c.b16 %v6710, %v6706
    %v6819 = vpack.c.b16 %v6711, %v6707
    %v6820 = vpack.c.b16 %v6712, %v6708
    %v6821 = vpack.c.b16 %v6717, %v6713
    %v6822 = vpack.c.b16 %v6718, %v6714
    %v6823 = vpack.c.b16 %v6719, %v6715
    %v6824 = vpack.c.b16 %v6720, %v6716
    %v6825 = vpack.c.b16 %v6725, %v6721
    %v6826 = vpack.c.b16 %v6726, %v6722
    %v6827 = vpack.c.b16 %v6727, %v6723
    %v6828 = vpack.c.b16 %v6728, %v6724
    %v6829 = vpack.c.b16 %v6733, %v6729
    %v6830 = vpack.c.b16 %v6734, %v6730
    %v6831 = vpack.c.b16 %v6735, %v6731
    %v6832 = vpack.c.b16 %v6736, %v6732
    %v6833 = vpack.c.b16 %v6741, %v6737
    %v6834 = vpack.c.b16 %v6742, %v6738
    %v6835 = vpack.c.b16 %v6743, %v6739
    %v6836 = vpack.c.b16 %v6744, %v6740
    %v6837 = vpack.c.b16 %v6749, %v6745
    %v6838 = vpack.c.b16 %v6750, %v6746
    %v6839 = vpack.c.b16 %v6751, %v6747
    %v6840 = vpack.c.b16 %v6752, %v6748
    %v6841 = vpack.c.b16 %v6757, %v6753
    %v6842 = vpack.c.b16 %v6758, %v6754
    %v6843 = vpack.c.b16 %v6759, %v6755
    %v6844 = vpack.c.b16 %v6760, %v6756
    %v6845 = vpack.c.b16 %v6765, %v6761
    %v6846 = vpack.c.b16 %v6766, %v6762
    %v6847 = vpack.c.b16 %v6767, %v6763
    %v6848 = vpack.c.b16 %v6768, %v6764
    %v6849 = vpack.c.b16 %v6773, %v6769
    %v6850 = vpack.c.b16 %v6774, %v6770
    %v6851 = vpack.c.b16 %v6775, %v6771
    %v6852 = vpack.c.b16 %v6776, %v6772
    %v6853 = vpack.c.b16 %v6781, %v6777
    %v6854 = vpack.c.b16 %v6782, %v6778
    %v6855 = vpack.c.b16 %v6783, %v6779
    %v6856 = vpack.c.b16 %v6784, %v6780
    %v6857 = vpack.c.b16 %v6789, %v6785
    %v6858 = vpack.c.b16 %v6790, %v6786
    %v6859 = vpack.c.b16 %v6791, %v6787
    %v6860 = vpack.c.b16 %v6792, %v6788
    %v6861 = vpack.c.b16 %v6797, %v6793
    %v6862 = vpack.c.b16 %v6798, %v6794
    %v6863 = vpack.c.b16 %v6799, %v6795
    %v6864 = vpack.c.b16 %v6800, %v6796
    %6929 = vmatprep.subr.bf16.mxu0 %v6802
    %6930 = vmatpush1.bf16.msra.mxu0 %v6801
    %6931 = vmatprep.subr.bf16.mxu0 %v6806
    %6932 = vmatpush1.bf16.msra.mxu0 %v6805
    %6933 = vmatprep.subr.bf16.mxu0 %v6810
    %6934 = vmatpush1.bf16.msra.mxu0 %v6809
    %6935 = vmatprep.subr.bf16.mxu0 %v6814
    %6936 = vmatpush1.bf16.msra.mxu0 %v6813
    %6937 = vmatprep.subr.bf16.mxu0 %v6818
    %6938 = vmatpush1.bf16.msra.mxu0 %v6817
    %6939 = vmatprep.subr.bf16.mxu0 %v6822
    %6940 = vmatpush1.bf16.msra.mxu0 %v6821
    %6941 = vmatprep.subr.bf16.mxu0 %v6826
    %6942 = vmatpush1.bf16.msra.mxu0 %v6825
    %6943 = vmatprep.subr.bf16.mxu0 %v6830
    %6944 = vmatpush1.bf16.msra.mxu0 %v6829
    %6945 = vmatprep.subr.bf16.mxu0 %v6834
    %6946 = vmatpush1.bf16.msra.mxu0 %v6833
    %6947 = vmatprep.subr.bf16.mxu0 %v6838
    %6948 = vmatpush1.bf16.msra.mxu0 %v6837
    %6949 = vmatprep.subr.bf16.mxu0 %v6842
    %6950 = vmatpush1.bf16.msra.mxu0 %v6841
    %6951 = vmatprep.subr.bf16.mxu0 %v6846
    %6952 = vmatpush1.bf16.msra.mxu0 %v6845
    %6953 = vmatprep.subr.bf16.mxu0 %v6850
    %6954 = vmatpush1.bf16.msra.mxu0 %v6849
    %6955 = vmatprep.subr.bf16.mxu0 %v6854
    %6956 = vmatpush1.bf16.msra.mxu0 %v6853
    %6957 = vmatprep.subr.bf16.mxu0 %v6858
    %6958 = vmatpush1.bf16.msra.mxu0 %v6857
    %6959 = vmatprep.subr.bf16.mxu0 %v6862
    %6960 = vmatpush1.bf16.msra.mxu0 %v6861
    %6961 = vmatprep.mubr.bf16.mxu0 %v6030
    %6962 = vmatmul.mubr.bf16.gmra.mrb[0].mxu0 %v6029
    %v6963 = vpop.f32.mrb[0].mxu0
    %v6964 = vadd.f32 %v6592, %v6963
    %v6965 = vpop.f32.mrb[0].mxu0
    %v6966 = vadd.f32 %v6596, %v6965
    %v6967 = vpop.f32.mrb[0].mxu0
    %v6968 = vpop.f32.mrb[0].mxu0
    %6969 = vdwg.mxu0
    %6970 = vmatprep.subr.bf16.mxu0 %v6804
    %6971 = vmatpush1.bf16.msra.mxu0 %v6803
    %6972 = vmatprep.subr.bf16.mxu0 %v6808
    %6973 = vmatpush1.bf16.msra.mxu0 %v6807
    %6974 = vmatprep.subr.bf16.mxu0 %v6812
    %6975 = vmatpush1.bf16.msra.mxu0 %v6811
    %6976 = vmatprep.subr.bf16.mxu0 %v6816
    %6977 = vmatpush1.bf16.msra.mxu0 %v6815
    %6978 = vmatprep.subr.bf16.mxu0 %v6820
    %6979 = vmatpush1.bf16.msra.mxu0 %v6819
    %6980 = vmatprep.subr.bf16.mxu0 %v6824
    %6981 = vmatpush1.bf16.msra.mxu0 %v6823
    %6982 = vmatprep.subr.bf16.mxu0 %v6828
    %6983 = vmatpush1.bf16.msra.mxu0 %v6827
    %6984 = vmatprep.subr.bf16.mxu0 %v6832
    %6985 = vmatpush1.bf16.msra.mxu0 %v6831
    %6986 = vmatprep.subr.bf16.mxu0 %v6836
    %6987 = vmatpush1.bf16.msra.mxu0 %v6835
    %6988 = vmatprep.subr.bf16.mxu0 %v6840
    %6989 = vmatpush1.bf16.msra.mxu0 %v6839
    %6990 = vmatprep.subr.bf16.mxu0 %v6844
    %6991 = vmatpush1.bf16.msra.mxu0 %v6843
    %6992 = vmatprep.subr.bf16.mxu0 %v6848
    %6993 = vmatpush1.bf16.msra.mxu0 %v6847
    %6994 = vmatprep.subr.bf16.mxu0 %v6852
    %6995 = vmatpush1.bf16.msra.mxu0 %v6851
    %6996 = vmatprep.subr.bf16.mxu0 %v6856
    %6997 = vmatpush1.bf16.msra.mxu0 %v6855
    %6998 = vmatprep.subr.bf16.mxu0 %v6860
    %6999 = vmatpush1.bf16.msra.mxu0 %v6859
    %7000 = vmatprep.subr.bf16.mxu0 %v6864
    %7001 = vmatpush1.bf16.msra.mxu0 %v6863
    %7002 = vmatprep.mubr.bf16.mxu0 %v6030
    %7003 = vmatmul.mubr.bf16.gmra.mrb[0].mxu0 %v6029
    %v7004 = vpop.f32.mrb[0].mxu0
    %v7005 = vadd.f32 %v6600, %v7004
    %v7006 = vpop.f32.mrb[0].mxu0
    %v7007 = vadd.f32 %v6604, %v7006
    %v7008 = vpop.f32.mrb[0].mxu0
    %v7009 = vpop.f32.mrb[0].mxu0
    %7010 = vdwg.mxu0
    %v7011 = vpack.c.bf16 %v6519, %v6519
    %v7012 = vpack.c.bf16 %v6520, %v6520
    %v7013 = vpack.c.bf16 %v6521, %v6521
    %v7014 = vpack.c.bf16 %v6522, %v6522
    %v7015 = vld [vmem:[#allocation94] sm:$0xff]
    %v7016 = vld [vmem:[#allocation94 + $0x8] sm:$0xff]
    %v7017 = vld [vmem:[#allocation94 + $0x10] sm:$0xff]
    %v7018 = vld [vmem:[#allocation94 + $0x18] sm:$0xff]
    %v7019 = vld [vmem:[#allocation94 + $0x20] sm:$0xff]
    %v7020 = vld [vmem:[#allocation94 + $0x28] sm:$0xff]
    %v7021 = vld [vmem:[#allocation94 + $0x30] sm:$0xff]
    %v7022 = vld [vmem:[#allocation94 + $0x38] sm:$0xff]
    %v7023 = vld [vmem:[#allocation94 + $0x40] sm:$0xff]
    %v7024 = vld [vmem:[#allocation94 + $0x48] sm:$0xff]
    %v7025 = vld [vmem:[#allocation94 + $0x50] sm:$0xff]
    %v7026 = vld [vmem:[#allocation94 + $0x58] sm:$0xff]
    %v7027 = vld [vmem:[#allocation94 + $0x60] sm:$0xff]
    %v7028 = vld [vmem:[#allocation94 + $0x68] sm:$0xff]
    %v7029 = vld [vmem:[#allocation94 + $0x70] sm:$0xff]
    %v7030 = vld [vmem:[#allocation94 + $0x78] sm:$0xff]
    %v7031 = vld [vmem:[#allocation94 + $0x80] sm:$0xff]
    %v7032 = vld [vmem:[#allocation94 + $0x88] sm:$0xff]
    %v7033 = vld [vmem:[#allocation94 + $0x90] sm:$0xff]
    %v7034 = vld [vmem:[#allocation94 + $0x98] sm:$0xff]
    %v7035 = vld [vmem:[#allocation94 + $0xa0] sm:$0xff]
    %v7036 = vld [vmem:[#allocation94 + $0xa8] sm:$0xff]
    %v7037 = vld [vmem:[#allocation94 + $0xb0] sm:$0xff]
    %v7038 = vld [vmem:[#allocation94 + $0xb8] sm:$0xff]
    %v7039 = vld [vmem:[#allocation94 + $0xc0] sm:$0xff]
    %v7040 = vld [vmem:[#allocation94 + $0xc8] sm:$0xff]
    %v7041 = vld [vmem:[#allocation94 + $0xd0] sm:$0xff]
    %v7042 = vld [vmem:[#allocation94 + $0xd8] sm:$0xff]
    %v7043 = vld [vmem:[#allocation94 + $0xe0] sm:$0xff]
    %v7044 = vld [vmem:[#allocation94 + $0xe8] sm:$0xff]
    %v7045 = vld [vmem:[#allocation94 + $0xf0] sm:$0xff]
    %v7046 = vld [vmem:[#allocation94 + $0xf8] sm:$0xff]
    %v7047 = vld [vmem:[#allocation94 + $0x100] sm:$0xff]
    %v7048 = vld [vmem:[#allocation94 + $0x108] sm:$0xff]
    %v7049 = vld [vmem:[#allocation94 + $0x110] sm:$0xff]
    %v7050 = vld [vmem:[#allocation94 + $0x118] sm:$0xff]
    %v7051 = vld [vmem:[#allocation94 + $0x120] sm:$0xff]
    %v7052 = vld [vmem:[#allocation94 + $0x128] sm:$0xff]
    %v7053 = vld [vmem:[#allocation94 + $0x130] sm:$0xff]
    %v7054 = vld [vmem:[#allocation94 + $0x138] sm:$0xff]
    %v7055 = vld [vmem:[#allocation94 + $0x140] sm:$0xff]
    %v7056 = vld [vmem:[#allocation94 + $0x148] sm:$0xff]
    %v7057 = vld [vmem:[#allocation94 + $0x150] sm:$0xff]
    %v7058 = vld [vmem:[#allocation94 + $0x158] sm:$0xff]
    %v7059 = vld [vmem:[#allocation94 + $0x160] sm:$0xff]
    %v7060 = vld [vmem:[#allocation94 + $0x168] sm:$0xff]
    %v7061 = vld [vmem:[#allocation94 + $0x170] sm:$0xff]
    %v7062 = vld [vmem:[#allocation94 + $0x178] sm:$0xff]
    %v7063 = vld [vmem:[#allocation94 + $0x180] sm:$0xff]
    %v7064 = vld [vmem:[#allocation94 + $0x188] sm:$0xff]
    %v7065 = vld [vmem:[#allocation94 + $0x190] sm:$0xff]
    %v7066 = vld [vmem:[#allocation94 + $0x198] sm:$0xff]
    %v7067 = vld [vmem:[#allocation94 + $0x1a0] sm:$0xff]
    %v7068 = vld [vmem:[#allocation94 + $0x1a8] sm:$0xff]
    %v7069 = vld [vmem:[#allocation94 + $0x1b0] sm:$0xff]
    %v7070 = vld [vmem:[#allocation94 + $0x1b8] sm:$0xff]
    %v7071 = vld [vmem:[#allocation94 + $0x1c0] sm:$0xff]
    %v7072 = vld [vmem:[#allocation94 + $0x1c8] sm:$0xff]
    %v7073 = vld [vmem:[#allocation94 + $0x1d0] sm:$0xff]
    %v7074 = vld [vmem:[#allocation94 + $0x1d8] sm:$0xff]
    %v7075 = vld [vmem:[#allocation94 + $0x1e0] sm:$0xff]
    %v7076 = vld [vmem:[#allocation94 + $0x1e8] sm:$0xff]
    %v7077 = vld [vmem:[#allocation94 + $0x1f0] sm:$0xff]
    %v7078 = vld [vmem:[#allocation94 + $0x1f8] sm:$0xff]
    %v7079 = vld [vmem:[#allocation94 + $0x200] sm:$0xff]
    %v7080 = vld [vmem:[#allocation94 + $0x208] sm:$0xff]
    %v7081 = vld [vmem:[#allocation94 + $0x210] sm:$0xff]
    %v7082 = vld [vmem:[#allocation94 + $0x218] sm:$0xff]
    %v7083 = vld [vmem:[#allocation94 + $0x220] sm:$0xff]
    %v7084 = vld [vmem:[#allocation94 + $0x228] sm:$0xff]
    %v7085 = vld [vmem:[#allocation94 + $0x230] sm:$0xff]
    %v7086 = vld [vmem:[#allocation94 + $0x238] sm:$0xff]
    %v7087 = vld [vmem:[#allocation94 + $0x240] sm:$0xff]
    %v7088 = vld [vmem:[#allocation94 + $0x248] sm:$0xff]
    %v7089 = vld [vmem:[#allocation94 + $0x250] sm:$0xff]
    %v7090 = vld [vmem:[#allocation94 + $0x258] sm:$0xff]
    %v7091 = vld [vmem:[#allocation94 + $0x260] sm:$0xff]
    %v7092 = vld [vmem:[#allocation94 + $0x268] sm:$0xff]
    %v7093 = vld [vmem:[#allocation94 + $0x270] sm:$0xff]
    %v7094 = vld [vmem:[#allocation94 + $0x278] sm:$0xff]
    %v7095 = vld [vmem:[#allocation94 + $0x280] sm:$0xff]
    %v7096 = vld [vmem:[#allocation94 + $0x288] sm:$0xff]
    %v7097 = vld [vmem:[#allocation94 + $0x290] sm:$0xff]
    %v7098 = vld [vmem:[#allocation94 + $0x298] sm:$0xff]
    %v7099 = vld [vmem:[#allocation94 + $0x2a0] sm:$0xff]
    %v7100 = vld [vmem:[#allocation94 + $0x2a8] sm:$0xff]
    %v7101 = vld [vmem:[#allocation94 + $0x2b0] sm:$0xff]
    %v7102 = vld [vmem:[#allocation94 + $0x2b8] sm:$0xff]
    %v7103 = vld [vmem:[#allocation94 + $0x2c0] sm:$0xff]
    %v7104 = vld [vmem:[#allocation94 + $0x2c8] sm:$0xff]
    %v7105 = vld [vmem:[#allocation94 + $0x2d0] sm:$0xff]
    %v7106 = vld [vmem:[#allocation94 + $0x2d8] sm:$0xff]
    %v7107 = vld [vmem:[#allocation94 + $0x2e0] sm:$0xff]
    %v7108 = vld [vmem:[#allocation94 + $0x2e8] sm:$0xff]
    %v7109 = vld [vmem:[#allocation94 + $0x2f0] sm:$0xff]
    %v7110 = vld [vmem:[#allocation94 + $0x2f8] sm:$0xff]
    %v7111 = vld [vmem:[#allocation94 + $0x300] sm:$0xff]
    %v7112 = vld [vmem:[#allocation94 + $0x308] sm:$0xff]
    %v7113 = vld [vmem:[#allocation94 + $0x310] sm:$0xff]
    %v7114 = vld [vmem:[#allocation94 + $0x318] sm:$0xff]
    %v7115 = vld [vmem:[#allocation94 + $0x320] sm:$0xff]
    %v7116 = vld [vmem:[#allocation94 + $0x328] sm:$0xff]
    %v7117 = vld [vmem:[#allocation94 + $0x330] sm:$0xff]
    %v7118 = vld [vmem:[#allocation94 + $0x338] sm:$0xff]
    %v7119 = vld [vmem:[#allocation94 + $0x340] sm:$0xff]
    %v7120 = vld [vmem:[#allocation94 + $0x348] sm:$0xff]
    %v7121 = vld [vmem:[#allocation94 + $0x350] sm:$0xff]
    %v7122 = vld [vmem:[#allocation94 + $0x358] sm:$0xff]
    %v7123 = vld [vmem:[#allocation94 + $0x360] sm:$0xff]
    %v7124 = vld [vmem:[#allocation94 + $0x368] sm:$0xff]
    %v7125 = vld [vmem:[#allocation94 + $0x370] sm:$0xff]
    %v7126 = vld [vmem:[#allocation94 + $0x378] sm:$0xff]
    %v7127 = vld [vmem:[#allocation94 + $0x380] sm:$0xff]
    %v7128 = vld [vmem:[#allocation94 + $0x388] sm:$0xff]
    %v7129 = vld [vmem:[#allocation94 + $0x390] sm:$0xff]
    %v7130 = vld [vmem:[#allocation94 + $0x398] sm:$0xff]
    %v7131 = vld [vmem:[#allocation94 + $0x3a0] sm:$0xff]
    %v7132 = vld [vmem:[#allocation94 + $0x3a8] sm:$0xff]
    %v7133 = vld [vmem:[#allocation94 + $0x3b0] sm:$0xff]
    %v7134 = vld [vmem:[#allocation94 + $0x3b8] sm:$0xff]
    %v7135 = vld [vmem:[#allocation94 + $0x3c0] sm:$0xff]
    %v7136 = vld [vmem:[#allocation94 + $0x3c8] sm:$0xff]
    %v7137 = vld [vmem:[#allocation94 + $0x3d0] sm:$0xff]
    %v7138 = vld [vmem:[#allocation94 + $0x3d8] sm:$0xff]
    %v7139 = vld [vmem:[#allocation94 + $0x3e0] sm:$0xff]
    %v7140 = vld [vmem:[#allocation94 + $0x3e8] sm:$0xff]
    %v7141 = vld [vmem:[#allocation94 + $0x3f0] sm:$0xff]
    %v7142 = vld [vmem:[#allocation94 + $0x3f8] sm:$0xff]
    %v7143 = vld [vmem:[%s121] sm:$0xf]
    %v7145 = vlaneseq
    %v7146 = vshrl.u32 %v7145, 7
    %v7147 = vsub.s32 0, %v7146
    %v7148 = vrot.slane %v7143, %v7147
    %v7149 = vlaneseq
    %v7150 = vshrl.u32 %v7149, 7
    %v7151 = vsub.s32 1, %v7150
    %v7152 = vrot.slane %v7143, %v7151
    %v7153 = vlaneseq
    %v7154 = vshrl.u32 %v7153, 7
    %v7155 = vsub.s32 2, %v7154
    %v7156 = vrot.slane %v7143, %v7155
    %v7157 = vlaneseq
    %v7158 = vshrl.u32 %v7157, 7
    %v7159 = vsub.s32 3, %v7158
    %v7160 = vrot.slane %v7143, %v7159
    %v7293 = vunpack.c.l.b16 %v7015
    %v7294 = vunpack.c.h.b16 %v7015
    %v7295 = vunpack.c.l.b16 %v7016
    %v7296 = vunpack.c.h.b16 %v7016
    %v7297 = vunpack.c.l.b16 %v7017
    %v7298 = vunpack.c.h.b16 %v7017
    %v7299 = vunpack.c.l.b16 %v7018
    %v7300 = vunpack.c.h.b16 %v7018
    %v7301 = vunpack.c.l.b16 %v7019
    %v7302 = vunpack.c.h.b16 %v7019
    %v7303 = vunpack.c.l.b16 %v7020
    %v7304 = vunpack.c.h.b16 %v7020
    %v7305 = vunpack.c.l.b16 %v7021
    %v7306 = vunpack.c.h.b16 %v7021
    %v7307 = vunpack.c.l.b16 %v7022
    %v7308 = vunpack.c.h.b16 %v7022
    %v7309 = vunpack.c.l.b16 %v7023
    %v7310 = vunpack.c.h.b16 %v7023
    %v7311 = vunpack.c.l.b16 %v7024
    %v7312 = vunpack.c.h.b16 %v7024
    %v7313 = vunpack.c.l.b16 %v7025
    %v7314 = vunpack.c.h.b16 %v7025
    %v7315 = vunpack.c.l.b16 %v7026
    %v7316 = vunpack.c.h.b16 %v7026
    %v7317 = vunpack.c.l.b16 %v7027
    %v7318 = vunpack.c.h.b16 %v7027
    %v7319 = vunpack.c.l.b16 %v7028
    %v7320 = vunpack.c.h.b16 %v7028
    %v7321 = vunpack.c.l.b16 %v7029
    %v7322 = vunpack.c.h.b16 %v7029
    %v7323 = vunpack.c.l.b16 %v7030
    %v7324 = vunpack.c.h.b16 %v7030
    %v7325 = vunpack.c.l.b16 %v7031
    %v7326 = vunpack.c.h.b16 %v7031
    %v7327 = vunpack.c.l.b16 %v7032
    %v7328 = vunpack.c.h.b16 %v7032
    %v7329 = vunpack.c.l.b16 %v7033
    %v7330 = vunpack.c.h.b16 %v7033
    %v7331 = vunpack.c.l.b16 %v7034
    %v7332 = vunpack.c.h.b16 %v7034
    %v7333 = vunpack.c.l.b16 %v7035
    %v7334 = vunpack.c.h.b16 %v7035
    %v7335 = vunpack.c.l.b16 %v7036
    %v7336 = vunpack.c.h.b16 %v7036
    %v7337 = vunpack.c.l.b16 %v7037
    %v7338 = vunpack.c.h.b16 %v7037
    %v7339 = vunpack.c.l.b16 %v7038
    %v7340 = vunpack.c.h.b16 %v7038
    %v7341 = vunpack.c.l.b16 %v7039
    %v7342 = vunpack.c.h.b16 %v7039
    %v7343 = vunpack.c.l.b16 %v7040
    %v7344 = vunpack.c.h.b16 %v7040
    %v7345 = vunpack.c.l.b16 %v7041
    %v7346 = vunpack.c.h.b16 %v7041
    %v7347 = vunpack.c.l.b16 %v7042
    %v7348 = vunpack.c.h.b16 %v7042
    %v7349 = vunpack.c.l.b16 %v7043
    %v7350 = vunpack.c.h.b16 %v7043
    %v7351 = vunpack.c.l.b16 %v7044
    %v7352 = vunpack.c.h.b16 %v7044
    %v7353 = vunpack.c.l.b16 %v7045
    %v7354 = vunpack.c.h.b16 %v7045
    %v7355 = vunpack.c.l.b16 %v7046
    %v7356 = vunpack.c.h.b16 %v7046
    %v7357 = vunpack.c.l.b16 %v7047
    %v7358 = vunpack.c.h.b16 %v7047
    %v7359 = vunpack.c.l.b16 %v7048
    %v7360 = vunpack.c.h.b16 %v7048
    %v7361 = vunpack.c.l.b16 %v7049
    %v7362 = vunpack.c.h.b16 %v7049
    %v7363 = vunpack.c.l.b16 %v7050
    %v7364 = vunpack.c.h.b16 %v7050
    %v7365 = vunpack.c.l.b16 %v7051
    %v7366 = vunpack.c.h.b16 %v7051
    %v7367 = vunpack.c.l.b16 %v7052
    %v7368 = vunpack.c.h.b16 %v7052
    %v7369 = vunpack.c.l.b16 %v7053
    %v7370 = vunpack.c.h.b16 %v7053
    %v7371 = vunpack.c.l.b16 %v7054
    %v7372 = vunpack.c.h.b16 %v7054
    %v7373 = vunpack.c.l.b16 %v7055
    %v7374 = vunpack.c.h.b16 %v7055
    %v7375 = vunpack.c.l.b16 %v7056
    %v7376 = vunpack.c.h.b16 %v7056
    %v7377 = vunpack.c.l.b16 %v7057
    %v7378 = vunpack.c.h.b16 %v7057
    %v7379 = vunpack.c.l.b16 %v7058
    %v7380 = vunpack.c.h.b16 %v7058
    %v7381 = vunpack.c.l.b16 %v7059
    %v7382 = vunpack.c.h.b16 %v7059
    %v7383 = vunpack.c.l.b16 %v7060
    %v7384 = vunpack.c.h.b16 %v7060
    %v7385 = vunpack.c.l.b16 %v7061
    %v7386 = vunpack.c.h.b16 %v7061
    %v7387 = vunpack.c.l.b16 %v7062
    %v7388 = vunpack.c.h.b16 %v7062
    %v7389 = vunpack.c.l.b16 %v7063
    %v7390 = vunpack.c.h.b16 %v7063
    %v7391 = vunpack.c.l.b16 %v7064
    %v7392 = vunpack.c.h.b16 %v7064
    %v7393 = vunpack.c.l.b16 %v7065
    %v7394 = vunpack.c.h.b16 %v7065
    %v7395 = vunpack.c.l.b16 %v7066
    %v7396 = vunpack.c.h.b16 %v7066
    %v7397 = vunpack.c.l.b16 %v7067
    %v7398 = vunpack.c.h.b16 %v7067
    %v7399 = vunpack.c.l.b16 %v7068
    %v7400 = vunpack.c.h.b16 %v7068
    %v7401 = vunpack.c.l.b16 %v7069
    %v7402 = vunpack.c.h.b16 %v7069
    %v7403 = vunpack.c.l.b16 %v7070
    %v7404 = vunpack.c.h.b16 %v7070
    %v7405 = vunpack.c.l.b16 %v7071
    %v7406 = vunpack.c.h.b16 %v7071
    %v7407 = vunpack.c.l.b16 %v7072
    %v7408 = vunpack.c.h.b16 %v7072
    %v7409 = vunpack.c.l.b16 %v7073
    %v7410 = vunpack.c.h.b16 %v7073
    %v7411 = vunpack.c.l.b16 %v7074
    %v7412 = vunpack.c.h.b16 %v7074
    %v7413 = vunpack.c.l.b16 %v7075
    %v7414 = vunpack.c.h.b16 %v7075
    %v7415 = vunpack.c.l.b16 %v7076
    %v7416 = vunpack.c.h.b16 %v7076
    %v7417 = vunpack.c.l.b16 %v7077
    %v7418 = vunpack.c.h.b16 %v7077
    %v7419 = vunpack.c.l.b16 %v7078
    %v7420 = vunpack.c.h.b16 %v7078
    %v7421 = vunpack.c.l.b16 %v7079
    %v7422 = vunpack.c.h.b16 %v7079
    %v7423 = vunpack.c.l.b16 %v7080
    %v7424 = vunpack.c.h.b16 %v7080
    %v7425 = vunpack.c.l.b16 %v7081
    %v7426 = vunpack.c.h.b16 %v7081
    %v7427 = vunpack.c.l.b16 %v7082
    %v7428 = vunpack.c.h.b16 %v7082
    %v7429 = vunpack.c.l.b16 %v7083
    %v7430 = vunpack.c.h.b16 %v7083
    %v7431 = vunpack.c.l.b16 %v7084
    %v7432 = vunpack.c.h.b16 %v7084
    %v7433 = vunpack.c.l.b16 %v7085
    %v7434 = vunpack.c.h.b16 %v7085
    %v7435 = vunpack.c.l.b16 %v7086
    %v7436 = vunpack.c.h.b16 %v7086
    %v7437 = vunpack.c.l.b16 %v7087
    %v7438 = vunpack.c.h.b16 %v7087
    %v7439 = vunpack.c.l.b16 %v7088
    %v7440 = vunpack.c.h.b16 %v7088
    %v7441 = vunpack.c.l.b16 %v7089
    %v7442 = vunpack.c.h.b16 %v7089
    %v7443 = vunpack.c.l.b16 %v7090
    %v7444 = vunpack.c.h.b16 %v7090
    %v7445 = vunpack.c.l.b16 %v7091
    %v7446 = vunpack.c.h.b16 %v7091
    %v7447 = vunpack.c.l.b16 %v7092
    %v7448 = vunpack.c.h.b16 %v7092
    %v7449 = vunpack.c.l.b16 %v7093
    %v7450 = vunpack.c.h.b16 %v7093
    %v7451 = vunpack.c.l.b16 %v7094
    %v7452 = vunpack.c.h.b16 %v7094
    %v7453 = vunpack.c.l.b16 %v7095
    %v7454 = vunpack.c.h.b16 %v7095
    %v7455 = vunpack.c.l.b16 %v7096
    %v7456 = vunpack.c.h.b16 %v7096
    %v7457 = vunpack.c.l.b16 %v7097
    %v7458 = vunpack.c.h.b16 %v7097
    %v7459 = vunpack.c.l.b16 %v7098
    %v7460 = vunpack.c.h.b16 %v7098
    %v7461 = vunpack.c.l.b16 %v7099
    %v7462 = vunpack.c.h.b16 %v7099
    %v7463 = vunpack.c.l.b16 %v7100
    %v7464 = vunpack.c.h.b16 %v7100
    %v7465 = vunpack.c.l.b16 %v7101
    %v7466 = vunpack.c.h.b16 %v7101
    %v7467 = vunpack.c.l.b16 %v7102
    %v7468 = vunpack.c.h.b16 %v7102
    %v7469 = vunpack.c.l.b16 %v7103
    %v7470 = vunpack.c.h.b16 %v7103
    %v7471 = vunpack.c.l.b16 %v7104
    %v7472 = vunpack.c.h.b16 %v7104
    %v7473 = vunpack.c.l.b16 %v7105
    %v7474 = vunpack.c.h.b16 %v7105
    %v7475 = vunpack.c.l.b16 %v7106
    %v7476 = vunpack.c.h.b16 %v7106
    %v7477 = vunpack.c.l.b16 %v7107
    %v7478 = vunpack.c.h.b16 %v7107
    %v7479 = vunpack.c.l.b16 %v7108
    %v7480 = vunpack.c.h.b16 %v7108
    %v7481 = vunpack.c.l.b16 %v7109
    %v7482 = vunpack.c.h.b16 %v7109
    %v7483 = vunpack.c.l.b16 %v7110
    %v7484 = vunpack.c.h.b16 %v7110
    %v7485 = vunpack.c.l.b16 %v7111
    %v7486 = vunpack.c.h.b16 %v7111
    %v7487 = vunpack.c.l.b16 %v7112
    %v7488 = vunpack.c.h.b16 %v7112
    %v7489 = vunpack.c.l.b16 %v7113
    %v7490 = vunpack.c.h.b16 %v7113
    %v7491 = vunpack.c.l.b16 %v7114
    %v7492 = vunpack.c.h.b16 %v7114
    %v7493 = vunpack.c.l.b16 %v7115
    %v7494 = vunpack.c.h.b16 %v7115
    %v7495 = vunpack.c.l.b16 %v7116
    %v7496 = vunpack.c.h.b16 %v7116
    %v7497 = vunpack.c.l.b16 %v7117
    %v7498 = vunpack.c.h.b16 %v7117
    %v7499 = vunpack.c.l.b16 %v7118
    %v7500 = vunpack.c.h.b16 %v7118
    %v7501 = vunpack.c.l.b16 %v7119
    %v7502 = vunpack.c.h.b16 %v7119
    %v7503 = vunpack.c.l.b16 %v7120
    %v7504 = vunpack.c.h.b16 %v7120
    %v7505 = vunpack.c.l.b16 %v7121
    %v7506 = vunpack.c.h.b16 %v7121
    %v7507 = vunpack.c.l.b16 %v7122
    %v7508 = vunpack.c.h.b16 %v7122
    %v7509 = vunpack.c.l.b16 %v7123
    %v7510 = vunpack.c.h.b16 %v7123
    %v7511 = vunpack.c.l.b16 %v7124
    %v7512 = vunpack.c.h.b16 %v7124
    %v7513 = vunpack.c.l.b16 %v7125
    %v7514 = vunpack.c.h.b16 %v7125
    %v7515 = vunpack.c.l.b16 %v7126
    %v7516 = vunpack.c.h.b16 %v7126
    %v7517 = vunpack.c.l.b16 %v7127
    %v7518 = vunpack.c.h.b16 %v7127
    %v7519 = vunpack.c.l.b16 %v7128
    %v7520 = vunpack.c.h.b16 %v7128
    %v7521 = vunpack.c.l.b16 %v7129
    %v7522 = vunpack.c.h.b16 %v7129
    %v7523 = vunpack.c.l.b16 %v7130
    %v7524 = vunpack.c.h.b16 %v7130
    %v7525 = vunpack.c.l.b16 %v7131
    %v7526 = vunpack.c.h.b16 %v7131
    %v7527 = vunpack.c.l.b16 %v7132
    %v7528 = vunpack.c.h.b16 %v7132
    %v7529 = vunpack.c.l.b16 %v7133
    %v7530 = vunpack.c.h.b16 %v7133
    %v7531 = vunpack.c.l.b16 %v7134
    %v7532 = vunpack.c.h.b16 %v7134
    %v7533 = vunpack.c.l.b16 %v7135
    %v7534 = vunpack.c.h.b16 %v7135
    %v7535 = vunpack.c.l.b16 %v7136
    %v7536 = vunpack.c.h.b16 %v7136
    %v7537 = vunpack.c.l.b16 %v7137
    %v7538 = vunpack.c.h.b16 %v7137
    %v7539 = vunpack.c.l.b16 %v7138
    %v7540 = vunpack.c.h.b16 %v7138
    %v7541 = vunpack.c.l.b16 %v7139
    %v7542 = vunpack.c.h.b16 %v7139
    %v7543 = vunpack.c.l.b16 %v7140
    %v7544 = vunpack.c.h.b16 %v7140
    %v7545 = vunpack.c.l.b16 %v7141
    %v7546 = vunpack.c.h.b16 %v7141
    %v7547 = vunpack.c.l.b16 %v7142
    %v7548 = vunpack.c.h.b16 %v7142
    %v7549 = vpack.c.b16 %v7297, %v7293
    %v7550 = vpack.c.b16 %v7298, %v7294
    %v7551 = vpack.c.b16 %v7299, %v7295
    %v7552 = vpack.c.b16 %v7300, %v7296
    %v7553 = vpack.c.b16 %v7305, %v7301
    %v7554 = vpack.c.b16 %v7306, %v7302
    %v7555 = vpack.c.b16 %v7307, %v7303
    %v7556 = vpack.c.b16 %v7308, %v7304
    %v7557 = vpack.c.b16 %v7313, %v7309
    %v7558 = vpack.c.b16 %v7314, %v7310
    %v7559 = vpack.c.b16 %v7315, %v7311
    %v7560 = vpack.c.b16 %v7316, %v7312
    %v7561 = vpack.c.b16 %v7321, %v7317
    %v7562 = vpack.c.b16 %v7322, %v7318
    %v7563 = vpack.c.b16 %v7323, %v7319
    %v7564 = vpack.c.b16 %v7324, %v7320
    %v7565 = vpack.c.b16 %v7329, %v7325
    %v7566 = vpack.c.b16 %v7330, %v7326
    %v7567 = vpack.c.b16 %v7331, %v7327
    %v7568 = vpack.c.b16 %v7332, %v7328
    %v7569 = vpack.c.b16 %v7337, %v7333
    %v7570 = vpack.c.b16 %v7338, %v7334
    %v7571 = vpack.c.b16 %v7339, %v7335
    %v7572 = vpack.c.b16 %v7340, %v7336
    %v7573 = vpack.c.b16 %v7345, %v7341
    %v7574 = vpack.c.b16 %v7346, %v7342
    %v7575 = vpack.c.b16 %v7347, %v7343
    %v7576 = vpack.c.b16 %v7348, %v7344
    %v7577 = vpack.c.b16 %v7353, %v7349
    %v7578 = vpack.c.b16 %v7354, %v7350
    %v7579 = vpack.c.b16 %v7355, %v7351
    %v7580 = vpack.c.b16 %v7356, %v7352
    %v7581 = vpack.c.b16 %v7361, %v7357
    %v7582 = vpack.c.b16 %v7362, %v7358
    %v7583 = vpack.c.b16 %v7363, %v7359
    %v7584 = vpack.c.b16 %v7364, %v7360
    %v7585 = vpack.c.b16 %v7369, %v7365
    %v7586 = vpack.c.b16 %v7370, %v7366
    %v7587 = vpack.c.b16 %v7371, %v7367
    %v7588 = vpack.c.b16 %v7372, %v7368
    %v7589 = vpack.c.b16 %v7377, %v7373
    %v7590 = vpack.c.b16 %v7378, %v7374
    %v7591 = vpack.c.b16 %v7379, %v7375
    %v7592 = vpack.c.b16 %v7380, %v7376
    %v7593 = vpack.c.b16 %v7385, %v7381
    %v7594 = vpack.c.b16 %v7386, %v7382
    %v7595 = vpack.c.b16 %v7387, %v7383
    %v7596 = vpack.c.b16 %v7388, %v7384
    %v7597 = vpack.c.b16 %v7393, %v7389
    %v7598 = vpack.c.b16 %v7394, %v7390
    %v7599 = vpack.c.b16 %v7395, %v7391
    %v7600 = vpack.c.b16 %v7396, %v7392
    %v7601 = vpack.c.b16 %v7401, %v7397
    %v7602 = vpack.c.b16 %v7402, %v7398
    %v7603 = vpack.c.b16 %v7403, %v7399
    %v7604 = vpack.c.b16 %v7404, %v7400
    %v7605 = vpack.c.b16 %v7409, %v7405
    %v7606 = vpack.c.b16 %v7410, %v7406
    %v7607 = vpack.c.b16 %v7411, %v7407
    %v7608 = vpack.c.b16 %v7412, %v7408
    %v7609 = vpack.c.b16 %v7417, %v7413
    %v7610 = vpack.c.b16 %v7418, %v7414
    %v7611 = vpack.c.b16 %v7419, %v7415
    %v7612 = vpack.c.b16 %v7420, %v7416
    %v7613 = vpack.c.b16 %v7425, %v7421
    %v7614 = vpack.c.b16 %v7426, %v7422
    %v7615 = vpack.c.b16 %v7427, %v7423
    %v7616 = vpack.c.b16 %v7428, %v7424
    %v7617 = vpack.c.b16 %v7433, %v7429
    %v7618 = vpack.c.b16 %v7434, %v7430
    %v7619 = vpack.c.b16 %v7435, %v7431
    %v7620 = vpack.c.b16 %v7436, %v7432
    %v7621 = vpack.c.b16 %v7441, %v7437
    %v7622 = vpack.c.b16 %v7442, %v7438
    %v7623 = vpack.c.b16 %v7443, %v7439
    %v7624 = vpack.c.b16 %v7444, %v7440
    %v7625 = vpack.c.b16 %v7449, %v7445
    %v7626 = vpack.c.b16 %v7450, %v7446
    %v7627 = vpack.c.b16 %v7451, %v7447
    %v7628 = vpack.c.b16 %v7452, %v7448
    %v7629 = vpack.c.b16 %v7457, %v7453
    %v7630 = vpack.c.b16 %v7458, %v7454
    %v7631 = vpack.c.b16 %v7459, %v7455
    %v7632 = vpack.c.b16 %v7460, %v7456
    %v7633 = vpack.c.b16 %v7465, %v7461
    %v7634 = vpack.c.b16 %v7466, %v7462
    %v7635 = vpack.c.b16 %v7467, %v7463
    %v7636 = vpack.c.b16 %v7468, %v7464
    %v7637 = vpack.c.b16 %v7473, %v7469
    %v7638 = vpack.c.b16 %v7474, %v7470
    %v7639 = vpack.c.b16 %v7475, %v7471
    %v7640 = vpack.c.b16 %v7476, %v7472
    %v7641 = vpack.c.b16 %v7481, %v7477
    %v7642 = vpack.c.b16 %v7482, %v7478
    %v7643 = vpack.c.b16 %v7483, %v7479
    %v7644 = vpack.c.b16 %v7484, %v7480
    %v7645 = vpack.c.b16 %v7489, %v7485
    %v7646 = vpack.c.b16 %v7490, %v7486
    %v7647 = vpack.c.b16 %v7491, %v7487
    %v7648 = vpack.c.b16 %v7492, %v7488
    %v7649 = vpack.c.b16 %v7497, %v7493
    %v7650 = vpack.c.b16 %v7498, %v7494
    %v7651 = vpack.c.b16 %v7499, %v7495
    %v7652 = vpack.c.b16 %v7500, %v7496
    %v7653 = vpack.c.b16 %v7505, %v7501
    %v7654 = vpack.c.b16 %v7506, %v7502
    %v7655 = vpack.c.b16 %v7507, %v7503
    %v7656 = vpack.c.b16 %v7508, %v7504
    %v7657 = vpack.c.b16 %v7513, %v7509
    %v7658 = vpack.c.b16 %v7514, %v7510
    %v7659 = vpack.c.b16 %v7515, %v7511
    %v7660 = vpack.c.b16 %v7516, %v7512
    %v7661 = vpack.c.b16 %v7521, %v7517
    %v7662 = vpack.c.b16 %v7522, %v7518
    %v7663 = vpack.c.b16 %v7523, %v7519
    %v7664 = vpack.c.b16 %v7524, %v7520
    %v7665 = vpack.c.b16 %v7529, %v7525
    %v7666 = vpack.c.b16 %v7530, %v7526
    %v7667 = vpack.c.b16 %v7531, %v7527
    %v7668 = vpack.c.b16 %v7532, %v7528
    %v7669 = vpack.c.b16 %v7537, %v7533
    %v7670 = vpack.c.b16 %v7538, %v7534
    %v7671 = vpack.c.b16 %v7539, %v7535
    %v7672 = vpack.c.b16 %v7540, %v7536
    %v7673 = vpack.c.b16 %v7545, %v7541
    %v7674 = vpack.c.b16 %v7546, %v7542
    %v7675 = vpack.c.b16 %v7547, %v7543
    %v7676 = vpack.c.b16 %v7548, %v7544
    %7805 = vmatprep.subr.bf16.mxu0 %v7550
    %7806 = vmatpush1.bf16.msra.mxu0 %v7549
    %7807 = vmatprep.subr.bf16.mxu0 %v7554
    %7808 = vmatpush1.bf16.msra.mxu0 %v7553
    %7809 = vmatprep.subr.bf16.mxu0 %v7558
    %7810 = vmatpush1.bf16.msra.mxu0 %v7557
    %7811 = vmatprep.subr.bf16.mxu0 %v7562
    %7812 = vmatpush1.bf16.msra.mxu0 %v7561
    %7813 = vmatprep.subr.bf16.mxu0 %v7566
    %7814 = vmatpush1.bf16.msra.mxu0 %v7565
    %7815 = vmatprep.subr.bf16.mxu0 %v7570
    %7816 = vmatpush1.bf16.msra.mxu0 %v7569
    %7817 = vmatprep.subr.bf16.mxu0 %v7574
    %7818 = vmatpush1.bf16.msra.mxu0 %v7573
    %7819 = vmatprep.subr.bf16.mxu0 %v7578
    %7820 = vmatpush1.bf16.msra.mxu0 %v7577
    %7821 = vmatprep.subr.bf16.mxu0 %v7582
    %7822 = vmatpush1.bf16.msra.mxu0 %v7581
    %7823 = vmatprep.subr.bf16.mxu0 %v7586
    %7824 = vmatpush1.bf16.msra.mxu0 %v7585
    %7825 = vmatprep.subr.bf16.mxu0 %v7590
    %7826 = vmatpush1.bf16.msra.mxu0 %v7589
    %7827 = vmatprep.subr.bf16.mxu0 %v7594
    %7828 = vmatpush1.bf16.msra.mxu0 %v7593
    %7829 = vmatprep.subr.bf16.mxu0 %v7598
    %7830 = vmatpush1.bf16.msra.mxu0 %v7597
    %7831 = vmatprep.subr.bf16.mxu0 %v7602
    %7832 = vmatpush1.bf16.msra.mxu0 %v7601
    %7833 = vmatprep.subr.bf16.mxu0 %v7606
    %7834 = vmatpush1.bf16.msra.mxu0 %v7605
    %7835 = vmatprep.subr.bf16.mxu0 %v7610
    %7836 = vmatpush1.bf16.msra.mxu0 %v7609
    %7837 = vmatprep.mubr.bf16.mxu0 %v7012
    %7838 = vmatmul.mubr.bf16.gmra.mrb[0].mxu0 %v7011
    %v7839 = vpop.f32.mrb[0].mxu0
    %v7840 = vadd.f32 %v7148, %v7839
    %v7841 = vpop.f32.mrb[0].mxu0
    %v7842 = vadd.f32 %v7152, %v7841
    %v7843 = vpop.f32.mrb[0].mxu0
    %v7844 = vpop.f32.mrb[0].mxu0
    %7845 = vdwg.mxu0
    %7846 = vmatprep.subr.bf16.mxu0 %v7614
    %7847 = vmatpush1.bf16.msra.mxu0 %v7613
    %7848 = vmatprep.subr.bf16.mxu0 %v7618
    %7849 = vmatpush1.bf16.msra.mxu0 %v7617
    %7850 = vmatprep.subr.bf16.mxu0 %v7622
    %7851 = vmatpush1.bf16.msra.mxu0 %v7621
    %7852 = vmatprep.subr.bf16.mxu0 %v7626
    %7853 = vmatpush1.bf16.msra.mxu0 %v7625
    %7854 = vmatprep.subr.bf16.mxu0 %v7630
    %7855 = vmatpush1.bf16.msra.mxu0 %v7629
    %7856 = vmatprep.subr.bf16.mxu0 %v7634
    %7857 = vmatpush1.bf16.msra.mxu0 %v7633
    %7858 = vmatprep.subr.bf16.mxu0 %v7638
    %7859 = vmatpush1.bf16.msra.mxu0 %v7637
    %7860 = vmatprep.subr.bf16.mxu0 %v7642
    %7861 = vmatpush1.bf16.msra.mxu0 %v7641
    %7862 = vmatprep.subr.bf16.mxu0 %v7646
    %7863 = vmatpush1.bf16.msra.mxu0 %v7645
    %7864 = vmatprep.subr.bf16.mxu0 %v7650
    %7865 = vmatpush1.bf16.msra.mxu0 %v7649
    %7866 = vmatprep.subr.bf16.mxu0 %v7654
    %7867 = vmatpush1.bf16.msra.mxu0 %v7653
    %7868 = vmatprep.subr.bf16.mxu0 %v7658
    %7869 = vmatpush1.bf16.msra.mxu0 %v7657
    %7870 = vmatprep.subr.bf16.mxu0 %v7662
    %7871 = vmatpush1.bf16.msra.mxu0 %v7661
    %7872 = vmatprep.subr.bf16.mxu0 %v7666
    %7873 = vmatpush1.bf16.msra.mxu0 %v7665
    %7874 = vmatprep.subr.bf16.mxu0 %v7670
    %7875 = vmatpush1.bf16.msra.mxu0 %v7669
    %7876 = vmatprep.subr.bf16.mxu0 %v7674
    %7877 = vmatpush1.bf16.msra.mxu0 %v7673
    %7878 = vmatprep.mubr.bf16.mxu0 %v7014
    %7879 = vmatmul.mubr.bf16.gmra.mrb[0].mxu0 %v7013
    %v7880 = vpop.f32.mrb[0].mxu0
    %v7881 = vadd.f32 %v7840, %v7880
    %v7882 = vpop.f32.mrb[0].mxu0
    %v7883 = vadd.f32 %v7842, %v7882
    %v7884 = vpop.f32.mrb[0].mxu0
    %v7885 = vpop.f32.mrb[0].mxu0
    %7886 = vdwg.mxu0
    %7887 = vmatprep.subr.bf16.mxu0 %v7552
    %7888 = vmatpush1.bf16.msra.mxu0 %v7551
    %7889 = vmatprep.subr.bf16.mxu0 %v7556
    %7890 = vmatpush1.bf16.msra.mxu0 %v7555
    %7891 = vmatprep.subr.bf16.mxu0 %v7560
    %7892 = vmatpush1.bf16.msra.mxu0 %v7559
    %7893 = vmatprep.subr.bf16.mxu0 %v7564
    %7894 = vmatpush1.bf16.msra.mxu0 %v7563
    %7895 = vmatprep.subr.bf16.mxu0 %v7568
    %7896 = vmatpush1.bf16.msra.mxu0 %v7567
    %7897 = vmatprep.subr.bf16.mxu0 %v7572
    %7898 = vmatpush1.bf16.msra.mxu0 %v7571
    %7899 = vmatprep.subr.bf16.mxu0 %v7576
    %7900 = vmatpush1.bf16.msra.mxu0 %v7575
    %7901 = vmatprep.subr.bf16.mxu0 %v7580
    %7902 = vmatpush1.bf16.msra.mxu0 %v7579
    %7903 = vmatprep.subr.bf16.mxu0 %v7584
    %7904 = vmatpush1.bf16.msra.mxu0 %v7583
    %7905 = vmatprep.subr.bf16.mxu0 %v7588
    %7906 = vmatpush1.bf16.msra.mxu0 %v7587
    %7907 = vmatprep.subr.bf16.mxu0 %v7592
    %7908 = vmatpush1.bf16.msra.mxu0 %v7591
    %7909 = vmatprep.subr.bf16.mxu0 %v7596
    %7910 = vmatpush1.bf16.msra.mxu0 %v7595
    %7911 = vmatprep.subr.bf16.mxu0 %v7600
    %7912 = vmatpush1.bf16.msra.mxu0 %v7599
    %7913 = vmatprep.subr.bf16.mxu0 %v7604
    %7914 = vmatpush1.bf16.msra.mxu0 %v7603
    %7915 = vmatprep.subr.bf16.mxu0 %v7608
    %7916 = vmatpush1.bf16.msra.mxu0 %v7607
    %7917 = vmatprep.subr.bf16.mxu0 %v7612
    %7918 = vmatpush1.bf16.msra.mxu0 %v7611
    %7919 = vmatprep.mubr.bf16.mxu0 %v7012
    %7920 = vmatmul.mubr.bf16.gmra.mrb[0].mxu0 %v7011
    %v7921 = vpop.f32.mrb[0].mxu0
    %v7922 = vadd.f32 %v7156, %v7921
    %v7923 = vpop.f32.mrb[0].mxu0
    %v7924 = vadd.f32 %v7160, %v7923
    %v7925 = vpop.f32.mrb[0].mxu0
    %v7926 = vpop.f32.mrb[0].mxu0
    %7927 = vdwg.mxu0
    %7928 = vmatprep.subr.bf16.mxu0 %v7616
    %7929 = vmatpush1.bf16.msra.mxu0 %v7615
    %7930 = vmatprep.subr.bf16.mxu0 %v7620
    %7931 = vmatpush1.bf16.msra.mxu0 %v7619
    %7932 = vmatprep.subr.bf16.mxu0 %v7624
    %7933 = vmatpush1.bf16.msra.mxu0 %v7623
    %7934 = vmatprep.subr.bf16.mxu0 %v7628
    %7935 = vmatpush1.bf16.msra.mxu0 %v7627
    %7936 = vmatprep.subr.bf16.mxu0 %v7632
    %7937 = vmatpush1.bf16.msra.mxu0 %v7631
    %7938 = vmatprep.subr.bf16.mxu0 %v7636
    %7939 = vmatpush1.bf16.msra.mxu0 %v7635
    %7940 = vmatprep.subr.bf16.mxu0 %v7640
    %7941 = vmatpush1.bf16.msra.mxu0 %v7639
    %7942 = vmatprep.subr.bf16.mxu0 %v7644
    %7943 = vmatpush1.bf16.msra.mxu0 %v7643
    %7944 = vmatprep.subr.bf16.mxu0 %v7648
    %7945 = vmatpush1.bf16.msra.mxu0 %v7647
    %7946 = vmatprep.subr.bf16.mxu0 %v7652
    %7947 = vmatpush1.bf16.msra.mxu0 %v7651
    %7948 = vmatprep.subr.bf16.mxu0 %v7656
    %7949 = vmatpush1.bf16.msra.mxu0 %v7655
    %7950 = vmatprep.subr.bf16.mxu0 %v7660
    %7951 = vmatpush1.bf16.msra.mxu0 %v7659
    %7952 = vmatprep.subr.bf16.mxu0 %v7664
    %7953 = vmatpush1.bf16.msra.mxu0 %v7663
    %7954 = vmatprep.subr.bf16.mxu0 %v7668
    %7955 = vmatpush1.bf16.msra.mxu0 %v7667
    %7956 = vmatprep.subr.bf16.mxu0 %v7672
    %7957 = vmatpush1.bf16.msra.mxu0 %v7671
    %7958 = vmatprep.subr.bf16.mxu0 %v7676
    %7959 = vmatpush1.bf16.msra.mxu0 %v7675
    %7960 = vmatprep.mubr.bf16.mxu0 %v7014
    %7961 = vmatmul.mubr.bf16.gmra.mrb[0].mxu0 %v7013
    %v7962 = vpop.f32.mrb[0].mxu0
    %v7963 = vadd.f32 %v7922, %v7962
    %v7964 = vpop.f32.mrb[0].mxu0
    %v7965 = vadd.f32 %v7924, %v7964
    %v7966 = vpop.f32.mrb[0].mxu0
    %v7967 = vpop.f32.mrb[0].mxu0
    %7968 = vdwg.mxu0
    %v7969 = vadd.f32 %v7881, %v6964
    %v7970 = vadd.f32 %v7883, %v6966
    %v7971 = vadd.f32 %v7963, %v7005
    %v7972 = vadd.f32 %v7965, %v7007
    %v7973 = vmax.f32 %v7969, 0.0
    %v7974 = vmax.f32 %v7970, 0.0
    %v7975 = vmax.f32 %v7971, 0.0
    %v7976 = vmax.f32 %v7972, 0.0
    %v7977 = vpack.c.bf16 %v7973, %v7973
    %v7978 = vpack.c.bf16 %v7974, %v7974
    %v7979 = vpack.c.bf16 %v7975, %v7975
    %v7980 = vpack.c.bf16 %v7976, %v7976
    %v7981 = vld [vmem:[#allocation97] sm:$0xff]
    %v7982 = vld [vmem:[#allocation97 + $0x8] sm:$0xff]
    %v7983 = vld [vmem:[#allocation97 + $0x10] sm:$0xff]
    %v7984 = vld [vmem:[#allocation97 + $0x18] sm:$0xff]
    %v7985 = vld [vmem:[#allocation97 + $0x20] sm:$0xff]
    %v7986 = vld [vmem:[#allocation97 + $0x28] sm:$0xff]
    %v7987 = vld [vmem:[#allocation97 + $0x30] sm:$0xff]
    %v7988 = vld [vmem:[#allocation97 + $0x38] sm:$0xff]
    %v7989 = vld [vmem:[#allocation97 + $0x40] sm:$0xff]
    %v7990 = vld [vmem:[#allocation97 + $0x48] sm:$0xff]
    %v7991 = vld [vmem:[#allocation97 + $0x50] sm:$0xff]
    %v7992 = vld [vmem:[#allocation97 + $0x58] sm:$0xff]
    %v7993 = vld [vmem:[#allocation97 + $0x60] sm:$0xff]
    %v7994 = vld [vmem:[#allocation97 + $0x68] sm:$0xff]
    %v7995 = vld [vmem:[#allocation97 + $0x70] sm:$0xff]
    %v7996 = vld [vmem:[#allocation97 + $0x78] sm:$0xff]
    %v7997 = vld [vmem:[#allocation97 + $0x80] sm:$0xff]
    %v7998 = vld [vmem:[#allocation97 + $0x88] sm:$0xff]
    %v7999 = vld [vmem:[#allocation97 + $0x90] sm:$0xff]
    %v8000 = vld [vmem:[#allocation97 + $0x98] sm:$0xff]
    %v8001 = vld [vmem:[#allocation97 + $0xa0] sm:$0xff]
    %v8002 = vld [vmem:[#allocation97 + $0xa8] sm:$0xff]
    %v8003 = vld [vmem:[#allocation97 + $0xb0] sm:$0xff]
    %v8004 = vld [vmem:[#allocation97 + $0xb8] sm:$0xff]
    %v8005 = vld [vmem:[#allocation97 + $0xc0] sm:$0xff]
    %v8006 = vld [vmem:[#allocation97 + $0xc8] sm:$0xff]
    %v8007 = vld [vmem:[#allocation97 + $0xd0] sm:$0xff]
    %v8008 = vld [vmem:[#allocation97 + $0xd8] sm:$0xff]
    %v8009 = vld [vmem:[#allocation97 + $0xe0] sm:$0xff]
    %v8010 = vld [vmem:[#allocation97 + $0xe8] sm:$0xff]
    %v8011 = vld [vmem:[#allocation97 + $0xf0] sm:$0xff]
    %v8012 = vld [vmem:[#allocation97 + $0xf8] sm:$0xff]
    %v8013 = vld [vmem:[#allocation97 + $0x100] sm:$0xff]
    %v8014 = vld [vmem:[#allocation97 + $0x108] sm:$0xff]
    %v8015 = vld [vmem:[#allocation97 + $0x110] sm:$0xff]
    %v8016 = vld [vmem:[#allocation97 + $0x118] sm:$0xff]
    %v8017 = vld [vmem:[#allocation97 + $0x120] sm:$0xff]
    %v8018 = vld [vmem:[#allocation97 + $0x128] sm:$0xff]
    %v8019 = vld [vmem:[#allocation97 + $0x130] sm:$0xff]
    %v8020 = vld [vmem:[#allocation97 + $0x138] sm:$0xff]
    %v8021 = vld [vmem:[#allocation97 + $0x140] sm:$0xff]
    %v8022 = vld [vmem:[#allocation97 + $0x148] sm:$0xff]
    %v8023 = vld [vmem:[#allocation97 + $0x150] sm:$0xff]
    %v8024 = vld [vmem:[#allocation97 + $0x158] sm:$0xff]
    %v8025 = vld [vmem:[#allocation97 + $0x160] sm:$0xff]
    %v8026 = vld [vmem:[#allocation97 + $0x168] sm:$0xff]
    %v8027 = vld [vmem:[#allocation97 + $0x170] sm:$0xff]
    %v8028 = vld [vmem:[#allocation97 + $0x178] sm:$0xff]
    %v8029 = vld [vmem:[#allocation97 + $0x180] sm:$0xff]
    %v8030 = vld [vmem:[#allocation97 + $0x188] sm:$0xff]
    %v8031 = vld [vmem:[#allocation97 + $0x190] sm:$0xff]
    %v8032 = vld [vmem:[#allocation97 + $0x198] sm:$0xff]
    %v8033 = vld [vmem:[#allocation97 + $0x1a0] sm:$0xff]
    %v8034 = vld [vmem:[#allocation97 + $0x1a8] sm:$0xff]
    %v8035 = vld [vmem:[#allocation97 + $0x1b0] sm:$0xff]
    %v8036 = vld [vmem:[#allocation97 + $0x1b8] sm:$0xff]
    %v8037 = vld [vmem:[#allocation97 + $0x1c0] sm:$0xff]
    %v8038 = vld [vmem:[#allocation97 + $0x1c8] sm:$0xff]
    %v8039 = vld [vmem:[#allocation97 + $0x1d0] sm:$0xff]
    %v8040 = vld [vmem:[#allocation97 + $0x1d8] sm:$0xff]
    %v8041 = vld [vmem:[#allocation97 + $0x1e0] sm:$0xff]
    %v8042 = vld [vmem:[#allocation97 + $0x1e8] sm:$0xff]
    %v8043 = vld [vmem:[#allocation97 + $0x1f0] sm:$0xff]
    %v8044 = vld [vmem:[#allocation97 + $0x1f8] sm:$0xff]
    %v8045 = vld [vmem:[#allocation97 + $0x200] sm:$0xff]
    %v8046 = vld [vmem:[#allocation97 + $0x208] sm:$0xff]
    %v8047 = vld [vmem:[#allocation97 + $0x210] sm:$0xff]
    %v8048 = vld [vmem:[#allocation97 + $0x218] sm:$0xff]
    %v8049 = vld [vmem:[#allocation97 + $0x220] sm:$0xff]
    %v8050 = vld [vmem:[#allocation97 + $0x228] sm:$0xff]
    %v8051 = vld [vmem:[#allocation97 + $0x230] sm:$0xff]
    %v8052 = vld [vmem:[#allocation97 + $0x238] sm:$0xff]
    %v8053 = vld [vmem:[#allocation97 + $0x240] sm:$0xff]
    %v8054 = vld [vmem:[#allocation97 + $0x248] sm:$0xff]
    %v8055 = vld [vmem:[#allocation97 + $0x250] sm:$0xff]
    %v8056 = vld [vmem:[#allocation97 + $0x258] sm:$0xff]
    %v8057 = vld [vmem:[#allocation97 + $0x260] sm:$0xff]
    %v8058 = vld [vmem:[#allocation97 + $0x268] sm:$0xff]
    %v8059 = vld [vmem:[#allocation97 + $0x270] sm:$0xff]
    %v8060 = vld [vmem:[#allocation97 + $0x278] sm:$0xff]
    %v8061 = vld [vmem:[#allocation97 + $0x280] sm:$0xff]
    %v8062 = vld [vmem:[#allocation97 + $0x288] sm:$0xff]
    %v8063 = vld [vmem:[#allocation97 + $0x290] sm:$0xff]
    %v8064 = vld [vmem:[#allocation97 + $0x298] sm:$0xff]
    %v8065 = vld [vmem:[#allocation97 + $0x2a0] sm:$0xff]
    %v8066 = vld [vmem:[#allocation97 + $0x2a8] sm:$0xff]
    %v8067 = vld [vmem:[#allocation97 + $0x2b0] sm:$0xff]
    %v8068 = vld [vmem:[#allocation97 + $0x2b8] sm:$0xff]
    %v8069 = vld [vmem:[#allocation97 + $0x2c0] sm:$0xff]
    %v8070 = vld [vmem:[#allocation97 + $0x2c8] sm:$0xff]
    %v8071 = vld [vmem:[#allocation97 + $0x2d0] sm:$0xff]
    %v8072 = vld [vmem:[#allocation97 + $0x2d8] sm:$0xff]
    %v8073 = vld [vmem:[#allocation97 + $0x2e0] sm:$0xff]
    %v8074 = vld [vmem:[#allocation97 + $0x2e8] sm:$0xff]
    %v8075 = vld [vmem:[#allocation97 + $0x2f0] sm:$0xff]
    %v8076 = vld [vmem:[#allocation97 + $0x2f8] sm:$0xff]
    %v8077 = vld [vmem:[#allocation97 + $0x300] sm:$0xff]
    %v8078 = vld [vmem:[#allocation97 + $0x308] sm:$0xff]
    %v8079 = vld [vmem:[#allocation97 + $0x310] sm:$0xff]
    %v8080 = vld [vmem:[#allocation97 + $0x318] sm:$0xff]
    %v8081 = vld [vmem:[#allocation97 + $0x320] sm:$0xff]
    %v8082 = vld [vmem:[#allocation97 + $0x328] sm:$0xff]
    %v8083 = vld [vmem:[#allocation97 + $0x330] sm:$0xff]
    %v8084 = vld [vmem:[#allocation97 + $0x338] sm:$0xff]
    %v8085 = vld [vmem:[#allocation97 + $0x340] sm:$0xff]
    %v8086 = vld [vmem:[#allocation97 + $0x348] sm:$0xff]
    %v8087 = vld [vmem:[#allocation97 + $0x350] sm:$0xff]
    %v8088 = vld [vmem:[#allocation97 + $0x358] sm:$0xff]
    %v8089 = vld [vmem:[#allocation97 + $0x360] sm:$0xff]
    %v8090 = vld [vmem:[#allocation97 + $0x368] sm:$0xff]
    %v8091 = vld [vmem:[#allocation97 + $0x370] sm:$0xff]
    %v8092 = vld [vmem:[#allocation97 + $0x378] sm:$0xff]
    %v8093 = vld [vmem:[#allocation97 + $0x380] sm:$0xff]
    %v8094 = vld [vmem:[#allocation97 + $0x388] sm:$0xff]
    %v8095 = vld [vmem:[#allocation97 + $0x390] sm:$0xff]
    %v8096 = vld [vmem:[#allocation97 + $0x398] sm:$0xff]
    %v8097 = vld [vmem:[#allocation97 + $0x3a0] sm:$0xff]
    %v8098 = vld [vmem:[#allocation97 + $0x3a8] sm:$0xff]
    %v8099 = vld [vmem:[#allocation97 + $0x3b0] sm:$0xff]
    %v8100 = vld [vmem:[#allocation97 + $0x3b8] sm:$0xff]
    %v8101 = vld [vmem:[#allocation97 + $0x3c0] sm:$0xff]
    %v8102 = vld [vmem:[#allocation97 + $0x3c8] sm:$0xff]
    %v8103 = vld [vmem:[#allocation97 + $0x3d0] sm:$0xff]
    %v8104 = vld [vmem:[#allocation97 + $0x3d8] sm:$0xff]
    %v8105 = vld [vmem:[#allocation97 + $0x3e0] sm:$0xff]
    %v8106 = vld [vmem:[#allocation97 + $0x3e8] sm:$0xff]
    %v8107 = vld [vmem:[#allocation97 + $0x3f0] sm:$0xff]
    %v8108 = vld [vmem:[#allocation97 + $0x3f8] sm:$0xff]
    %v8109 = vld [vmem:[%s131] sm:$0xf]
    %v8111 = vlaneseq
    %v8112 = vshrl.u32 %v8111, 7
    %v8113 = vsub.s32 0, %v8112
    %v8114 = vrot.slane %v8109, %v8113
    %v8115 = vlaneseq
    %v8116 = vshrl.u32 %v8115, 7
    %v8117 = vsub.s32 1, %v8116
    %v8118 = vrot.slane %v8109, %v8117
    %v8119 = vlaneseq
    %v8120 = vshrl.u32 %v8119, 7
    %v8121 = vsub.s32 2, %v8120
    %v8122 = vrot.slane %v8109, %v8121
    %v8123 = vlaneseq
    %v8124 = vshrl.u32 %v8123, 7
    %v8125 = vsub.s32 3, %v8124
    %v8126 = vrot.slane %v8109, %v8125
    %v8259 = vunpack.c.l.b16 %v7981
    %v8260 = vunpack.c.h.b16 %v7981
    %v8261 = vunpack.c.l.b16 %v7982
    %v8262 = vunpack.c.h.b16 %v7982
    %v8263 = vunpack.c.l.b16 %v7983
    %v8264 = vunpack.c.h.b16 %v7983
    %v8265 = vunpack.c.l.b16 %v7984
    %v8266 = vunpack.c.h.b16 %v7984
    %v8267 = vunpack.c.l.b16 %v7985
    %v8268 = vunpack.c.h.b16 %v7985
    %v8269 = vunpack.c.l.b16 %v7986
    %v8270 = vunpack.c.h.b16 %v7986
    %v8271 = vunpack.c.l.b16 %v7987
    %v8272 = vunpack.c.h.b16 %v7987
    %v8273 = vunpack.c.l.b16 %v7988
    %v8274 = vunpack.c.h.b16 %v7988
    %v8275 = vunpack.c.l.b16 %v7989
    %v8276 = vunpack.c.h.b16 %v7989
    %v8277 = vunpack.c.l.b16 %v7990
    %v8278 = vunpack.c.h.b16 %v7990
    %v8279 = vunpack.c.l.b16 %v7991
    %v8280 = vunpack.c.h.b16 %v7991
    %v8281 = vunpack.c.l.b16 %v7992
    %v8282 = vunpack.c.h.b16 %v7992
    %v8283 = vunpack.c.l.b16 %v7993
    %v8284 = vunpack.c.h.b16 %v7993
    %v8285 = vunpack.c.l.b16 %v7994
    %v8286 = vunpack.c.h.b16 %v7994
    %v8287 = vunpack.c.l.b16 %v7995
    %v8288 = vunpack.c.h.b16 %v7995
    %v8289 = vunpack.c.l.b16 %v7996
    %v8290 = vunpack.c.h.b16 %v7996
    %v8291 = vunpack.c.l.b16 %v7997
    %v8292 = vunpack.c.h.b16 %v7997
    %v8293 = vunpack.c.l.b16 %v7998
    %v8294 = vunpack.c.h.b16 %v7998
    %v8295 = vunpack.c.l.b16 %v7999
    %v8296 = vunpack.c.h.b16 %v7999
    %v8297 = vunpack.c.l.b16 %v8000
    %v8298 = vunpack.c.h.b16 %v8000
    %v8299 = vunpack.c.l.b16 %v8001
    %v8300 = vunpack.c.h.b16 %v8001
    %v8301 = vunpack.c.l.b16 %v8002
    %v8302 = vunpack.c.h.b16 %v8002
    %v8303 = vunpack.c.l.b16 %v8003
    %v8304 = vunpack.c.h.b16 %v8003
    %v8305 = vunpack.c.l.b16 %v8004
    %v8306 = vunpack.c.h.b16 %v8004
    %v8307 = vunpack.c.l.b16 %v8005
    %v8308 = vunpack.c.h.b16 %v8005
    %v8309 = vunpack.c.l.b16 %v8006
    %v8310 = vunpack.c.h.b16 %v8006
    %v8311 = vunpack.c.l.b16 %v8007
    %v8312 = vunpack.c.h.b16 %v8007
    %v8313 = vunpack.c.l.b16 %v8008
    %v8314 = vunpack.c.h.b16 %v8008
    %v8315 = vunpack.c.l.b16 %v8009
    %v8316 = vunpack.c.h.b16 %v8009
    %v8317 = vunpack.c.l.b16 %v8010
    %v8318 = vunpack.c.h.b16 %v8010
    %v8319 = vunpack.c.l.b16 %v8011
    %v8320 = vunpack.c.h.b16 %v8011
    %v8321 = vunpack.c.l.b16 %v8012
    %v8322 = vunpack.c.h.b16 %v8012
    %v8323 = vunpack.c.l.b16 %v8013
    %v8324 = vunpack.c.h.b16 %v8013
    %v8325 = vunpack.c.l.b16 %v8014
    %v8326 = vunpack.c.h.b16 %v8014
    %v8327 = vunpack.c.l.b16 %v8015
    %v8328 = vunpack.c.h.b16 %v8015
    %v8329 = vunpack.c.l.b16 %v8016
    %v8330 = vunpack.c.h.b16 %v8016
    %v8331 = vunpack.c.l.b16 %v8017
    %v8332 = vunpack.c.h.b16 %v8017
    %v8333 = vunpack.c.l.b16 %v8018
    %v8334 = vunpack.c.h.b16 %v8018
    %v8335 = vunpack.c.l.b16 %v8019
    %v8336 = vunpack.c.h.b16 %v8019
    %v8337 = vunpack.c.l.b16 %v8020
    %v8338 = vunpack.c.h.b16 %v8020
    %v8339 = vunpack.c.l.b16 %v8021
    %v8340 = vunpack.c.h.b16 %v8021
    %v8341 = vunpack.c.l.b16 %v8022
    %v8342 = vunpack.c.h.b16 %v8022
    %v8343 = vunpack.c.l.b16 %v8023
    %v8344 = vunpack.c.h.b16 %v8023
    %v8345 = vunpack.c.l.b16 %v8024
    %v8346 = vunpack.c.h.b16 %v8024
    %v8347 = vunpack.c.l.b16 %v8025
    %v8348 = vunpack.c.h.b16 %v8025
    %v8349 = vunpack.c.l.b16 %v8026
    %v8350 = vunpack.c.h.b16 %v8026
    %v8351 = vunpack.c.l.b16 %v8027
    %v8352 = vunpack.c.h.b16 %v8027
    %v8353 = vunpack.c.l.b16 %v8028
    %v8354 = vunpack.c.h.b16 %v8028
    %v8355 = vunpack.c.l.b16 %v8029
    %v8356 = vunpack.c.h.b16 %v8029
    %v8357 = vunpack.c.l.b16 %v8030
    %v8358 = vunpack.c.h.b16 %v8030
    %v8359 = vunpack.c.l.b16 %v8031
    %v8360 = vunpack.c.h.b16 %v8031
    %v8361 = vunpack.c.l.b16 %v8032
    %v8362 = vunpack.c.h.b16 %v8032
    %v8363 = vunpack.c.l.b16 %v8033
    %v8364 = vunpack.c.h.b16 %v8033
    %v8365 = vunpack.c.l.b16 %v8034
    %v8366 = vunpack.c.h.b16 %v8034
    %v8367 = vunpack.c.l.b16 %v8035
    %v8368 = vunpack.c.h.b16 %v8035
    %v8369 = vunpack.c.l.b16 %v8036
    %v8370 = vunpack.c.h.b16 %v8036
    %v8371 = vunpack.c.l.b16 %v8037
    %v8372 = vunpack.c.h.b16 %v8037
    %v8373 = vunpack.c.l.b16 %v8038
    %v8374 = vunpack.c.h.b16 %v8038
    %v8375 = vunpack.c.l.b16 %v8039
    %v8376 = vunpack.c.h.b16 %v8039
    %v8377 = vunpack.c.l.b16 %v8040
    %v8378 = vunpack.c.h.b16 %v8040
    %v8379 = vunpack.c.l.b16 %v8041
    %v8380 = vunpack.c.h.b16 %v8041
    %v8381 = vunpack.c.l.b16 %v8042
    %v8382 = vunpack.c.h.b16 %v8042
    %v8383 = vunpack.c.l.b16 %v8043
    %v8384 = vunpack.c.h.b16 %v8043
    %v8385 = vunpack.c.l.b16 %v8044
    %v8386 = vunpack.c.h.b16 %v8044
    %v8387 = vunpack.c.l.b16 %v8045
    %v8388 = vunpack.c.h.b16 %v8045
    %v8389 = vunpack.c.l.b16 %v8046
    %v8390 = vunpack.c.h.b16 %v8046
    %v8391 = vunpack.c.l.b16 %v8047
    %v8392 = vunpack.c.h.b16 %v8047
    %v8393 = vunpack.c.l.b16 %v8048
    %v8394 = vunpack.c.h.b16 %v8048
    %v8395 = vunpack.c.l.b16 %v8049
    %v8396 = vunpack.c.h.b16 %v8049
    %v8397 = vunpack.c.l.b16 %v8050
    %v8398 = vunpack.c.h.b16 %v8050
    %v8399 = vunpack.c.l.b16 %v8051
    %v8400 = vunpack.c.h.b16 %v8051
    %v8401 = vunpack.c.l.b16 %v8052
    %v8402 = vunpack.c.h.b16 %v8052
    %v8403 = vunpack.c.l.b16 %v8053
    %v8404 = vunpack.c.h.b16 %v8053
    %v8405 = vunpack.c.l.b16 %v8054
    %v8406 = vunpack.c.h.b16 %v8054
    %v8407 = vunpack.c.l.b16 %v8055
    %v8408 = vunpack.c.h.b16 %v8055
    %v8409 = vunpack.c.l.b16 %v8056
    %v8410 = vunpack.c.h.b16 %v8056
    %v8411 = vunpack.c.l.b16 %v8057
    %v8412 = vunpack.c.h.b16 %v8057
    %v8413 = vunpack.c.l.b16 %v8058
    %v8414 = vunpack.c.h.b16 %v8058
    %v8415 = vunpack.c.l.b16 %v8059
    %v8416 = vunpack.c.h.b16 %v8059
    %v8417 = vunpack.c.l.b16 %v8060
    %v8418 = vunpack.c.h.b16 %v8060
    %v8419 = vunpack.c.l.b16 %v8061
    %v8420 = vunpack.c.h.b16 %v8061
    %v8421 = vunpack.c.l.b16 %v8062
    %v8422 = vunpack.c.h.b16 %v8062
    %v8423 = vunpack.c.l.b16 %v8063
    %v8424 = vunpack.c.h.b16 %v8063
    %v8425 = vunpack.c.l.b16 %v8064
    %v8426 = vunpack.c.h.b16 %v8064
    %v8427 = vunpack.c.l.b16 %v8065
    %v8428 = vunpack.c.h.b16 %v8065
    %v8429 = vunpack.c.l.b16 %v8066
    %v8430 = vunpack.c.h.b16 %v8066
    %v8431 = vunpack.c.l.b16 %v8067
    %v8432 = vunpack.c.h.b16 %v8067
    %v8433 = vunpack.c.l.b16 %v8068
    %v8434 = vunpack.c.h.b16 %v8068
    %v8435 = vunpack.c.l.b16 %v8069
    %v8436 = vunpack.c.h.b16 %v8069
    %v8437 = vunpack.c.l.b16 %v8070
    %v8438 = vunpack.c.h.b16 %v8070
    %v8439 = vunpack.c.l.b16 %v8071
    %v8440 = vunpack.c.h.b16 %v8071
    %v8441 = vunpack.c.l.b16 %v8072
    %v8442 = vunpack.c.h.b16 %v8072
    %v8443 = vunpack.c.l.b16 %v8073
    %v8444 = vunpack.c.h.b16 %v8073
    %v8445 = vunpack.c.l.b16 %v8074
    %v8446 = vunpack.c.h.b16 %v8074
    %v8447 = vunpack.c.l.b16 %v8075
    %v8448 = vunpack.c.h.b16 %v8075
    %v8449 = vunpack.c.l.b16 %v8076
    %v8450 = vunpack.c.h.b16 %v8076
    %v8451 = vunpack.c.l.b16 %v8077
    %v8452 = vunpack.c.h.b16 %v8077
    %v8453 = vunpack.c.l.b16 %v8078
    %v8454 = vunpack.c.h.b16 %v8078
    %v8455 = vunpack.c.l.b16 %v8079
    %v8456 = vunpack.c.h.b16 %v8079
    %v8457 = vunpack.c.l.b16 %v8080
    %v8458 = vunpack.c.h.b16 %v8080
    %v8459 = vunpack.c.l.b16 %v8081
    %v8460 = vunpack.c.h.b16 %v8081
    %v8461 = vunpack.c.l.b16 %v8082
    %v8462 = vunpack.c.h.b16 %v8082
    %v8463 = vunpack.c.l.b16 %v8083
    %v8464 = vunpack.c.h.b16 %v8083
    %v8465 = vunpack.c.l.b16 %v8084
    %v8466 = vunpack.c.h.b16 %v8084
    %v8467 = vunpack.c.l.b16 %v8085
    %v8468 = vunpack.c.h.b16 %v8085
    %v8469 = vunpack.c.l.b16 %v8086
    %v8470 = vunpack.c.h.b16 %v8086
    %v8471 = vunpack.c.l.b16 %v8087
    %v8472 = vunpack.c.h.b16 %v8087
    %v8473 = vunpack.c.l.b16 %v8088
    %v8474 = vunpack.c.h.b16 %v8088
    %v8475 = vunpack.c.l.b16 %v8089
    %v8476 = vunpack.c.h.b16 %v8089
    %v8477 = vunpack.c.l.b16 %v8090
    %v8478 = vunpack.c.h.b16 %v8090
    %v8479 = vunpack.c.l.b16 %v8091
    %v8480 = vunpack.c.h.b16 %v8091
    %v8481 = vunpack.c.l.b16 %v8092
    %v8482 = vunpack.c.h.b16 %v8092
    %v8483 = vunpack.c.l.b16 %v8093
    %v8484 = vunpack.c.h.b16 %v8093
    %v8485 = vunpack.c.l.b16 %v8094
    %v8486 = vunpack.c.h.b16 %v8094
    %v8487 = vunpack.c.l.b16 %v8095
    %v8488 = vunpack.c.h.b16 %v8095
    %v8489 = vunpack.c.l.b16 %v8096
    %v8490 = vunpack.c.h.b16 %v8096
    %v8491 = vunpack.c.l.b16 %v8097
    %v8492 = vunpack.c.h.b16 %v8097
    %v8493 = vunpack.c.l.b16 %v8098
    %v8494 = vunpack.c.h.b16 %v8098
    %v8495 = vunpack.c.l.b16 %v8099
    %v8496 = vunpack.c.h.b16 %v8099
    %v8497 = vunpack.c.l.b16 %v8100
    %v8498 = vunpack.c.h.b16 %v8100
    %v8499 = vunpack.c.l.b16 %v8101
    %v8500 = vunpack.c.h.b16 %v8101
    %v8501 = vunpack.c.l.b16 %v8102
    %v8502 = vunpack.c.h.b16 %v8102
    %v8503 = vunpack.c.l.b16 %v8103
    %v8504 = vunpack.c.h.b16 %v8103
    %v8505 = vunpack.c.l.b16 %v8104
    %v8506 = vunpack.c.h.b16 %v8104
    %v8507 = vunpack.c.l.b16 %v8105
    %v8508 = vunpack.c.h.b16 %v8105
    %v8509 = vunpack.c.l.b16 %v8106
    %v8510 = vunpack.c.h.b16 %v8106
    %v8511 = vunpack.c.l.b16 %v8107
    %v8512 = vunpack.c.h.b16 %v8107
    %v8513 = vunpack.c.l.b16 %v8108
    %v8514 = vunpack.c.h.b16 %v8108
    %v8515 = vpack.c.b16 %v8263, %v8259
    %v8516 = vpack.c.b16 %v8264, %v8260
    %v8517 = vpack.c.b16 %v8265, %v8261
    %v8518 = vpack.c.b16 %v8266, %v8262
    %v8519 = vpack.c.b16 %v8271, %v8267
    %v8520 = vpack.c.b16 %v8272, %v8268
    %v8521 = vpack.c.b16 %v8273, %v8269
    %v8522 = vpack.c.b16 %v8274, %v8270
    %v8523 = vpack.c.b16 %v8279, %v8275
    %v8524 = vpack.c.b16 %v8280, %v8276
    %v8525 = vpack.c.b16 %v8281, %v8277
    %v8526 = vpack.c.b16 %v8282, %v8278
    %v8527 = vpack.c.b16 %v8287, %v8283
    %v8528 = vpack.c.b16 %v8288, %v8284
    %v8529 = vpack.c.b16 %v8289, %v8285
    %v8530 = vpack.c.b16 %v8290, %v8286
    %v8531 = vpack.c.b16 %v8295, %v8291
    %v8532 = vpack.c.b16 %v8296, %v8292
    %v8533 = vpack.c.b16 %v8297, %v8293
    %v8534 = vpack.c.b16 %v8298, %v8294
    %v8535 = vpack.c.b16 %v8303, %v8299
    %v8536 = vpack.c.b16 %v8304, %v8300
    %v8537 = vpack.c.b16 %v8305, %v8301
    %v8538 = vpack.c.b16 %v8306, %v8302
    %v8539 = vpack.c.b16 %v8311, %v8307
    %v8540 = vpack.c.b16 %v8312, %v8308
    %v8541 = vpack.c.b16 %v8313, %v8309
    %v8542 = vpack.c.b16 %v8314, %v8310
    %v8543 = vpack.c.b16 %v8319, %v8315
    %v8544 = vpack.c.b16 %v8320, %v8316
    %v8545 = vpack.c.b16 %v8321, %v8317
    %v8546 = vpack.c.b16 %v8322, %v8318
    %v8547 = vpack.c.b16 %v8327, %v8323
    %v8548 = vpack.c.b16 %v8328, %v8324
    %v8549 = vpack.c.b16 %v8329, %v8325
    %v8550 = vpack.c.b16 %v8330, %v8326
    %v8551 = vpack.c.b16 %v8335, %v8331
    %v8552 = vpack.c.b16 %v8336, %v8332
    %v8553 = vpack.c.b16 %v8337, %v8333
    %v8554 = vpack.c.b16 %v8338, %v8334
    %v8555 = vpack.c.b16 %v8343, %v8339
    %v8556 = vpack.c.b16 %v8344, %v8340
    %v8557 = vpack.c.b16 %v8345, %v8341
    %v8558 = vpack.c.b16 %v8346, %v8342
    %v8559 = vpack.c.b16 %v8351, %v8347
    %v8560 = vpack.c.b16 %v8352, %v8348
    %v8561 = vpack.c.b16 %v8353, %v8349
    %v8562 = vpack.c.b16 %v8354, %v8350
    %v8563 = vpack.c.b16 %v8359, %v8355
    %v8564 = vpack.c.b16 %v8360, %v8356
    %v8565 = vpack.c.b16 %v8361, %v8357
    %v8566 = vpack.c.b16 %v8362, %v8358
    %v8567 = vpack.c.b16 %v8367, %v8363
    %v8568 = vpack.c.b16 %v8368, %v8364
    %v8569 = vpack.c.b16 %v8369, %v8365
    %v8570 = vpack.c.b16 %v8370, %v8366
    %v8571 = vpack.c.b16 %v8375, %v8371
    %v8572 = vpack.c.b16 %v8376, %v8372
    %v8573 = vpack.c.b16 %v8377, %v8373
    %v8574 = vpack.c.b16 %v8378, %v8374
    %v8575 = vpack.c.b16 %v8383, %v8379
    %v8576 = vpack.c.b16 %v8384, %v8380
    %v8577 = vpack.c.b16 %v8385, %v8381
    %v8578 = vpack.c.b16 %v8386, %v8382
    %v8579 = vpack.c.b16 %v8391, %v8387
    %v8580 = vpack.c.b16 %v8392, %v8388
    %v8581 = vpack.c.b16 %v8393, %v8389
    %v8582 = vpack.c.b16 %v8394, %v8390
    %v8583 = vpack.c.b16 %v8399, %v8395
    %v8584 = vpack.c.b16 %v8400, %v8396
    %v8585 = vpack.c.b16 %v8401, %v8397
    %v8586 = vpack.c.b16 %v8402, %v8398
    %v8587 = vpack.c.b16 %v8407, %v8403
    %v8588 = vpack.c.b16 %v8408, %v8404
    %v8589 = vpack.c.b16 %v8409, %v8405
    %v8590 = vpack.c.b16 %v8410, %v8406
    %v8591 = vpack.c.b16 %v8415, %v8411
    %v8592 = vpack.c.b16 %v8416, %v8412
    %v8593 = vpack.c.b16 %v8417, %v8413
    %v8594 = vpack.c.b16 %v8418, %v8414
    %v8595 = vpack.c.b16 %v8423, %v8419
    %v8596 = vpack.c.b16 %v8424, %v8420
    %v8597 = vpack.c.b16 %v8425, %v8421
    %v8598 = vpack.c.b16 %v8426, %v8422
    %v8599 = vpack.c.b16 %v8431, %v8427
    %v8600 = vpack.c.b16 %v8432, %v8428
    %v8601 = vpack.c.b16 %v8433, %v8429
    %v8602 = vpack.c.b16 %v8434, %v8430
    %v8603 = vpack.c.b16 %v8439, %v8435
    %v8604 = vpack.c.b16 %v8440, %v8436
    %v8605 = vpack.c.b16 %v8441, %v8437
    %v8606 = vpack.c.b16 %v8442, %v8438
    %v8607 = vpack.c.b16 %v8447, %v8443
    %v8608 = vpack.c.b16 %v8448, %v8444
    %v8609 = vpack.c.b16 %v8449, %v8445
    %v8610 = vpack.c.b16 %v8450, %v8446
    %v8611 = vpack.c.b16 %v8455, %v8451
    %v8612 = vpack.c.b16 %v8456, %v8452
    %v8613 = vpack.c.b16 %v8457, %v8453
    %v8614 = vpack.c.b16 %v8458, %v8454
    %v8615 = vpack.c.b16 %v8463, %v8459
    %v8616 = vpack.c.b16 %v8464, %v8460
    %v8617 = vpack.c.b16 %v8465, %v8461
    %v8618 = vpack.c.b16 %v8466, %v8462
    %v8619 = vpack.c.b16 %v8471, %v8467
    %v8620 = vpack.c.b16 %v8472, %v8468
    %v8621 = vpack.c.b16 %v8473, %v8469
    %v8622 = vpack.c.b16 %v8474, %v8470
    %v8623 = vpack.c.b16 %v8479, %v8475
    %v8624 = vpack.c.b16 %v8480, %v8476
    %v8625 = vpack.c.b16 %v8481, %v8477
    %v8626 = vpack.c.b16 %v8482, %v8478
    %v8627 = vpack.c.b16 %v8487, %v8483
    %v8628 = vpack.c.b16 %v8488, %v8484
    %v8629 = vpack.c.b16 %v8489, %v8485
    %v8630 = vpack.c.b16 %v8490, %v8486
    %v8631 = vpack.c.b16 %v8495, %v8491
    %v8632 = vpack.c.b16 %v8496, %v8492
    %v8633 = vpack.c.b16 %v8497, %v8493
    %v8634 = vpack.c.b16 %v8498, %v8494
    %v8635 = vpack.c.b16 %v8503, %v8499
    %v8636 = vpack.c.b16 %v8504, %v8500
    %v8637 = vpack.c.b16 %v8505, %v8501
    %v8638 = vpack.c.b16 %v8506, %v8502
    %v8639 = vpack.c.b16 %v8511, %v8507
    %v8640 = vpack.c.b16 %v8512, %v8508
    %v8641 = vpack.c.b16 %v8513, %v8509
    %v8642 = vpack.c.b16 %v8514, %v8510
    %8771 = vmatprep.subr.bf16.mxu0 %v8516
    %8772 = vmatpush1.bf16.msra.mxu0 %v8515
    %8773 = vmatprep.subr.bf16.mxu0 %v8520
    %8774 = vmatpush1.bf16.msra.mxu0 %v8519
    %8775 = vmatprep.subr.bf16.mxu0 %v8524
    %8776 = vmatpush1.bf16.msra.mxu0 %v8523
    %8777 = vmatprep.subr.bf16.mxu0 %v8528
    %8778 = vmatpush1.bf16.msra.mxu0 %v8527
    %8779 = vmatprep.subr.bf16.mxu0 %v8532
    %8780 = vmatpush1.bf16.msra.mxu0 %v8531
    %8781 = vmatprep.subr.bf16.mxu0 %v8536
    %8782 = vmatpush1.bf16.msra.mxu0 %v8535
    %8783 = vmatprep.subr.bf16.mxu0 %v8540
    %8784 = vmatpush1.bf16.msra.mxu0 %v8539
    %8785 = vmatprep.subr.bf16.mxu0 %v8544
    %8786 = vmatpush1.bf16.msra.mxu0 %v8543
    %8787 = vmatprep.subr.bf16.mxu0 %v8548
    %8788 = vmatpush1.bf16.msra.mxu0 %v8547
    %8789 = vmatprep.subr.bf16.mxu0 %v8552
    %8790 = vmatpush1.bf16.msra.mxu0 %v8551
    %8791 = vmatprep.subr.bf16.mxu0 %v8556
    %8792 = vmatpush1.bf16.msra.mxu0 %v8555
    %8793 = vmatprep.subr.bf16.mxu0 %v8560
    %8794 = vmatpush1.bf16.msra.mxu0 %v8559
    %8795 = vmatprep.subr.bf16.mxu0 %v8564
    %8796 = vmatpush1.bf16.msra.mxu0 %v8563
    %8797 = vmatprep.subr.bf16.mxu0 %v8568
    %8798 = vmatpush1.bf16.msra.mxu0 %v8567
    %8799 = vmatprep.subr.bf16.mxu0 %v8572
    %8800 = vmatpush1.bf16.msra.mxu0 %v8571
    %8801 = vmatprep.subr.bf16.mxu0 %v8576
    %8802 = vmatpush1.bf16.msra.mxu0 %v8575
    %8803 = vmatprep.mubr.bf16.mxu0 %v7978
    %8804 = vmatmul.mubr.bf16.gmra.mrb[0].mxu0 %v7977
    %v8805 = vpop.f32.mrb[0].mxu0
    %v8806 = vadd.f32 %v8114, %v8805
    %v8807 = vpop.f32.mrb[0].mxu0
    %v8808 = vadd.f32 %v8118, %v8807
    %v8809 = vpop.f32.mrb[0].mxu0
    %v8810 = vpop.f32.mrb[0].mxu0
    %8811 = vdwg.mxu0
    %8812 = vmatprep.subr.bf16.mxu0 %v8580
    %8813 = vmatpush1.bf16.msra.mxu0 %v8579
    %8814 = vmatprep.subr.bf16.mxu0 %v8584
    %8815 = vmatpush1.bf16.msra.mxu0 %v8583
    %8816 = vmatprep.subr.bf16.mxu0 %v8588
    %8817 = vmatpush1.bf16.msra.mxu0 %v8587
    %8818 = vmatprep.subr.bf16.mxu0 %v8592
    %8819 = vmatpush1.bf16.msra.mxu0 %v8591
    %8820 = vmatprep.subr.bf16.mxu0 %v8596
    %8821 = vmatpush1.bf16.msra.mxu0 %v8595
    %8822 = vmatprep.subr.bf16.mxu0 %v8600
    %8823 = vmatpush1.bf16.msra.mxu0 %v8599
    %8824 = vmatprep.subr.bf16.mxu0 %v8604
    %8825 = vmatpush1.bf16.msra.mxu0 %v8603
    %8826 = vmatprep.subr.bf16.mxu0 %v8608
    %8827 = vmatpush1.bf16.msra.mxu0 %v8607
    %8828 = vmatprep.subr.bf16.mxu0 %v8612
    %8829 = vmatpush1.bf16.msra.mxu0 %v8611
    %8830 = vmatprep.subr.bf16.mxu0 %v8616
    %8831 = vmatpush1.bf16.msra.mxu0 %v8615
    %8832 = vmatprep.subr.bf16.mxu0 %v8620
    %8833 = vmatpush1.bf16.msra.mxu0 %v8619
    %8834 = vmatprep.subr.bf16.mxu0 %v8624
    %8835 = vmatpush1.bf16.msra.mxu0 %v8623
    %8836 = vmatprep.subr.bf16.mxu0 %v8628
    %8837 = vmatpush1.bf16.msra.mxu0 %v8627
    %8838 = vmatprep.subr.bf16.mxu0 %v8632
    %8839 = vmatpush1.bf16.msra.mxu0 %v8631
    %8840 = vmatprep.subr.bf16.mxu0 %v8636
    %8841 = vmatpush1.bf16.msra.mxu0 %v8635
    %8842 = vmatprep.subr.bf16.mxu0 %v8640
    %8843 = vmatpush1.bf16.msra.mxu0 %v8639
    %8844 = vmatprep.mubr.bf16.mxu0 %v7980
    %8845 = vmatmul.mubr.bf16.gmra.mrb[0].mxu0 %v7979
    %v8846 = vpop.f32.mrb[0].mxu0
    %v8847 = vadd.f32 %v8806, %v8846
    %v8848 = vpop.f32.mrb[0].mxu0
    %v8849 = vadd.f32 %v8808, %v8848
    %v8850 = vpop.f32.mrb[0].mxu0
    %v8851 = vpop.f32.mrb[0].mxu0
    %8852 = vdwg.mxu0
    %8853 = vmatprep.subr.bf16.mxu0 %v8518
    %8854 = vmatpush1.bf16.msra.mxu0 %v8517
    %8855 = vmatprep.subr.bf16.mxu0 %v8522
    %8856 = vmatpush1.bf16.msra.mxu0 %v8521
    %8857 = vmatprep.subr.bf16.mxu0 %v8526
    %8858 = vmatpush1.bf16.msra.mxu0 %v8525
    %8859 = vmatprep.subr.bf16.mxu0 %v8530
    %8860 = vmatpush1.bf16.msra.mxu0 %v8529
    %8861 = vmatprep.subr.bf16.mxu0 %v8534
    %8862 = vmatpush1.bf16.msra.mxu0 %v8533
    %8863 = vmatprep.subr.bf16.mxu0 %v8538
    %8864 = vmatpush1.bf16.msra.mxu0 %v8537
    %8865 = vmatprep.subr.bf16.mxu0 %v8542
    %8866 = vmatpush1.bf16.msra.mxu0 %v8541
    %8867 = vmatprep.subr.bf16.mxu0 %v8546
    %8868 = vmatpush1.bf16.msra.mxu0 %v8545
    %8869 = vmatprep.subr.bf16.mxu0 %v8550
    %8870 = vmatpush1.bf16.msra.mxu0 %v8549
    %8871 = vmatprep.subr.bf16.mxu0 %v8554
    %8872 = vmatpush1.bf16.msra.mxu0 %v8553
    %8873 = vmatprep.subr.bf16.mxu0 %v8558
    %8874 = vmatpush1.bf16.msra.mxu0 %v8557
    %8875 = vmatprep.subr.bf16.mxu0 %v8562
    %8876 = vmatpush1.bf16.msra.mxu0 %v8561
    %8877 = vmatprep.subr.bf16.mxu0 %v8566
    %8878 = vmatpush1.bf16.msra.mxu0 %v8565
    %8879 = vmatprep.subr.bf16.mxu0 %v8570
    %8880 = vmatpush1.bf16.msra.mxu0 %v8569
    %8881 = vmatprep.subr.bf16.mxu0 %v8574
    %8882 = vmatpush1.bf16.msra.mxu0 %v8573
    %8883 = vmatprep.subr.bf16.mxu0 %v8578
    %8884 = vmatpush1.bf16.msra.mxu0 %v8577
    %8885 = vmatprep.mubr.bf16.mxu0 %v7978
    %8886 = vmatmul.mubr.bf16.gmra.mrb[0].mxu0 %v7977
    %v8887 = vpop.f32.mrb[0].mxu0
    %v8888 = vadd.f32 %v8122, %v8887
    %v8889 = vpop.f32.mrb[0].mxu0
    %v8890 = vadd.f32 %v8126, %v8889
    %v8891 = vpop.f32.mrb[0].mxu0
    %v8892 = vpop.f32.mrb[0].mxu0
    %8893 = vdwg.mxu0
    %8894 = vmatprep.subr.bf16.mxu0 %v8582
    %8895 = vmatpush1.bf16.msra.mxu0 %v8581
    %8896 = vmatprep.subr.bf16.mxu0 %v8586
    %8897 = vmatpush1.bf16.msra.mxu0 %v8585
    %8898 = vmatprep.subr.bf16.mxu0 %v8590
    %8899 = vmatpush1.bf16.msra.mxu0 %v8589
    %8900 = vmatprep.subr.bf16.mxu0 %v8594
    %8901 = vmatpush1.bf16.msra.mxu0 %v8593
    %8902 = vmatprep.subr.bf16.mxu0 %v8598
    %8903 = vmatpush1.bf16.msra.mxu0 %v8597
    %8904 = vmatprep.subr.bf16.mxu0 %v8602
    %8905 = vmatpush1.bf16.msra.mxu0 %v8601
    %8906 = vmatprep.subr.bf16.mxu0 %v8606
    %8907 = vmatpush1.bf16.msra.mxu0 %v8605
    %8908 = vmatprep.subr.bf16.mxu0 %v8610
    %8909 = vmatpush1.bf16.msra.mxu0 %v8609
    %8910 = vmatprep.subr.bf16.mxu0 %v8614
    %8911 = vmatpush1.bf16.msra.mxu0 %v8613
    %8912 = vmatprep.subr.bf16.mxu0 %v8618
    %8913 = vmatpush1.bf16.msra.mxu0 %v8617
    %8914 = vmatprep.subr.bf16.mxu0 %v8622
    %8915 = vmatpush1.bf16.msra.mxu0 %v8621
    %8916 = vmatprep.subr.bf16.mxu0 %v8626
    %8917 = vmatpush1.bf16.msra.mxu0 %v8625
    %8918 = vmatprep.subr.bf16.mxu0 %v8630
    %8919 = vmatpush1.bf16.msra.mxu0 %v8629
    %8920 = vmatprep.subr.bf16.mxu0 %v8634
    %8921 = vmatpush1.bf16.msra.mxu0 %v8633
    %8922 = vmatprep.subr.bf16.mxu0 %v8638
    %8923 = vmatpush1.bf16.msra.mxu0 %v8637
    %8924 = vmatprep.subr.bf16.mxu0 %v8642
    %8925 = vmatpush1.bf16.msra.mxu0 %v8641
    %8926 = vmatprep.mubr.bf16.mxu0 %v7980
    %8927 = vmatmul.mubr.bf16.gmra.mrb[0].mxu0 %v7979
    %v8928 = vpop.f32.mrb[0].mxu0
    %v8929 = vadd.f32 %v8888, %v8928
    %v8930 = vpop.f32.mrb[0].mxu0
    %v8931 = vadd.f32 %v8890, %v8930
    %v8932 = vpop.f32.mrb[0].mxu0
    %v8933 = vpop.f32.mrb[0].mxu0
    %8934 = vdwg.mxu0
    %v8935 = vmax.f32 %v8847, 0.0
    %v8936 = vmax.f32 %v8849, 0.0
    %v8937 = vmax.f32 %v8929, 0.0
    %v8938 = vmax.f32 %v8931, 0.0
    %v8939 = vpack.c.bf16 %v8935, %v8935
    %v8940 = vpack.c.bf16 %v8936, %v8936
    %v8941 = vpack.c.bf16 %v8937, %v8937
    %v8942 = vpack.c.bf16 %v8938, %v8938
    %v8943 = vld [vmem:[#allocation98] sm:$0xff]
    %v8944 = vld [vmem:[#allocation98 + $0x8] sm:$0xff]
    %v8945 = vld [vmem:[#allocation98 + $0x10] sm:$0xff]
    %v8946 = vld [vmem:[#allocation98 + $0x18] sm:$0xff]
    %v8947 = vld [vmem:[#allocation98 + $0x20] sm:$0xff]
    %v8948 = vld [vmem:[#allocation98 + $0x28] sm:$0xff]
    %v8949 = vld [vmem:[#allocation98 + $0x30] sm:$0xff]
    %v8950 = vld [vmem:[#allocation98 + $0x38] sm:$0xff]
    %v8951 = vld [vmem:[#allocation98 + $0x40] sm:$0xff]
    %v8952 = vld [vmem:[#allocation98 + $0x48] sm:$0xff]
    %v8953 = vld [vmem:[#allocation98 + $0x50] sm:$0xff]
    %v8954 = vld [vmem:[#allocation98 + $0x58] sm:$0xff]
    %v8955 = vld [vmem:[#allocation98 + $0x60] sm:$0xff]
    %v8956 = vld [vmem:[#allocation98 + $0x68] sm:$0xff]
    %v8957 = vld [vmem:[#allocation98 + $0x70] sm:$0xff]
    %v8958 = vld [vmem:[#allocation98 + $0x78] sm:$0xff]
    %v8959 = vld [vmem:[#allocation98 + $0x80] sm:$0xff]
    %v8960 = vld [vmem:[#allocation98 + $0x88] sm:$0xff]
    %v8961 = vld [vmem:[#allocation98 + $0x90] sm:$0xff]
    %v8962 = vld [vmem:[#allocation98 + $0x98] sm:$0xff]
    %v8963 = vld [vmem:[#allocation98 + $0xa0] sm:$0xff]
    %v8964 = vld [vmem:[#allocation98 + $0xa8] sm:$0xff]
    %v8965 = vld [vmem:[#allocation98 + $0xb0] sm:$0xff]
    %v8966 = vld [vmem:[#allocation98 + $0xb8] sm:$0xff]
    %v8967 = vld [vmem:[#allocation98 + $0xc0] sm:$0xff]
    %v8968 = vld [vmem:[#allocation98 + $0xc8] sm:$0xff]
    %v8969 = vld [vmem:[#allocation98 + $0xd0] sm:$0xff]
    %v8970 = vld [vmem:[#allocation98 + $0xd8] sm:$0xff]
    %v8971 = vld [vmem:[#allocation98 + $0xe0] sm:$0xff]
    %v8972 = vld [vmem:[#allocation98 + $0xe8] sm:$0xff]
    %v8973 = vld [vmem:[#allocation98 + $0xf0] sm:$0xff]
    %v8974 = vld [vmem:[#allocation98 + $0xf8] sm:$0xff]
    %v8975 = vld [vmem:[#allocation98 + $0x100] sm:$0xff]
    %v8976 = vld [vmem:[#allocation98 + $0x108] sm:$0xff]
    %v8977 = vld [vmem:[#allocation98 + $0x110] sm:$0xff]
    %v8978 = vld [vmem:[#allocation98 + $0x118] sm:$0xff]
    %v8979 = vld [vmem:[#allocation98 + $0x120] sm:$0xff]
    %v8980 = vld [vmem:[#allocation98 + $0x128] sm:$0xff]
    %v8981 = vld [vmem:[#allocation98 + $0x130] sm:$0xff]
    %v8982 = vld [vmem:[#allocation98 + $0x138] sm:$0xff]
    %v8983 = vld [vmem:[#allocation98 + $0x140] sm:$0xff]
    %v8984 = vld [vmem:[#allocation98 + $0x148] sm:$0xff]
    %v8985 = vld [vmem:[#allocation98 + $0x150] sm:$0xff]
    %v8986 = vld [vmem:[#allocation98 + $0x158] sm:$0xff]
    %v8987 = vld [vmem:[#allocation98 + $0x160] sm:$0xff]
    %v8988 = vld [vmem:[#allocation98 + $0x168] sm:$0xff]
    %v8989 = vld [vmem:[#allocation98 + $0x170] sm:$0xff]
    %v8990 = vld [vmem:[#allocation98 + $0x178] sm:$0xff]
    %v8991 = vld [vmem:[#allocation98 + $0x180] sm:$0xff]
    %v8992 = vld [vmem:[#allocation98 + $0x188] sm:$0xff]
    %v8993 = vld [vmem:[#allocation98 + $0x190] sm:$0xff]
    %v8994 = vld [vmem:[#allocation98 + $0x198] sm:$0xff]
    %v8995 = vld [vmem:[#allocation98 + $0x1a0] sm:$0xff]
    %v8996 = vld [vmem:[#allocation98 + $0x1a8] sm:$0xff]
    %v8997 = vld [vmem:[#allocation98 + $0x1b0] sm:$0xff]
    %v8998 = vld [vmem:[#allocation98 + $0x1b8] sm:$0xff]
    %v8999 = vld [vmem:[#allocation98 + $0x1c0] sm:$0xff]
    %v9000 = vld [vmem:[#allocation98 + $0x1c8] sm:$0xff]
    %v9001 = vld [vmem:[#allocation98 + $0x1d0] sm:$0xff]
    %v9002 = vld [vmem:[#allocation98 + $0x1d8] sm:$0xff]
    %v9003 = vld [vmem:[#allocation98 + $0x1e0] sm:$0xff]
    %v9004 = vld [vmem:[#allocation98 + $0x1e8] sm:$0xff]
    %v9005 = vld [vmem:[#allocation98 + $0x1f0] sm:$0xff]
    %v9006 = vld [vmem:[#allocation98 + $0x1f8] sm:$0xff]
    %v9007 = vld [vmem:[#allocation98 + $0x200] sm:$0xff]
    %v9008 = vld [vmem:[#allocation98 + $0x208] sm:$0xff]
    %v9009 = vld [vmem:[#allocation98 + $0x210] sm:$0xff]
    %v9010 = vld [vmem:[#allocation98 + $0x218] sm:$0xff]
    %v9011 = vld [vmem:[#allocation98 + $0x220] sm:$0xff]
    %v9012 = vld [vmem:[#allocation98 + $0x228] sm:$0xff]
    %v9013 = vld [vmem:[#allocation98 + $0x230] sm:$0xff]
    %v9014 = vld [vmem:[#allocation98 + $0x238] sm:$0xff]
    %v9015 = vld [vmem:[#allocation98 + $0x240] sm:$0xff]
    %v9016 = vld [vmem:[#allocation98 + $0x248] sm:$0xff]
    %v9017 = vld [vmem:[#allocation98 + $0x250] sm:$0xff]
    %v9018 = vld [vmem:[#allocation98 + $0x258] sm:$0xff]
    %v9019 = vld [vmem:[#allocation98 + $0x260] sm:$0xff]
    %v9020 = vld [vmem:[#allocation98 + $0x268] sm:$0xff]
    %v9021 = vld [vmem:[#allocation98 + $0x270] sm:$0xff]
    %v9022 = vld [vmem:[#allocation98 + $0x278] sm:$0xff]
    %v9023 = vld [vmem:[#allocation98 + $0x280] sm:$0xff]
    %v9024 = vld [vmem:[#allocation98 + $0x288] sm:$0xff]
    %v9025 = vld [vmem:[#allocation98 + $0x290] sm:$0xff]
    %v9026 = vld [vmem:[#allocation98 + $0x298] sm:$0xff]
    %v9027 = vld [vmem:[#allocation98 + $0x2a0] sm:$0xff]
    %v9028 = vld [vmem:[#allocation98 + $0x2a8] sm:$0xff]
    %v9029 = vld [vmem:[#allocation98 + $0x2b0] sm:$0xff]
    %v9030 = vld [vmem:[#allocation98 + $0x2b8] sm:$0xff]
    %v9031 = vld [vmem:[#allocation98 + $0x2c0] sm:$0xff]
    %v9032 = vld [vmem:[#allocation98 + $0x2c8] sm:$0xff]
    %v9033 = vld [vmem:[#allocation98 + $0x2d0] sm:$0xff]
    %v9034 = vld [vmem:[#allocation98 + $0x2d8] sm:$0xff]
    %v9035 = vld [vmem:[#allocation98 + $0x2e0] sm:$0xff]
    %v9036 = vld [vmem:[#allocation98 + $0x2e8] sm:$0xff]
    %v9037 = vld [vmem:[#allocation98 + $0x2f0] sm:$0xff]
    %v9038 = vld [vmem:[#allocation98 + $0x2f8] sm:$0xff]
    %v9039 = vld [vmem:[#allocation98 + $0x300] sm:$0xff]
    %v9040 = vld [vmem:[#allocation98 + $0x308] sm:$0xff]
    %v9041 = vld [vmem:[#allocation98 + $0x310] sm:$0xff]
    %v9042 = vld [vmem:[#allocation98 + $0x318] sm:$0xff]
    %v9043 = vld [vmem:[#allocation98 + $0x320] sm:$0xff]
    %v9044 = vld [vmem:[#allocation98 + $0x328] sm:$0xff]
    %v9045 = vld [vmem:[#allocation98 + $0x330] sm:$0xff]
    %v9046 = vld [vmem:[#allocation98 + $0x338] sm:$0xff]
    %v9047 = vld [vmem:[#allocation98 + $0x340] sm:$0xff]
    %v9048 = vld [vmem:[#allocation98 + $0x348] sm:$0xff]
    %v9049 = vld [vmem:[#allocation98 + $0x350] sm:$0xff]
    %v9050 = vld [vmem:[#allocation98 + $0x358] sm:$0xff]
    %v9051 = vld [vmem:[#allocation98 + $0x360] sm:$0xff]
    %v9052 = vld [vmem:[#allocation98 + $0x368] sm:$0xff]
    %v9053 = vld [vmem:[#allocation98 + $0x370] sm:$0xff]
    %v9054 = vld [vmem:[#allocation98 + $0x378] sm:$0xff]
    %v9055 = vld [vmem:[#allocation98 + $0x380] sm:$0xff]
    %v9056 = vld [vmem:[#allocation98 + $0x388] sm:$0xff]
    %v9057 = vld [vmem:[#allocation98 + $0x390] sm:$0xff]
    %v9058 = vld [vmem:[#allocation98 + $0x398] sm:$0xff]
    %v9059 = vld [vmem:[#allocation98 + $0x3a0] sm:$0xff]
    %v9060 = vld [vmem:[#allocation98 + $0x3a8] sm:$0xff]
    %v9061 = vld [vmem:[#allocation98 + $0x3b0] sm:$0xff]
    %v9062 = vld [vmem:[#allocation98 + $0x3b8] sm:$0xff]
    %v9063 = vld [vmem:[#allocation98 + $0x3c0] sm:$0xff]
    %v9064 = vld [vmem:[#allocation98 + $0x3c8] sm:$0xff]
    %v9065 = vld [vmem:[#allocation98 + $0x3d0] sm:$0xff]
    %v9066 = vld [vmem:[#allocation98 + $0x3d8] sm:$0xff]
    %v9067 = vld [vmem:[#allocation98 + $0x3e0] sm:$0xff]
    %v9068 = vld [vmem:[#allocation98 + $0x3e8] sm:$0xff]
    %v9069 = vld [vmem:[#allocation98 + $0x3f0] sm:$0xff]
    %v9070 = vld [vmem:[#allocation98 + $0x3f8] sm:$0xff]
    %v9071 = vld [vmem:[%s133] sm:$0xf]
    %v9073 = vlaneseq
    %v9074 = vshrl.u32 %v9073, 7
    %v9075 = vsub.s32 0, %v9074
    %v9076 = vrot.slane %v9071, %v9075
    %v9077 = vlaneseq
    %v9078 = vshrl.u32 %v9077, 7
    %v9079 = vsub.s32 1, %v9078
    %v9080 = vrot.slane %v9071, %v9079
    %v9081 = vlaneseq
    %v9082 = vshrl.u32 %v9081, 7
    %v9083 = vsub.s32 2, %v9082
    %v9084 = vrot.slane %v9071, %v9083
    %v9085 = vlaneseq
    %v9086 = vshrl.u32 %v9085, 7
    %v9087 = vsub.s32 3, %v9086
    %v9088 = vrot.slane %v9071, %v9087
    %v9221 = vunpack.c.l.b16 %v8943
    %v9222 = vunpack.c.h.b16 %v8943
    %v9223 = vunpack.c.l.b16 %v8944
    %v9224 = vunpack.c.h.b16 %v8944
    %v9225 = vunpack.c.l.b16 %v8945
    %v9226 = vunpack.c.h.b16 %v8945
    %v9227 = vunpack.c.l.b16 %v8946
    %v9228 = vunpack.c.h.b16 %v8946
    %v9229 = vunpack.c.l.b16 %v8947
    %v9230 = vunpack.c.h.b16 %v8947
    %v9231 = vunpack.c.l.b16 %v8948
    %v9232 = vunpack.c.h.b16 %v8948
    %v9233 = vunpack.c.l.b16 %v8949
    %v9234 = vunpack.c.h.b16 %v8949
    %v9235 = vunpack.c.l.b16 %v8950
    %v9236 = vunpack.c.h.b16 %v8950
    %v9237 = vunpack.c.l.b16 %v8951
    %v9238 = vunpack.c.h.b16 %v8951
    %v9239 = vunpack.c.l.b16 %v8952
    %v9240 = vunpack.c.h.b16 %v8952
    %v9241 = vunpack.c.l.b16 %v8953
    %v9242 = vunpack.c.h.b16 %v8953
    %v9243 = vunpack.c.l.b16 %v8954
    %v9244 = vunpack.c.h.b16 %v8954
    %v9245 = vunpack.c.l.b16 %v8955
    %v9246 = vunpack.c.h.b16 %v8955
    %v9247 = vunpack.c.l.b16 %v8956
    %v9248 = vunpack.c.h.b16 %v8956
    %v9249 = vunpack.c.l.b16 %v8957
    %v9250 = vunpack.c.h.b16 %v8957
    %v9251 = vunpack.c.l.b16 %v8958
    %v9252 = vunpack.c.h.b16 %v8958
    %v9253 = vunpack.c.l.b16 %v8959
    %v9254 = vunpack.c.h.b16 %v8959
    %v9255 = vunpack.c.l.b16 %v8960
    %v9256 = vunpack.c.h.b16 %v8960
    %v9257 = vunpack.c.l.b16 %v8961
    %v9258 = vunpack.c.h.b16 %v8961
    %v9259 = vunpack.c.l.b16 %v8962
    %v9260 = vunpack.c.h.b16 %v8962
    %v9261 = vunpack.c.l.b16 %v8963
    %v9262 = vunpack.c.h.b16 %v8963
    %v9263 = vunpack.c.l.b16 %v8964
    %v9264 = vunpack.c.h.b16 %v8964
    %v9265 = vunpack.c.l.b16 %v8965
    %v9266 = vunpack.c.h.b16 %v8965
    %v9267 = vunpack.c.l.b16 %v8966
    %v9268 = vunpack.c.h.b16 %v8966
    %v9269 = vunpack.c.l.b16 %v8967
    %v9270 = vunpack.c.h.b16 %v8967
    %v9271 = vunpack.c.l.b16 %v8968
    %v9272 = vunpack.c.h.b16 %v8968
    %v9273 = vunpack.c.l.b16 %v8969
    %v9274 = vunpack.c.h.b16 %v8969
    %v9275 = vunpack.c.l.b16 %v8970
    %v9276 = vunpack.c.h.b16 %v8970
    %v9277 = vunpack.c.l.b16 %v8971
    %v9278 = vunpack.c.h.b16 %v8971
    %v9279 = vunpack.c.l.b16 %v8972
    %v9280 = vunpack.c.h.b16 %v8972
    %v9281 = vunpack.c.l.b16 %v8973
    %v9282 = vunpack.c.h.b16 %v8973
    %v9283 = vunpack.c.l.b16 %v8974
    %v9284 = vunpack.c.h.b16 %v8974
    %v9285 = vunpack.c.l.b16 %v8975
    %v9286 = vunpack.c.h.b16 %v8975
    %v9287 = vunpack.c.l.b16 %v8976
    %v9288 = vunpack.c.h.b16 %v8976
    %v9289 = vunpack.c.l.b16 %v8977
    %v9290 = vunpack.c.h.b16 %v8977
    %v9291 = vunpack.c.l.b16 %v8978
    %v9292 = vunpack.c.h.b16 %v8978
    %v9293 = vunpack.c.l.b16 %v8979
    %v9294 = vunpack.c.h.b16 %v8979
    %v9295 = vunpack.c.l.b16 %v8980
    %v9296 = vunpack.c.h.b16 %v8980
    %v9297 = vunpack.c.l.b16 %v8981
    %v9298 = vunpack.c.h.b16 %v8981
    %v9299 = vunpack.c.l.b16 %v8982
    %v9300 = vunpack.c.h.b16 %v8982
    %v9301 = vunpack.c.l.b16 %v8983
    %v9302 = vunpack.c.h.b16 %v8983
    %v9303 = vunpack.c.l.b16 %v8984
    %v9304 = vunpack.c.h.b16 %v8984
    %v9305 = vunpack.c.l.b16 %v8985
    %v9306 = vunpack.c.h.b16 %v8985
    %v9307 = vunpack.c.l.b16 %v8986
    %v9308 = vunpack.c.h.b16 %v8986
    %v9309 = vunpack.c.l.b16 %v8987
    %v9310 = vunpack.c.h.b16 %v8987
    %v9311 = vunpack.c.l.b16 %v8988
    %v9312 = vunpack.c.h.b16 %v8988
    %v9313 = vunpack.c.l.b16 %v8989
    %v9314 = vunpack.c.h.b16 %v8989
    %v9315 = vunpack.c.l.b16 %v8990
    %v9316 = vunpack.c.h.b16 %v8990
    %v9317 = vunpack.c.l.b16 %v8991
    %v9318 = vunpack.c.h.b16 %v8991
    %v9319 = vunpack.c.l.b16 %v8992
    %v9320 = vunpack.c.h.b16 %v8992
    %v9321 = vunpack.c.l.b16 %v8993
    %v9322 = vunpack.c.h.b16 %v8993
    %v9323 = vunpack.c.l.b16 %v8994
    %v9324 = vunpack.c.h.b16 %v8994
    %v9325 = vunpack.c.l.b16 %v8995
    %v9326 = vunpack.c.h.b16 %v8995
    %v9327 = vunpack.c.l.b16 %v8996
    %v9328 = vunpack.c.h.b16 %v8996
    %v9329 = vunpack.c.l.b16 %v8997
    %v9330 = vunpack.c.h.b16 %v8997
    %v9331 = vunpack.c.l.b16 %v8998
    %v9332 = vunpack.c.h.b16 %v8998
    %v9333 = vunpack.c.l.b16 %v8999
    %v9334 = vunpack.c.h.b16 %v8999
    %v9335 = vunpack.c.l.b16 %v9000
    %v9336 = vunpack.c.h.b16 %v9000
    %v9337 = vunpack.c.l.b16 %v9001
    %v9338 = vunpack.c.h.b16 %v9001
    %v9339 = vunpack.c.l.b16 %v9002
    %v9340 = vunpack.c.h.b16 %v9002
    %v9341 = vunpack.c.l.b16 %v9003
    %v9342 = vunpack.c.h.b16 %v9003
    %v9343 = vunpack.c.l.b16 %v9004
    %v9344 = vunpack.c.h.b16 %v9004
    %v9345 = vunpack.c.l.b16 %v9005
    %v9346 = vunpack.c.h.b16 %v9005
    %v9347 = vunpack.c.l.b16 %v9006
    %v9348 = vunpack.c.h.b16 %v9006
    %v9349 = vunpack.c.l.b16 %v9007
    %v9350 = vunpack.c.h.b16 %v9007
    %v9351 = vunpack.c.l.b16 %v9008
    %v9352 = vunpack.c.h.b16 %v9008
    %v9353 = vunpack.c.l.b16 %v9009
    %v9354 = vunpack.c.h.b16 %v9009
    %v9355 = vunpack.c.l.b16 %v9010
    %v9356 = vunpack.c.h.b16 %v9010
    %v9357 = vunpack.c.l.b16 %v9011
    %v9358 = vunpack.c.h.b16 %v9011
    %v9359 = vunpack.c.l.b16 %v9012
    %v9360 = vunpack.c.h.b16 %v9012
    %v9361 = vunpack.c.l.b16 %v9013
    %v9362 = vunpack.c.h.b16 %v9013
    %v9363 = vunpack.c.l.b16 %v9014
    %v9364 = vunpack.c.h.b16 %v9014
    %v9365 = vunpack.c.l.b16 %v9015
    %v9366 = vunpack.c.h.b16 %v9015
    %v9367 = vunpack.c.l.b16 %v9016
    %v9368 = vunpack.c.h.b16 %v9016
    %v9369 = vunpack.c.l.b16 %v9017
    %v9370 = vunpack.c.h.b16 %v9017
    %v9371 = vunpack.c.l.b16 %v9018
    %v9372 = vunpack.c.h.b16 %v9018
    %v9373 = vunpack.c.l.b16 %v9019
    %v9374 = vunpack.c.h.b16 %v9019
    %v9375 = vunpack.c.l.b16 %v9020
    %v9376 = vunpack.c.h.b16 %v9020
    %v9377 = vunpack.c.l.b16 %v9021
    %v9378 = vunpack.c.h.b16 %v9021
    %v9379 = vunpack.c.l.b16 %v9022
    %v9380 = vunpack.c.h.b16 %v9022
    %v9381 = vunpack.c.l.b16 %v9023
    %v9382 = vunpack.c.h.b16 %v9023
    %v9383 = vunpack.c.l.b16 %v9024
    %v9384 = vunpack.c.h.b16 %v9024
    %v9385 = vunpack.c.l.b16 %v9025
    %v9386 = vunpack.c.h.b16 %v9025
    %v9387 = vunpack.c.l.b16 %v9026
    %v9388 = vunpack.c.h.b16 %v9026
    %v9389 = vunpack.c.l.b16 %v9027
    %v9390 = vunpack.c.h.b16 %v9027
    %v9391 = vunpack.c.l.b16 %v9028
    %v9392 = vunpack.c.h.b16 %v9028
    %v9393 = vunpack.c.l.b16 %v9029
    %v9394 = vunpack.c.h.b16 %v9029
    %v9395 = vunpack.c.l.b16 %v9030
    %v9396 = vunpack.c.h.b16 %v9030
    %v9397 = vunpack.c.l.b16 %v9031
    %v9398 = vunpack.c.h.b16 %v9031
    %v9399 = vunpack.c.l.b16 %v9032
    %v9400 = vunpack.c.h.b16 %v9032
    %v9401 = vunpack.c.l.b16 %v9033
    %v9402 = vunpack.c.h.b16 %v9033
    %v9403 = vunpack.c.l.b16 %v9034
    %v9404 = vunpack.c.h.b16 %v9034
    %v9405 = vunpack.c.l.b16 %v9035
    %v9406 = vunpack.c.h.b16 %v9035
    %v9407 = vunpack.c.l.b16 %v9036
    %v9408 = vunpack.c.h.b16 %v9036
    %v9409 = vunpack.c.l.b16 %v9037
    %v9410 = vunpack.c.h.b16 %v9037
    %v9411 = vunpack.c.l.b16 %v9038
    %v9412 = vunpack.c.h.b16 %v9038
    %v9413 = vunpack.c.l.b16 %v9039
    %v9414 = vunpack.c.h.b16 %v9039
    %v9415 = vunpack.c.l.b16 %v9040
    %v9416 = vunpack.c.h.b16 %v9040
    %v9417 = vunpack.c.l.b16 %v9041
    %v9418 = vunpack.c.h.b16 %v9041
    %v9419 = vunpack.c.l.b16 %v9042
    %v9420 = vunpack.c.h.b16 %v9042
    %v9421 = vunpack.c.l.b16 %v9043
    %v9422 = vunpack.c.h.b16 %v9043
    %v9423 = vunpack.c.l.b16 %v9044
    %v9424 = vunpack.c.h.b16 %v9044
    %v9425 = vunpack.c.l.b16 %v9045
    %v9426 = vunpack.c.h.b16 %v9045
    %v9427 = vunpack.c.l.b16 %v9046
    %v9428 = vunpack.c.h.b16 %v9046
    %v9429 = vunpack.c.l.b16 %v9047
    %v9430 = vunpack.c.h.b16 %v9047
    %v9431 = vunpack.c.l.b16 %v9048
    %v9432 = vunpack.c.h.b16 %v9048
    %v9433 = vunpack.c.l.b16 %v9049
    %v9434 = vunpack.c.h.b16 %v9049
    %v9435 = vunpack.c.l.b16 %v9050
    %v9436 = vunpack.c.h.b16 %v9050
    %v9437 = vunpack.c.l.b16 %v9051
    %v9438 = vunpack.c.h.b16 %v9051
    %v9439 = vunpack.c.l.b16 %v9052
    %v9440 = vunpack.c.h.b16 %v9052
    %v9441 = vunpack.c.l.b16 %v9053
    %v9442 = vunpack.c.h.b16 %v9053
    %v9443 = vunpack.c.l.b16 %v9054
    %v9444 = vunpack.c.h.b16 %v9054
    %v9445 = vunpack.c.l.b16 %v9055
    %v9446 = vunpack.c.h.b16 %v9055
    %v9447 = vunpack.c.l.b16 %v9056
    %v9448 = vunpack.c.h.b16 %v9056
    %v9449 = vunpack.c.l.b16 %v9057
    %v9450 = vunpack.c.h.b16 %v9057
    %v9451 = vunpack.c.l.b16 %v9058
    %v9452 = vunpack.c.h.b16 %v9058
    %v9453 = vunpack.c.l.b16 %v9059
    %v9454 = vunpack.c.h.b16 %v9059
    %v9455 = vunpack.c.l.b16 %v9060
    %v9456 = vunpack.c.h.b16 %v9060
    %v9457 = vunpack.c.l.b16 %v9061
    %v9458 = vunpack.c.h.b16 %v9061
    %v9459 = vunpack.c.l.b16 %v9062
    %v9460 = vunpack.c.h.b16 %v9062
    %v9461 = vunpack.c.l.b16 %v9063
    %v9462 = vunpack.c.h.b16 %v9063
    %v9463 = vunpack.c.l.b16 %v9064
    %v9464 = vunpack.c.h.b16 %v9064
    %v9465 = vunpack.c.l.b16 %v9065
    %v9466 = vunpack.c.h.b16 %v9065
    %v9467 = vunpack.c.l.b16 %v9066
    %v9468 = vunpack.c.h.b16 %v9066
    %v9469 = vunpack.c.l.b16 %v9067
    %v9470 = vunpack.c.h.b16 %v9067
    %v9471 = vunpack.c.l.b16 %v9068
    %v9472 = vunpack.c.h.b16 %v9068
    %v9473 = vunpack.c.l.b16 %v9069
    %v9474 = vunpack.c.h.b16 %v9069
    %v9475 = vunpack.c.l.b16 %v9070
    %v9476 = vunpack.c.h.b16 %v9070
    %v9477 = vpack.c.b16 %v9225, %v9221
    %v9478 = vpack.c.b16 %v9226, %v9222
    %v9479 = vpack.c.b16 %v9227, %v9223
    %v9480 = vpack.c.b16 %v9228, %v9224
    %v9481 = vpack.c.b16 %v9233, %v9229
    %v9482 = vpack.c.b16 %v9234, %v9230
    %v9483 = vpack.c.b16 %v9235, %v9231
    %v9484 = vpack.c.b16 %v9236, %v9232
    %v9485 = vpack.c.b16 %v9241, %v9237
    %v9486 = vpack.c.b16 %v9242, %v9238
    %v9487 = vpack.c.b16 %v9243, %v9239
    %v9488 = vpack.c.b16 %v9244, %v9240
    %v9489 = vpack.c.b16 %v9249, %v9245
    %v9490 = vpack.c.b16 %v9250, %v9246
    %v9491 = vpack.c.b16 %v9251, %v9247
    %v9492 = vpack.c.b16 %v9252, %v9248
    %v9493 = vpack.c.b16 %v9257, %v9253
    %v9494 = vpack.c.b16 %v9258, %v9254
    %v9495 = vpack.c.b16 %v9259, %v9255
    %v9496 = vpack.c.b16 %v9260, %v9256
    %v9497 = vpack.c.b16 %v9265, %v9261
    %v9498 = vpack.c.b16 %v9266, %v9262
    %v9499 = vpack.c.b16 %v9267, %v9263
    %v9500 = vpack.c.b16 %v9268, %v9264
    %v9501 = vpack.c.b16 %v9273, %v9269
    %v9502 = vpack.c.b16 %v9274, %v9270
    %v9503 = vpack.c.b16 %v9275, %v9271
    %v9504 = vpack.c.b16 %v9276, %v9272
    %v9505 = vpack.c.b16 %v9281, %v9277
    %v9506 = vpack.c.b16 %v9282, %v9278
    %v9507 = vpack.c.b16 %v9283, %v9279
    %v9508 = vpack.c.b16 %v9284, %v9280
    %v9509 = vpack.c.b16 %v9289, %v9285
    %v9510 = vpack.c.b16 %v9290, %v9286
    %v9511 = vpack.c.b16 %v9291, %v9287
    %v9512 = vpack.c.b16 %v9292, %v9288
    %v9513 = vpack.c.b16 %v9297, %v9293
    %v9514 = vpack.c.b16 %v9298, %v9294
    %v9515 = vpack.c.b16 %v9299, %v9295
    %v9516 = vpack.c.b16 %v9300, %v9296
    %v9517 = vpack.c.b16 %v9305, %v9301
    %v9518 = vpack.c.b16 %v9306, %v9302
    %v9519 = vpack.c.b16 %v9307, %v9303
    %v9520 = vpack.c.b16 %v9308, %v9304
    %v9521 = vpack.c.b16 %v9313, %v9309
    %v9522 = vpack.c.b16 %v9314, %v9310
    %v9523 = vpack.c.b16 %v9315, %v9311
    %v9524 = vpack.c.b16 %v9316, %v9312
    %v9525 = vpack.c.b16 %v9321, %v9317
    %v9526 = vpack.c.b16 %v9322, %v9318
    %v9527 = vpack.c.b16 %v9323, %v9319
    %v9528 = vpack.c.b16 %v9324, %v9320
    %v9529 = vpack.c.b16 %v9329, %v9325
    %v9530 = vpack.c.b16 %v9330, %v9326
    %v9531 = vpack.c.b16 %v9331, %v9327
    %v9532 = vpack.c.b16 %v9332, %v9328
    %v9533 = vpack.c.b16 %v9337, %v9333
    %v9534 = vpack.c.b16 %v9338, %v9334
    %v9535 = vpack.c.b16 %v9339, %v9335
    %v9536 = vpack.c.b16 %v9340, %v9336
    %v9537 = vpack.c.b16 %v9345, %v9341
    %v9538 = vpack.c.b16 %v9346, %v9342
    %v9539 = vpack.c.b16 %v9347, %v9343
    %v9540 = vpack.c.b16 %v9348, %v9344
    %v9541 = vpack.c.b16 %v9353, %v9349
    %v9542 = vpack.c.b16 %v9354, %v9350
    %v9543 = vpack.c.b16 %v9355, %v9351
    %v9544 = vpack.c.b16 %v9356, %v9352
    %v9545 = vpack.c.b16 %v9361, %v9357
    %v9546 = vpack.c.b16 %v9362, %v9358
    %v9547 = vpack.c.b16 %v9363, %v9359
    %v9548 = vpack.c.b16 %v9364, %v9360
    %v9549 = vpack.c.b16 %v9369, %v9365
    %v9550 = vpack.c.b16 %v9370, %v9366
    %v9551 = vpack.c.b16 %v9371, %v9367
    %v9552 = vpack.c.b16 %v9372, %v9368
    %v9553 = vpack.c.b16 %v9377, %v9373
    %v9554 = vpack.c.b16 %v9378, %v9374
    %v9555 = vpack.c.b16 %v9379, %v9375
    %v9556 = vpack.c.b16 %v9380, %v9376
    %v9557 = vpack.c.b16 %v9385, %v9381
    %v9558 = vpack.c.b16 %v9386, %v9382
    %v9559 = vpack.c.b16 %v9387, %v9383
    %v9560 = vpack.c.b16 %v9388, %v9384
    %v9561 = vpack.c.b16 %v9393, %v9389
    %v9562 = vpack.c.b16 %v9394, %v9390
    %v9563 = vpack.c.b16 %v9395, %v9391
    %v9564 = vpack.c.b16 %v9396, %v9392
    %v9565 = vpack.c.b16 %v9401, %v9397
    %v9566 = vpack.c.b16 %v9402, %v9398
    %v9567 = vpack.c.b16 %v9403, %v9399
    %v9568 = vpack.c.b16 %v9404, %v9400
    %v9569 = vpack.c.b16 %v9409, %v9405
    %v9570 = vpack.c.b16 %v9410, %v9406
    %v9571 = vpack.c.b16 %v9411, %v9407
    %v9572 = vpack.c.b16 %v9412, %v9408
    %v9573 = vpack.c.b16 %v9417, %v9413
    %v9574 = vpack.c.b16 %v9418, %v9414
    %v9575 = vpack.c.b16 %v9419, %v9415
    %v9576 = vpack.c.b16 %v9420, %v9416
    %v9577 = vpack.c.b16 %v9425, %v9421
    %v9578 = vpack.c.b16 %v9426, %v9422
    %v9579 = vpack.c.b16 %v9427, %v9423
    %v9580 = vpack.c.b16 %v9428, %v9424
    %v9581 = vpack.c.b16 %v9433, %v9429
    %v9582 = vpack.c.b16 %v9434, %v9430
    %v9583 = vpack.c.b16 %v9435, %v9431
    %v9584 = vpack.c.b16 %v9436, %v9432
    %v9585 = vpack.c.b16 %v9441, %v9437
    %v9586 = vpack.c.b16 %v9442, %v9438
    %v9587 = vpack.c.b16 %v9443, %v9439
    %v9588 = vpack.c.b16 %v9444, %v9440
    %v9589 = vpack.c.b16 %v9449, %v9445
    %v9590 = vpack.c.b16 %v9450, %v9446
    %v9591 = vpack.c.b16 %v9451, %v9447
    %v9592 = vpack.c.b16 %v9452, %v9448
    %v9593 = vpack.c.b16 %v9457, %v9453
    %v9594 = vpack.c.b16 %v9458, %v9454
    %v9595 = vpack.c.b16 %v9459, %v9455
    %v9596 = vpack.c.b16 %v9460, %v9456
    %v9597 = vpack.c.b16 %v9465, %v9461
    %v9598 = vpack.c.b16 %v9466, %v9462
    %v9599 = vpack.c.b16 %v9467, %v9463
    %v9600 = vpack.c.b16 %v9468, %v9464
    %v9601 = vpack.c.b16 %v9473, %v9469
    %v9602 = vpack.c.b16 %v9474, %v9470
    %v9603 = vpack.c.b16 %v9475, %v9471
    %v9604 = vpack.c.b16 %v9476, %v9472
    %9733 = vmatprep.subr.bf16.mxu0 %v9478
    %9734 = vmatpush1.bf16.msra.mxu0 %v9477
    %9735 = vmatprep.subr.bf16.mxu0 %v9482
    %9736 = vmatpush1.bf16.msra.mxu0 %v9481
    %9737 = vmatprep.subr.bf16.mxu0 %v9486
    %9738 = vmatpush1.bf16.msra.mxu0 %v9485
    %9739 = vmatprep.subr.bf16.mxu0 %v9490
    %9740 = vmatpush1.bf16.msra.mxu0 %v9489
    %9741 = vmatprep.subr.bf16.mxu0 %v9494
    %9742 = vmatpush1.bf16.msra.mxu0 %v9493
    %9743 = vmatprep.subr.bf16.mxu0 %v9498
    %9744 = vmatpush1.bf16.msra.mxu0 %v9497
    %9745 = vmatprep.subr.bf16.mxu0 %v9502
    %9746 = vmatpush1.bf16.msra.mxu0 %v9501
    %9747 = vmatprep.subr.bf16.mxu0 %v9506
    %9748 = vmatpush1.bf16.msra.mxu0 %v9505
    %9749 = vmatprep.subr.bf16.mxu0 %v9510
    %9750 = vmatpush1.bf16.msra.mxu0 %v9509
    %9751 = vmatprep.subr.bf16.mxu0 %v9514
    %9752 = vmatpush1.bf16.msra.mxu0 %v9513
    %9753 = vmatprep.subr.bf16.mxu0 %v9518
    %9754 = vmatpush1.bf16.msra.mxu0 %v9517
    %9755 = vmatprep.subr.bf16.mxu0 %v9522
    %9756 = vmatpush1.bf16.msra.mxu0 %v9521
    %9757 = vmatprep.subr.bf16.mxu0 %v9526
    %9758 = vmatpush1.bf16.msra.mxu0 %v9525
    %9759 = vmatprep.subr.bf16.mxu0 %v9530
    %9760 = vmatpush1.bf16.msra.mxu0 %v9529
    %9761 = vmatprep.subr.bf16.mxu0 %v9534
    %9762 = vmatpush1.bf16.msra.mxu0 %v9533
    %9763 = vmatprep.subr.bf16.mxu0 %v9538
    %9764 = vmatpush1.bf16.msra.mxu0 %v9537
    %9765 = vmatprep.mubr.bf16.mxu0 %v8940
    %9766 = vmatmul.mubr.bf16.gmra.mrb[0].mxu0 %v8939
    %v9767 = vpop.f32.mrb[0].mxu0
    %v9768 = vadd.f32 %v9076, %v9767
    %v9769 = vpop.f32.mrb[0].mxu0
    %v9770 = vadd.f32 %v9080, %v9769
    %v9771 = vpop.f32.mrb[0].mxu0
    %v9772 = vpop.f32.mrb[0].mxu0
    %9773 = vdwg.mxu0
    %9774 = vmatprep.subr.bf16.mxu0 %v9542
    %9775 = vmatpush1.bf16.msra.mxu0 %v9541
    %9776 = vmatprep.subr.bf16.mxu0 %v9546
    %9777 = vmatpush1.bf16.msra.mxu0 %v9545
    %9778 = vmatprep.subr.bf16.mxu0 %v9550
    %9779 = vmatpush1.bf16.msra.mxu0 %v9549
    %9780 = vmatprep.subr.bf16.mxu0 %v9554
    %9781 = vmatpush1.bf16.msra.mxu0 %v9553
    %9782 = vmatprep.subr.bf16.mxu0 %v9558
    %9783 = vmatpush1.bf16.msra.mxu0 %v9557
    %9784 = vmatprep.subr.bf16.mxu0 %v9562
    %9785 = vmatpush1.bf16.msra.mxu0 %v9561
    %9786 = vmatprep.subr.bf16.mxu0 %v9566
    %9787 = vmatpush1.bf16.msra.mxu0 %v9565
    %9788 = vmatprep.subr.bf16.mxu0 %v9570
    %9789 = vmatpush1.bf16.msra.mxu0 %v9569
    %9790 = vmatprep.subr.bf16.mxu0 %v9574
    %9791 = vmatpush1.bf16.msra.mxu0 %v9573
    %9792 = vmatprep.subr.bf16.mxu0 %v9578
    %9793 = vmatpush1.bf16.msra.mxu0 %v9577
    %9794 = vmatprep.subr.bf16.mxu0 %v9582
    %9795 = vmatpush1.bf16.msra.mxu0 %v9581
    %9796 = vmatprep.subr.bf16.mxu0 %v9586
    %9797 = vmatpush1.bf16.msra.mxu0 %v9585
    %9798 = vmatprep.subr.bf16.mxu0 %v9590
    %9799 = vmatpush1.bf16.msra.mxu0 %v9589
    %9800 = vmatprep.subr.bf16.mxu0 %v9594
    %9801 = vmatpush1.bf16.msra.mxu0 %v9593
    %9802 = vmatprep.subr.bf16.mxu0 %v9598
    %9803 = vmatpush1.bf16.msra.mxu0 %v9597
    %9804 = vmatprep.subr.bf16.mxu0 %v9602
    %9805 = vmatpush1.bf16.msra.mxu0 %v9601
    %9806 = vmatprep.mubr.bf16.mxu0 %v8942
    %9807 = vmatmul.mubr.bf16.gmra.mrb[0].mxu0 %v8941
    %v9808 = vpop.f32.mrb[0].mxu0
    %v9809 = vadd.f32 %v9768, %v9808
    %v9810 = vpop.f32.mrb[0].mxu0
    %v9811 = vadd.f32 %v9770, %v9810
    %v9812 = vpop.f32.mrb[0].mxu0
    %v9813 = vpop.f32.mrb[0].mxu0
    %9814 = vdwg.mxu0
    %9815 = vmatprep.subr.bf16.mxu0 %v9480
    %9816 = vmatpush1.bf16.msra.mxu0 %v9479
    %9817 = vmatprep.subr.bf16.mxu0 %v9484
    %9818 = vmatpush1.bf16.msra.mxu0 %v9483
    %9819 = vmatprep.subr.bf16.mxu0 %v9488
    %9820 = vmatpush1.bf16.msra.mxu0 %v9487
    %9821 = vmatprep.subr.bf16.mxu0 %v9492
    %9822 = vmatpush1.bf16.msra.mxu0 %v9491
    %9823 = vmatprep.subr.bf16.mxu0 %v9496
    %9824 = vmatpush1.bf16.msra.mxu0 %v9495
    %9825 = vmatprep.subr.bf16.mxu0 %v9500
    %9826 = vmatpush1.bf16.msra.mxu0 %v9499
    %9827 = vmatprep.subr.bf16.mxu0 %v9504
    %9828 = vmatpush1.bf16.msra.mxu0 %v9503
    %9829 = vmatprep.subr.bf16.mxu0 %v9508
    %9830 = vmatpush1.bf16.msra.mxu0 %v9507
    %9831 = vmatprep.subr.bf16.mxu0 %v9512
    %9832 = vmatpush1.bf16.msra.mxu0 %v9511
    %9833 = vmatprep.subr.bf16.mxu0 %v9516
    %9834 = vmatpush1.bf16.msra.mxu0 %v9515
    %9835 = vmatprep.subr.bf16.mxu0 %v9520
    %9836 = vmatpush1.bf16.msra.mxu0 %v9519
    %9837 = vmatprep.subr.bf16.mxu0 %v9524
    %9838 = vmatpush1.bf16.msra.mxu0 %v9523
    %9839 = vmatprep.subr.bf16.mxu0 %v9528
    %9840 = vmatpush1.bf16.msra.mxu0 %v9527
    %9841 = vmatprep.subr.bf16.mxu0 %v9532
    %9842 = vmatpush1.bf16.msra.mxu0 %v9531
    %9843 = vmatprep.subr.bf16.mxu0 %v9536
    %9844 = vmatpush1.bf16.msra.mxu0 %v9535
    %9845 = vmatprep.subr.bf16.mxu0 %v9540
    %9846 = vmatpush1.bf16.msra.mxu0 %v9539
    %9847 = vmatprep.mubr.bf16.mxu0 %v8940
    %9848 = vmatmul.mubr.bf16.gmra.mrb[0].mxu0 %v8939
    %v9849 = vpop.f32.mrb[0].mxu0
    %v9850 = vadd.f32 %v9084, %v9849
    %v9851 = vpop.f32.mrb[0].mxu0
    %v9852 = vadd.f32 %v9088, %v9851
    %v9853 = vpop.f32.mrb[0].mxu0
    %v9854 = vpop.f32.mrb[0].mxu0
    %9855 = vdwg.mxu0
    %9856 = vmatprep.subr.bf16.mxu0 %v9544
    %9857 = vmatpush1.bf16.msra.mxu0 %v9543
    %9858 = vmatprep.subr.bf16.mxu0 %v9548
    %9859 = vmatpush1.bf16.msra.mxu0 %v9547
    %9860 = vmatprep.subr.bf16.mxu0 %v9552
    %9861 = vmatpush1.bf16.msra.mxu0 %v9551
    %9862 = vmatprep.subr.bf16.mxu0 %v9556
    %9863 = vmatpush1.bf16.msra.mxu0 %v9555
    %9864 = vmatprep.subr.bf16.mxu0 %v9560
    %9865 = vmatpush1.bf16.msra.mxu0 %v9559
    %9866 = vmatprep.subr.bf16.mxu0 %v9564
    %9867 = vmatpush1.bf16.msra.mxu0 %v9563
    %9868 = vmatprep.subr.bf16.mxu0 %v9568
    %9869 = vmatpush1.bf16.msra.mxu0 %v9567
    %9870 = vmatprep.subr.bf16.mxu0 %v9572
    %9871 = vmatpush1.bf16.msra.mxu0 %v9571
    %9872 = vmatprep.subr.bf16.mxu0 %v9576
    %9873 = vmatpush1.bf16.msra.mxu0 %v9575
    %9874 = vmatprep.subr.bf16.mxu0 %v9580
    %9875 = vmatpush1.bf16.msra.mxu0 %v9579
    %9876 = vmatprep.subr.bf16.mxu0 %v9584
    %9877 = vmatpush1.bf16.msra.mxu0 %v9583
    %9878 = vmatprep.subr.bf16.mxu0 %v9588
    %9879 = vmatpush1.bf16.msra.mxu0 %v9587
    %9880 = vmatprep.subr.bf16.mxu0 %v9592
    %9881 = vmatpush1.bf16.msra.mxu0 %v9591
    %9882 = vmatprep.subr.bf16.mxu0 %v9596
    %9883 = vmatpush1.bf16.msra.mxu0 %v9595
    %9884 = vmatprep.subr.bf16.mxu0 %v9600
    %9885 = vmatpush1.bf16.msra.mxu0 %v9599
    %9886 = vmatprep.subr.bf16.mxu0 %v9604
    %9887 = vmatpush1.bf16.msra.mxu0 %v9603
    %9888 = vmatprep.mubr.bf16.mxu0 %v8942
    %9889 = vmatmul.mubr.bf16.gmra.mrb[0].mxu0 %v8941
    %v9890 = vpop.f32.mrb[0].mxu0
    %v9891 = vadd.f32 %v9850, %v9890
    %v9892 = vpop.f32.mrb[0].mxu0
    %v9893 = vadd.f32 %v9852, %v9892
    %v9894 = vpop.f32.mrb[0].mxu0
    %v9895 = vpop.f32.mrb[0].mxu0
    %9896 = vdwg.mxu0
    %v9897 = vadd.f32 %v9809, %v7973
    %v9898 = vadd.f32 %v9811, %v7974
    %v9899 = vadd.f32 %v9891, %v7975
    %v9900 = vadd.f32 %v9893, %v7976
    %v9901 = vmax.f32 %v9897, 0.0
    %v9902 = vmax.f32 %v9898, 0.0
    %v9903 = vmax.f32 %v9899, 0.0
    %v9904 = vmax.f32 %v9900, 0.0
    %v9905 = vpack.c.bf16 %v9901, %v9901
    %v9906 = vpack.c.bf16 %v9902, %v9902
    %v9907 = vpack.c.bf16 %v9903, %v9903
    %v9908 = vpack.c.bf16 %v9904, %v9904
    %v9909 = vld [vmem:[#allocation101] sm:$0xff]
    %v9910 = vld [vmem:[#allocation101 + $0x8] sm:$0xff]
    %v9911 = vld [vmem:[#allocation101 + $0x10] sm:$0xff]
    %v9912 = vld [vmem:[#allocation101 + $0x18] sm:$0xff]
    %v9913 = vld [vmem:[#allocation101 + $0x20] sm:$0xff]
    %v9914 = vld [vmem:[#allocation101 + $0x28] sm:$0xff]
    %v9915 = vld [vmem:[#allocation101 + $0x30] sm:$0xff]
    %v9916 = vld [vmem:[#allocation101 + $0x38] sm:$0xff]
    %v9917 = vld [vmem:[#allocation101 + $0x40] sm:$0xff]
    %v9918 = vld [vmem:[#allocation101 + $0x48] sm:$0xff]
    %v9919 = vld [vmem:[#allocation101 + $0x50] sm:$0xff]
    %v9920 = vld [vmem:[#allocation101 + $0x58] sm:$0xff]
    %v9921 = vld [vmem:[#allocation101 + $0x60] sm:$0xff]
    %v9922 = vld [vmem:[#allocation101 + $0x68] sm:$0xff]
    %v9923 = vld [vmem:[#allocation101 + $0x70] sm:$0xff]
    %v9924 = vld [vmem:[#allocation101 + $0x78] sm:$0xff]
    %v9925 = vld [vmem:[#allocation101 + $0x80] sm:$0xff]
    %v9926 = vld [vmem:[#allocation101 + $0x88] sm:$0xff]
    %v9927 = vld [vmem:[#allocation101 + $0x90] sm:$0xff]
    %v9928 = vld [vmem:[#allocation101 + $0x98] sm:$0xff]
    %v9929 = vld [vmem:[#allocation101 + $0xa0] sm:$0xff]
    %v9930 = vld [vmem:[#allocation101 + $0xa8] sm:$0xff]
    %v9931 = vld [vmem:[#allocation101 + $0xb0] sm:$0xff]
    %v9932 = vld [vmem:[#allocation101 + $0xb8] sm:$0xff]
    %v9933 = vld [vmem:[#allocation101 + $0xc0] sm:$0xff]
    %v9934 = vld [vmem:[#allocation101 + $0xc8] sm:$0xff]
    %v9935 = vld [vmem:[#allocation101 + $0xd0] sm:$0xff]
    %v9936 = vld [vmem:[#allocation101 + $0xd8] sm:$0xff]
    %v9937 = vld [vmem:[#allocation101 + $0xe0] sm:$0xff]
    %v9938 = vld [vmem:[#allocation101 + $0xe8] sm:$0xff]
    %v9939 = vld [vmem:[#allocation101 + $0xf0] sm:$0xff]
    %v9940 = vld [vmem:[#allocation101 + $0xf8] sm:$0xff]
    %v9941 = vld [vmem:[#allocation101 + $0x100] sm:$0xff]
    %v9942 = vld [vmem:[#allocation101 + $0x108] sm:$0xff]
    %v9943 = vld [vmem:[#allocation101 + $0x110] sm:$0xff]
    %v9944 = vld [vmem:[#allocation101 + $0x118] sm:$0xff]
    %v9945 = vld [vmem:[#allocation101 + $0x120] sm:$0xff]
    %v9946 = vld [vmem:[#allocation101 + $0x128] sm:$0xff]
    %v9947 = vld [vmem:[#allocation101 + $0x130] sm:$0xff]
    %v9948 = vld [vmem:[#allocation101 + $0x138] sm:$0xff]
    %v9949 = vld [vmem:[#allocation101 + $0x140] sm:$0xff]
    %v9950 = vld [vmem:[#allocation101 + $0x148] sm:$0xff]
    %v9951 = vld [vmem:[#allocation101 + $0x150] sm:$0xff]
    %v9952 = vld [vmem:[#allocation101 + $0x158] sm:$0xff]
    %v9953 = vld [vmem:[#allocation101 + $0x160] sm:$0xff]
    %v9954 = vld [vmem:[#allocation101 + $0x168] sm:$0xff]
    %v9955 = vld [vmem:[#allocation101 + $0x170] sm:$0xff]
    %v9956 = vld [vmem:[#allocation101 + $0x178] sm:$0xff]
    %v9957 = vld [vmem:[#allocation101 + $0x180] sm:$0xff]
    %v9958 = vld [vmem:[#allocation101 + $0x188] sm:$0xff]
    %v9959 = vld [vmem:[#allocation101 + $0x190] sm:$0xff]
    %v9960 = vld [vmem:[#allocation101 + $0x198] sm:$0xff]
    %v9961 = vld [vmem:[#allocation101 + $0x1a0] sm:$0xff]
    %v9962 = vld [vmem:[#allocation101 + $0x1a8] sm:$0xff]
    %v9963 = vld [vmem:[#allocation101 + $0x1b0] sm:$0xff]
    %v9964 = vld [vmem:[#allocation101 + $0x1b8] sm:$0xff]
    %v9965 = vld [vmem:[#allocation101 + $0x1c0] sm:$0xff]
    %v9966 = vld [vmem:[#allocation101 + $0x1c8] sm:$0xff]
    %v9967 = vld [vmem:[#allocation101 + $0x1d0] sm:$0xff]
    %v9968 = vld [vmem:[#allocation101 + $0x1d8] sm:$0xff]
    %v9969 = vld [vmem:[#allocation101 + $0x1e0] sm:$0xff]
    %v9970 = vld [vmem:[#allocation101 + $0x1e8] sm:$0xff]
    %v9971 = vld [vmem:[#allocation101 + $0x1f0] sm:$0xff]
    %v9972 = vld [vmem:[#allocation101 + $0x1f8] sm:$0xff]
    %v9973 = vld [vmem:[#allocation101 + $0x200] sm:$0xff]
    %v9974 = vld [vmem:[#allocation101 + $0x208] sm:$0xff]
    %v9975 = vld [vmem:[#allocation101 + $0x210] sm:$0xff]
    %v9976 = vld [vmem:[#allocation101 + $0x218] sm:$0xff]
    %v9977 = vld [vmem:[#allocation101 + $0x220] sm:$0xff]
    %v9978 = vld [vmem:[#allocation101 + $0x228] sm:$0xff]
    %v9979 = vld [vmem:[#allocation101 + $0x230] sm:$0xff]
    %v9980 = vld [vmem:[#allocation101 + $0x238] sm:$0xff]
    %v9981 = vld [vmem:[#allocation101 + $0x240] sm:$0xff]
    %v9982 = vld [vmem:[#allocation101 + $0x248] sm:$0xff]
    %v9983 = vld [vmem:[#allocation101 + $0x250] sm:$0xff]
    %v9984 = vld [vmem:[#allocation101 + $0x258] sm:$0xff]
    %v9985 = vld [vmem:[#allocation101 + $0x260] sm:$0xff]
    %v9986 = vld [vmem:[#allocation101 + $0x268] sm:$0xff]
    %v9987 = vld [vmem:[#allocation101 + $0x270] sm:$0xff]
    %v9988 = vld [vmem:[#allocation101 + $0x278] sm:$0xff]
    %v9989 = vld [vmem:[#allocation101 + $0x280] sm:$0xff]
    %v9990 = vld [vmem:[#allocation101 + $0x288] sm:$0xff]
    %v9991 = vld [vmem:[#allocation101 + $0x290] sm:$0xff]
    %v9992 = vld [vmem:[#allocation101 + $0x298] sm:$0xff]
    %v9993 = vld [vmem:[#allocation101 + $0x2a0] sm:$0xff]
    %v9994 = vld [vmem:[#allocation101 + $0x2a8] sm:$0xff]
    %v9995 = vld [vmem:[#allocation101 + $0x2b0] sm:$0xff]
    %v9996 = vld [vmem:[#allocation101 + $0x2b8] sm:$0xff]
    %v9997 = vld [vmem:[#allocation101 + $0x2c0] sm:$0xff]
    %v9998 = vld [vmem:[#allocation101 + $0x2c8] sm:$0xff]
    %v9999 = vld [vmem:[#allocation101 + $0x2d0] sm:$0xff]
    %v10000 = vld [vmem:[#allocation101 + $0x2d8] sm:$0xff]
    %v10001 = vld [vmem:[#allocation101 + $0x2e0] sm:$0xff]
    %v10002 = vld [vmem:[#allocation101 + $0x2e8] sm:$0xff]
    %v10003 = vld [vmem:[#allocation101 + $0x2f0] sm:$0xff]
    %v10004 = vld [vmem:[#allocation101 + $0x2f8] sm:$0xff]
    %v10005 = vld [vmem:[#allocation101 + $0x300] sm:$0xff]
    %v10006 = vld [vmem:[#allocation101 + $0x308] sm:$0xff]
    %v10007 = vld [vmem:[#allocation101 + $0x310] sm:$0xff]
    %v10008 = vld [vmem:[#allocation101 + $0x318] sm:$0xff]
    %v10009 = vld [vmem:[#allocation101 + $0x320] sm:$0xff]
    %v10010 = vld [vmem:[#allocation101 + $0x328] sm:$0xff]
    %v10011 = vld [vmem:[#allocation101 + $0x330] sm:$0xff]
    %v10012 = vld [vmem:[#allocation101 + $0x338] sm:$0xff]
    %v10013 = vld [vmem:[#allocation101 + $0x340] sm:$0xff]
    %v10014 = vld [vmem:[#allocation101 + $0x348] sm:$0xff]
    %v10015 = vld [vmem:[#allocation101 + $0x350] sm:$0xff]
    %v10016 = vld [vmem:[#allocation101 + $0x358] sm:$0xff]
    %v10017 = vld [vmem:[#allocation101 + $0x360] sm:$0xff]
    %v10018 = vld [vmem:[#allocation101 + $0x368] sm:$0xff]
    %v10019 = vld [vmem:[#allocation101 + $0x370] sm:$0xff]
    %v10020 = vld [vmem:[#allocation101 + $0x378] sm:$0xff]
    %v10021 = vld [vmem:[#allocation101 + $0x380] sm:$0xff]
    %v10022 = vld [vmem:[#allocation101 + $0x388] sm:$0xff]
    %v10023 = vld [vmem:[#allocation101 + $0x390] sm:$0xff]
    %v10024 = vld [vmem:[#allocation101 + $0x398] sm:$0xff]
    %v10025 = vld [vmem:[#allocation101 + $0x3a0] sm:$0xff]
    %v10026 = vld [vmem:[#allocation101 + $0x3a8] sm:$0xff]
    %v10027 = vld [vmem:[#allocation101 + $0x3b0] sm:$0xff]
    %v10028 = vld [vmem:[#allocation101 + $0x3b8] sm:$0xff]
    %v10029 = vld [vmem:[#allocation101 + $0x3c0] sm:$0xff]
    %v10030 = vld [vmem:[#allocation101 + $0x3c8] sm:$0xff]
    %v10031 = vld [vmem:[#allocation101 + $0x3d0] sm:$0xff]
    %v10032 = vld [vmem:[#allocation101 + $0x3d8] sm:$0xff]
    %v10033 = vld [vmem:[#allocation101 + $0x3e0] sm:$0xff]
    %v10034 = vld [vmem:[#allocation101 + $0x3e8] sm:$0xff]
    %v10035 = vld [vmem:[#allocation101 + $0x3f0] sm:$0xff]
    %v10036 = vld [vmem:[#allocation101 + $0x3f8] sm:$0xff]
    %v10037 = vld [vmem:[%s139] sm:$0xf]
    %v10039 = vlaneseq
    %v10040 = vshrl.u32 %v10039, 7
    %v10041 = vsub.s32 0, %v10040
    %v10042 = vrot.slane %v10037, %v10041
    %v10043 = vlaneseq
    %v10044 = vshrl.u32 %v10043, 7
    %v10045 = vsub.s32 1, %v10044
    %v10046 = vrot.slane %v10037, %v10045
    %v10047 = vlaneseq
    %v10048 = vshrl.u32 %v10047, 7
    %v10049 = vsub.s32 2, %v10048
    %v10050 = vrot.slane %v10037, %v10049
    %v10051 = vlaneseq
    %v10052 = vshrl.u32 %v10051, 7
    %v10053 = vsub.s32 3, %v10052
    %v10054 = vrot.slane %v10037, %v10053
    %v10187 = vunpack.c.l.b16 %v9909
    %v10188 = vunpack.c.h.b16 %v9909
    %v10189 = vunpack.c.l.b16 %v9910
    %v10190 = vunpack.c.h.b16 %v9910
    %v10191 = vunpack.c.l.b16 %v9911
    %v10192 = vunpack.c.h.b16 %v9911
    %v10193 = vunpack.c.l.b16 %v9912
    %v10194 = vunpack.c.h.b16 %v9912
    %v10195 = vunpack.c.l.b16 %v9913
    %v10196 = vunpack.c.h.b16 %v9913
    %v10197 = vunpack.c.l.b16 %v9914
    %v10198 = vunpack.c.h.b16 %v9914
    %v10199 = vunpack.c.l.b16 %v9915
    %v10200 = vunpack.c.h.b16 %v9915
    %v10201 = vunpack.c.l.b16 %v9916
    %v10202 = vunpack.c.h.b16 %v9916
    %v10203 = vunpack.c.l.b16 %v9917
    %v10204 = vunpack.c.h.b16 %v9917
    %v10205 = vunpack.c.l.b16 %v9918
    %v10206 = vunpack.c.h.b16 %v9918
    %v10207 = vunpack.c.l.b16 %v9919
    %v10208 = vunpack.c.h.b16 %v9919
    %v10209 = vunpack.c.l.b16 %v9920
    %v10210 = vunpack.c.h.b16 %v9920
    %v10211 = vunpack.c.l.b16 %v9921
    %v10212 = vunpack.c.h.b16 %v9921
    %v10213 = vunpack.c.l.b16 %v9922
    %v10214 = vunpack.c.h.b16 %v9922
    %v10215 = vunpack.c.l.b16 %v9923
    %v10216 = vunpack.c.h.b16 %v9923
    %v10217 = vunpack.c.l.b16 %v9924
    %v10218 = vunpack.c.h.b16 %v9924
    %v10219 = vunpack.c.l.b16 %v9925
    %v10220 = vunpack.c.h.b16 %v9925
    %v10221 = vunpack.c.l.b16 %v9926
    %v10222 = vunpack.c.h.b16 %v9926
    %v10223 = vunpack.c.l.b16 %v9927
    %v10224 = vunpack.c.h.b16 %v9927
    %v10225 = vunpack.c.l.b16 %v9928
    %v10226 = vunpack.c.h.b16 %v9928
    %v10227 = vunpack.c.l.b16 %v9929
    %v10228 = vunpack.c.h.b16 %v9929
    %v10229 = vunpack.c.l.b16 %v9930
    %v10230 = vunpack.c.h.b16 %v9930
    %v10231 = vunpack.c.l.b16 %v9931
    %v10232 = vunpack.c.h.b16 %v9931
    %v10233 = vunpack.c.l.b16 %v9932
    %v10234 = vunpack.c.h.b16 %v9932
    %v10235 = vunpack.c.l.b16 %v9933
    %v10236 = vunpack.c.h.b16 %v9933
    %v10237 = vunpack.c.l.b16 %v9934
    %v10238 = vunpack.c.h.b16 %v9934
    %v10239 = vunpack.c.l.b16 %v9935
    %v10240 = vunpack.c.h.b16 %v9935
    %v10241 = vunpack.c.l.b16 %v9936
    %v10242 = vunpack.c.h.b16 %v9936
    %v10243 = vunpack.c.l.b16 %v9937
    %v10244 = vunpack.c.h.b16 %v9937
    %v10245 = vunpack.c.l.b16 %v9938
    %v10246 = vunpack.c.h.b16 %v9938
    %v10247 = vunpack.c.l.b16 %v9939
    %v10248 = vunpack.c.h.b16 %v9939
    %v10249 = vunpack.c.l.b16 %v9940
    %v10250 = vunpack.c.h.b16 %v9940
    %v10251 = vunpack.c.l.b16 %v9941
    %v10252 = vunpack.c.h.b16 %v9941
    %v10253 = vunpack.c.l.b16 %v9942
    %v10254 = vunpack.c.h.b16 %v9942
    %v10255 = vunpack.c.l.b16 %v9943
    %v10256 = vunpack.c.h.b16 %v9943
    %v10257 = vunpack.c.l.b16 %v9944
    %v10258 = vunpack.c.h.b16 %v9944
    %v10259 = vunpack.c.l.b16 %v9945
    %v10260 = vunpack.c.h.b16 %v9945
    %v10261 = vunpack.c.l.b16 %v9946
    %v10262 = vunpack.c.h.b16 %v9946
    %v10263 = vunpack.c.l.b16 %v9947
    %v10264 = vunpack.c.h.b16 %v9947
    %v10265 = vunpack.c.l.b16 %v9948
    %v10266 = vunpack.c.h.b16 %v9948
    %v10267 = vunpack.c.l.b16 %v9949
    %v10268 = vunpack.c.h.b16 %v9949
    %v10269 = vunpack.c.l.b16 %v9950
    %v10270 = vunpack.c.h.b16 %v9950
    %v10271 = vunpack.c.l.b16 %v9951
    %v10272 = vunpack.c.h.b16 %v9951
    %v10273 = vunpack.c.l.b16 %v9952
    %v10274 = vunpack.c.h.b16 %v9952
    %v10275 = vunpack.c.l.b16 %v9953
    %v10276 = vunpack.c.h.b16 %v9953
    %v10277 = vunpack.c.l.b16 %v9954
    %v10278 = vunpack.c.h.b16 %v9954
    %v10279 = vunpack.c.l.b16 %v9955
    %v10280 = vunpack.c.h.b16 %v9955
    %v10281 = vunpack.c.l.b16 %v9956
    %v10282 = vunpack.c.h.b16 %v9956
    %v10283 = vunpack.c.l.b16 %v9957
    %v10284 = vunpack.c.h.b16 %v9957
    %v10285 = vunpack.c.l.b16 %v9958
    %v10286 = vunpack.c.h.b16 %v9958
    %v10287 = vunpack.c.l.b16 %v9959
    %v10288 = vunpack.c.h.b16 %v9959
    %v10289 = vunpack.c.l.b16 %v9960
    %v10290 = vunpack.c.h.b16 %v9960
    %v10291 = vunpack.c.l.b16 %v9961
    %v10292 = vunpack.c.h.b16 %v9961
    %v10293 = vunpack.c.l.b16 %v9962
    %v10294 = vunpack.c.h.b16 %v9962
    %v10295 = vunpack.c.l.b16 %v9963
    %v10296 = vunpack.c.h.b16 %v9963
    %v10297 = vunpack.c.l.b16 %v9964
    %v10298 = vunpack.c.h.b16 %v9964
    %v10299 = vunpack.c.l.b16 %v9965
    %v10300 = vunpack.c.h.b16 %v9965
    %v10301 = vunpack.c.l.b16 %v9966
    %v10302 = vunpack.c.h.b16 %v9966
    %v10303 = vunpack.c.l.b16 %v9967
    %v10304 = vunpack.c.h.b16 %v9967
    %v10305 = vunpack.c.l.b16 %v9968
    %v10306 = vunpack.c.h.b16 %v9968
    %v10307 = vunpack.c.l.b16 %v9969
    %v10308 = vunpack.c.h.b16 %v9969
    %v10309 = vunpack.c.l.b16 %v9970
    %v10310 = vunpack.c.h.b16 %v9970
    %v10311 = vunpack.c.l.b16 %v9971
    %v10312 = vunpack.c.h.b16 %v9971
    %v10313 = vunpack.c.l.b16 %v9972
    %v10314 = vunpack.c.h.b16 %v9972
    %v10315 = vunpack.c.l.b16 %v9973
    %v10316 = vunpack.c.h.b16 %v9973
    %v10317 = vunpack.c.l.b16 %v9974
    %v10318 = vunpack.c.h.b16 %v9974
    %v10319 = vunpack.c.l.b16 %v9975
    %v10320 = vunpack.c.h.b16 %v9975
    %v10321 = vunpack.c.l.b16 %v9976
    %v10322 = vunpack.c.h.b16 %v9976
    %v10323 = vunpack.c.l.b16 %v9977
    %v10324 = vunpack.c.h.b16 %v9977
    %v10325 = vunpack.c.l.b16 %v9978
    %v10326 = vunpack.c.h.b16 %v9978
    %v10327 = vunpack.c.l.b16 %v9979
    %v10328 = vunpack.c.h.b16 %v9979
    %v10329 = vunpack.c.l.b16 %v9980
    %v10330 = vunpack.c.h.b16 %v9980
    %v10331 = vunpack.c.l.b16 %v9981
    %v10332 = vunpack.c.h.b16 %v9981
    %v10333 = vunpack.c.l.b16 %v9982
    %v10334 = vunpack.c.h.b16 %v9982
    %v10335 = vunpack.c.l.b16 %v9983
    %v10336 = vunpack.c.h.b16 %v9983
    %v10337 = vunpack.c.l.b16 %v9984
    %v10338 = vunpack.c.h.b16 %v9984
    %v10339 = vunpack.c.l.b16 %v9985
    %v10340 = vunpack.c.h.b16 %v9985
    %v10341 = vunpack.c.l.b16 %v9986
    %v10342 = vunpack.c.h.b16 %v9986
    %v10343 = vunpack.c.l.b16 %v9987
    %v10344 = vunpack.c.h.b16 %v9987
    %v10345 = vunpack.c.l.b16 %v9988
    %v10346 = vunpack.c.h.b16 %v9988
    %v10347 = vunpack.c.l.b16 %v9989
    %v10348 = vunpack.c.h.b16 %v9989
    %v10349 = vunpack.c.l.b16 %v9990
    %v10350 = vunpack.c.h.b16 %v9990
    %v10351 = vunpack.c.l.b16 %v9991
    %v10352 = vunpack.c.h.b16 %v9991
    %v10353 = vunpack.c.l.b16 %v9992
    %v10354 = vunpack.c.h.b16 %v9992
    %v10355 = vunpack.c.l.b16 %v9993
    %v10356 = vunpack.c.h.b16 %v9993
    %v10357 = vunpack.c.l.b16 %v9994
    %v10358 = vunpack.c.h.b16 %v9994
    %v10359 = vunpack.c.l.b16 %v9995
    %v10360 = vunpack.c.h.b16 %v9995
    %v10361 = vunpack.c.l.b16 %v9996
    %v10362 = vunpack.c.h.b16 %v9996
    %v10363 = vunpack.c.l.b16 %v9997
    %v10364 = vunpack.c.h.b16 %v9997
    %v10365 = vunpack.c.l.b16 %v9998
    %v10366 = vunpack.c.h.b16 %v9998
    %v10367 = vunpack.c.l.b16 %v9999
    %v10368 = vunpack.c.h.b16 %v9999
    %v10369 = vunpack.c.l.b16 %v10000
    %v10370 = vunpack.c.h.b16 %v10000
    %v10371 = vunpack.c.l.b16 %v10001
    %v10372 = vunpack.c.h.b16 %v10001
    %v10373 = vunpack.c.l.b16 %v10002
    %v10374 = vunpack.c.h.b16 %v10002
    %v10375 = vunpack.c.l.b16 %v10003
    %v10376 = vunpack.c.h.b16 %v10003
    %v10377 = vunpack.c.l.b16 %v10004
    %v10378 = vunpack.c.h.b16 %v10004
    %v10379 = vunpack.c.l.b16 %v10005
    %v10380 = vunpack.c.h.b16 %v10005
    %v10381 = vunpack.c.l.b16 %v10006
    %v10382 = vunpack.c.h.b16 %v10006
    %v10383 = vunpack.c.l.b16 %v10007
    %v10384 = vunpack.c.h.b16 %v10007
    %v10385 = vunpack.c.l.b16 %v10008
    %v10386 = vunpack.c.h.b16 %v10008
    %v10387 = vunpack.c.l.b16 %v10009
    %v10388 = vunpack.c.h.b16 %v10009
    %v10389 = vunpack.c.l.b16 %v10010
    %v10390 = vunpack.c.h.b16 %v10010
    %v10391 = vunpack.c.l.b16 %v10011
    %v10392 = vunpack.c.h.b16 %v10011
    %v10393 = vunpack.c.l.b16 %v10012
    %v10394 = vunpack.c.h.b16 %v10012
    %v10395 = vunpack.c.l.b16 %v10013
    %v10396 = vunpack.c.h.b16 %v10013
    %v10397 = vunpack.c.l.b16 %v10014
    %v10398 = vunpack.c.h.b16 %v10014
    %v10399 = vunpack.c.l.b16 %v10015
    %v10400 = vunpack.c.h.b16 %v10015
    %v10401 = vunpack.c.l.b16 %v10016
    %v10402 = vunpack.c.h.b16 %v10016
    %v10403 = vunpack.c.l.b16 %v10017
    %v10404 = vunpack.c.h.b16 %v10017
    %v10405 = vunpack.c.l.b16 %v10018
    %v10406 = vunpack.c.h.b16 %v10018
    %v10407 = vunpack.c.l.b16 %v10019
    %v10408 = vunpack.c.h.b16 %v10019
    %v10409 = vunpack.c.l.b16 %v10020
    %v10410 = vunpack.c.h.b16 %v10020
    %v10411 = vunpack.c.l.b16 %v10021
    %v10412 = vunpack.c.h.b16 %v10021
    %v10413 = vunpack.c.l.b16 %v10022
    %v10414 = vunpack.c.h.b16 %v10022
    %v10415 = vunpack.c.l.b16 %v10023
    %v10416 = vunpack.c.h.b16 %v10023
    %v10417 = vunpack.c.l.b16 %v10024
    %v10418 = vunpack.c.h.b16 %v10024
    %v10419 = vunpack.c.l.b16 %v10025
    %v10420 = vunpack.c.h.b16 %v10025
    %v10421 = vunpack.c.l.b16 %v10026
    %v10422 = vunpack.c.h.b16 %v10026
    %v10423 = vunpack.c.l.b16 %v10027
    %v10424 = vunpack.c.h.b16 %v10027
    %v10425 = vunpack.c.l.b16 %v10028
    %v10426 = vunpack.c.h.b16 %v10028
    %v10427 = vunpack.c.l.b16 %v10029
    %v10428 = vunpack.c.h.b16 %v10029
    %v10429 = vunpack.c.l.b16 %v10030
    %v10430 = vunpack.c.h.b16 %v10030
    %v10431 = vunpack.c.l.b16 %v10031
    %v10432 = vunpack.c.h.b16 %v10031
    %v10433 = vunpack.c.l.b16 %v10032
    %v10434 = vunpack.c.h.b16 %v10032
    %v10435 = vunpack.c.l.b16 %v10033
    %v10436 = vunpack.c.h.b16 %v10033
    %v10437 = vunpack.c.l.b16 %v10034
    %v10438 = vunpack.c.h.b16 %v10034
    %v10439 = vunpack.c.l.b16 %v10035
    %v10440 = vunpack.c.h.b16 %v10035
    %v10441 = vunpack.c.l.b16 %v10036
    %v10442 = vunpack.c.h.b16 %v10036
    %v10443 = vpack.c.b16 %v10191, %v10187
    %v10444 = vpack.c.b16 %v10192, %v10188
    %v10445 = vpack.c.b16 %v10193, %v10189
    %v10446 = vpack.c.b16 %v10194, %v10190
    %v10447 = vpack.c.b16 %v10199, %v10195
    %v10448 = vpack.c.b16 %v10200, %v10196
    %v10449 = vpack.c.b16 %v10201, %v10197
    %v10450 = vpack.c.b16 %v10202, %v10198
    %v10451 = vpack.c.b16 %v10207, %v10203
    %v10452 = vpack.c.b16 %v10208, %v10204
    %v10453 = vpack.c.b16 %v10209, %v10205
    %v10454 = vpack.c.b16 %v10210, %v10206
    %v10455 = vpack.c.b16 %v10215, %v10211
    %v10456 = vpack.c.b16 %v10216, %v10212
    %v10457 = vpack.c.b16 %v10217, %v10213
    %v10458 = vpack.c.b16 %v10218, %v10214
    %v10459 = vpack.c.b16 %v10223, %v10219
    %v10460 = vpack.c.b16 %v10224, %v10220
    %v10461 = vpack.c.b16 %v10225, %v10221
    %v10462 = vpack.c.b16 %v10226, %v10222
    %v10463 = vpack.c.b16 %v10231, %v10227
    %v10464 = vpack.c.b16 %v10232, %v10228
    %v10465 = vpack.c.b16 %v10233, %v10229
    %v10466 = vpack.c.b16 %v10234, %v10230
    %v10467 = vpack.c.b16 %v10239, %v10235
    %v10468 = vpack.c.b16 %v10240, %v10236
    %v10469 = vpack.c.b16 %v10241, %v10237
    %v10470 = vpack.c.b16 %v10242, %v10238
    %v10471 = vpack.c.b16 %v10247, %v10243
    %v10472 = vpack.c.b16 %v10248, %v10244
    %v10473 = vpack.c.b16 %v10249, %v10245
    %v10474 = vpack.c.b16 %v10250, %v10246
    %v10475 = vpack.c.b16 %v10255, %v10251
    %v10476 = vpack.c.b16 %v10256, %v10252
    %v10477 = vpack.c.b16 %v10257, %v10253
    %v10478 = vpack.c.b16 %v10258, %v10254
    %v10479 = vpack.c.b16 %v10263, %v10259
    %v10480 = vpack.c.b16 %v10264, %v10260
    %v10481 = vpack.c.b16 %v10265, %v10261
    %v10482 = vpack.c.b16 %v10266, %v10262
    %v10483 = vpack.c.b16 %v10271, %v10267
    %v10484 = vpack.c.b16 %v10272, %v10268
    %v10485 = vpack.c.b16 %v10273, %v10269
    %v10486 = vpack.c.b16 %v10274, %v10270
    %v10487 = vpack.c.b16 %v10279, %v10275
    %v10488 = vpack.c.b16 %v10280, %v10276
    %v10489 = vpack.c.b16 %v10281, %v10277
    %v10490 = vpack.c.b16 %v10282, %v10278
    %v10491 = vpack.c.b16 %v10287, %v10283
    %v10492 = vpack.c.b16 %v10288, %v10284
    %v10493 = vpack.c.b16 %v10289, %v10285
    %v10494 = vpack.c.b16 %v10290, %v10286
    %v10495 = vpack.c.b16 %v10295, %v10291
    %v10496 = vpack.c.b16 %v10296, %v10292
    %v10497 = vpack.c.b16 %v10297, %v10293
    %v10498 = vpack.c.b16 %v10298, %v10294
    %v10499 = vpack.c.b16 %v10303, %v10299
    %v10500 = vpack.c.b16 %v10304, %v10300
    %v10501 = vpack.c.b16 %v10305, %v10301
    %v10502 = vpack.c.b16 %v10306, %v10302
    %v10503 = vpack.c.b16 %v10311, %v10307
    %v10504 = vpack.c.b16 %v10312, %v10308
    %v10505 = vpack.c.b16 %v10313, %v10309
    %v10506 = vpack.c.b16 %v10314, %v10310
    %v10507 = vpack.c.b16 %v10319, %v10315
    %v10508 = vpack.c.b16 %v10320, %v10316
    %v10509 = vpack.c.b16 %v10321, %v10317
    %v10510 = vpack.c.b16 %v10322, %v10318
    %v10511 = vpack.c.b16 %v10327, %v10323
    %v10512 = vpack.c.b16 %v10328, %v10324
    %v10513 = vpack.c.b16 %v10329, %v10325
    %v10514 = vpack.c.b16 %v10330, %v10326
    %v10515 = vpack.c.b16 %v10335, %v10331
    %v10516 = vpack.c.b16 %v10336, %v10332
    %v10517 = vpack.c.b16 %v10337, %v10333
    %v10518 = vpack.c.b16 %v10338, %v10334
    %v10519 = vpack.c.b16 %v10343, %v10339
    %v10520 = vpack.c.b16 %v10344, %v10340
    %v10521 = vpack.c.b16 %v10345, %v10341
    %v10522 = vpack.c.b16 %v10346, %v10342
    %v10523 = vpack.c.b16 %v10351, %v10347
    %v10524 = vpack.c.b16 %v10352, %v10348
    %v10525 = vpack.c.b16 %v10353, %v10349
    %v10526 = vpack.c.b16 %v10354, %v10350
    %v10527 = vpack.c.b16 %v10359, %v10355
    %v10528 = vpack.c.b16 %v10360, %v10356
    %v10529 = vpack.c.b16 %v10361, %v10357
    %v10530 = vpack.c.b16 %v10362, %v10358
    %v10531 = vpack.c.b16 %v10367, %v10363
    %v10532 = vpack.c.b16 %v10368, %v10364
    %v10533 = vpack.c.b16 %v10369, %v10365
    %v10534 = vpack.c.b16 %v10370, %v10366
    %v10535 = vpack.c.b16 %v10375, %v10371
    %v10536 = vpack.c.b16 %v10376, %v10372
    %v10537 = vpack.c.b16 %v10377, %v10373
    %v10538 = vpack.c.b16 %v10378, %v10374
    %v10539 = vpack.c.b16 %v10383, %v10379
    %v10540 = vpack.c.b16 %v10384, %v10380
    %v10541 = vpack.c.b16 %v10385, %v10381
    %v10542 = vpack.c.b16 %v10386, %v10382
    %v10543 = vpack.c.b16 %v10391, %v10387
    %v10544 = vpack.c.b16 %v10392, %v10388
    %v10545 = vpack.c.b16 %v10393, %v10389
    %v10546 = vpack.c.b16 %v10394, %v10390
    %v10547 = vpack.c.b16 %v10399, %v10395
    %v10548 = vpack.c.b16 %v10400, %v10396
    %v10549 = vpack.c.b16 %v10401, %v10397
    %v10550 = vpack.c.b16 %v10402, %v10398
    %v10551 = vpack.c.b16 %v10407, %v10403
    %v10552 = vpack.c.b16 %v10408, %v10404
    %v10553 = vpack.c.b16 %v10409, %v10405
    %v10554 = vpack.c.b16 %v10410, %v10406
    %v10555 = vpack.c.b16 %v10415, %v10411
    %v10556 = vpack.c.b16 %v10416, %v10412
    %v10557 = vpack.c.b16 %v10417, %v10413
    %v10558 = vpack.c.b16 %v10418, %v10414
    %v10559 = vpack.c.b16 %v10423, %v10419
    %v10560 = vpack.c.b16 %v10424, %v10420
    %v10561 = vpack.c.b16 %v10425, %v10421
    %v10562 = vpack.c.b16 %v10426, %v10422
    %v10563 = vpack.c.b16 %v10431, %v10427
    %v10564 = vpack.c.b16 %v10432, %v10428
    %v10565 = vpack.c.b16 %v10433, %v10429
    %v10566 = vpack.c.b16 %v10434, %v10430
    %v10567 = vpack.c.b16 %v10439, %v10435
    %v10568 = vpack.c.b16 %v10440, %v10436
    %v10569 = vpack.c.b16 %v10441, %v10437
    %v10570 = vpack.c.b16 %v10442, %v10438
    %10699 = vmatprep.subr.bf16.mxu0 %v10444
    %10700 = vmatpush1.bf16.msra.mxu0 %v10443
    %10701 = vmatprep.subr.bf16.mxu0 %v10448
    %10702 = vmatpush1.bf16.msra.mxu0 %v10447
    %10703 = vmatprep.subr.bf16.mxu0 %v10452
    %10704 = vmatpush1.bf16.msra.mxu0 %v10451
    %10705 = vmatprep.subr.bf16.mxu0 %v10456
    %10706 = vmatpush1.bf16.msra.mxu0 %v10455
    %10707 = vmatprep.subr.bf16.mxu0 %v10460
    %10708 = vmatpush1.bf16.msra.mxu0 %v10459
    %10709 = vmatprep.subr.bf16.mxu0 %v10464
    %10710 = vmatpush1.bf16.msra.mxu0 %v10463
    %10711 = vmatprep.subr.bf16.mxu0 %v10468
    %10712 = vmatpush1.bf16.msra.mxu0 %v10467
    %10713 = vmatprep.subr.bf16.mxu0 %v10472
    %10714 = vmatpush1.bf16.msra.mxu0 %v10471
    %10715 = vmatprep.subr.bf16.mxu0 %v10476
    %10716 = vmatpush1.bf16.msra.mxu0 %v10475
    %10717 = vmatprep.subr.bf16.mxu0 %v10480
    %10718 = vmatpush1.bf16.msra.mxu0 %v10479
    %10719 = vmatprep.subr.bf16.mxu0 %v10484
    %10720 = vmatpush1.bf16.msra.mxu0 %v10483
    %10721 = vmatprep.subr.bf16.mxu0 %v10488
    %10722 = vmatpush1.bf16.msra.mxu0 %v10487
    %10723 = vmatprep.subr.bf16.mxu0 %v10492
    %10724 = vmatpush1.bf16.msra.mxu0 %v10491
    %10725 = vmatprep.subr.bf16.mxu0 %v10496
    %10726 = vmatpush1.bf16.msra.mxu0 %v10495
    %10727 = vmatprep.subr.bf16.mxu0 %v10500
    %10728 = vmatpush1.bf16.msra.mxu0 %v10499
    %10729 = vmatprep.subr.bf16.mxu0 %v10504
    %10730 = vmatpush1.bf16.msra.mxu0 %v10503
    %10731 = vmatprep.mubr.bf16.mxu0 %v9906
    %10732 = vmatmul.mubr.bf16.gmra.mrb[0].mxu0 %v9905
    %v10733 = vpop.f32.mrb[0].mxu0
    %v10734 = vadd.f32 %v10042, %v10733
    %v10735 = vpop.f32.mrb[0].mxu0
    %v10736 = vadd.f32 %v10046, %v10735
    %v10737 = vpop.f32.mrb[0].mxu0
    %v10738 = vpop.f32.mrb[0].mxu0
    %10739 = vdwg.mxu0
    %10740 = vmatprep.subr.bf16.mxu0 %v10508
    %10741 = vmatpush1.bf16.msra.mxu0 %v10507
    %10742 = vmatprep.subr.bf16.mxu0 %v10512
    %10743 = vmatpush1.bf16.msra.mxu0 %v10511
    %10744 = vmatprep.subr.bf16.mxu0 %v10516
    %10745 = vmatpush1.bf16.msra.mxu0 %v10515
    %10746 = vmatprep.subr.bf16.mxu0 %v10520
    %10747 = vmatpush1.bf16.msra.mxu0 %v10519
    %10748 = vmatprep.subr.bf16.mxu0 %v10524
    %10749 = vmatpush1.bf16.msra.mxu0 %v10523
    %10750 = vmatprep.subr.bf16.mxu0 %v10528
    %10751 = vmatpush1.bf16.msra.mxu0 %v10527
    %10752 = vmatprep.subr.bf16.mxu0 %v10532
    %10753 = vmatpush1.bf16.msra.mxu0 %v10531
    %10754 = vmatprep.subr.bf16.mxu0 %v10536
    %10755 = vmatpush1.bf16.msra.mxu0 %v10535
    %10756 = vmatprep.subr.bf16.mxu0 %v10540
    %10757 = vmatpush1.bf16.msra.mxu0 %v10539
    %10758 = vmatprep.subr.bf16.mxu0 %v10544
    %10759 = vmatpush1.bf16.msra.mxu0 %v10543
    %10760 = vmatprep.subr.bf16.mxu0 %v10548
    %10761 = vmatpush1.bf16.msra.mxu0 %v10547
    %10762 = vmatprep.subr.bf16.mxu0 %v10552
    %10763 = vmatpush1.bf16.msra.mxu0 %v10551
    %10764 = vmatprep.subr.bf16.mxu0 %v10556
    %10765 = vmatpush1.bf16.msra.mxu0 %v10555
    %10766 = vmatprep.subr.bf16.mxu0 %v10560
    %10767 = vmatpush1.bf16.msra.mxu0 %v10559
    %10768 = vmatprep.subr.bf16.mxu0 %v10564
    %10769 = vmatpush1.bf16.msra.mxu0 %v10563
    %10770 = vmatprep.subr.bf16.mxu0 %v10568
    %10771 = vmatpush1.bf16.msra.mxu0 %v10567
    %10772 = vmatprep.mubr.bf16.mxu0 %v9908
    %10773 = vmatmul.mubr.bf16.gmra.mrb[0].mxu0 %v9907
    %v10774 = vpop.f32.mrb[0].mxu0
    %v10775 = vadd.f32 %v10734, %v10774
    %v10776 = vpop.f32.mrb[0].mxu0
    %v10777 = vadd.f32 %v10736, %v10776
    %v10778 = vpop.f32.mrb[0].mxu0
    %v10779 = vpop.f32.mrb[0].mxu0
    %10780 = vdwg.mxu0
    %10781 = vmatprep.subr.bf16.mxu0 %v10446
    %10782 = vmatpush1.bf16.msra.mxu0 %v10445
    %10783 = vmatprep.subr.bf16.mxu0 %v10450
    %10784 = vmatpush1.bf16.msra.mxu0 %v10449
    %10785 = vmatprep.subr.bf16.mxu0 %v10454
    %10786 = vmatpush1.bf16.msra.mxu0 %v10453
    %10787 = vmatprep.subr.bf16.mxu0 %v10458
    %10788 = vmatpush1.bf16.msra.mxu0 %v10457
    %10789 = vmatprep.subr.bf16.mxu0 %v10462
    %10790 = vmatpush1.bf16.msra.mxu0 %v10461
    %10791 = vmatprep.subr.bf16.mxu0 %v10466
    %10792 = vmatpush1.bf16.msra.mxu0 %v10465
    %10793 = vmatprep.subr.bf16.mxu0 %v10470
    %10794 = vmatpush1.bf16.msra.mxu0 %v10469
    %10795 = vmatprep.subr.bf16.mxu0 %v10474
    %10796 = vmatpush1.bf16.msra.mxu0 %v10473
    %10797 = vmatprep.subr.bf16.mxu0 %v10478
    %10798 = vmatpush1.bf16.msra.mxu0 %v10477
    %10799 = vmatprep.subr.bf16.mxu0 %v10482
    %10800 = vmatpush1.bf16.msra.mxu0 %v10481
    %10801 = vmatprep.subr.bf16.mxu0 %v10486
    %10802 = vmatpush1.bf16.msra.mxu0 %v10485
    %10803 = vmatprep.subr.bf16.mxu0 %v10490
    %10804 = vmatpush1.bf16.msra.mxu0 %v10489
    %10805 = vmatprep.subr.bf16.mxu0 %v10494
    %10806 = vmatpush1.bf16.msra.mxu0 %v10493
    %10807 = vmatprep.subr.bf16.mxu0 %v10498
    %10808 = vmatpush1.bf16.msra.mxu0 %v10497
    %10809 = vmatprep.subr.bf16.mxu0 %v10502
    %10810 = vmatpush1.bf16.msra.mxu0 %v10501
    %10811 = vmatprep.subr.bf16.mxu0 %v10506
    %10812 = vmatpush1.bf16.msra.mxu0 %v10505
    %10813 = vmatprep.mubr.bf16.mxu0 %v9906
    %10814 = vmatmul.mubr.bf16.gmra.mrb[0].mxu0 %v9905
    %v10815 = vpop.f32.mrb[0].mxu0
    %v10816 = vadd.f32 %v10050, %v10815
    %v10817 = vpop.f32.mrb[0].mxu0
    %v10818 = vadd.f32 %v10054, %v10817
    %v10819 = vpop.f32.mrb[0].mxu0
    %v10820 = vpop.f32.mrb[0].mxu0
    %10821 = vdwg.mxu0
    %10822 = vmatprep.subr.bf16.mxu0 %v10510
    %10823 = vmatpush1.bf16.msra.mxu0 %v10509
    %10824 = vmatprep.subr.bf16.mxu0 %v10514
    %10825 = vmatpush1.bf16.msra.mxu0 %v10513
    %10826 = vmatprep.subr.bf16.mxu0 %v10518
    %10827 = vmatpush1.bf16.msra.mxu0 %v10517
    %10828 = vmatprep.subr.bf16.mxu0 %v10522
    %10829 = vmatpush1.bf16.msra.mxu0 %v10521
    %10830 = vmatprep.subr.bf16.mxu0 %v10526
    %10831 = vmatpush1.bf16.msra.mxu0 %v10525
    %10832 = vmatprep.subr.bf16.mxu0 %v10530
    %10833 = vmatpush1.bf16.msra.mxu0 %v10529
    %10834 = vmatprep.subr.bf16.mxu0 %v10534
    %10835 = vmatpush1.bf16.msra.mxu0 %v10533
    %10836 = vmatprep.subr.bf16.mxu0 %v10538
    %10837 = vmatpush1.bf16.msra.mxu0 %v10537
    %10838 = vmatprep.subr.bf16.mxu0 %v10542
    %10839 = vmatpush1.bf16.msra.mxu0 %v10541
    %10840 = vmatprep.subr.bf16.mxu0 %v10546
    %10841 = vmatpush1.bf16.msra.mxu0 %v10545
    %10842 = vmatprep.subr.bf16.mxu0 %v10550
    %10843 = vmatpush1.bf16.msra.mxu0 %v10549
    %10844 = vmatprep.subr.bf16.mxu0 %v10554
    %10845 = vmatpush1.bf16.msra.mxu0 %v10553
    %10846 = vmatprep.subr.bf16.mxu0 %v10558
    %10847 = vmatpush1.bf16.msra.mxu0 %v10557
    %10848 = vmatprep.subr.bf16.mxu0 %v10562
    %10849 = vmatpush1.bf16.msra.mxu0 %v10561
    %10850 = vmatprep.subr.bf16.mxu0 %v10566
    %10851 = vmatpush1.bf16.msra.mxu0 %v10565
    %10852 = vmatprep.subr.bf16.mxu0 %v10570
    %10853 = vmatpush1.bf16.msra.mxu0 %v10569
    %10854 = vmatprep.mubr.bf16.mxu0 %v9908
    %10855 = vmatmul.mubr.bf16.gmra.mrb[0].mxu0 %v9907
    %v10856 = vpop.f32.mrb[0].mxu0
    %v10857 = vadd.f32 %v10816, %v10856
    %v10858 = vpop.f32.mrb[0].mxu0
    %v10859 = vadd.f32 %v10818, %v10858
    %v10860 = vpop.f32.mrb[0].mxu0
    %v10861 = vpop.f32.mrb[0].mxu0
    %10862 = vdwg.mxu0
    %v10863 = vmax.f32 %v10775, 0.0
    %v10864 = vmax.f32 %v10777, 0.0
    %v10865 = vmax.f32 %v10857, 0.0
    %v10866 = vmax.f32 %v10859, 0.0
    %v10867 = vpack.c.bf16 %v10863, %v10863
    %v10868 = vpack.c.bf16 %v10864, %v10864
    %v10869 = vpack.c.bf16 %v10865, %v10865
    %v10870 = vpack.c.bf16 %v10866, %v10866
    %v10871 = vld [vmem:[#allocation103] sm:$0xff]
    %v10872 = vld [vmem:[#allocation103 + $0x8] sm:$0xff]
    %v10873 = vld [vmem:[#allocation103 + $0x10] sm:$0xff]
    %v10874 = vld [vmem:[#allocation103 + $0x18] sm:$0xff]
    %v10875 = vld [vmem:[#allocation103 + $0x20] sm:$0xff]
    %v10876 = vld [vmem:[#allocation103 + $0x28] sm:$0xff]
    %v10877 = vld [vmem:[#allocation103 + $0x30] sm:$0xff]
    %v10878 = vld [vmem:[#allocation103 + $0x38] sm:$0xff]
    %v10879 = vld [vmem:[#allocation103 + $0x40] sm:$0xff]
    %v10880 = vld [vmem:[#allocation103 + $0x48] sm:$0xff]
    %v10881 = vld [vmem:[#allocation103 + $0x50] sm:$0xff]
    %v10882 = vld [vmem:[#allocation103 + $0x58] sm:$0xff]
    %v10883 = vld [vmem:[#allocation103 + $0x60] sm:$0xff]
    %v10884 = vld [vmem:[#allocation103 + $0x68] sm:$0xff]
    %v10885 = vld [vmem:[#allocation103 + $0x70] sm:$0xff]
    %v10886 = vld [vmem:[#allocation103 + $0x78] sm:$0xff]
    %v10887 = vld [vmem:[#allocation103 + $0x80] sm:$0xff]
    %v10888 = vld [vmem:[#allocation103 + $0x88] sm:$0xff]
    %v10889 = vld [vmem:[#allocation103 + $0x90] sm:$0xff]
    %v10890 = vld [vmem:[#allocation103 + $0x98] sm:$0xff]
    %v10891 = vld [vmem:[#allocation103 + $0xa0] sm:$0xff]
    %v10892 = vld [vmem:[#allocation103 + $0xa8] sm:$0xff]
    %v10893 = vld [vmem:[#allocation103 + $0xb0] sm:$0xff]
    %v10894 = vld [vmem:[#allocation103 + $0xb8] sm:$0xff]
    %v10895 = vld [vmem:[#allocation103 + $0xc0] sm:$0xff]
    %v10896 = vld [vmem:[#allocation103 + $0xc8] sm:$0xff]
    %v10897 = vld [vmem:[#allocation103 + $0xd0] sm:$0xff]
    %v10898 = vld [vmem:[#allocation103 + $0xd8] sm:$0xff]
    %v10899 = vld [vmem:[#allocation103 + $0xe0] sm:$0xff]
    %v10900 = vld [vmem:[#allocation103 + $0xe8] sm:$0xff]
    %v10901 = vld [vmem:[#allocation103 + $0xf0] sm:$0xff]
    %v10902 = vld [vmem:[#allocation103 + $0xf8] sm:$0xff]
    %v10903 = vld [vmem:[#allocation103 + $0x100] sm:$0xff]
    %v10904 = vld [vmem:[#allocation103 + $0x108] sm:$0xff]
    %v10905 = vld [vmem:[#allocation103 + $0x110] sm:$0xff]
    %v10906 = vld [vmem:[#allocation103 + $0x118] sm:$0xff]
    %v10907 = vld [vmem:[#allocation103 + $0x120] sm:$0xff]
    %v10908 = vld [vmem:[#allocation103 + $0x128] sm:$0xff]
    %v10909 = vld [vmem:[#allocation103 + $0x130] sm:$0xff]
    %v10910 = vld [vmem:[#allocation103 + $0x138] sm:$0xff]
    %v10911 = vld [vmem:[#allocation103 + $0x140] sm:$0xff]
    %v10912 = vld [vmem:[#allocation103 + $0x148] sm:$0xff]
    %v10913 = vld [vmem:[#allocation103 + $0x150] sm:$0xff]
    %v10914 = vld [vmem:[#allocation103 + $0x158] sm:$0xff]
    %v10915 = vld [vmem:[#allocation103 + $0x160] sm:$0xff]
    %v10916 = vld [vmem:[#allocation103 + $0x168] sm:$0xff]
    %v10917 = vld [vmem:[#allocation103 + $0x170] sm:$0xff]
    %v10918 = vld [vmem:[#allocation103 + $0x178] sm:$0xff]
    %v10919 = vld [vmem:[#allocation103 + $0x180] sm:$0xff]
    %v10920 = vld [vmem:[#allocation103 + $0x188] sm:$0xff]
    %v10921 = vld [vmem:[#allocation103 + $0x190] sm:$0xff]
    %v10922 = vld [vmem:[#allocation103 + $0x198] sm:$0xff]
    %v10923 = vld [vmem:[#allocation103 + $0x1a0] sm:$0xff]
    %v10924 = vld [vmem:[#allocation103 + $0x1a8] sm:$0xff]
    %v10925 = vld [vmem:[#allocation103 + $0x1b0] sm:$0xff]
    %v10926 = vld [vmem:[#allocation103 + $0x1b8] sm:$0xff]
    %v10927 = vld [vmem:[#allocation103 + $0x1c0] sm:$0xff]
    %v10928 = vld [vmem:[#allocation103 + $0x1c8] sm:$0xff]
    %v10929 = vld [vmem:[#allocation103 + $0x1d0] sm:$0xff]
    %v10930 = vld [vmem:[#allocation103 + $0x1d8] sm:$0xff]
    %v10931 = vld [vmem:[#allocation103 + $0x1e0] sm:$0xff]
    %v10932 = vld [vmem:[#allocation103 + $0x1e8] sm:$0xff]
    %v10933 = vld [vmem:[#allocation103 + $0x1f0] sm:$0xff]
    %v10934 = vld [vmem:[#allocation103 + $0x1f8] sm:$0xff]
    %v10935 = vld [vmem:[#allocation103 + $0x200] sm:$0xff]
    %v10936 = vld [vmem:[#allocation103 + $0x208] sm:$0xff]
    %v10937 = vld [vmem:[#allocation103 + $0x210] sm:$0xff]
    %v10938 = vld [vmem:[#allocation103 + $0x218] sm:$0xff]
    %v10939 = vld [vmem:[#allocation103 + $0x220] sm:$0xff]
    %v10940 = vld [vmem:[#allocation103 + $0x228] sm:$0xff]
    %v10941 = vld [vmem:[#allocation103 + $0x230] sm:$0xff]
    %v10942 = vld [vmem:[#allocation103 + $0x238] sm:$0xff]
    %v10943 = vld [vmem:[#allocation103 + $0x240] sm:$0xff]
    %v10944 = vld [vmem:[#allocation103 + $0x248] sm:$0xff]
    %v10945 = vld [vmem:[#allocation103 + $0x250] sm:$0xff]
    %v10946 = vld [vmem:[#allocation103 + $0x258] sm:$0xff]
    %v10947 = vld [vmem:[#allocation103 + $0x260] sm:$0xff]
    %v10948 = vld [vmem:[#allocation103 + $0x268] sm:$0xff]
    %v10949 = vld [vmem:[#allocation103 + $0x270] sm:$0xff]
    %v10950 = vld [vmem:[#allocation103 + $0x278] sm:$0xff]
    %v10951 = vld [vmem:[#allocation103 + $0x280] sm:$0xff]
    %v10952 = vld [vmem:[#allocation103 + $0x288] sm:$0xff]
    %v10953 = vld [vmem:[#allocation103 + $0x290] sm:$0xff]
    %v10954 = vld [vmem:[#allocation103 + $0x298] sm:$0xff]
    %v10955 = vld [vmem:[#allocation103 + $0x2a0] sm:$0xff]
    %v10956 = vld [vmem:[#allocation103 + $0x2a8] sm:$0xff]
    %v10957 = vld [vmem:[#allocation103 + $0x2b0] sm:$0xff]
    %v10958 = vld [vmem:[#allocation103 + $0x2b8] sm:$0xff]
    %v10959 = vld [vmem:[#allocation103 + $0x2c0] sm:$0xff]
    %v10960 = vld [vmem:[#allocation103 + $0x2c8] sm:$0xff]
    %v10961 = vld [vmem:[#allocation103 + $0x2d0] sm:$0xff]
    %v10962 = vld [vmem:[#allocation103 + $0x2d8] sm:$0xff]
    %v10963 = vld [vmem:[#allocation103 + $0x2e0] sm:$0xff]
    %v10964 = vld [vmem:[#allocation103 + $0x2e8] sm:$0xff]
    %v10965 = vld [vmem:[#allocation103 + $0x2f0] sm:$0xff]
    %v10966 = vld [vmem:[#allocation103 + $0x2f8] sm:$0xff]
    %v10967 = vld [vmem:[#allocation103 + $0x300] sm:$0xff]
    %v10968 = vld [vmem:[#allocation103 + $0x308] sm:$0xff]
    %v10969 = vld [vmem:[#allocation103 + $0x310] sm:$0xff]
    %v10970 = vld [vmem:[#allocation103 + $0x318] sm:$0xff]
    %v10971 = vld [vmem:[#allocation103 + $0x320] sm:$0xff]
    %v10972 = vld [vmem:[#allocation103 + $0x328] sm:$0xff]
    %v10973 = vld [vmem:[#allocation103 + $0x330] sm:$0xff]
    %v10974 = vld [vmem:[#allocation103 + $0x338] sm:$0xff]
    %v10975 = vld [vmem:[#allocation103 + $0x340] sm:$0xff]
    %v10976 = vld [vmem:[#allocation103 + $0x348] sm:$0xff]
    %v10977 = vld [vmem:[#allocation103 + $0x350] sm:$0xff]
    %v10978 = vld [vmem:[#allocation103 + $0x358] sm:$0xff]
    %v10979 = vld [vmem:[#allocation103 + $0x360] sm:$0xff]
    %v10980 = vld [vmem:[#allocation103 + $0x368] sm:$0xff]
    %v10981 = vld [vmem:[#allocation103 + $0x370] sm:$0xff]
    %v10982 = vld [vmem:[#allocation103 + $0x378] sm:$0xff]
    %v10983 = vld [vmem:[#allocation103 + $0x380] sm:$0xff]
    %v10984 = vld [vmem:[#allocation103 + $0x388] sm:$0xff]
    %v10985 = vld [vmem:[#allocation103 + $0x390] sm:$0xff]
    %v10986 = vld [vmem:[#allocation103 + $0x398] sm:$0xff]
    %v10987 = vld [vmem:[#allocation103 + $0x3a0] sm:$0xff]
    %v10988 = vld [vmem:[#allocation103 + $0x3a8] sm:$0xff]
    %v10989 = vld [vmem:[#allocation103 + $0x3b0] sm:$0xff]
    %v10990 = vld [vmem:[#allocation103 + $0x3b8] sm:$0xff]
    %v10991 = vld [vmem:[#allocation103 + $0x3c0] sm:$0xff]
    %v10992 = vld [vmem:[#allocation103 + $0x3c8] sm:$0xff]
    %v10993 = vld [vmem:[#allocation103 + $0x3d0] sm:$0xff]
    %v10994 = vld [vmem:[#allocation103 + $0x3d8] sm:$0xff]
    %v10995 = vld [vmem:[#allocation103 + $0x3e0] sm:$0xff]
    %v10996 = vld [vmem:[#allocation103 + $0x3e8] sm:$0xff]
    %v10997 = vld [vmem:[#allocation103 + $0x3f0] sm:$0xff]
    %v10998 = vld [vmem:[#allocation103 + $0x3f8] sm:$0xff]
    %v10999 = vld [vmem:[#allocation100] sm:$0xf]
    %v11001 = vlaneseq
    %v11002 = vshrl.u32 %v11001, 7
    %v11003 = vsub.s32 0, %v11002
    %v11004 = vrot.slane %v10999, %v11003
    %v11005 = vlaneseq
    %v11006 = vshrl.u32 %v11005, 7
    %v11007 = vsub.s32 1, %v11006
    %v11008 = vrot.slane %v10999, %v11007
    %v11009 = vlaneseq
    %v11010 = vshrl.u32 %v11009, 7
    %v11011 = vsub.s32 2, %v11010
    %v11012 = vrot.slane %v10999, %v11011
    %v11013 = vlaneseq
    %v11014 = vshrl.u32 %v11013, 7
    %v11015 = vsub.s32 3, %v11014
    %v11016 = vrot.slane %v10999, %v11015
    %v11149 = vunpack.c.l.b16 %v10871
    %v11150 = vunpack.c.h.b16 %v10871
    %v11151 = vunpack.c.l.b16 %v10872
    %v11152 = vunpack.c.h.b16 %v10872
    %v11153 = vunpack.c.l.b16 %v10873
    %v11154 = vunpack.c.h.b16 %v10873
    %v11155 = vunpack.c.l.b16 %v10874
    %v11156 = vunpack.c.h.b16 %v10874
    %v11157 = vunpack.c.l.b16 %v10875
    %v11158 = vunpack.c.h.b16 %v10875
    %v11159 = vunpack.c.l.b16 %v10876
    %v11160 = vunpack.c.h.b16 %v10876
    %v11161 = vunpack.c.l.b16 %v10877
    %v11162 = vunpack.c.h.b16 %v10877
    %v11163 = vunpack.c.l.b16 %v10878
    %v11164 = vunpack.c.h.b16 %v10878
    %v11165 = vunpack.c.l.b16 %v10879
    %v11166 = vunpack.c.h.b16 %v10879
    %v11167 = vunpack.c.l.b16 %v10880
    %v11168 = vunpack.c.h.b16 %v10880
    %v11169 = vunpack.c.l.b16 %v10881
    %v11170 = vunpack.c.h.b16 %v10881
    %v11171 = vunpack.c.l.b16 %v10882
    %v11172 = vunpack.c.h.b16 %v10882
    %v11173 = vunpack.c.l.b16 %v10883
    %v11174 = vunpack.c.h.b16 %v10883
    %v11175 = vunpack.c.l.b16 %v10884
    %v11176 = vunpack.c.h.b16 %v10884
    %v11177 = vunpack.c.l.b16 %v10885
    %v11178 = vunpack.c.h.b16 %v10885
    %v11179 = vunpack.c.l.b16 %v10886
    %v11180 = vunpack.c.h.b16 %v10886
    %v11181 = vunpack.c.l.b16 %v10887
    %v11182 = vunpack.c.h.b16 %v10887
    %v11183 = vunpack.c.l.b16 %v10888
    %v11184 = vunpack.c.h.b16 %v10888
    %v11185 = vunpack.c.l.b16 %v10889
    %v11186 = vunpack.c.h.b16 %v10889
    %v11187 = vunpack.c.l.b16 %v10890
    %v11188 = vunpack.c.h.b16 %v10890
    %v11189 = vunpack.c.l.b16 %v10891
    %v11190 = vunpack.c.h.b16 %v10891
    %v11191 = vunpack.c.l.b16 %v10892
    %v11192 = vunpack.c.h.b16 %v10892
    %v11193 = vunpack.c.l.b16 %v10893
    %v11194 = vunpack.c.h.b16 %v10893
    %v11195 = vunpack.c.l.b16 %v10894
    %v11196 = vunpack.c.h.b16 %v10894
    %v11197 = vunpack.c.l.b16 %v10895
    %v11198 = vunpack.c.h.b16 %v10895
    %v11199 = vunpack.c.l.b16 %v10896
    %v11200 = vunpack.c.h.b16 %v10896
    %v11201 = vunpack.c.l.b16 %v10897
    %v11202 = vunpack.c.h.b16 %v10897
    %v11203 = vunpack.c.l.b16 %v10898
    %v11204 = vunpack.c.h.b16 %v10898
    %v11205 = vunpack.c.l.b16 %v10899
    %v11206 = vunpack.c.h.b16 %v10899
    %v11207 = vunpack.c.l.b16 %v10900
    %v11208 = vunpack.c.h.b16 %v10900
    %v11209 = vunpack.c.l.b16 %v10901
    %v11210 = vunpack.c.h.b16 %v10901
    %v11211 = vunpack.c.l.b16 %v10902
    %v11212 = vunpack.c.h.b16 %v10902
    %v11213 = vunpack.c.l.b16 %v10903
    %v11214 = vunpack.c.h.b16 %v10903
    %v11215 = vunpack.c.l.b16 %v10904
    %v11216 = vunpack.c.h.b16 %v10904
    %v11217 = vunpack.c.l.b16 %v10905
    %v11218 = vunpack.c.h.b16 %v10905
    %v11219 = vunpack.c.l.b16 %v10906
    %v11220 = vunpack.c.h.b16 %v10906
    %v11221 = vunpack.c.l.b16 %v10907
    %v11222 = vunpack.c.h.b16 %v10907
    %v11223 = vunpack.c.l.b16 %v10908
    %v11224 = vunpack.c.h.b16 %v10908
    %v11225 = vunpack.c.l.b16 %v10909
    %v11226 = vunpack.c.h.b16 %v10909
    %v11227 = vunpack.c.l.b16 %v10910
    %v11228 = vunpack.c.h.b16 %v10910
    %v11229 = vunpack.c.l.b16 %v10911
    %v11230 = vunpack.c.h.b16 %v10911
    %v11231 = vunpack.c.l.b16 %v10912
    %v11232 = vunpack.c.h.b16 %v10912
    %v11233 = vunpack.c.l.b16 %v10913
    %v11234 = vunpack.c.h.b16 %v10913
    %v11235 = vunpack.c.l.b16 %v10914
    %v11236 = vunpack.c.h.b16 %v10914
    %v11237 = vunpack.c.l.b16 %v10915
    %v11238 = vunpack.c.h.b16 %v10915
    %v11239 = vunpack.c.l.b16 %v10916
    %v11240 = vunpack.c.h.b16 %v10916
    %v11241 = vunpack.c.l.b16 %v10917
    %v11242 = vunpack.c.h.b16 %v10917
    %v11243 = vunpack.c.l.b16 %v10918
    %v11244 = vunpack.c.h.b16 %v10918
    %v11245 = vunpack.c.l.b16 %v10919
    %v11246 = vunpack.c.h.b16 %v10919
    %v11247 = vunpack.c.l.b16 %v10920
    %v11248 = vunpack.c.h.b16 %v10920
    %v11249 = vunpack.c.l.b16 %v10921
    %v11250 = vunpack.c.h.b16 %v10921
    %v11251 = vunpack.c.l.b16 %v10922
    %v11252 = vunpack.c.h.b16 %v10922
    %v11253 = vunpack.c.l.b16 %v10923
    %v11254 = vunpack.c.h.b16 %v10923
    %v11255 = vunpack.c.l.b16 %v10924
    %v11256 = vunpack.c.h.b16 %v10924
    %v11257 = vunpack.c.l.b16 %v10925
    %v11258 = vunpack.c.h.b16 %v10925
    %v11259 = vunpack.c.l.b16 %v10926
    %v11260 = vunpack.c.h.b16 %v10926
    %v11261 = vunpack.c.l.b16 %v10927
    %v11262 = vunpack.c.h.b16 %v10927
    %v11263 = vunpack.c.l.b16 %v10928
    %v11264 = vunpack.c.h.b16 %v10928
    %v11265 = vunpack.c.l.b16 %v10929
    %v11266 = vunpack.c.h.b16 %v10929
    %v11267 = vunpack.c.l.b16 %v10930
    %v11268 = vunpack.c.h.b16 %v10930
    %v11269 = vunpack.c.l.b16 %v10931
    %v11270 = vunpack.c.h.b16 %v10931
    %v11271 = vunpack.c.l.b16 %v10932
    %v11272 = vunpack.c.h.b16 %v10932
    %v11273 = vunpack.c.l.b16 %v10933
    %v11274 = vunpack.c.h.b16 %v10933
    %v11275 = vunpack.c.l.b16 %v10934
    %v11276 = vunpack.c.h.b16 %v10934
    %v11277 = vunpack.c.l.b16 %v10935
    %v11278 = vunpack.c.h.b16 %v10935
    %v11279 = vunpack.c.l.b16 %v10936
    %v11280 = vunpack.c.h.b16 %v10936
    %v11281 = vunpack.c.l.b16 %v10937
    %v11282 = vunpack.c.h.b16 %v10937
    %v11283 = vunpack.c.l.b16 %v10938
    %v11284 = vunpack.c.h.b16 %v10938
    %v11285 = vunpack.c.l.b16 %v10939
    %v11286 = vunpack.c.h.b16 %v10939
    %v11287 = vunpack.c.l.b16 %v10940
    %v11288 = vunpack.c.h.b16 %v10940
    %v11289 = vunpack.c.l.b16 %v10941
    %v11290 = vunpack.c.h.b16 %v10941
    %v11291 = vunpack.c.l.b16 %v10942
    %v11292 = vunpack.c.h.b16 %v10942
    %v11293 = vunpack.c.l.b16 %v10943
    %v11294 = vunpack.c.h.b16 %v10943
    %v11295 = vunpack.c.l.b16 %v10944
    %v11296 = vunpack.c.h.b16 %v10944
    %v11297 = vunpack.c.l.b16 %v10945
    %v11298 = vunpack.c.h.b16 %v10945
    %v11299 = vunpack.c.l.b16 %v10946
    %v11300 = vunpack.c.h.b16 %v10946
    %v11301 = vunpack.c.l.b16 %v10947
    %v11302 = vunpack.c.h.b16 %v10947
    %v11303 = vunpack.c.l.b16 %v10948
    %v11304 = vunpack.c.h.b16 %v10948
    %v11305 = vunpack.c.l.b16 %v10949
    %v11306 = vunpack.c.h.b16 %v10949
    %v11307 = vunpack.c.l.b16 %v10950
    %v11308 = vunpack.c.h.b16 %v10950
    %v11309 = vunpack.c.l.b16 %v10951
    %v11310 = vunpack.c.h.b16 %v10951
    %v11311 = vunpack.c.l.b16 %v10952
    %v11312 = vunpack.c.h.b16 %v10952
    %v11313 = vunpack.c.l.b16 %v10953
    %v11314 = vunpack.c.h.b16 %v10953
    %v11315 = vunpack.c.l.b16 %v10954
    %v11316 = vunpack.c.h.b16 %v10954
    %v11317 = vunpack.c.l.b16 %v10955
    %v11318 = vunpack.c.h.b16 %v10955
    %v11319 = vunpack.c.l.b16 %v10956
    %v11320 = vunpack.c.h.b16 %v10956
    %v11321 = vunpack.c.l.b16 %v10957
    %v11322 = vunpack.c.h.b16 %v10957
    %v11323 = vunpack.c.l.b16 %v10958
    %v11324 = vunpack.c.h.b16 %v10958
    %v11325 = vunpack.c.l.b16 %v10959
    %v11326 = vunpack.c.h.b16 %v10959
    %v11327 = vunpack.c.l.b16 %v10960
    %v11328 = vunpack.c.h.b16 %v10960
    %v11329 = vunpack.c.l.b16 %v10961
    %v11330 = vunpack.c.h.b16 %v10961
    %v11331 = vunpack.c.l.b16 %v10962
    %v11332 = vunpack.c.h.b16 %v10962
    %v11333 = vunpack.c.l.b16 %v10963
    %v11334 = vunpack.c.h.b16 %v10963
    %v11335 = vunpack.c.l.b16 %v10964
    %v11336 = vunpack.c.h.b16 %v10964
    %v11337 = vunpack.c.l.b16 %v10965
    %v11338 = vunpack.c.h.b16 %v10965
    %v11339 = vunpack.c.l.b16 %v10966
    %v11340 = vunpack.c.h.b16 %v10966
    %v11341 = vunpack.c.l.b16 %v10967
    %v11342 = vunpack.c.h.b16 %v10967
    %v11343 = vunpack.c.l.b16 %v10968
    %v11344 = vunpack.c.h.b16 %v10968
    %v11345 = vunpack.c.l.b16 %v10969
    %v11346 = vunpack.c.h.b16 %v10969
    %v11347 = vunpack.c.l.b16 %v10970
    %v11348 = vunpack.c.h.b16 %v10970
    %v11349 = vunpack.c.l.b16 %v10971
    %v11350 = vunpack.c.h.b16 %v10971
    %v11351 = vunpack.c.l.b16 %v10972
    %v11352 = vunpack.c.h.b16 %v10972
    %v11353 = vunpack.c.l.b16 %v10973
    %v11354 = vunpack.c.h.b16 %v10973
    %v11355 = vunpack.c.l.b16 %v10974
    %v11356 = vunpack.c.h.b16 %v10974
    %v11357 = vunpack.c.l.b16 %v10975
    %v11358 = vunpack.c.h.b16 %v10975
    %v11359 = vunpack.c.l.b16 %v10976
    %v11360 = vunpack.c.h.b16 %v10976
    %v11361 = vunpack.c.l.b16 %v10977
    %v11362 = vunpack.c.h.b16 %v10977
    %v11363 = vunpack.c.l.b16 %v10978
    %v11364 = vunpack.c.h.b16 %v10978
    %v11365 = vunpack.c.l.b16 %v10979
    %v11366 = vunpack.c.h.b16 %v10979
    %v11367 = vunpack.c.l.b16 %v10980
    %v11368 = vunpack.c.h.b16 %v10980
    %v11369 = vunpack.c.l.b16 %v10981
    %v11370 = vunpack.c.h.b16 %v10981
    %v11371 = vunpack.c.l.b16 %v10982
    %v11372 = vunpack.c.h.b16 %v10982
    %v11373 = vunpack.c.l.b16 %v10983
    %v11374 = vunpack.c.h.b16 %v10983
    %v11375 = vunpack.c.l.b16 %v10984
    %v11376 = vunpack.c.h.b16 %v10984
    %v11377 = vunpack.c.l.b16 %v10985
    %v11378 = vunpack.c.h.b16 %v10985
    %v11379 = vunpack.c.l.b16 %v10986
    %v11380 = vunpack.c.h.b16 %v10986
    %v11381 = vunpack.c.l.b16 %v10987
    %v11382 = vunpack.c.h.b16 %v10987
    %v11383 = vunpack.c.l.b16 %v10988
    %v11384 = vunpack.c.h.b16 %v10988
    %v11385 = vunpack.c.l.b16 %v10989
    %v11386 = vunpack.c.h.b16 %v10989
    %v11387 = vunpack.c.l.b16 %v10990
    %v11388 = vunpack.c.h.b16 %v10990
    %v11389 = vunpack.c.l.b16 %v10991
    %v11390 = vunpack.c.h.b16 %v10991
    %v11391 = vunpack.c.l.b16 %v10992
    %v11392 = vunpack.c.h.b16 %v10992
    %v11393 = vunpack.c.l.b16 %v10993
    %v11394 = vunpack.c.h.b16 %v10993
    %v11395 = vunpack.c.l.b16 %v10994
    %v11396 = vunpack.c.h.b16 %v10994
    %v11397 = vunpack.c.l.b16 %v10995
    %v11398 = vunpack.c.h.b16 %v10995
    %v11399 = vunpack.c.l.b16 %v10996
    %v11400 = vunpack.c.h.b16 %v10996
    %v11401 = vunpack.c.l.b16 %v10997
    %v11402 = vunpack.c.h.b16 %v10997
    %v11403 = vunpack.c.l.b16 %v10998
    %v11404 = vunpack.c.h.b16 %v10998
    %v11405 = vpack.c.b16 %v11153, %v11149
    %v11406 = vpack.c.b16 %v11154, %v11150
    %v11407 = vpack.c.b16 %v11155, %v11151
    %v11408 = vpack.c.b16 %v11156, %v11152
    %v11409 = vpack.c.b16 %v11161, %v11157
    %v11410 = vpack.c.b16 %v11162, %v11158
    %v11411 = vpack.c.b16 %v11163, %v11159
    %v11412 = vpack.c.b16 %v11164, %v11160
    %v11413 = vpack.c.b16 %v11169, %v11165
    %v11414 = vpack.c.b16 %v11170, %v11166
    %v11415 = vpack.c.b16 %v11171, %v11167
    %v11416 = vpack.c.b16 %v11172, %v11168
    %v11417 = vpack.c.b16 %v11177, %v11173
    %v11418 = vpack.c.b16 %v11178, %v11174
    %v11419 = vpack.c.b16 %v11179, %v11175
    %v11420 = vpack.c.b16 %v11180, %v11176
    %v11421 = vpack.c.b16 %v11185, %v11181
    %v11422 = vpack.c.b16 %v11186, %v11182
    %v11423 = vpack.c.b16 %v11187, %v11183
    %v11424 = vpack.c.b16 %v11188, %v11184
    %v11425 = vpack.c.b16 %v11193, %v11189
    %v11426 = vpack.c.b16 %v11194, %v11190
    %v11427 = vpack.c.b16 %v11195, %v11191
    %v11428 = vpack.c.b16 %v11196, %v11192
    %v11429 = vpack.c.b16 %v11201, %v11197
    %v11430 = vpack.c.b16 %v11202, %v11198
    %v11431 = vpack.c.b16 %v11203, %v11199
    %v11432 = vpack.c.b16 %v11204, %v11200
    %v11433 = vpack.c.b16 %v11209, %v11205
    %v11434 = vpack.c.b16 %v11210, %v11206
    %v11435 = vpack.c.b16 %v11211, %v11207
    %v11436 = vpack.c.b16 %v11212, %v11208
    %v11437 = vpack.c.b16 %v11217, %v11213
    %v11438 = vpack.c.b16 %v11218, %v11214
    %v11439 = vpack.c.b16 %v11219, %v11215
    %v11440 = vpack.c.b16 %v11220, %v11216
    %v11441 = vpack.c.b16 %v11225, %v11221
    %v11442 = vpack.c.b16 %v11226, %v11222
    %v11443 = vpack.c.b16 %v11227, %v11223
    %v11444 = vpack.c.b16 %v11228, %v11224
    %v11445 = vpack.c.b16 %v11233, %v11229
    %v11446 = vpack.c.b16 %v11234, %v11230
    %v11447 = vpack.c.b16 %v11235, %v11231
    %v11448 = vpack.c.b16 %v11236, %v11232
    %v11449 = vpack.c.b16 %v11241, %v11237
    %v11450 = vpack.c.b16 %v11242, %v11238
    %v11451 = vpack.c.b16 %v11243, %v11239
    %v11452 = vpack.c.b16 %v11244, %v11240
    %v11453 = vpack.c.b16 %v11249, %v11245
    %v11454 = vpack.c.b16 %v11250, %v11246
    %v11455 = vpack.c.b16 %v11251, %v11247
    %v11456 = vpack.c.b16 %v11252, %v11248
    %v11457 = vpack.c.b16 %v11257, %v11253
    %v11458 = vpack.c.b16 %v11258, %v11254
    %v11459 = vpack.c.b16 %v11259, %v11255
    %v11460 = vpack.c.b16 %v11260, %v11256
    %v11461 = vpack.c.b16 %v11265, %v11261
    %v11462 = vpack.c.b16 %v11266, %v11262
    %v11463 = vpack.c.b16 %v11267, %v11263
    %v11464 = vpack.c.b16 %v11268, %v11264
    %v11465 = vpack.c.b16 %v11273, %v11269
    %v11466 = vpack.c.b16 %v11274, %v11270
    %v11467 = vpack.c.b16 %v11275, %v11271
    %v11468 = vpack.c.b16 %v11276, %v11272
    %v11469 = vpack.c.b16 %v11281, %v11277
    %v11470 = vpack.c.b16 %v11282, %v11278
    %v11471 = vpack.c.b16 %v11283, %v11279
    %v11472 = vpack.c.b16 %v11284, %v11280
    %v11473 = vpack.c.b16 %v11289, %v11285
    %v11474 = vpack.c.b16 %v11290, %v11286
    %v11475 = vpack.c.b16 %v11291, %v11287
    %v11476 = vpack.c.b16 %v11292, %v11288
    %v11477 = vpack.c.b16 %v11297, %v11293
    %v11478 = vpack.c.b16 %v11298, %v11294
    %v11479 = vpack.c.b16 %v11299, %v11295
    %v11480 = vpack.c.b16 %v11300, %v11296
    %v11481 = vpack.c.b16 %v11305, %v11301
    %v11482 = vpack.c.b16 %v11306, %v11302
    %v11483 = vpack.c.b16 %v11307, %v11303
    %v11484 = vpack.c.b16 %v11308, %v11304
    %v11485 = vpack.c.b16 %v11313, %v11309
    %v11486 = vpack.c.b16 %v11314, %v11310
    %v11487 = vpack.c.b16 %v11315, %v11311
    %v11488 = vpack.c.b16 %v11316, %v11312
    %v11489 = vpack.c.b16 %v11321, %v11317
    %v11490 = vpack.c.b16 %v11322, %v11318
    %v11491 = vpack.c.b16 %v11323, %v11319
    %v11492 = vpack.c.b16 %v11324, %v11320
    %v11493 = vpack.c.b16 %v11329, %v11325
    %v11494 = vpack.c.b16 %v11330, %v11326
    %v11495 = vpack.c.b16 %v11331, %v11327
    %v11496 = vpack.c.b16 %v11332, %v11328
    %v11497 = vpack.c.b16 %v11337, %v11333
    %v11498 = vpack.c.b16 %v11338, %v11334
    %v11499 = vpack.c.b16 %v11339, %v11335
    %v11500 = vpack.c.b16 %v11340, %v11336
    %v11501 = vpack.c.b16 %v11345, %v11341
    %v11502 = vpack.c.b16 %v11346, %v11342
    %v11503 = vpack.c.b16 %v11347, %v11343
    %v11504 = vpack.c.b16 %v11348, %v11344
    %v11505 = vpack.c.b16 %v11353, %v11349
    %v11506 = vpack.c.b16 %v11354, %v11350
    %v11507 = vpack.c.b16 %v11355, %v11351
    %v11508 = vpack.c.b16 %v11356, %v11352
    %v11509 = vpack.c.b16 %v11361, %v11357
    %v11510 = vpack.c.b16 %v11362, %v11358
    %v11511 = vpack.c.b16 %v11363, %v11359
    %v11512 = vpack.c.b16 %v11364, %v11360
    %v11513 = vpack.c.b16 %v11369, %v11365
    %v11514 = vpack.c.b16 %v11370, %v11366
    %v11515 = vpack.c.b16 %v11371, %v11367
    %v11516 = vpack.c.b16 %v11372, %v11368
    %v11517 = vpack.c.b16 %v11377, %v11373
    %v11518 = vpack.c.b16 %v11378, %v11374
    %v11519 = vpack.c.b16 %v11379, %v11375
    %v11520 = vpack.c.b16 %v11380, %v11376
    %v11521 = vpack.c.b16 %v11385, %v11381
    %v11522 = vpack.c.b16 %v11386, %v11382
    %v11523 = vpack.c.b16 %v11387, %v11383
    %v11524 = vpack.c.b16 %v11388, %v11384
    %v11525 = vpack.c.b16 %v11393, %v11389
    %v11526 = vpack.c.b16 %v11394, %v11390
    %v11527 = vpack.c.b16 %v11395, %v11391
    %v11528 = vpack.c.b16 %v11396, %v11392
    %v11529 = vpack.c.b16 %v11401, %v11397
    %v11530 = vpack.c.b16 %v11402, %v11398
    %v11531 = vpack.c.b16 %v11403, %v11399
    %v11532 = vpack.c.b16 %v11404, %v11400
    %11661 = vmatprep.subr.bf16.mxu0 %v11406
    %11662 = vmatpush1.bf16.msra.mxu0 %v11405
    %11663 = vmatprep.subr.bf16.mxu0 %v11410
    %11664 = vmatpush1.bf16.msra.mxu0 %v11409
    %11665 = vmatprep.subr.bf16.mxu0 %v11414
    %11666 = vmatpush1.bf16.msra.mxu0 %v11413
    %11667 = vmatprep.subr.bf16.mxu0 %v11418
    %11668 = vmatpush1.bf16.msra.mxu0 %v11417
    %11669 = vmatprep.subr.bf16.mxu0 %v11422
    %11670 = vmatpush1.bf16.msra.mxu0 %v11421
    %11671 = vmatprep.subr.bf16.mxu0 %v11426
    %11672 = vmatpush1.bf16.msra.mxu0 %v11425
    %11673 = vmatprep.subr.bf16.mxu0 %v11430
    %11674 = vmatpush1.bf16.msra.mxu0 %v11429
    %11675 = vmatprep.subr.bf16.mxu0 %v11434
    %11676 = vmatpush1.bf16.msra.mxu0 %v11433
    %11677 = vmatprep.subr.bf16.mxu0 %v11438
    %11678 = vmatpush1.bf16.msra.mxu0 %v11437
    %11679 = vmatprep.subr.bf16.mxu0 %v11442
    %11680 = vmatpush1.bf16.msra.mxu0 %v11441
    %11681 = vmatprep.subr.bf16.mxu0 %v11446
    %11682 = vmatpush1.bf16.msra.mxu0 %v11445
    %11683 = vmatprep.subr.bf16.mxu0 %v11450
    %11684 = vmatpush1.bf16.msra.mxu0 %v11449
    %11685 = vmatprep.subr.bf16.mxu0 %v11454
    %11686 = vmatpush1.bf16.msra.mxu0 %v11453
    %11687 = vmatprep.subr.bf16.mxu0 %v11458
    %11688 = vmatpush1.bf16.msra.mxu0 %v11457
    %11689 = vmatprep.subr.bf16.mxu0 %v11462
    %11690 = vmatpush1.bf16.msra.mxu0 %v11461
    %11691 = vmatprep.subr.bf16.mxu0 %v11466
    %11692 = vmatpush1.bf16.msra.mxu0 %v11465
    %11693 = vmatprep.mubr.bf16.mxu0 %v10868
    %11694 = vmatmul.mubr.bf16.gmra.mrb[0].mxu0 %v10867
    %v11695 = vpop.f32.mrb[0].mxu0
    %v11696 = vadd.f32 %v11004, %v11695
    %v11697 = vpop.f32.mrb[0].mxu0
    %v11698 = vadd.f32 %v11008, %v11697
    %v11699 = vpop.f32.mrb[0].mxu0
    %v11700 = vpop.f32.mrb[0].mxu0
    %11701 = vdwg.mxu0
    %11702 = vmatprep.subr.bf16.mxu0 %v11470
    %11703 = vmatpush1.bf16.msra.mxu0 %v11469
    %11704 = vmatprep.subr.bf16.mxu0 %v11474
    %11705 = vmatpush1.bf16.msra.mxu0 %v11473
    %11706 = vmatprep.subr.bf16.mxu0 %v11478
    %11707 = vmatpush1.bf16.msra.mxu0 %v11477
    %11708 = vmatprep.subr.bf16.mxu0 %v11482
    %11709 = vmatpush1.bf16.msra.mxu0 %v11481
    %11710 = vmatprep.subr.bf16.mxu0 %v11486
    %11711 = vmatpush1.bf16.msra.mxu0 %v11485
    %11712 = vmatprep.subr.bf16.mxu0 %v11490
    %11713 = vmatpush1.bf16.msra.mxu0 %v11489
    %11714 = vmatprep.subr.bf16.mxu0 %v11494
    %11715 = vmatpush1.bf16.msra.mxu0 %v11493
    %11716 = vmatprep.subr.bf16.mxu0 %v11498
    %11717 = vmatpush1.bf16.msra.mxu0 %v11497
    %11718 = vmatprep.subr.bf16.mxu0 %v11502
    %11719 = vmatpush1.bf16.msra.mxu0 %v11501
    %11720 = vmatprep.subr.bf16.mxu0 %v11506
    %11721 = vmatpush1.bf16.msra.mxu0 %v11505
    %11722 = vmatprep.subr.bf16.mxu0 %v11510
    %11723 = vmatpush1.bf16.msra.mxu0 %v11509
    %11724 = vmatprep.subr.bf16.mxu0 %v11514
    %11725 = vmatpush1.bf16.msra.mxu0 %v11513
    %11726 = vmatprep.subr.bf16.mxu0 %v11518
    %11727 = vmatpush1.bf16.msra.mxu0 %v11517
    %11728 = vmatprep.subr.bf16.mxu0 %v11522
    %11729 = vmatpush1.bf16.msra.mxu0 %v11521
    %11730 = vmatprep.subr.bf16.mxu0 %v11526
    %11731 = vmatpush1.bf16.msra.mxu0 %v11525
    %11732 = vmatprep.subr.bf16.mxu0 %v11530
    %11733 = vmatpush1.bf16.msra.mxu0 %v11529
    %11734 = vmatprep.mubr.bf16.mxu0 %v10870
    %11735 = vmatmul.mubr.bf16.gmra.mrb[0].mxu0 %v10869
    %v11736 = vpop.f32.mrb[0].mxu0
    %v11737 = vadd.f32 %v11696, %v11736
    %v11738 = vpop.f32.mrb[0].mxu0
    %v11739 = vadd.f32 %v11698, %v11738
    %v11740 = vpop.f32.mrb[0].mxu0
    %v11741 = vpop.f32.mrb[0].mxu0
    %11742 = vdwg.mxu0
    %11743 = vmatprep.subr.bf16.mxu0 %v11408
    %11744 = vmatpush1.bf16.msra.mxu0 %v11407
    %11745 = vmatprep.subr.bf16.mxu0 %v11412
    %11746 = vmatpush1.bf16.msra.mxu0 %v11411
    %11747 = vmatprep.subr.bf16.mxu0 %v11416
    %11748 = vmatpush1.bf16.msra.mxu0 %v11415
    %11749 = vmatprep.subr.bf16.mxu0 %v11420
    %11750 = vmatpush1.bf16.msra.mxu0 %v11419
    %11751 = vmatprep.subr.bf16.mxu0 %v11424
    %11752 = vmatpush1.bf16.msra.mxu0 %v11423
    %11753 = vmatprep.subr.bf16.mxu0 %v11428
    %11754 = vmatpush1.bf16.msra.mxu0 %v11427
    %11755 = vmatprep.subr.bf16.mxu0 %v11432
    %11756 = vmatpush1.bf16.msra.mxu0 %v11431
    %11757 = vmatprep.subr.bf16.mxu0 %v11436
    %11758 = vmatpush1.bf16.msra.mxu0 %v11435
    %11759 = vmatprep.subr.bf16.mxu0 %v11440
    %11760 = vmatpush1.bf16.msra.mxu0 %v11439
    %11761 = vmatprep.subr.bf16.mxu0 %v11444
    %11762 = vmatpush1.bf16.msra.mxu0 %v11443
    %11763 = vmatprep.subr.bf16.mxu0 %v11448
    %11764 = vmatpush1.bf16.msra.mxu0 %v11447
    %11765 = vmatprep.subr.bf16.mxu0 %v11452
    %11766 = vmatpush1.bf16.msra.mxu0 %v11451
    %11767 = vmatprep.subr.bf16.mxu0 %v11456
    %11768 = vmatpush1.bf16.msra.mxu0 %v11455
    %11769 = vmatprep.subr.bf16.mxu0 %v11460
    %11770 = vmatpush1.bf16.msra.mxu0 %v11459
    %11771 = vmatprep.subr.bf16.mxu0 %v11464
    %11772 = vmatpush1.bf16.msra.mxu0 %v11463
    %11773 = vmatprep.subr.bf16.mxu0 %v11468
    %11774 = vmatpush1.bf16.msra.mxu0 %v11467
    %11775 = vmatprep.mubr.bf16.mxu0 %v10868
    %11776 = vmatmul.mubr.bf16.gmra.mrb[0].mxu0 %v10867
    %v11777 = vpop.f32.mrb[0].mxu0
    %v11778 = vadd.f32 %v11012, %v11777
    %v11779 = vpop.f32.mrb[0].mxu0
    %v11780 = vadd.f32 %v11016, %v11779
    %v11781 = vpop.f32.mrb[0].mxu0
    %v11782 = vpop.f32.mrb[0].mxu0
    %11783 = vdwg.mxu0
    %11784 = vmatprep.subr.bf16.mxu0 %v11472
    %11785 = vmatpush1.bf16.msra.mxu0 %v11471
    %11786 = vmatprep.subr.bf16.mxu0 %v11476
    %11787 = vmatpush1.bf16.msra.mxu0 %v11475
    %11788 = vmatprep.subr.bf16.mxu0 %v11480
    %11789 = vmatpush1.bf16.msra.mxu0 %v11479
    %11790 = vmatprep.subr.bf16.mxu0 %v11484
    %11791 = vmatpush1.bf16.msra.mxu0 %v11483
    %11792 = vmatprep.subr.bf16.mxu0 %v11488
    %11793 = vmatpush1.bf16.msra.mxu0 %v11487
    %11794 = vmatprep.subr.bf16.mxu0 %v11492
    %11795 = vmatpush1.bf16.msra.mxu0 %v11491
    %11796 = vmatprep.subr.bf16.mxu0 %v11496
    %11797 = vmatpush1.bf16.msra.mxu0 %v11495
    %11798 = vmatprep.subr.bf16.mxu0 %v11500
    %11799 = vmatpush1.bf16.msra.mxu0 %v11499
    %11800 = vmatprep.subr.bf16.mxu0 %v11504
    %11801 = vmatpush1.bf16.msra.mxu0 %v11503
    %11802 = vmatprep.subr.bf16.mxu0 %v11508
    %11803 = vmatpush1.bf16.msra.mxu0 %v11507
    %11804 = vmatprep.subr.bf16.mxu0 %v11512
    %11805 = vmatpush1.bf16.msra.mxu0 %v11511
    %11806 = vmatprep.subr.bf16.mxu0 %v11516
    %11807 = vmatpush1.bf16.msra.mxu0 %v11515
    %11808 = vmatprep.subr.bf16.mxu0 %v11520
    %11809 = vmatpush1.bf16.msra.mxu0 %v11519
    %11810 = vmatprep.subr.bf16.mxu0 %v11524
    %11811 = vmatpush1.bf16.msra.mxu0 %v11523
    %11812 = vmatprep.subr.bf16.mxu0 %v11528
    %11813 = vmatpush1.bf16.msra.mxu0 %v11527
    %11814 = vmatprep.subr.bf16.mxu0 %v11532
    %11815 = vmatpush1.bf16.msra.mxu0 %v11531
    %11816 = vmatprep.mubr.bf16.mxu0 %v10870
    %11817 = vmatmul.mubr.bf16.gmra.mrb[0].mxu0 %v10869
    %v11818 = vpop.f32.mrb[0].mxu0
    %v11819 = vadd.f32 %v11778, %v11818
    %v11820 = vpop.f32.mrb[0].mxu0
    %v11821 = vadd.f32 %v11780, %v11820
    %v11822 = vpop.f32.mrb[0].mxu0
    %v11823 = vpop.f32.mrb[0].mxu0
    %11824 = vdwg.mxu0
    %v11825 = vadd.f32 %v11737, %v9901
    %v11826 = vadd.f32 %v11739, %v9902
    %v11827 = vadd.f32 %v11819, %v9903
    %v11828 = vadd.f32 %v11821, %v9904
    %v11829 = vmax.f32 %v11825, 0.0
    %v11830 = vmax.f32 %v11826, 0.0
    %v11831 = vmax.f32 %v11827, 0.0
    %v11832 = vmax.f32 %v11828, 0.0
    %v11833 = vpack.c.bf16 %v11829, %v11829
    %v11834 = vpack.c.bf16 %v11830, %v11830
    %v11835 = vpack.c.bf16 %v11831, %v11831
    %v11836 = vpack.c.bf16 %v11832, %v11832
    %v11837 = vld [vmem:[%s149] sm:$0xf]
    %v11838 = vld [vmem:[%s149 + $0x4] sm:$0xf]
    %v11839 = vld [vmem:[%s149 + $0x8] sm:$0xf]
    %v11840 = vld [vmem:[%s149 + $0xc] sm:$0xf]
    %v11841 = vld [vmem:[%s149 + $0x10] sm:$0xf]
    %v11842 = vld [vmem:[%s149 + $0x14] sm:$0xf]
    %v11843 = vld [vmem:[%s149 + $0x18] sm:$0xf]
    %v11844 = vld [vmem:[%s149 + $0x1c] sm:$0xf]
    %v11845 = vld [vmem:[%s149 + $0x20] sm:$0xf]
    %v11846 = vld [vmem:[%s149 + $0x24] sm:$0xf]
    %v11847 = vld [vmem:[%s149 + $0x28] sm:$0xf]
    %v11848 = vld [vmem:[%s149 + $0x2c] sm:$0xf]
    %v11849 = vld [vmem:[%s149 + $0x30] sm:$0xf]
    %v11850 = vld [vmem:[%s149 + $0x34] sm:$0xf]
    %v11851 = vld [vmem:[%s149 + $0x38] sm:$0xf]
    %v11852 = vld [vmem:[%s149 + $0x3c] sm:$0xf]
    %v11853 = vld [vmem:[%s149 + $0x40] sm:$0xf]
    %v11854 = vld [vmem:[%s149 + $0x44] sm:$0xf]
    %v11855 = vld [vmem:[%s149 + $0x48] sm:$0xf]
    %v11856 = vld [vmem:[%s149 + $0x4c] sm:$0xf]
    %v11857 = vld [vmem:[%s149 + $0x50] sm:$0xf]
    %v11858 = vld [vmem:[%s149 + $0x54] sm:$0xf]
    %v11859 = vld [vmem:[%s149 + $0x58] sm:$0xf]
    %v11860 = vld [vmem:[%s149 + $0x5c] sm:$0xf]
    %v11861 = vld [vmem:[%s149 + $0x60] sm:$0xf]
    %v11862 = vld [vmem:[%s149 + $0x64] sm:$0xf]
    %v11863 = vld [vmem:[%s149 + $0x68] sm:$0xf]
    %v11864 = vld [vmem:[%s149 + $0x6c] sm:$0xf]
    %v11865 = vld [vmem:[%s149 + $0x70] sm:$0xf]
    %v11866 = vld [vmem:[%s149 + $0x74] sm:$0xf]
    %v11867 = vld [vmem:[%s149 + $0x78] sm:$0xf]
    %v11868 = vld [vmem:[%s149 + $0x7c] sm:$0xf]
    %v11869 = vld [vmem:[%s149 + $0x80] sm:$0xf]
    %v11870 = vld [vmem:[%s149 + $0x84] sm:$0xf]
    %v11871 = vld [vmem:[%s149 + $0x88] sm:$0xf]
    %v11872 = vld [vmem:[%s149 + $0x8c] sm:$0xf]
    %v11873 = vld [vmem:[%s149 + $0x90] sm:$0xf]
    %v11874 = vld [vmem:[%s149 + $0x94] sm:$0xf]
    %v11875 = vld [vmem:[%s149 + $0x98] sm:$0xf]
    %v11876 = vld [vmem:[%s149 + $0x9c] sm:$0xf]
    %v11877 = vld [vmem:[%s149 + $0xa0] sm:$0xf]
    %v11878 = vld [vmem:[%s149 + $0xa4] sm:$0xf]
    %v11879 = vld [vmem:[%s149 + $0xa8] sm:$0xf]
    %v11880 = vld [vmem:[%s149 + $0xac] sm:$0xf]
    %v11881 = vld [vmem:[%s149 + $0xb0] sm:$0xf]
    %v11882 = vld [vmem:[%s149 + $0xb4] sm:$0xf]
    %v11883 = vld [vmem:[%s149 + $0xb8] sm:$0xf]
    %v11884 = vld [vmem:[%s149 + $0xbc] sm:$0xf]
    %v11885 = vld [vmem:[%s149 + $0xc0] sm:$0xf]
    %v11886 = vld [vmem:[%s149 + $0xc4] sm:$0xf]
    %v11887 = vld [vmem:[%s149 + $0xc8] sm:$0xf]
    %v11888 = vld [vmem:[%s149 + $0xcc] sm:$0xf]
    %v11889 = vld [vmem:[%s149 + $0xd0] sm:$0xf]
    %v11890 = vld [vmem:[%s149 + $0xd4] sm:$0xf]
    %v11891 = vld [vmem:[%s149 + $0xd8] sm:$0xf]
    %v11892 = vld [vmem:[%s149 + $0xdc] sm:$0xf]
    %v11893 = vld [vmem:[%s149 + $0xe0] sm:$0xf]
    %v11894 = vld [vmem:[%s149 + $0xe4] sm:$0xf]
    %v11895 = vld [vmem:[%s149 + $0xe8] sm:$0xf]
    %v11896 = vld [vmem:[%s149 + $0xec] sm:$0xf]
    %v11897 = vld [vmem:[%s149 + $0xf0] sm:$0xf]
    %v11898 = vld [vmem:[%s149 + $0xf4] sm:$0xf]
    %v11899 = vld [vmem:[%s149 + $0xf8] sm:$0xf]
    %v11900 = vld [vmem:[%s149 + $0xfc] sm:$0xf]
    %v11901 = vld [vmem:[#allocation7] sm:$0x1]
    %v11903 = vlaneseq
    %v11904 = vshrl.u32 %v11903, 7
    %v11905 = vsub.s32 0, %v11904
    %v11906 = vrot.slane %v11901, %v11905
    %v11972 = vunpack.c.l.b16 %v11837
    %v11973 = vunpack.c.l.b16 %v11838
    %v11974 = vunpack.c.l.b16 %v11839
    %v11975 = vunpack.c.l.b16 %v11840
    %v11976 = vunpack.c.l.b16 %v11841
    %v11977 = vunpack.c.l.b16 %v11842
    %v11978 = vunpack.c.l.b16 %v11843
    %v11979 = vunpack.c.l.b16 %v11844
    %v11980 = vunpack.c.l.b16 %v11845
    %v11981 = vunpack.c.l.b16 %v11846
    %v11982 = vunpack.c.l.b16 %v11847
    %v11983 = vunpack.c.l.b16 %v11848
    %v11984 = vunpack.c.l.b16 %v11849
    %v11985 = vunpack.c.l.b16 %v11850
    %v11986 = vunpack.c.l.b16 %v11851
    %v11987 = vunpack.c.l.b16 %v11852
    %v11988 = vunpack.c.l.b16 %v11853
    %v11989 = vunpack.c.l.b16 %v11854
    %v11990 = vunpack.c.l.b16 %v11855
    %v11991 = vunpack.c.l.b16 %v11856
    %v11992 = vunpack.c.l.b16 %v11857
    %v11993 = vunpack.c.l.b16 %v11858
    %v11994 = vunpack.c.l.b16 %v11859
    %v11995 = vunpack.c.l.b16 %v11860
    %v11996 = vunpack.c.l.b16 %v11861
    %v11997 = vunpack.c.l.b16 %v11862
    %v11998 = vunpack.c.l.b16 %v11863
    %v11999 = vunpack.c.l.b16 %v11864
    %v12000 = vunpack.c.l.b16 %v11865
    %v12001 = vunpack.c.l.b16 %v11866
    %v12002 = vunpack.c.l.b16 %v11867
    %v12003 = vunpack.c.l.b16 %v11868
    %v12004 = vunpack.c.l.b16 %v11869
    %v12005 = vunpack.c.l.b16 %v11870
    %v12006 = vunpack.c.l.b16 %v11871
    %v12007 = vunpack.c.l.b16 %v11872
    %v12008 = vunpack.c.l.b16 %v11873
    %v12009 = vunpack.c.l.b16 %v11874
    %v12010 = vunpack.c.l.b16 %v11875
    %v12011 = vunpack.c.l.b16 %v11876
    %v12012 = vunpack.c.l.b16 %v11877
    %v12013 = vunpack.c.l.b16 %v11878
    %v12014 = vunpack.c.l.b16 %v11879
    %v12015 = vunpack.c.l.b16 %v11880
    %v12016 = vunpack.c.l.b16 %v11881
    %v12017 = vunpack.c.l.b16 %v11882
    %v12018 = vunpack.c.l.b16 %v11883
    %v12019 = vunpack.c.l.b16 %v11884
    %v12020 = vunpack.c.l.b16 %v11885
    %v12021 = vunpack.c.l.b16 %v11886
    %v12022 = vunpack.c.l.b16 %v11887
    %v12023 = vunpack.c.l.b16 %v11888
    %v12024 = vunpack.c.l.b16 %v11889
    %v12025 = vunpack.c.l.b16 %v11890
    %v12026 = vunpack.c.l.b16 %v11891
    %v12027 = vunpack.c.l.b16 %v11892
    %v12028 = vunpack.c.l.b16 %v11893
    %v12029 = vunpack.c.l.b16 %v11894
    %v12030 = vunpack.c.l.b16 %v11895
    %v12031 = vunpack.c.l.b16 %v11896
    %v12032 = vunpack.c.l.b16 %v11897
    %v12033 = vunpack.c.l.b16 %v11898
    %v12034 = vunpack.c.l.b16 %v11899
    %v12035 = vunpack.c.l.b16 %v11900
    %v12036 = vpack.c.b16 %v11973, %v11972
    %v12037 = vpack.c.b16 %v11975, %v11974
    %v12038 = vpack.c.b16 %v11977, %v11976
    %v12039 = vpack.c.b16 %v11979, %v11978
    %v12040 = vpack.c.b16 %v11981, %v11980
    %v12041 = vpack.c.b16 %v11983, %v11982
    %v12042 = vpack.c.b16 %v11985, %v11984
    %v12043 = vpack.c.b16 %v11987, %v11986
    %v12044 = vpack.c.b16 %v11989, %v11988
    %v12045 = vpack.c.b16 %v11991, %v11990
    %v12046 = vpack.c.b16 %v11993, %v11992
    %v12047 = vpack.c.b16 %v11995, %v11994
    %v12048 = vpack.c.b16 %v11997, %v11996
    %v12049 = vpack.c.b16 %v11999, %v11998
    %v12050 = vpack.c.b16 %v12001, %v12000
    %v12051 = vpack.c.b16 %v12003, %v12002
    %v12052 = vpack.c.b16 %v12005, %v12004
    %v12053 = vpack.c.b16 %v12007, %v12006
    %v12054 = vpack.c.b16 %v12009, %v12008
    %v12055 = vpack.c.b16 %v12011, %v12010
    %v12056 = vpack.c.b16 %v12013, %v12012
    %v12057 = vpack.c.b16 %v12015, %v12014
    %v12058 = vpack.c.b16 %v12017, %v12016
    %v12059 = vpack.c.b16 %v12019, %v12018
    %v12060 = vpack.c.b16 %v12021, %v12020
    %v12061 = vpack.c.b16 %v12023, %v12022
    %v12062 = vpack.c.b16 %v12025, %v12024
    %v12063 = vpack.c.b16 %v12027, %v12026
    %v12064 = vpack.c.b16 %v12029, %v12028
    %v12065 = vpack.c.b16 %v12031, %v12030
    %v12066 = vpack.c.b16 %v12033, %v12032
    %v12067 = vpack.c.b16 %v12035, %v12034
    %12100 = vmatprep.subr.bf16.mxu0 0
    %12101 = vmatpush1.bf16.msra.mxu0 %v12036
    %12102 = vmatprep.subr.bf16.mxu0 0
    %12103 = vmatpush1.bf16.msra.mxu0 %v12037
    %12104 = vmatprep.subr.bf16.mxu0 0
    %12105 = vmatpush1.bf16.msra.mxu0 %v12038
    %12106 = vmatprep.subr.bf16.mxu0 0
    %12107 = vmatpush1.bf16.msra.mxu0 %v12039
    %12108 = vmatprep.subr.bf16.mxu0 0
    %12109 = vmatpush1.bf16.msra.mxu0 %v12040
    %12110 = vmatprep.subr.bf16.mxu0 0
    %12111 = vmatpush1.bf16.msra.mxu0 %v12041
    %12112 = vmatprep.subr.bf16.mxu0 0
    %12113 = vmatpush1.bf16.msra.mxu0 %v12042
    %12114 = vmatprep.subr.bf16.mxu0 0
    %12115 = vmatpush1.bf16.msra.mxu0 %v12043
    %12116 = vmatprep.subr.bf16.mxu0 0
    %12117 = vmatpush1.bf16.msra.mxu0 %v12044
    %12118 = vmatprep.subr.bf16.mxu0 0
    %12119 = vmatpush1.bf16.msra.mxu0 %v12045
    %12120 = vmatprep.subr.bf16.mxu0 0
    %12121 = vmatpush1.bf16.msra.mxu0 %v12046
    %12122 = vmatprep.subr.bf16.mxu0 0
    %12123 = vmatpush1.bf16.msra.mxu0 %v12047
    %12124 = vmatprep.subr.bf16.mxu0 0
    %12125 = vmatpush1.bf16.msra.mxu0 %v12048
    %12126 = vmatprep.subr.bf16.mxu0 0
    %12127 = vmatpush1.bf16.msra.mxu0 %v12049
    %12128 = vmatprep.subr.bf16.mxu0 0
    %12129 = vmatpush1.bf16.msra.mxu0 %v12050
    %12130 = vmatprep.subr.bf16.mxu0 0
    %12131 = vmatpush1.bf16.msra.mxu0 %v12051
    %12132 = vmatprep.mubr.bf16.mxu0 %v11834
    %12133 = vmatmul.mubr.bf16.gmra.mrb[0].mxu0 %v11833
    %v12134 = vpop.f32.mrb[0].mxu0
    %v12135 = vadd.f32 %v11906, %v12134
    %v12136 = vpop.f32.mrb[0].mxu0
    %v12137 = vpop.f32.mrb[0].mxu0
    %v12138 = vpop.f32.mrb[0].mxu0
    %12139 = vdwg.mxu0
    %12140 = vmatprep.subr.bf16.mxu0 0
    %12141 = vmatpush1.bf16.msra.mxu0 %v12052
    %12142 = vmatprep.subr.bf16.mxu0 0
    %12143 = vmatpush1.bf16.msra.mxu0 %v12053
    %12144 = vmatprep.subr.bf16.mxu0 0
    %12145 = vmatpush1.bf16.msra.mxu0 %v12054
    %12146 = vmatprep.subr.bf16.mxu0 0
    %12147 = vmatpush1.bf16.msra.mxu0 %v12055
    %12148 = vmatprep.subr.bf16.mxu0 0
    %12149 = vmatpush1.bf16.msra.mxu0 %v12056
    %12150 = vmatprep.subr.bf16.mxu0 0
    %12151 = vmatpush1.bf16.msra.mxu0 %v12057
    %12152 = vmatprep.subr.bf16.mxu0 0
    %12153 = vmatpush1.bf16.msra.mxu0 %v12058
    %12154 = vmatprep.subr.bf16.mxu0 0
    %12155 = vmatpush1.bf16.msra.mxu0 %v12059
    %12156 = vmatprep.subr.bf16.mxu0 0
    %12157 = vmatpush1.bf16.msra.mxu0 %v12060
    %12158 = vmatprep.subr.bf16.mxu0 0
    %12159 = vmatpush1.bf16.msra.mxu0 %v12061
    %12160 = vmatprep.subr.bf16.mxu0 0
    %12161 = vmatpush1.bf16.msra.mxu0 %v12062
    %12162 = vmatprep.subr.bf16.mxu0 0
    %12163 = vmatpush1.bf16.msra.mxu0 %v12063
    %12164 = vmatprep.subr.bf16.mxu0 0
    %12165 = vmatpush1.bf16.msra.mxu0 %v12064
    %12166 = vmatprep.subr.bf16.mxu0 0
    %12167 = vmatpush1.bf16.msra.mxu0 %v12065
    %12168 = vmatprep.subr.bf16.mxu0 0
    %12169 = vmatpush1.bf16.msra.mxu0 %v12066
    %12170 = vmatprep.subr.bf16.mxu0 0
    %12171 = vmatpush1.bf16.msra.mxu0 %v12067
    %12172 = vmatprep.mubr.bf16.mxu0 %v11836
    %12173 = vmatmul.mubr.bf16.gmra.mrb[0].mxu0 %v11835
    %v12174 = vpop.f32.mrb[0].mxu0
    %v12175 = vadd.f32 %v12135, %v12174
    %v12176 = vpop.f32.mrb[0].mxu0
    %v12177 = vpop.f32.mrb[0].mxu0
    %v12178 = vpop.f32.mrb[0].mxu0
    %12179 = vdwg.mxu0
    %12180 = vst [vmem:[#allocation106] sm:$0xff] %v12175
    // Predicated region
    $region574: #{fused_resnet_forward.1} parent=1 // pred_check
      _
    $region575: #{fused_resnet_forward.1} parent=1 // pred_check_branch
      %12182 = sbr.rel (0) target = $region577
    $region576: #{fused_resnet_forward.1} parent=1 // pred_region
      %s12184 = ssub.s32 128, 128
      %12185 = vsyncadd [#allocation4], %s12184
      %s12187 = sshll.u32 [#allocation106], 4
      %s12188 = int_to_ptr.vmem [resolvable:$true] %s12187
      %12190 = dma.vmem_to_hbm [thread:$0]  %s12188, 128, %s151, [#allocation4]
    $region577: #{fused_resnet_forward.1} parent=1 // pred_fallthru
      _
    // Predicated region
    $region578: #{fused_resnet_forward.1} parent=1 // pred_check
      _
    $region579: #{fused_resnet_forward.1} parent=1 // pred_check_branch
      %12192 = sbr.rel (0) target = $region581
    $region580: #{fused_resnet_forward.1} parent=1 // pred_region
      %12193 = dma.done [#allocation4], 128
    $region581: #{fused_resnet_forward.1} parent=1 // pred_fallthru
      _
    %12194 = vsyncpa [#allocation3], 1
    %12195 = vsyncpa [#allocation6], 1
    %12196 = vsyncpa [#allocation9], 1
    %12197 = vsyncpa [#allocation12], 1
    %12198 = vsyncpa [#allocation15], 1
    %12199 = vsyncpa [#allocation18], 1
    %12200 = vsyncpa [#allocation21], 1
    %12201 = vsyncpa [#allocation24], 1
    %12202 = vsyncpa [#allocation27], 1
    %12203 = vsyncpa [#allocation30], 1
    %12204 = vsyncpa [#allocation33], 1
    %12205 = vsyncpa [#allocation36], 1
    %12206 = vsyncpa [#allocation39], 1
    %12207 = vsyncpa [#allocation42], 1
    %12208 = vsyncpa [#allocation45], 1
    %12209 = vsyncpa [#allocation48], 1
    %12210 = vsyncpa [#allocation51], 1
    %12211 = vsyncpa [#allocation54], 1
    %12212 = vsyncpa [#allocation57], 1
    %12213 = vsyncpa [#allocation60], 1
    %12214 = vsyncpa [#allocation63], 1
    %12215 = vsyncpa [#allocation66], 1
    %12216 = vsyncpa [#allocation69], 1
    %12217 = vsyncpa [#allocation72], 1
    %12218 = vsyncpa [#allocation75], 1
    %12219 = vsyncpa [#allocation78], 1
    %12220 = vsyncpa [#allocation81], 1
    %12221 = vsyncpa [#allocation84], 1
    %12222 = vsyncpa [#allocation87], 1
    %12223 = vsyncpa [#allocation90], 1
    %12224 = vsyncpa [#allocation93], 1
    %12225 = vsyncpa [#allocation96], 1
    %12226 = vsyncpa [#allocation99], 1
    %12227 = vsyncpa [#allocation102], 1
    %12228 = vsyncpa [#allocation105], 1
    %12229 = vsyncpa [#allocation4], 1

</llo_original>
